<compile_context>
chip_gen: v7x
topology: tpu7x:2x2x1
jax: 0.10.0
libtpu: 0.0.40
codegen_flags: <defaults>
</compile_context>

<pallas_src>
import jax
import jax.numpy as jnp
import numpy as np
from jax import lax
from jax.experimental import pallas as pl
from jax.experimental.pallas import tpu as pltpu


LANE = 128


def _round_up(x, m):
    return (x + m - 1) // m * m


# ----------------------------------------------------------------------------
# Fully fused Pallas kernel
# ----------------------------------------------------------------------------
def _bottleneck_kernel(x_hbm, w1_ref, b1_ref, w2_ref, b2_ref, w3_ref, b3_ref,
                       o_ref, xband, h1, sem):
    # Static shapes:
    #   x_hbm : (N, H, W, Ci)    bf16, HBM (pl.ANY)
    #   xband : (th+2, W, Ci)    bf16 VMEM scratch  (row band + 1-row halo)
    #   h1    : (th+2, W+2, Wd)  bf16 VMEM scratch  (conv1 output with zero spatial ring)
    #   o_ref : (1, th, W, Co)   bf16 output block
    th = xband.shape[0] - 2
    W = xband.shape[1]
    Ci = xband.shape[2]
    Wd = h1.shape[2]
    Co = o_ref.shape[3]
    H = x_hbm.shape[1]

    n = pl.program_id(0)
    i = pl.program_id(1)
    last = pl.num_programs(1) - 1
    r0 = pl.multiple_of(i * th, th)

    # ---- manual DMA of the halo'd x band (rows r0-1 .. r0+th, clamped at the image edge) ----
    top = jnp.maximum(r0 - 1, 0)
    bot = jnp.minimum(r0 + th, H - 1)
    cp_top = pltpu.make_async_copy(x_hbm.at[n, pl.ds(top, 1)], xband.at[pl.ds(0, 1)], sem.at[0])
    cp_mid = pltpu.make_async_copy(x_hbm.at[n, pl.ds(r0, th)], xband.at[pl.ds(1, th)], sem.at[1])
    cp_bot = pltpu.make_async_copy(x_hbm.at[n, pl.ds(bot, 1)], xband.at[pl.ds(th + 1, 1)], sem.at[2])
    cp_top.start(); cp_mid.start(); cp_bot.start()
    cp_top.wait(); cp_mid.wait(); cp_bot.wait()
    # TODO(synk): double-buffer xband and prefetch the next band's slab while computing this one.

    # ---- conv1 (1x1) + folded bn1 + relu over the halo'd band ----
    xb = xband[...]                                                    # (th+2, W, Ci) bf16
    a1 = jnp.dot(xb.reshape((th + 2) * W, Ci), w1_ref[...],
                 preferred_element_type=jnp.float32)                  # ((th+2)*W, Wd) f32
    hh = jnp.maximum(a1 + b1_ref[...], 0.0).astype(jnp.bfloat16)

    # h1 holds conv1 output surrounded by a zero ring: the ring IS conv2's padding=1.
    h1[...] = jnp.zeros(h1.shape, h1.dtype)
    h1[:, 1:W + 1, :] = hh.reshape(th + 2, W, Wd)

    @pl.when(i == 0)          # top image boundary: the halo row is conv2 zero-padding
    def _():
        h1[0:1, :, :] = jnp.zeros((1, W + 2, Wd), h1.dtype)

    @pl.when(i == last)       # bottom image boundary
    def _():
        h1[th + 1:th + 2, :, :] = jnp.zeros((1, W + 2, Wd), h1.dtype)

    # ---- conv2 (3x3, pad=1) as 9 shifted matmuls + folded bn2 + relu ----
    acc = jnp.zeros((th * W, Wd), jnp.float32)
    for kh in range(3):
        for kw in range(3):
            patch = h1[kh:kh + th, kw:kw + W, :].reshape(th * W, Wd)   # bf16, VMEM-local
            acc = acc + jnp.dot(patch, w2_ref[kh * 3 + kw],
                                preferred_element_type=jnp.float32)
    h2 = jnp.maximum(acc + b2_ref[...], 0.0).astype(jnp.bfloat16)      # (th*W, Wd)

    # ---- conv3 (1x1) + folded bn3 + residual + relu (f32 epilogue, bf16 store) ----
    y = jnp.dot(h2, w3_ref[...], preferred_element_type=jnp.float32) + b3_ref[...]
    res = xband[1:th + 1, :, :].reshape(th * W, Ci).astype(jnp.float32)  # identity path
    out = jnp.maximum(y + res, 0.0).astype(o_ref.dtype)
    o_ref[...] = out.reshape(1, th, W, Co)


# ----------------------------------------------------------------------------
# Spec helpers / tile sizing
# ----------------------------------------------------------------------------
def _const_spec(shape, single_buffer):
    nd = len(shape)
    idx = lambda n, i: (0,) * nd
    if single_buffer:
        # Resident operands (BN-folded weights/biases): same block every step -> 1 buffer.
        return pl.BlockSpec(shape, idx, pipeline_mode=pl.Buffered(1))
    return pl.BlockSpec(shape, idx)


def _pick_tile_rows(N, H, W, Ci, Wd, Co, weight_bytes, single_buffer):
    """Band height (divides H) + vmem_limit_bytes from the real per-band footprint."""
    try:
        vmem_cap = int(pltpu.get_tpu_info().vmem_capacity_bytes)
    except Exception:  # pragma: no cover - conservative fallback (v7x per-core VMEM)
        vmem_cap = 64 * 1024 * 1024
    w_resident = weight_bytes * (1 if single_buffer else 2)
    budget = int(vmem_cap * 0.6) - w_resident
    per_row = (W * Ci * 2                  # bf16 x band scratch
               + (W + 2) * Wd * 2          # bf16 conv1 scratch
               + 2 * W * Co * 2            # bf16 output block, double-buffered
               + W * (2 * Wd + Co) * 4)    # f32 intermediates / regalloc headroom
    th_max = max(1, budget // max(per_row, 1) - 2)
    cands = [t for t in range(1, H + 1) if H % t == 0 and t <= th_max] or [1]

    def pref(t):
        steps = N * (H // t)
        # prefer >= 8 grid steps (v7x 2-TC balance), even split, then the largest band
        return (steps >= 8, steps % 2 == 0, t)

    th = max(cands, key=pref)
    footprint = w_resident + per_row * (th + 2) + (4 << 20)
    vmem_limit = min(int(vmem_cap * 0.85), max(32 << 20, 2 * footprint))
    return th, vmem_limit


# ----------------------------------------------------------------------------
# Forward wrapper
# ----------------------------------------------------------------------------
def bottleneck_baseline_forward(x_nchw, prep, *, single_buffer_weights=True):
    """Bottleneck_Baseline forward (stride=1, downsample=None, groups=1, dilation=1)."""
    # TODO(synk): stride>1 / dilation>1 / groups>1 / downsample conv path not implemented
    # (the module's defaults are stride=1, downsample=None, groups=1, dilation=1).
    N, Cin, H, W = x_nchw.shape
    inplanes, out_ch = prep["inplanes"], prep["out_ch"]
    Ci, Wd, Co = prep["Ci"], prep["Wd"], prep["Co"]
    assert Cin == inplanes and inplanes == out_ch, "identity residual needs inplanes == planes*4"
    assert Ci == Co

    # ONE lane-padded bf16 NHWC copy of x: feeds both conv1 and the residual add.
    x = jnp.transpose(x_nchw, (0, 2, 3, 1)).astype(jnp.bfloat16)
    if Ci > Cin:
        x = jnp.pad(x, ((0, 0), (0, 0), (0, 0), (0, Ci - Cin)))

    weight_bytes = sum(int(prep[k].size) * prep[k].dtype.itemsize
                       for k in ("w1", "b1", "w2", "b2", "w3", "b3"))
    th, vmem_limit = _pick_tile_rows(N, H, W, Ci, Wd, Co, weight_bytes, single_buffer_weights)
    nH = H // th

    cs = lambda shape: _const_spec(shape, single_buffer_weights)

    out = pl.pallas_call(
        _bottleneck_kernel,
        out_shape=jax.ShapeDtypeStruct((N, H, W, Co), jnp.bfloat16),
        grid_spec=pltpu.PrefetchScalarGridSpec(
            num_scalar_prefetch=0,
            grid=(N, nH),
            in_specs=[
                pl.BlockSpec(memory_space=pl.ANY),     # x stays in HBM; halo'd bands DMA'd manually
                cs((Ci, Wd)), cs((1, Wd)),             # w1, b1 (BN1 folded)
                cs((9, Wd, Wd)), cs((1, Wd)),          # w2, b2 (BN2 folded)
                cs((Wd, Co)), cs((1, Co)),             # w3, b3 (BN3 folded)
            ],
            out_specs=pl.BlockSpec((1, th, W, Co), lambda n, i: (n, i, 0, 0)),
            scratch_shapes=[
                pltpu.VMEM((th + 2, W, Ci), jnp.bfloat16),      # halo'd x band
                pltpu.VMEM((th + 2, W + 2, Wd), jnp.bfloat16),  # conv1 output + zero ring
                pltpu.SemaphoreType.DMA((3,)),
            ],
        ),
        compiler_params=pltpu.CompilerParams(
            dimension_semantics=("parallel", "parallel"),
            vmem_limit_bytes=vmem_limit,
        ),
    )(x, prep["w1"], prep["b1"], prep["w2"], prep["b2"], prep["w3"], prep["b3"])

    out = out[..., :out_ch]                                   # drop channel lane-padding
    return jnp.transpose(out, (0, 3, 1, 2)).astype(jnp.float32)   # NHWC -> NCHW


# ----------------------------------------------------------------------------
# Parameter construction / one-time prep (BN folding, transposes, lane padding, bf16 cast)
# ----------------------------------------------------------------------------
def _fold_bn(gamma, beta, mean, var, eps=1e-5):
    scale = gamma / jnp.sqrt(var + eps)
    bias = beta - mean * scale
    return scale, bias


def make_bottleneck_params(key, inplanes, planes, base_width=64, groups=1):
    width = int(planes * (base_width / 64.0)) * groups
    out_ch = planes * 4
    ks = jax.random.split(key, 12)

    def w(k, shape, fan_in):
        return (jax.random.normal(k, shape, jnp.float32) / np.sqrt(fan_in)).astype(jnp.float32)

    params = {
        # conv weights stored PyTorch-style (Cout, Cin, kh, kw)
        "w1": w(ks[0], (width, inplanes, 1, 1), inplanes),
        "w2": w(ks[1], (width, width, 3, 3), 9 * width),
        "w3": w(ks[2], (out_ch, width, 1, 1), width),
        # BN params (inference-mode running stats): gamma, beta, mean, var
        "bn1": (jax.random.uniform(ks[3], (width,), jnp.float32, 0.5, 1.5),
                jax.random.normal(ks[4], (width,)) * 0.1,
                jax.random.normal(ks[5], (width,)) * 0.1,
                jax.random.uniform(ks[6], (width,), jnp.float32, 0.5, 1.5)),
        "bn2": (jax.random.uniform(ks[7], (width,), jnp.float32, 0.5, 1.5),
                jax.random.normal(ks[8], (width,)) * 0.1,
                jax.random.normal(ks[9], (width,)) * 0.1,
                jax.random.uniform(ks[10], (width,), jnp.float32, 0.5, 1.5)),
        "bn3": (jax.random.uniform(ks[11], (out_ch,), jnp.float32, 0.5, 1.5),
                jnp.zeros((out_ch,), jnp.float32),
                jnp.zeros((out_ch,), jnp.float32),
                jnp.ones((out_ch,), jnp.float32)),
    }
    return params, width, out_ch


def prepare_params(params, inplanes, width, out_ch):
    Ci = _round_up(inplanes, LANE)
    Wd = _round_up(width, LANE)
    Co = _round_up(out_ch, LANE)

    s1, b1 = _fold_bn(*params["bn1"])
    s2, b2 = _fold_bn(*params["bn2"])
    s3, b3 = _fold_bn(*params["bn3"])

    # conv1 (1x1): (width, inplanes, 1, 1) -> (inplanes, width), BN1 scale folded into columns.
    w1 = jnp.transpose(params["w1"][:, :, 0, 0], (1, 0)) * s1[None, :]
    w1p = jnp.zeros((Ci, Wd), jnp.float32).at[:inplanes, :width].set(w1)
    b1p = jnp.zeros((1, Wd), jnp.float32).at[0, :width].set(b1)

    # conv2 (3x3): (width, width, 3, 3) -> (kh, kw, Cin, Cout) -> (9, Wd, Wd), BN2 scale folded.
    w2 = jnp.transpose(params["w2"], (2, 3, 1, 0)) * s2[None, None, None, :]
    w2p = jnp.zeros((3, 3, Wd, Wd), jnp.float32).at[:, :, :width, :width].set(w2)
    w2p = w2p.reshape(9, Wd, Wd)
    b2p = jnp.zeros((1, Wd), jnp.float32).at[0, :width].set(b2)

    # conv3 (1x1): (out_ch, width, 1, 1) -> (width, out_ch), BN3 scale folded.
    w3 = jnp.transpose(params["w3"][:, :, 0, 0], (1, 0)) * s3[None, :]
    w3p = jnp.zeros((Wd, Co), jnp.float32).at[:width, :out_ch].set(w3)
    b3p = jnp.zeros((1, Co), jnp.float32).at[0, :out_ch].set(b3)

    return {
        "inplanes": inplanes, "width": width, "out_ch": out_ch,
        "Ci": Ci, "Wd": Wd, "Co": Co,
        "w1": w1p.astype(jnp.bfloat16), "b1": b1p,
        "w2": w2p.astype(jnp.bfloat16), "b2": b2p,
        "w3": w3p.astype(jnp.bfloat16), "b3": b3p,
    }


# ----------------------------------------------------------------------------
# Pure-JAX reference (lax convs) for verification
# ----------------------------------------------------------------------------
def _reference_forward(x_nchw, params, stride=1, dilation=1):
    def bn(y, p):
        g, b, m, v = p
        g, b, m, v = (t.reshape(1, -1, 1, 1) for t in (g, b, m, v))
        return (y - m) / jnp.sqrt(v + 1e-5) * g + b

    dn = ("NCHW", "OIHW", "NCHW")
    out = lax.conv_general_dilated(x_nchw, params["w1"], (1, 1), "VALID", dimension_numbers=dn)
    out = jax.nn.relu(bn(out, params["bn1"]))
    out = lax.conv_general_dilated(out, params["w2"], (stride, stride),
                                   [(dilation, dilation)] * 2,
                                   rhs_dilation=(dilation, dilation), dimension_numbers=dn)
    out = jax.nn.relu(bn(out, params["bn2"]))
    out = lax.conv_general_dilated(out, params["w3"], (1, 1), "VALID", dimension_numbers=dn)
    out = bn(out, params["bn3"]) + x_nchw
    return jax.nn.relu(out)


if __name__ == "__main__":
    key = jax.random.PRNGKey(0)
    k_x, k_p = jax.random.split(key)

    # inplanes == planes * expansion so the identity residual path is valid
    # (downsample=None, stride=1, groups=1, base_width=64, dilation=1).
    N, inplanes, H, W = 2, 16, 16, 16
    planes = 4

    x = jax.random.normal(k_x, (N, inplanes, H, W), jnp.float32)
    params, width, out_ch = make_bottleneck_params(k_p, inplanes, planes)
    prep = prepare_params(params, inplanes, width, out_ch)

    def run(single_buffer):
        fwd = jax.jit(lambda xx: bottleneck_baseline_forward(
            xx, prep, single_buffer_weights=single_buffer))
        return jax.block_until_ready(fwd(x))

    try:
        out = run(True)
    except Exception:
        # Fallback if this JAX build rejects pipeline_mode=pl.Buffered(1) on resident weights.
        out = run(False)

    assert out.shape == (N, planes * 4, H, W)

    ref = jax.block_until_ready(_reference_forward(x, params))
    # bf16 matmul operands / intermediates / residual -> bf16-appropriate tolerance
    np.testing.assert_allclose(np.asarray(out), np.asarray(ref), rtol=3e-2, atol=3e-2)

    print("KERNEL_OK")
</pallas_src>

<mosaic_0001>
module attributes {stable_mosaic.version = 11 : i64} {
  func.func @_bottleneck_kernel(%arg0: i32, %arg1: i32, %arg2: memref<2x16x16x128xbf16, #tpu.memory_space<any>>, %arg3: memref<128x128xbf16, #tpu.memory_space<vmem>>, %arg4: memref<1x128xf32, #tpu.memory_space<vmem>>, %arg5: memref<9x128x128xbf16, #tpu.memory_space<vmem>>, %arg6: memref<1x128xf32, #tpu.memory_space<vmem>>, %arg7: memref<128x128xbf16, #tpu.memory_space<vmem>>, %arg8: memref<1x128xf32, #tpu.memory_space<vmem>>, %arg9: memref<1x4x16x128xbf16, #tpu.memory_space<vmem>>, %arg10: memref<6x16x128xbf16, #tpu.memory_space<vmem>>, %arg11: memref<6x18x128xbf16, #tpu.memory_space<vmem>>, %arg12: memref<3x!tpu.dma_semaphore, #tpu.memory_space<semaphore_mem>>) attributes {dimension_semantics = [#tpu.dimension_semantics<parallel>, #tpu.dimension_semantics<parallel>], iteration_bounds = array<i64: 2, 4>, scalar_prefetch = 0 : i64, scratch_operands = 3 : i64, tpu.core_type = #tpu.core_type<tc>, window_params = [{}, {pipeline_mode = #tpu.pipeline_mode<synchronous>, transform_indices = @transform_1, window_bounds = array<i64: 128, 128>}, {pipeline_mode = #tpu.pipeline_mode<synchronous>, transform_indices = @transform_2, window_bounds = array<i64: 1, 128>}, {pipeline_mode = #tpu.pipeline_mode<synchronous>, transform_indices = @transform_3, window_bounds = array<i64: 9, 128, 128>}, {pipeline_mode = #tpu.pipeline_mode<synchronous>, transform_indices = @transform_4, window_bounds = array<i64: 1, 128>}, {pipeline_mode = #tpu.pipeline_mode<synchronous>, transform_indices = @transform_5, window_bounds = array<i64: 128, 128>}, {pipeline_mode = #tpu.pipeline_mode<synchronous>, transform_indices = @transform_6, window_bounds = array<i64: 1, 128>}, {transform_indices = @transform_7, window_bounds = array<i64: 1, 4, 16, 128>}]} {
    %c4_i32 = arith.constant 4 : i32
    %0 = arith.muli %arg1, %c4_i32 : i32
    %1 = tpu.assume_multiple %0, 4 : i32
    %c1_i32 = arith.constant 1 : i32
    %2 = arith.subi %1, %c1_i32 : i32
    %c0_i32 = arith.constant 0 : i32
    %3 = arith.maxsi %2, %c0_i32 : i32
    %c4_i32_0 = arith.constant 4 : i32
    %4 = arith.addi %1, %c4_i32_0 : i32
    %c15_i32 = arith.constant 15 : i32
    %5 = arith.minsi %4, %c15_i32 : i32
    %c0_i32_1 = arith.constant 0 : i32
    %c0_i32_2 = arith.constant 0 : i32
    %c0_i32_3 = arith.constant 0 : i32
    %6 = tpu.memref_slice %arg2[%arg0, %3, %c0_i32_2, %c0_i32_3] : memref<2x16x16x128xbf16, #tpu.memory_space<any>> -> memref<1x1x16x128xbf16, #tpu.memory_space<any>>
    %7 = tpu.memref_squeeze %6 : memref<1x1x16x128xbf16, #tpu.memory_space<any>> -> memref<1x16x128xbf16, #tpu.memory_space<any>>
    %c0_i32_4 = arith.constant 0 : i32
    %c0_i32_5 = arith.constant 0 : i32
    %c0_i32_6 = arith.constant 0 : i32
    %8 = tpu.memref_slice %arg10[%c0_i32_4, %c0_i32_5, %c0_i32_6] : memref<6x16x128xbf16, #tpu.memory_space<vmem>> -> memref<1x16x128xbf16, #tpu.memory_space<vmem>>
    %9 = tpu.memref_slice %arg12[%c0_i32_1] : memref<3x!tpu.dma_semaphore, #tpu.memory_space<semaphore_mem>> -> memref<1x!tpu.dma_semaphore, #tpu.memory_space<semaphore_mem>>
    %10 = tpu.memref_squeeze %9 : memref<1x!tpu.dma_semaphore, #tpu.memory_space<semaphore_mem>> -> memref<!tpu.dma_semaphore, #tpu.memory_space<semaphore_mem>>
    tpu.enqueue_dma source(%7 : memref<1x16x128xbf16, #tpu.memory_space<any>>) target(%8 : memref<1x16x128xbf16, #tpu.memory_space<vmem>>) target_semaphore(%10 : memref<!tpu.dma_semaphore, #tpu.memory_space<semaphore_mem>>)
    %c1_i32_7 = arith.constant 1 : i32
    %c0_i32_8 = arith.constant 0 : i32
    %c0_i32_9 = arith.constant 0 : i32
    %11 = tpu.memref_slice %arg2[%arg0, %1, %c0_i32_8, %c0_i32_9] : memref<2x16x16x128xbf16, #tpu.memory_space<any>> -> memref<1x4x16x128xbf16, #tpu.memory_space<any>>
    %12 = tpu.memref_squeeze %11 : memref<1x4x16x128xbf16, #tpu.memory_space<any>> -> memref<4x16x128xbf16, #tpu.memory_space<any>>
    %c1_i32_10 = arith.constant 1 : i32
    %c0_i32_11 = arith.constant 0 : i32
    %c0_i32_12 = arith.constant 0 : i32
    %13 = tpu.memref_slice %arg10[%c1_i32_10, %c0_i32_11, %c0_i32_12] : memref<6x16x128xbf16, #tpu.memory_space<vmem>> -> memref<4x16x128xbf16, #tpu.memory_space<vmem>>
    %14 = tpu.memref_slice %arg12[%c1_i32_7] : memref<3x!tpu.dma_semaphore, #tpu.memory_space<semaphore_mem>> -> memref<1x!tpu.dma_semaphore, #tpu.memory_space<semaphore_mem>>
    %15 = tpu.memref_squeeze %14 : memref<1x!tpu.dma_semaphore, #tpu.memory_space<semaphore_mem>> -> memref<!tpu.dma_semaphore, #tpu.memory_space<semaphore_mem>>
    tpu.enqueue_dma source(%12 : memref<4x16x128xbf16, #tpu.memory_space<any>>) target(%13 : memref<4x16x128xbf16, #tpu.memory_space<vmem>>) target_semaphore(%15 : memref<!tpu.dma_semaphore, #tpu.memory_space<semaphore_mem>>)
    %c2_i32 = arith.constant 2 : i32
    %c0_i32_13 = arith.constant 0 : i32
    %c0_i32_14 = arith.constant 0 : i32
    %16 = tpu.memref_slice %arg2[%arg0, %5, %c0_i32_13, %c0_i32_14] : memref<2x16x16x128xbf16, #tpu.memory_space<any>> -> memref<1x1x16x128xbf16, #tpu.memory_space<any>>
    %17 = tpu.memref_squeeze %16 : memref<1x1x16x128xbf16, #tpu.memory_space<any>> -> memref<1x16x128xbf16, #tpu.memory_space<any>>
    %c5_i32 = arith.constant 5 : i32
    %c0_i32_15 = arith.constant 0 : i32
    %c0_i32_16 = arith.constant 0 : i32
    %18 = tpu.memref_slice %arg10[%c5_i32, %c0_i32_15, %c0_i32_16] : memref<6x16x128xbf16, #tpu.memory_space<vmem>> -> memref<1x16x128xbf16, #tpu.memory_space<vmem>>
    %19 = tpu.memref_slice %arg12[%c2_i32] : memref<3x!tpu.dma_semaphore, #tpu.memory_space<semaphore_mem>> -> memref<1x!tpu.dma_semaphore, #tpu.memory_space<semaphore_mem>>
    %20 = tpu.memref_squeeze %19 : memref<1x!tpu.dma_semaphore, #tpu.memory_space<semaphore_mem>> -> memref<!tpu.dma_semaphore, #tpu.memory_space<semaphore_mem>>
    tpu.enqueue_dma source(%17 : memref<1x16x128xbf16, #tpu.memory_space<any>>) target(%18 : memref<1x16x128xbf16, #tpu.memory_space<vmem>>) target_semaphore(%20 : memref<!tpu.dma_semaphore, #tpu.memory_space<semaphore_mem>>)
    %c0_i32_17 = arith.constant 0 : i32
    %c0_i32_18 = arith.constant 0 : i32
    %c0_i32_19 = arith.constant 0 : i32
    %21 = tpu.memref_slice %arg2[%arg0, %3, %c0_i32_18, %c0_i32_19] : memref<2x16x16x128xbf16, #tpu.memory_space<any>> -> memref<1x1x16x128xbf16, #tpu.memory_space<any>>
    %22 = tpu.memref_squeeze %21 : memref<1x1x16x128xbf16, #tpu.memory_space<any>> -> memref<1x16x128xbf16, #tpu.memory_space<any>>
    %c0_i32_20 = arith.constant 0 : i32
    %c0_i32_21 = arith.constant 0 : i32
    %c0_i32_22 = arith.constant 0 : i32
    %23 = tpu.memref_slice %arg10[%c0_i32_20, %c0_i32_21, %c0_i32_22] : memref<6x16x128xbf16, #tpu.memory_space<vmem>> -> memref<1x16x128xbf16, #tpu.memory_space<vmem>>
    %24 = tpu.memref_slice %arg12[%c0_i32_17] : memref<3x!tpu.dma_semaphore, #tpu.memory_space<semaphore_mem>> -> memref<1x!tpu.dma_semaphore, #tpu.memory_space<semaphore_mem>>
    %25 = tpu.memref_squeeze %24 : memref<1x!tpu.dma_semaphore, #tpu.memory_space<semaphore_mem>> -> memref<!tpu.dma_semaphore, #tpu.memory_space<semaphore_mem>>
    tpu.wait_dma2 semaphore(%25 : memref<!tpu.dma_semaphore, #tpu.memory_space<semaphore_mem>>) src(%22 : memref<1x16x128xbf16, #tpu.memory_space<any>>) dst(%23 : memref<1x16x128xbf16, #tpu.memory_space<vmem>>)
    %c1_i32_23 = arith.constant 1 : i32
    %c0_i32_24 = arith.constant 0 : i32
    %c0_i32_25 = arith.constant 0 : i32
    %26 = tpu.memref_slice %arg2[%arg0, %1, %c0_i32_24, %c0_i32_25] : memref<2x16x16x128xbf16, #tpu.memory_space<any>> -> memref<1x4x16x128xbf16, #tpu.memory_space<any>>
    %27 = tpu.memref_squeeze %26 : memref<1x4x16x128xbf16, #tpu.memory_space<any>> -> memref<4x16x128xbf16, #tpu.memory_space<any>>
    %c1_i32_26 = arith.constant 1 : i32
    %c0_i32_27 = arith.constant 0 : i32
    %c0_i32_28 = arith.constant 0 : i32
    %28 = tpu.memref_slice %arg10[%c1_i32_26, %c0_i32_27, %c0_i32_28] : memref<6x16x128xbf16, #tpu.memory_space<vmem>> -> memref<4x16x128xbf16, #tpu.memory_space<vmem>>
    %29 = tpu.memref_slice %arg12[%c1_i32_23] : memref<3x!tpu.dma_semaphore, #tpu.memory_space<semaphore_mem>> -> memref<1x!tpu.dma_semaphore, #tpu.memory_space<semaphore_mem>>
    %30 = tpu.memref_squeeze %29 : memref<1x!tpu.dma_semaphore, #tpu.memory_space<semaphore_mem>> -> memref<!tpu.dma_semaphore, #tpu.memory_space<semaphore_mem>>
    tpu.wait_dma2 semaphore(%30 : memref<!tpu.dma_semaphore, #tpu.memory_space<semaphore_mem>>) src(%27 : memref<4x16x128xbf16, #tpu.memory_space<any>>) dst(%28 : memref<4x16x128xbf16, #tpu.memory_space<vmem>>)
    %c2_i32_29 = arith.constant 2 : i32
    %c0_i32_30 = arith.constant 0 : i32
    %c0_i32_31 = arith.constant 0 : i32
    %31 = tpu.memref_slice %arg2[%arg0, %5, %c0_i32_30, %c0_i32_31] : memref<2x16x16x128xbf16, #tpu.memory_space<any>> -> memref<1x1x16x128xbf16, #tpu.memory_space<any>>
    %32 = tpu.memref_squeeze %31 : memref<1x1x16x128xbf16, #tpu.memory_space<any>> -> memref<1x16x128xbf16, #tpu.memory_space<any>>
    %c5_i32_32 = arith.constant 5 : i32
    %c0_i32_33 = arith.constant 0 : i32
    %c0_i32_34 = arith.constant 0 : i32
    %33 = tpu.memref_slice %arg10[%c5_i32_32, %c0_i32_33, %c0_i32_34] : memref<6x16x128xbf16, #tpu.memory_space<vmem>> -> memref<1x16x128xbf16, #tpu.memory_space<vmem>>
    %34 = tpu.memref_slice %arg12[%c2_i32_29] : memref<3x!tpu.dma_semaphore, #tpu.memory_space<semaphore_mem>> -> memref<1x!tpu.dma_semaphore, #tpu.memory_space<semaphore_mem>>
    %35 = tpu.memref_squeeze %34 : memref<1x!tpu.dma_semaphore, #tpu.memory_space<semaphore_mem>> -> memref<!tpu.dma_semaphore, #tpu.memory_space<semaphore_mem>>
    tpu.wait_dma2 semaphore(%35 : memref<!tpu.dma_semaphore, #tpu.memory_space<semaphore_mem>>) src(%32 : memref<1x16x128xbf16, #tpu.memory_space<any>>) dst(%33 : memref<1x16x128xbf16, #tpu.memory_space<vmem>>)
    %c0 = arith.constant 0 : index
    %c0_35 = arith.constant 0 : index
    %c0_36 = arith.constant 0 : index
    %36 = vector.load %arg10[%c0, %c0_35, %c0_36] : memref<6x16x128xbf16, #tpu.memory_space<vmem>>, vector<6x16x128xbf16>
    %37 = vector.shape_cast %36 : vector<6x16x128xbf16> to vector<96x128xbf16>
    %c0_37 = arith.constant 0 : index
    %c0_38 = arith.constant 0 : index
    %38 = vector.load %arg3[%c0_37, %c0_38] : memref<128x128xbf16, #tpu.memory_space<vmem>>, vector<128x128xbf16>
    %cst = arith.constant dense<0.000000e+00> : vector<96x128xf32>
    %39 = tpu.matmul %37, %38, %cst {dimension_numbers = #tpu.dot_dimension_numbers<[1], [0], [0], [1], [0, 0, 1, 1], [], []>} : vector<96x128xbf16>, vector<128x128xbf16>, vector<96x128xf32> -> vector<96x128xf32>
    %c0_39 = arith.constant 0 : index
    %c0_40 = arith.constant 0 : index
    %40 = vector.load %arg4[%c0_39, %c0_40] : memref<1x128xf32, #tpu.memory_space<vmem>>, vector<1x128xf32>
    %41 = vector.broadcast %40 : vector<1x128xf32> to vector<96x128xf32>
    %42 = arith.addf %39, %41 : vector<96x128xf32>
    %cst_41 = arith.constant 0.000000e+00 : f32
    %43 = vector.broadcast %cst_41 : f32 to vector<96x128xf32>
    %44 = arith.maximumf %42, %43 : vector<96x128xf32>
    %45 = arith.truncf %44 : vector<96x128xf32> to vector<96x128xbf16>
    %cst_42 = arith.constant 0.000000e+00 : bf16
    %46 = vector.broadcast %cst_42 : bf16 to vector<6x18x128xbf16>
    %c0_43 = arith.constant 0 : index
    %c0_44 = arith.constant 0 : index
    %c0_45 = arith.constant 0 : index
    %47 = vector.load %arg11[%c0_43, %c0_44, %c0_45] : memref<6x18x128xbf16, #tpu.memory_space<vmem>>, vector<6x18x128xbf16>
    tpu.vector_store %arg11[%c0_43, %c0_44, %c0_45], %46 {strides = array<i32>} : memref<6x18x128xbf16, #tpu.memory_space<vmem>>, vector<6x18x128xbf16>,
    %48 = vector.shape_cast %45 : vector<96x128xbf16> to vector<6x16x128xbf16>
    %c0_46 = arith.constant 0 : index
    %c1 = arith.constant 1 : index
    %c0_47 = arith.constant 0 : index
    %49 = vector.load %arg11[%c0_46, %c1, %c0_47] : memref<6x18x128xbf16, #tpu.memory_space<vmem>>, vector<6x16x128xbf16>
    tpu.vector_store %arg11[%c0_46, %c1, %c0_47], %48 {strides = array<i32>} : memref<6x18x128xbf16, #tpu.memory_space<vmem>>, vector<6x16x128xbf16>,
    %c0_i32_48 = arith.constant 0 : i32
    %50 = arith.cmpi eq, %arg1, %c0_i32_48 : i32
    %51 = arith.extui %50 : i1 to i32
    %c0_i32_49 = arith.constant 0 : i32
    %52 = arith.cmpi ne, %51, %c0_i32_49 : i32
    scf.if %52 {
      %cst_124 = arith.constant 0.000000e+00 : bf16
      %131 = vector.broadcast %cst_124 : bf16 to vector<1x18x128xbf16>
      %c0_125 = arith.constant 0 : index
      %c0_126 = arith.constant 0 : index
      %c0_127 = arith.constant 0 : index
      %132 = vector.load %arg11[%c0_125, %c0_126, %c0_127] : memref<6x18x128xbf16, #tpu.memory_space<vmem>>, vector<1x18x128xbf16>
      tpu.vector_store %arg11[%c0_125, %c0_126, %c0_127], %131 {strides = array<i32>} : memref<6x18x128xbf16, #tpu.memory_space<vmem>>, vector<1x18x128xbf16>,
    } else {
    }
    %c3_i32 = arith.constant 3 : i32
    %53 = arith.cmpi eq, %arg1, %c3_i32 : i32
    %54 = arith.extui %53 : i1 to i32
    %c0_i32_50 = arith.constant 0 : i32
    %55 = arith.cmpi ne, %54, %c0_i32_50 : i32
    scf.if %55 {
      %cst_124 = arith.constant 0.000000e+00 : bf16
      %131 = vector.broadcast %cst_124 : bf16 to vector<1x18x128xbf16>
      %c5_125 = arith.constant 5 : index
      %c0_126 = arith.constant 0 : index
      %c0_127 = arith.constant 0 : index
      %132 = vector.load %arg11[%c5_125, %c0_126, %c0_127] : memref<6x18x128xbf16, #tpu.memory_space<vmem>>, vector<1x18x128xbf16>
      tpu.vector_store %arg11[%c5_125, %c0_126, %c0_127], %131 {strides = array<i32>} : memref<6x18x128xbf16, #tpu.memory_space<vmem>>, vector<1x18x128xbf16>,
    } else {
    }
    %cst_51 = arith.constant 0.000000e+00 : f32
    %56 = vector.broadcast %cst_51 : f32 to vector<64x128xf32>
    %c0_52 = arith.constant 0 : index
    %c0_53 = arith.constant 0 : index
    %c0_54 = arith.constant 0 : index
    %57 = vector.load %arg11[%c0_52, %c0_53, %c0_54] : memref<6x18x128xbf16, #tpu.memory_space<vmem>>, vector<4x16x128xbf16>
    %58 = vector.shape_cast %57 : vector<4x16x128xbf16> to vector<64x128xbf16>
    %c0_55 = arith.constant 0 : index
    %c0_56 = arith.constant 0 : index
    %c0_57 = arith.constant 0 : index
    %59 = vector.load %arg5[%c0_55, %c0_56, %c0_57] : memref<9x128x128xbf16, #tpu.memory_space<vmem>>, vector<1x128x128xbf16>
    %60 = vector.shape_cast %59 : vector<1x128x128xbf16> to vector<128x128xbf16>
    %cst_58 = arith.constant dense<0.000000e+00> : vector<64x128xf32>
    %61 = tpu.matmul %58, %60, %cst_58 {dimension_numbers = #tpu.dot_dimension_numbers<[1], [0], [0], [1], [0, 0, 1, 1], [], []>} : vector<64x128xbf16>, vector<128x128xbf16>, vector<64x128xf32> -> vector<64x128xf32>
    %62 = arith.addf %56, %61 : vector<64x128xf32>
    %c0_59 = arith.constant 0 : index
    %c1_60 = arith.constant 1 : index
    %c0_61 = arith.constant 0 : index
    %63 = vector.load %arg11[%c0_59, %c1_60, %c0_61] : memref<6x18x128xbf16, #tpu.memory_space<vmem>>, vector<4x16x128xbf16>
    %64 = vector.shape_cast %63 : vector<4x16x128xbf16> to vector<64x128xbf16>
    %c1_62 = arith.constant 1 : index
    %c0_63 = arith.constant 0 : index
    %c0_64 = arith.constant 0 : index
    %65 = vector.load %arg5[%c1_62, %c0_63, %c0_64] : memref<9x128x128xbf16, #tpu.memory_space<vmem>>, vector<1x128x128xbf16>
    %66 = vector.shape_cast %65 : vector<1x128x128xbf16> to vector<128x128xbf16>
    %cst_65 = arith.constant dense<0.000000e+00> : vector<64x128xf32>
    %67 = tpu.matmul %64, %66, %cst_65 {dimension_numbers = #tpu.dot_dimension_numbers<[1], [0], [0], [1], [0, 0, 1, 1], [], []>} : vector<64x128xbf16>, vector<128x128xbf16>, vector<64x128xf32> -> vector<64x128xf32>
    %68 = arith.addf %62, %67 : vector<64x128xf32>
    %c0_66 = arith.constant 0 : index
    %c2 = arith.constant 2 : index
    %c0_67 = arith.constant 0 : index
    %69 = vector.load %arg11[%c0_66, %c2, %c0_67] : memref<6x18x128xbf16, #tpu.memory_space<vmem>>, vector<4x16x128xbf16>
    %70 = vector.shape_cast %69 : vector<4x16x128xbf16> to vector<64x128xbf16>
    %c2_68 = arith.constant 2 : index
    %c0_69 = arith.constant 0 : index
    %c0_70 = arith.constant 0 : index
    %71 = vector.load %arg5[%c2_68, %c0_69, %c0_70] : memref<9x128x128xbf16, #tpu.memory_space<vmem>>, vector<1x128x128xbf16>
    %72 = vector.shape_cast %71 : vector<1x128x128xbf16> to vector<128x128xbf16>
    %cst_71 = arith.constant dense<0.000000e+00> : vector<64x128xf32>
    %73 = tpu.matmul %70, %72, %cst_71 {dimension_numbers = #tpu.dot_dimension_numbers<[1], [0], [0], [1], [0, 0, 1, 1], [], []>} : vector<64x128xbf16>, vector<128x128xbf16>, vector<64x128xf32> -> vector<64x128xf32>
    %74 = arith.addf %68, %73 : vector<64x128xf32>
    %c1_72 = arith.constant 1 : index
    %c0_73 = arith.constant 0 : index
    %c0_74 = arith.constant 0 : index
    %75 = vector.load %arg11[%c1_72, %c0_73, %c0_74] : memref<6x18x128xbf16, #tpu.memory_space<vmem>>, vector<4x16x128xbf16>
    %76 = vector.shape_cast %75 : vector<4x16x128xbf16> to vector<64x128xbf16>
    %c3 = arith.constant 3 : index
    %c0_75 = arith.constant 0 : index
    %c0_76 = arith.constant 0 : index
    %77 = vector.load %arg5[%c3, %c0_75, %c0_76] : memref<9x128x128xbf16, #tpu.memory_space<vmem>>, vector<1x128x128xbf16>
    %78 = vector.shape_cast %77 : vector<1x128x128xbf16> to vector<128x128xbf16>
    %cst_77 = arith.constant dense<0.000000e+00> : vector<64x128xf32>
    %79 = tpu.matmul %76, %78, %cst_77 {dimension_numbers = #tpu.dot_dimension_numbers<[1], [0], [0], [1], [0, 0, 1, 1], [], []>} : vector<64x128xbf16>, vector<128x128xbf16>, vector<64x128xf32> -> vector<64x128xf32>
    %80 = arith.addf %74, %79 : vector<64x128xf32>
    %c1_78 = arith.constant 1 : index
    %c1_79 = arith.constant 1 : index
    %c0_80 = arith.constant 0 : index
    %81 = vector.load %arg11[%c1_78, %c1_79, %c0_80] : memref<6x18x128xbf16, #tpu.memory_space<vmem>>, vector<4x16x128xbf16>
    %82 = vector.shape_cast %81 : vector<4x16x128xbf16> to vector<64x128xbf16>
    %c4 = arith.constant 4 : index
    %c0_81 = arith.constant 0 : index
    %c0_82 = arith.constant 0 : index
    %83 = vector.load %arg5[%c4, %c0_81, %c0_82] : memref<9x128x128xbf16, #tpu.memory_space<vmem>>, vector<1x128x128xbf16>
    %84 = vector.shape_cast %83 : vector<1x128x128xbf16> to vector<128x128xbf16>
    %cst_83 = arith.constant dense<0.000000e+00> : vector<64x128xf32>
    %85 = tpu.matmul %82, %84, %cst_83 {dimension_numbers = #tpu.dot_dimension_numbers<[1], [0], [0], [1], [0, 0, 1, 1], [], []>} : vector<64x128xbf16>, vector<128x128xbf16>, vector<64x128xf32> -> vector<64x128xf32>
    %86 = arith.addf %80, %85 : vector<64x128xf32>
    %c1_84 = arith.constant 1 : index
    %c2_85 = arith.constant 2 : index
    %c0_86 = arith.constant 0 : index
    %87 = vector.load %arg11[%c1_84, %c2_85, %c0_86] : memref<6x18x128xbf16, #tpu.memory_space<vmem>>, vector<4x16x128xbf16>
    %88 = vector.shape_cast %87 : vector<4x16x128xbf16> to vector<64x128xbf16>
    %c5 = arith.constant 5 : index
    %c0_87 = arith.constant 0 : index
    %c0_88 = arith.constant 0 : index
    %89 = vector.load %arg5[%c5, %c0_87, %c0_88] : memref<9x128x128xbf16, #tpu.memory_space<vmem>>, vector<1x128x128xbf16>
    %90 = vector.shape_cast %89 : vector<1x128x128xbf16> to vector<128x128xbf16>
    %cst_89 = arith.constant dense<0.000000e+00> : vector<64x128xf32>
    %91 = tpu.matmul %88, %90, %cst_89 {dimension_numbers = #tpu.dot_dimension_numbers<[1], [0], [0], [1], [0, 0, 1, 1], [], []>} : vector<64x128xbf16>, vector<128x128xbf16>, vector<64x128xf32> -> vector<64x128xf32>
    %92 = arith.addf %86, %91 : vector<64x128xf32>
    %c2_90 = arith.constant 2 : index
    %c0_91 = arith.constant 0 : index
    %c0_92 = arith.constant 0 : index
    %93 = vector.load %arg11[%c2_90, %c0_91, %c0_92] : memref<6x18x128xbf16, #tpu.memory_space<vmem>>, vector<4x16x128xbf16>
    %94 = vector.shape_cast %93 : vector<4x16x128xbf16> to vector<64x128xbf16>
    %c6 = arith.constant 6 : index
    %c0_93 = arith.constant 0 : index
    %c0_94 = arith.constant 0 : index
    %95 = vector.load %arg5[%c6, %c0_93, %c0_94] : memref<9x128x128xbf16, #tpu.memory_space<vmem>>, vector<1x128x128xbf16>
    %96 = vector.shape_cast %95 : vector<1x128x128xbf16> to vector<128x128xbf16>
    %cst_95 = arith.constant dense<0.000000e+00> : vector<64x128xf32>
    %97 = tpu.matmul %94, %96, %cst_95 {dimension_numbers = #tpu.dot_dimension_numbers<[1], [0], [0], [1], [0, 0, 1, 1], [], []>} : vector<64x128xbf16>, vector<128x128xbf16>, vector<64x128xf32> -> vector<64x128xf32>
    %98 = arith.addf %92, %97 : vector<64x128xf32>
    %c2_96 = arith.constant 2 : index
    %c1_97 = arith.constant 1 : index
    %c0_98 = arith.constant 0 : index
    %99 = vector.load %arg11[%c2_96, %c1_97, %c0_98] : memref<6x18x128xbf16, #tpu.memory_space<vmem>>, vector<4x16x128xbf16>
    %100 = vector.shape_cast %99 : vector<4x16x128xbf16> to vector<64x128xbf16>
    %c7 = arith.constant 7 : index
    %c0_99 = arith.constant 0 : index
    %c0_100 = arith.constant 0 : index
    %101 = vector.load %arg5[%c7, %c0_99, %c0_100] : memref<9x128x128xbf16, #tpu.memory_space<vmem>>, vector<1x128x128xbf16>
    %102 = vector.shape_cast %101 : vector<1x128x128xbf16> to vector<128x128xbf16>
    %cst_101 = arith.constant dense<0.000000e+00> : vector<64x128xf32>
    %103 = tpu.matmul %100, %102, %cst_101 {dimension_numbers = #tpu.dot_dimension_numbers<[1], [0], [0], [1], [0, 0, 1, 1], [], []>} : vector<64x128xbf16>, vector<128x128xbf16>, vector<64x128xf32> -> vector<64x128xf32>
    %104 = arith.addf %98, %103 : vector<64x128xf32>
    %c2_102 = arith.constant 2 : index
    %c2_103 = arith.constant 2 : index
    %c0_104 = arith.constant 0 : index
    %105 = vector.load %arg11[%c2_102, %c2_103, %c0_104] : memref<6x18x128xbf16, #tpu.memory_space<vmem>>, vector<4x16x128xbf16>
    %106 = vector.shape_cast %105 : vector<4x16x128xbf16> to vector<64x128xbf16>
    %c8 = arith.constant 8 : index
    %c0_105 = arith.constant 0 : index
    %c0_106 = arith.constant 0 : index
    %107 = vector.load %arg5[%c8, %c0_105, %c0_106] : memref<9x128x128xbf16, #tpu.memory_space<vmem>>, vector<1x128x128xbf16>
    %108 = vector.shape_cast %107 : vector<1x128x128xbf16> to vector<128x128xbf16>
    %cst_107 = arith.constant dense<0.000000e+00> : vector<64x128xf32>
    %109 = tpu.matmul %106, %108, %cst_107 {dimension_numbers = #tpu.dot_dimension_numbers<[1], [0], [0], [1], [0, 0, 1, 1], [], []>} : vector<64x128xbf16>, vector<128x128xbf16>, vector<64x128xf32> -> vector<64x128xf32>
    %110 = arith.addf %104, %109 : vector<64x128xf32>
    %c0_108 = arith.constant 0 : index
    %c0_109 = arith.constant 0 : index
    %111 = vector.load %arg6[%c0_108, %c0_109] : memref<1x128xf32, #tpu.memory_space<vmem>>, vector<1x128xf32>
    %112 = vector.broadcast %111 : vector<1x128xf32> to vector<64x128xf32>
    %113 = arith.addf %110, %112 : vector<64x128xf32>
    %cst_110 = arith.constant 0.000000e+00 : f32
    %114 = vector.broadcast %cst_110 : f32 to vector<64x128xf32>
    %115 = arith.maximumf %113, %114 : vector<64x128xf32>
    %116 = arith.truncf %115 : vector<64x128xf32> to vector<64x128xbf16>
    %c0_111 = arith.constant 0 : index
    %c0_112 = arith.constant 0 : index
    %117 = vector.load %arg7[%c0_111, %c0_112] : memref<128x128xbf16, #tpu.memory_space<vmem>>, vector<128x128xbf16>
    %cst_113 = arith.constant dense<0.000000e+00> : vector<64x128xf32>
    %118 = tpu.matmul %116, %117, %cst_113 {dimension_numbers = #tpu.dot_dimension_numbers<[1], [0], [0], [1], [0, 0, 1, 1], [], []>} : vector<64x128xbf16>, vector<128x128xbf16>, vector<64x128xf32> -> vector<64x128xf32>
    %c0_114 = arith.constant 0 : index
    %c0_115 = arith.constant 0 : index
    %119 = vector.load %arg8[%c0_114, %c0_115] : memref<1x128xf32, #tpu.memory_space<vmem>>, vector<1x128xf32>
    %120 = vector.broadcast %119 : vector<1x128xf32> to vector<64x128xf32>
    %121 = arith.addf %118, %120 : vector<64x128xf32>
    %c1_116 = arith.constant 1 : index
    %c0_117 = arith.constant 0 : index
    %c0_118 = arith.constant 0 : index
    %122 = vector.load %arg10[%c1_116, %c0_117, %c0_118] : memref<6x16x128xbf16, #tpu.memory_space<vmem>>, vector<4x16x128xbf16>
    %123 = vector.shape_cast %122 : vector<4x16x128xbf16> to vector<64x128xbf16>
    %124 = arith.extf %123 : vector<64x128xbf16> to vector<64x128xf32>
    %125 = arith.addf %121, %124 : vector<64x128xf32>
    %cst_119 = arith.constant 0.000000e+00 : f32
    %126 = vector.broadcast %cst_119 : f32 to vector<64x128xf32>
    %127 = arith.maximumf %125, %126 : vector<64x128xf32>
    %128 = arith.truncf %127 : vector<64x128xf32> to vector<64x128xbf16>
    %129 = vector.shape_cast %128 : vector<64x128xbf16> to vector<1x4x16x128xbf16>
    %c0_120 = arith.constant 0 : index
    %c0_121 = arith.constant 0 : index
    %c0_122 = arith.constant 0 : index
    %c0_123 = arith.constant 0 : index
    %130 = vector.load %arg9[%c0_120, %c0_121, %c0_122, %c0_123] : memref<1x4x16x128xbf16, #tpu.memory_space<vmem>>, vector<1x4x16x128xbf16>
    tpu.vector_store %arg9[%c0_120, %c0_121, %c0_122, %c0_123], %129 {strides = array<i32>} : memref<1x4x16x128xbf16, #tpu.memory_space<vmem>>, vector<1x4x16x128xbf16>,
    return
  }
  func.func @transform_1(%arg0: i32, %arg1: i32) -> (i32, i32) {
    %c0_i32 = arith.constant 0 : i32
    %c0_i32_0 = arith.constant 0 : i32
    %c0_i32_1 = arith.constant 0 : i32
    return %c0_i32, %c0_i32_0 : i32, i32
  }
  func.func @transform_2(%arg0: i32, %arg1: i32) -> (i32, i32) {
    %c0_i32 = arith.constant 0 : i32
    %c0_i32_0 = arith.constant 0 : i32
    %c0_i32_1 = arith.constant 0 : i32
    return %c0_i32, %c0_i32_0 : i32, i32
  }
  func.func @transform_3(%arg0: i32, %arg1: i32) -> (i32, i32, i32) {
    %c0_i32 = arith.constant 0 : i32
    %c0_i32_0 = arith.constant 0 : i32
    %c0_i32_1 = arith.constant 0 : i32
    %c0_i32_2 = arith.constant 0 : i32
    return %c0_i32, %c0_i32_0, %c0_i32_1 : i32, i32, i32
  }
  func.func @transform_4(%arg0: i32, %arg1: i32) -> (i32, i32) {
    %c0_i32 = arith.constant 0 : i32
    %c0_i32_0 = arith.constant 0 : i32
    %c0_i32_1 = arith.constant 0 : i32
    return %c0_i32, %c0_i32_0 : i32, i32
  }
  func.func @transform_5(%arg0: i32, %arg1: i32) -> (i32, i32) {
    %c0_i32 = arith.constant 0 : i32
    %c0_i32_0 = arith.constant 0 : i32
    %c0_i32_1 = arith.constant 0 : i32
    return %c0_i32, %c0_i32_0 : i32, i32
  }
  func.func @transform_6(%arg0: i32, %arg1: i32) -> (i32, i32) {
    %c0_i32 = arith.constant 0 : i32
    %c0_i32_0 = arith.constant 0 : i32
    %c0_i32_1 = arith.constant 0 : i32
    return %c0_i32, %c0_i32_0 : i32, i32
  }
  func.func @transform_7(%arg0: i32, %arg1: i32) -> (i32, i32, i32, i32) {
    %c0_i32 = arith.constant 0 : i32
    %c0_i32_0 = arith.constant 0 : i32
    %c0_i32_1 = arith.constant 0 : i32
    return %arg0, %arg1, %c0_i32, %c0_i32_0 : i32, i32, i32, i32
  }
}

module attributes {stable_mosaic.version = 11 : i64} {
  func.func @_bottleneck_kernel(%arg0: i32, %arg1: i32, %arg2: memref<2x16x16x128xbf16, #tpu.memory_space<any>>, %arg3: memref<128x128xbf16, #tpu.memory_space<vmem>>, %arg4: memref<1x128xf32, #tpu.memory_space<vmem>>, %arg5: memref<9x128x128xbf16, #tpu.memory_space<vmem>>, %arg6: memref<1x128xf32, #tpu.memory_space<vmem>>, %arg7: memref<128x128xbf16, #tpu.memory_space<vmem>>, %arg8: memref<1x128xf32, #tpu.memory_space<vmem>>, %arg9: memref<1x4x16x128xbf16, #tpu.memory_space<vmem>>, %arg10: memref<6x16x128xbf16, #tpu.memory_space<vmem>>, %arg11: memref<6x18x128xbf16, #tpu.memory_space<vmem>>, %arg12: memref<3x!tpu.dma_semaphore, #tpu.memory_space<semaphore_mem>>) attributes {dimension_semantics = [#tpu.dimension_semantics<parallel>, #tpu.dimension_semantics<parallel>], iteration_bounds = array<i64: 2, 4>, scalar_prefetch = 0 : i64, scratch_operands = 3 : i64, tpu.core_type = #tpu.core_type<tc>, window_params = [{}, {pipeline_mode = #tpu.pipeline_mode<synchronous>, transform_indices = @transform_1, window_bounds = array<i64: 128, 128>}, {pipeline_mode = #tpu.pipeline_mode<synchronous>, transform_indices = @transform_2, window_bounds = array<i64: 1, 128>}, {pipeline_mode = #tpu.pipeline_mode<synchronous>, transform_indices = @transform_3, window_bounds = array<i64: 9, 128, 128>}, {pipeline_mode = #tpu.pipeline_mode<synchronous>, transform_indices = @transform_4, window_bounds = array<i64: 1, 128>}, {pipeline_mode = #tpu.pipeline_mode<synchronous>, transform_indices = @transform_5, window_bounds = array<i64: 128, 128>}, {pipeline_mode = #tpu.pipeline_mode<synchronous>, transform_indices = @transform_6, window_bounds = array<i64: 1, 128>}, {transform_indices = @transform_7, window_bounds = array<i64: 1, 4, 16, 128>}]} {
    %c4_i32 = arith.constant 4 : i32
    %0 = arith.muli %arg1, %c4_i32 : i32
    %1 = tpu.assume_multiple %0, 4 : i32
    %c1_i32 = arith.constant 1 : i32
    %2 = arith.subi %1, %c1_i32 : i32
    %c0_i32 = arith.constant 0 : i32
    %3 = arith.maxsi %2, %c0_i32 : i32
    %c4_i32_0 = arith.constant 4 : i32
    %4 = arith.addi %1, %c4_i32_0 : i32
    %c15_i32 = arith.constant 15 : i32
    %5 = arith.minsi %4, %c15_i32 : i32
    %c0_i32_1 = arith.constant 0 : i32
    %c0_i32_2 = arith.constant 0 : i32
    %c0_i32_3 = arith.constant 0 : i32
    %6 = tpu.memref_slice %arg2[%arg0, %3, %c0_i32_2, %c0_i32_3] : memref<2x16x16x128xbf16, #tpu.memory_space<any>> -> memref<1x1x16x128xbf16, #tpu.memory_space<any>>
    %7 = tpu.memref_squeeze %6 : memref<1x1x16x128xbf16, #tpu.memory_space<any>> -> memref<1x16x128xbf16, #tpu.memory_space<any>>
    %c0_i32_4 = arith.constant 0 : i32
    %c0_i32_5 = arith.constant 0 : i32
    %c0_i32_6 = arith.constant 0 : i32
    %8 = tpu.memref_slice %arg10[%c0_i32_4, %c0_i32_5, %c0_i32_6] : memref<6x16x128xbf16, #tpu.memory_space<vmem>> -> memref<1x16x128xbf16, #tpu.memory_space<vmem>>
    %9 = tpu.memref_slice %arg12[%c0_i32_1] : memref<3x!tpu.dma_semaphore, #tpu.memory_space<semaphore_mem>> -> memref<1x!tpu.dma_semaphore, #tpu.memory_space<semaphore_mem>>
    %10 = tpu.memref_squeeze %9 : memref<1x!tpu.dma_semaphore, #tpu.memory_space<semaphore_mem>> -> memref<!tpu.dma_semaphore, #tpu.memory_space<semaphore_mem>>
    tpu.enqueue_dma source(%7 : memref<1x16x128xbf16, #tpu.memory_space<any>>) target(%8 : memref<1x16x128xbf16, #tpu.memory_space<vmem>>) target_semaphore(%10 : memref<!tpu.dma_semaphore, #tpu.memory_space<semaphore_mem>>)
    %c1_i32_7 = arith.constant 1 : i32
    %c0_i32_8 = arith.constant 0 : i32
    %c0_i32_9 = arith.constant 0 : i32
    %11 = tpu.memref_slice %arg2[%arg0, %1, %c0_i32_8, %c0_i32_9] : memref<2x16x16x128xbf16, #tpu.memory_space<any>> -> memref<1x4x16x128xbf16, #tpu.memory_space<any>>
    %12 = tpu.memref_squeeze %11 : memref<1x4x16x128xbf16, #tpu.memory_space<any>> -> memref<4x16x128xbf16, #tpu.memory_space<any>>
    %c1_i32_10 = arith.constant 1 : i32
    %c0_i32_11 = arith.constant 0 : i32
    %c0_i32_12 = arith.constant 0 : i32
    %13 = tpu.memref_slice %arg10[%c1_i32_10, %c0_i32_11, %c0_i32_12] : memref<6x16x128xbf16, #tpu.memory_space<vmem>> -> memref<4x16x128xbf16, #tpu.memory_space<vmem>>
    %14 = tpu.memref_slice %arg12[%c1_i32_7] : memref<3x!tpu.dma_semaphore, #tpu.memory_space<semaphore_mem>> -> memref<1x!tpu.dma_semaphore, #tpu.memory_space<semaphore_mem>>
    %15 = tpu.memref_squeeze %14 : memref<1x!tpu.dma_semaphore, #tpu.memory_space<semaphore_mem>> -> memref<!tpu.dma_semaphore, #tpu.memory_space<semaphore_mem>>
    tpu.enqueue_dma source(%12 : memref<4x16x128xbf16, #tpu.memory_space<any>>) target(%13 : memref<4x16x128xbf16, #tpu.memory_space<vmem>>) target_semaphore(%15 : memref<!tpu.dma_semaphore, #tpu.memory_space<semaphore_mem>>)
    %c2_i32 = arith.constant 2 : i32
    %c0_i32_13 = arith.constant 0 : i32
    %c0_i32_14 = arith.constant 0 : i32
    %16 = tpu.memref_slice %arg2[%arg0, %5, %c0_i32_13, %c0_i32_14] : memref<2x16x16x128xbf16, #tpu.memory_space<any>> -> memref<1x1x16x128xbf16, #tpu.memory_space<any>>
    %17 = tpu.memref_squeeze %16 : memref<1x1x16x128xbf16, #tpu.memory_space<any>> -> memref<1x16x128xbf16, #tpu.memory_space<any>>
    %c5_i32 = arith.constant 5 : i32
    %c0_i32_15 = arith.constant 0 : i32
    %c0_i32_16 = arith.constant 0 : i32
    %18 = tpu.memref_slice %arg10[%c5_i32, %c0_i32_15, %c0_i32_16] : memref<6x16x128xbf16, #tpu.memory_space<vmem>> -> memref<1x16x128xbf16, #tpu.memory_space<vmem>>
    %19 = tpu.memref_slice %arg12[%c2_i32] : memref<3x!tpu.dma_semaphore, #tpu.memory_space<semaphore_mem>> -> memref<1x!tpu.dma_semaphore, #tpu.memory_space<semaphore_mem>>
    %20 = tpu.memref_squeeze %19 : memref<1x!tpu.dma_semaphore, #tpu.memory_space<semaphore_mem>> -> memref<!tpu.dma_semaphore, #tpu.memory_space<semaphore_mem>>
    tpu.enqueue_dma source(%17 : memref<1x16x128xbf16, #tpu.memory_space<any>>) target(%18 : memref<1x16x128xbf16, #tpu.memory_space<vmem>>) target_semaphore(%20 : memref<!tpu.dma_semaphore, #tpu.memory_space<semaphore_mem>>)
    %c0_i32_17 = arith.constant 0 : i32
    %c0_i32_18 = arith.constant 0 : i32
    %c0_i32_19 = arith.constant 0 : i32
    %21 = tpu.memref_slice %arg2[%arg0, %3, %c0_i32_18, %c0_i32_19] : memref<2x16x16x128xbf16, #tpu.memory_space<any>> -> memref<1x1x16x128xbf16, #tpu.memory_space<any>>
    %22 = tpu.memref_squeeze %21 : memref<1x1x16x128xbf16, #tpu.memory_space<any>> -> memref<1x16x128xbf16, #tpu.memory_space<any>>
    %c0_i32_20 = arith.constant 0 : i32
    %c0_i32_21 = arith.constant 0 : i32
    %c0_i32_22 = arith.constant 0 : i32
    %23 = tpu.memref_slice %arg10[%c0_i32_20, %c0_i32_21, %c0_i32_22] : memref<6x16x128xbf16, #tpu.memory_space<vmem>> -> memref<1x16x128xbf16, #tpu.memory_space<vmem>>
    %24 = tpu.memref_slice %arg12[%c0_i32_17] : memref<3x!tpu.dma_semaphore, #tpu.memory_space<semaphore_mem>> -> memref<1x!tpu.dma_semaphore, #tpu.memory_space<semaphore_mem>>
    %25 = tpu.memref_squeeze %24 : memref<1x!tpu.dma_semaphore, #tpu.memory_space<semaphore_mem>> -> memref<!tpu.dma_semaphore, #tpu.memory_space<semaphore_mem>>
    tpu.wait_dma2 semaphore(%25 : memref<!tpu.dma_semaphore, #tpu.memory_space<semaphore_mem>>) src(%22 : memref<1x16x128xbf16, #tpu.memory_space<any>>) dst(%23 : memref<1x16x128xbf16, #tpu.memory_space<vmem>>)
    %c1_i32_23 = arith.constant 1 : i32
    %c0_i32_24 = arith.constant 0 : i32
    %c0_i32_25 = arith.constant 0 : i32
    %26 = tpu.memref_slice %arg2[%arg0, %1, %c0_i32_24, %c0_i32_25] : memref<2x16x16x128xbf16, #tpu.memory_space<any>> -> memref<1x4x16x128xbf16, #tpu.memory_space<any>>
    %27 = tpu.memref_squeeze %26 : memref<1x4x16x128xbf16, #tpu.memory_space<any>> -> memref<4x16x128xbf16, #tpu.memory_space<any>>
    %c1_i32_26 = arith.constant 1 : i32
    %c0_i32_27 = arith.constant 0 : i32
    %c0_i32_28 = arith.constant 0 : i32
    %28 = tpu.memref_slice %arg10[%c1_i32_26, %c0_i32_27, %c0_i32_28] : memref<6x16x128xbf16, #tpu.memory_space<vmem>> -> memref<4x16x128xbf16, #tpu.memory_space<vmem>>
    %29 = tpu.memref_slice %arg12[%c1_i32_23] : memref<3x!tpu.dma_semaphore, #tpu.memory_space<semaphore_mem>> -> memref<1x!tpu.dma_semaphore, #tpu.memory_space<semaphore_mem>>
    %30 = tpu.memref_squeeze %29 : memref<1x!tpu.dma_semaphore, #tpu.memory_space<semaphore_mem>> -> memref<!tpu.dma_semaphore, #tpu.memory_space<semaphore_mem>>
    tpu.wait_dma2 semaphore(%30 : memref<!tpu.dma_semaphore, #tpu.memory_space<semaphore_mem>>) src(%27 : memref<4x16x128xbf16, #tpu.memory_space<any>>) dst(%28 : memref<4x16x128xbf16, #tpu.memory_space<vmem>>)
    %c2_i32_29 = arith.constant 2 : i32
    %c0_i32_30 = arith.constant 0 : i32
    %c0_i32_31 = arith.constant 0 : i32
    %31 = tpu.memref_slice %arg2[%arg0, %5, %c0_i32_30, %c0_i32_31] : memref<2x16x16x128xbf16, #tpu.memory_space<any>> -> memref<1x1x16x128xbf16, #tpu.memory_space<any>>
    %32 = tpu.memref_squeeze %31 : memref<1x1x16x128xbf16, #tpu.memory_space<any>> -> memref<1x16x128xbf16, #tpu.memory_space<any>>
    %c5_i32_32 = arith.constant 5 : i32
    %c0_i32_33 = arith.constant 0 : i32
    %c0_i32_34 = arith.constant 0 : i32
    %33 = tpu.memref_slice %arg10[%c5_i32_32, %c0_i32_33, %c0_i32_34] : memref<6x16x128xbf16, #tpu.memory_space<vmem>> -> memref<1x16x128xbf16, #tpu.memory_space<vmem>>
    %34 = tpu.memref_slice %arg12[%c2_i32_29] : memref<3x!tpu.dma_semaphore, #tpu.memory_space<semaphore_mem>> -> memref<1x!tpu.dma_semaphore, #tpu.memory_space<semaphore_mem>>
    %35 = tpu.memref_squeeze %34 : memref<1x!tpu.dma_semaphore, #tpu.memory_space<semaphore_mem>> -> memref<!tpu.dma_semaphore, #tpu.memory_space<semaphore_mem>>
    tpu.wait_dma2 semaphore(%35 : memref<!tpu.dma_semaphore, #tpu.memory_space<semaphore_mem>>) src(%32 : memref<1x16x128xbf16, #tpu.memory_space<any>>) dst(%33 : memref<1x16x128xbf16, #tpu.memory_space<vmem>>)
    %c0 = arith.constant 0 : index
    %c0_35 = arith.constant 0 : index
    %c0_36 = arith.constant 0 : index
    %36 = vector.load %arg10[%c0, %c0_35, %c0_36] : memref<6x16x128xbf16, #tpu.memory_space<vmem>>, vector<6x16x128xbf16>
    %37 = vector.shape_cast %36 : vector<6x16x128xbf16> to vector<96x128xbf16>
    %c0_37 = arith.constant 0 : index
    %c0_38 = arith.constant 0 : index
    %38 = vector.load %arg3[%c0_37, %c0_38] : memref<128x128xbf16, #tpu.memory_space<vmem>>, vector<128x128xbf16>
    %cst = arith.constant dense<0.000000e+00> : vector<96x128xf32>
    %39 = tpu.matmul %37, %38, %cst {dimension_numbers = #tpu.dot_dimension_numbers<[1], [0], [0], [1], [0, 0, 1, 1], [], []>} : vector<96x128xbf16>, vector<128x128xbf16>, vector<96x128xf32> -> vector<96x128xf32>
    %c0_39 = arith.constant 0 : index
    %c0_40 = arith.constant 0 : index
    %40 = vector.load %arg4[%c0_39, %c0_40] : memref<1x128xf32, #tpu.memory_space<vmem>>, vector<1x128xf32>
    %41 = vector.broadcast %40 : vector<1x128xf32> to vector<96x128xf32>
    %42 = arith.addf %39, %41 : vector<96x128xf32>
    %cst_41 = arith.constant 0.000000e+00 : f32
    %43 = vector.broadcast %cst_41 : f32 to vector<96x128xf32>
    %44 = arith.maximumf %42, %43 : vector<96x128xf32>
    %45 = arith.truncf %44 : vector<96x128xf32> to vector<96x128xbf16>
    %cst_42 = arith.constant 0.000000e+00 : bf16
    %46 = vector.broadcast %cst_42 : bf16 to vector<6x18x128xbf16>
    %c0_43 = arith.constant 0 : index
    %c0_44 = arith.constant 0 : index
    %c0_45 = arith.constant 0 : index
    %47 = vector.load %arg11[%c0_43, %c0_44, %c0_45] : memref<6x18x128xbf16, #tpu.memory_space<vmem>>, vector<6x18x128xbf16>
    tpu.vector_store %arg11[%c0_43, %c0_44, %c0_45], %46 {strides = array<i32>} : memref<6x18x128xbf16, #tpu.memory_space<vmem>>, vector<6x18x128xbf16>,
    %48 = vector.shape_cast %45 : vector<96x128xbf16> to vector<6x16x128xbf16>
    %c0_46 = arith.constant 0 : index
    %c1 = arith.constant 1 : index
    %c0_47 = arith.constant 0 : index
    %49 = vector.load %arg11[%c0_46, %c1, %c0_47] : memref<6x18x128xbf16, #tpu.memory_space<vmem>>, vector<6x16x128xbf16>
    tpu.vector_store %arg11[%c0_46, %c1, %c0_47], %48 {strides = array<i32>} : memref<6x18x128xbf16, #tpu.memory_space<vmem>>, vector<6x16x128xbf16>,
    %c0_i32_48 = arith.constant 0 : i32
    %50 = arith.cmpi eq, %arg1, %c0_i32_48 : i32
    %51 = arith.extui %50 : i1 to i32
    %c0_i32_49 = arith.constant 0 : i32
    %52 = arith.cmpi ne, %51, %c0_i32_49 : i32
    scf.if %52 {
      %cst_124 = arith.constant 0.000000e+00 : bf16
      %131 = vector.broadcast %cst_124 : bf16 to vector<1x18x128xbf16>
      %c0_125 = arith.constant 0 : index
      %c0_126 = arith.constant 0 : index
      %c0_127 = arith.constant 0 : index
      %132 = vector.load %arg11[%c0_125, %c0_126, %c0_127] : memref<6x18x128xbf16, #tpu.memory_space<vmem>>, vector<1x18x128xbf16>
      tpu.vector_store %arg11[%c0_125, %c0_126, %c0_127], %131 {strides = array<i32>} : memref<6x18x128xbf16, #tpu.memory_space<vmem>>, vector<1x18x128xbf16>,
    } else {
    }
    %c3_i32 = arith.constant 3 : i32
    %53 = arith.cmpi eq, %arg1, %c3_i32 : i32
    %54 = arith.extui %53 : i1 to i32
    %c0_i32_50 = arith.constant 0 : i32
    %55 = arith.cmpi ne, %54, %c0_i32_50 : i32
    scf.if %55 {
      %cst_124 = arith.constant 0.000000e+00 : bf16
      %131 = vector.broadcast %cst_124 : bf16 to vector<1x18x128xbf16>
      %c5_125 = arith.constant 5 : index
      %c0_126 = arith.constant 0 : index
      %c0_127 = arith.constant 0 : index
      %132 = vector.load %arg11[%c5_125, %c0_126, %c0_127] : memref<6x18x128xbf16, #tpu.memory_space<vmem>>, vector<1x18x128xbf16>
      tpu.vector_store %arg11[%c5_125, %c0_126, %c0_127], %131 {strides = array<i32>} : memref<6x18x128xbf16, #tpu.memory_space<vmem>>, vector<1x18x128xbf16>,
    } else {
    }
    %cst_51 = arith.constant 0.000000e+00 : f32
    %56 = vector.broadcast %cst_51 : f32 to vector<64x128xf32>
    %c0_52 = arith.constant 0 : index
    %c0_53 = arith.constant 0 : index
    %c0_54 = arith.constant 0 : index
    %57 = vector.load %arg11[%c0_52, %c0_53, %c0_54] : memref<6x18x128xbf16, #tpu.memory_space<vmem>>, vector<4x16x128xbf16>
    %58 = vector.shape_cast %57 : vector<4x16x128xbf16> to vector<64x128xbf16>
    %c0_55 = arith.constant 0 : index
    %c0_56 = arith.constant 0 : index
    %c0_57 = arith.constant 0 : index
    %59 = vector.load %arg5[%c0_55, %c0_56, %c0_57] : memref<9x128x128xbf16, #tpu.memory_space<vmem>>, vector<1x128x128xbf16>
    %60 = vector.shape_cast %59 : vector<1x128x128xbf16> to vector<128x128xbf16>
    %cst_58 = arith.constant dense<0.000000e+00> : vector<64x128xf32>
    %61 = tpu.matmul %58, %60, %cst_58 {dimension_numbers = #tpu.dot_dimension_numbers<[1], [0], [0], [1], [0, 0, 1, 1], [], []>} : vector<64x128xbf16>, vector<128x128xbf16>, vector<64x128xf32> -> vector<64x128xf32>
    %62 = arith.addf %56, %61 : vector<64x128xf32>
    %c0_59 = arith.constant 0 : index
    %c1_60 = arith.constant 1 : index
    %c0_61 = arith.constant 0 : index
    %63 = vector.load %arg11[%c0_59, %c1_60, %c0_61] : memref<6x18x128xbf16, #tpu.memory_space<vmem>>, vector<4x16x128xbf16>
    %64 = vector.shape_cast %63 : vector<4x16x128xbf16> to vector<64x128xbf16>
    %c1_62 = arith.constant 1 : index
    %c0_63 = arith.constant 0 : index
    %c0_64 = arith.constant 0 : index
    %65 = vector.load %arg5[%c1_62, %c0_63, %c0_64] : memref<9x128x128xbf16, #tpu.memory_space<vmem>>, vector<1x128x128xbf16>
    %66 = vector.shape_cast %65 : vector<1x128x128xbf16> to vector<128x128xbf16>
    %cst_65 = arith.constant dense<0.000000e+00> : vector<64x128xf32>
    %67 = tpu.matmul %64, %66, %cst_65 {dimension_numbers = #tpu.dot_dimension_numbers<[1], [0], [0], [1], [0, 0, 1, 1], [], []>} : vector<64x128xbf16>, vector<128x128xbf16>, vector<64x128xf32> -> vector<64x128xf32>
    %68 = arith.addf %62, %67 : vector<64x128xf32>
    %c0_66 = arith.constant 0 : index
    %c2 = arith.constant 2 : index
    %c0_67 = arith.constant 0 : index
    %69 = vector.load %arg11[%c0_66, %c2, %c0_67] : memref<6x18x128xbf16, #tpu.memory_space<vmem>>, vector<4x16x128xbf16>
    %70 = vector.shape_cast %69 : vector<4x16x128xbf16> to vector<64x128xbf16>
    %c2_68 = arith.constant 2 : index
    %c0_69 = arith.constant 0 : index
    %c0_70 = arith.constant 0 : index
    %71 = vector.load %arg5[%c2_68, %c0_69, %c0_70] : memref<9x128x128xbf16, #tpu.memory_space<vmem>>, vector<1x128x128xbf16>
    %72 = vector.shape_cast %71 : vector<1x128x128xbf16> to vector<128x128xbf16>
    %cst_71 = arith.constant dense<0.000000e+00> : vector<64x128xf32>
    %73 = tpu.matmul %70, %72, %cst_71 {dimension_numbers = #tpu.dot_dimension_numbers<[1], [0], [0], [1], [0, 0, 1, 1], [], []>} : vector<64x128xbf16>, vector<128x128xbf16>, vector<64x128xf32> -> vector<64x128xf32>
    %74 = arith.addf %68, %73 : vector<64x128xf32>
    %c1_72 = arith.constant 1 : index
    %c0_73 = arith.constant 0 : index
    %c0_74 = arith.constant 0 : index
    %75 = vector.load %arg11[%c1_72, %c0_73, %c0_74] : memref<6x18x128xbf16, #tpu.memory_space<vmem>>, vector<4x16x128xbf16>
    %76 = vector.shape_cast %75 : vector<4x16x128xbf16> to vector<64x128xbf16>
    %c3 = arith.constant 3 : index
    %c0_75 = arith.constant 0 : index
    %c0_76 = arith.constant 0 : index
    %77 = vector.load %arg5[%c3, %c0_75, %c0_76] : memref<9x128x128xbf16, #tpu.memory_space<vmem>>, vector<1x128x128xbf16>
    %78 = vector.shape_cast %77 : vector<1x128x128xbf16> to vector<128x128xbf16>
    %cst_77 = arith.constant dense<0.000000e+00> : vector<64x128xf32>
    %79 = tpu.matmul %76, %78, %cst_77 {dimension_numbers = #tpu.dot_dimension_numbers<[1], [0], [0], [1], [0, 0, 1, 1], [], []>} : vector<64x128xbf16>, vector<128x128xbf16>, vector<64x128xf32> -> vector<64x128xf32>
    %80 = arith.addf %74, %79 : vector<64x128xf32>
    %c1_78 = arith.constant 1 : index
    %c1_79 = arith.constant 1 : index
    %c0_80 = arith.constant 0 : index
    %81 = vector.load %arg11[%c1_78, %c1_79, %c0_80] : memref<6x18x128xbf16, #tpu.memory_space<vmem>>, vector<4x16x128xbf16>
    %82 = vector.shape_cast %81 : vector<4x16x128xbf16> to vector<64x128xbf16>
    %c4 = arith.constant 4 : index
    %c0_81 = arith.constant 0 : index
    %c0_82 = arith.constant 0 : index
    %83 = vector.load %arg5[%c4, %c0_81, %c0_82] : memref<9x128x128xbf16, #tpu.memory_space<vmem>>, vector<1x128x128xbf16>
    %84 = vector.shape_cast %83 : vector<1x128x128xbf16> to vector<128x128xbf16>
    %cst_83 = arith.constant dense<0.000000e+00> : vector<64x128xf32>
    %85 = tpu.matmul %82, %84, %cst_83 {dimension_numbers = #tpu.dot_dimension_numbers<[1], [0], [0], [1], [0, 0, 1, 1], [], []>} : vector<64x128xbf16>, vector<128x128xbf16>, vector<64x128xf32> -> vector<64x128xf32>
    %86 = arith.addf %80, %85 : vector<64x128xf32>
    %c1_84 = arith.constant 1 : index
    %c2_85 = arith.constant 2 : index
    %c0_86 = arith.constant 0 : index
    %87 = vector.load %arg11[%c1_84, %c2_85, %c0_86] : memref<6x18x128xbf16, #tpu.memory_space<vmem>>, vector<4x16x128xbf16>
    %88 = vector.shape_cast %87 : vector<4x16x128xbf16> to vector<64x128xbf16>
    %c5 = arith.constant 5 : index
    %c0_87 = arith.constant 0 : index
    %c0_88 = arith.constant 0 : index
    %89 = vector.load %arg5[%c5, %c0_87, %c0_88] : memref<9x128x128xbf16, #tpu.memory_space<vmem>>, vector<1x128x128xbf16>
    %90 = vector.shape_cast %89 : vector<1x128x128xbf16> to vector<128x128xbf16>
    %cst_89 = arith.constant dense<0.000000e+00> : vector<64x128xf32>
    %91 = tpu.matmul %88, %90, %cst_89 {dimension_numbers = #tpu.dot_dimension_numbers<[1], [0], [0], [1], [0, 0, 1, 1], [], []>} : vector<64x128xbf16>, vector<128x128xbf16>, vector<64x128xf32> -> vector<64x128xf32>
    %92 = arith.addf %86, %91 : vector<64x128xf32>
    %c2_90 = arith.constant 2 : index
    %c0_91 = arith.constant 0 : index
    %c0_92 = arith.constant 0 : index
    %93 = vector.load %arg11[%c2_90, %c0_91, %c0_92] : memref<6x18x128xbf16, #tpu.memory_space<vmem>>, vector<4x16x128xbf16>
    %94 = vector.shape_cast %93 : vector<4x16x128xbf16> to vector<64x128xbf16>
    %c6 = arith.constant 6 : index
    %c0_93 = arith.constant 0 : index
    %c0_94 = arith.constant 0 : index
    %95 = vector.load %arg5[%c6, %c0_93, %c0_94] : memref<9x128x128xbf16, #tpu.memory_space<vmem>>, vector<1x128x128xbf16>
    %96 = vector.shape_cast %95 : vector<1x128x128xbf16> to vector<128x128xbf16>
    %cst_95 = arith.constant dense<0.000000e+00> : vector<64x128xf32>
    %97 = tpu.matmul %94, %96, %cst_95 {dimension_numbers = #tpu.dot_dimension_numbers<[1], [0], [0], [1], [0, 0, 1, 1], [], []>} : vector<64x128xbf16>, vector<128x128xbf16>, vector<64x128xf32> -> vector<64x128xf32>
    %98 = arith.addf %92, %97 : vector<64x128xf32>
    %c2_96 = arith.constant 2 : index
    %c1_97 = arith.constant 1 : index
    %c0_98 = arith.constant 0 : index
    %99 = vector.load %arg11[%c2_96, %c1_97, %c0_98] : memref<6x18x128xbf16, #tpu.memory_space<vmem>>, vector<4x16x128xbf16>
    %100 = vector.shape_cast %99 : vector<4x16x128xbf16> to vector<64x128xbf16>
    %c7 = arith.constant 7 : index
    %c0_99 = arith.constant 0 : index
    %c0_100 = arith.constant 0 : index
    %101 = vector.load %arg5[%c7, %c0_99, %c0_100] : memref<9x128x128xbf16, #tpu.memory_space<vmem>>, vector<1x128x128xbf16>
    %102 = vector.shape_cast %101 : vector<1x128x128xbf16> to vector<128x128xbf16>
    %cst_101 = arith.constant dense<0.000000e+00> : vector<64x128xf32>
    %103 = tpu.matmul %100, %102, %cst_101 {dimension_numbers = #tpu.dot_dimension_numbers<[1], [0], [0], [1], [0, 0, 1, 1], [], []>} : vector<64x128xbf16>, vector<128x128xbf16>, vector<64x128xf32> -> vector<64x128xf32>
    %104 = arith.addf %98, %103 : vector<64x128xf32>
    %c2_102 = arith.constant 2 : index
    %c2_103 = arith.constant 2 : index
    %c0_104 = arith.constant 0 : index
    %105 = vector.load %arg11[%c2_102, %c2_103, %c0_104] : memref<6x18x128xbf16, #tpu.memory_space<vmem>>, vector<4x16x128xbf16>
    %106 = vector.shape_cast %105 : vector<4x16x128xbf16> to vector<64x128xbf16>
    %c8 = arith.constant 8 : index
    %c0_105 = arith.constant 0 : index
    %c0_106 = arith.constant 0 : index
    %107 = vector.load %arg5[%c8, %c0_105, %c0_106] : memref<9x128x128xbf16, #tpu.memory_space<vmem>>, vector<1x128x128xbf16>
    %108 = vector.shape_cast %107 : vector<1x128x128xbf16> to vector<128x128xbf16>
    %cst_107 = arith.constant dense<0.000000e+00> : vector<64x128xf32>
    %109 = tpu.matmul %106, %108, %cst_107 {dimension_numbers = #tpu.dot_dimension_numbers<[1], [0], [0], [1], [0, 0, 1, 1], [], []>} : vector<64x128xbf16>, vector<128x128xbf16>, vector<64x128xf32> -> vector<64x128xf32>
    %110 = arith.addf %104, %109 : vector<64x128xf32>
    %c0_108 = arith.constant 0 : index
    %c0_109 = arith.constant 0 : index
    %111 = vector.load %arg6[%c0_108, %c0_109] : memref<1x128xf32, #tpu.memory_space<vmem>>, vector<1x128xf32>
    %112 = vector.broadcast %111 : vector<1x128xf32> to vector<64x128xf32>
    %113 = arith.addf %110, %112 : vector<64x128xf32>
    %cst_110 = arith.constant 0.000000e+00 : f32
    %114 = vector.broadcast %cst_110 : f32 to vector<64x128xf32>
    %115 = arith.maximumf %113, %114 : vector<64x128xf32>
    %116 = arith.truncf %115 : vector<64x128xf32> to vector<64x128xbf16>
    %c0_111 = arith.constant 0 : index
    %c0_112 = arith.constant 0 : index
    %117 = vector.load %arg7[%c0_111, %c0_112] : memref<128x128xbf16, #tpu.memory_space<vmem>>, vector<128x128xbf16>
    %cst_113 = arith.constant dense<0.000000e+00> : vector<64x128xf32>
    %118 = tpu.matmul %116, %117, %cst_113 {dimension_numbers = #tpu.dot_dimension_numbers<[1], [0], [0], [1], [0, 0, 1, 1], [], []>} : vector<64x128xbf16>, vector<128x128xbf16>, vector<64x128xf32> -> vector<64x128xf32>
    %c0_114 = arith.constant 0 : index
    %c0_115 = arith.constant 0 : index
    %119 = vector.load %arg8[%c0_114, %c0_115] : memref<1x128xf32, #tpu.memory_space<vmem>>, vector<1x128xf32>
    %120 = vector.broadcast %119 : vector<1x128xf32> to vector<64x128xf32>
    %121 = arith.addf %118, %120 : vector<64x128xf32>
    %c1_116 = arith.constant 1 : index
    %c0_117 = arith.constant 0 : index
    %c0_118 = arith.constant 0 : index
    %122 = vector.load %arg10[%c1_116, %c0_117, %c0_118] : memref<6x16x128xbf16, #tpu.memory_space<vmem>>, vector<4x16x128xbf16>
    %123 = vector.shape_cast %122 : vector<4x16x128xbf16> to vector<64x128xbf16>
    %124 = arith.extf %123 : vector<64x128xbf16> to vector<64x128xf32>
    %125 = arith.addf %121, %124 : vector<64x128xf32>
    %cst_119 = arith.constant 0.000000e+00 : f32
    %126 = vector.broadcast %cst_119 : f32 to vector<64x128xf32>
    %127 = arith.maximumf %125, %126 : vector<64x128xf32>
    %128 = arith.truncf %127 : vector<64x128xf32> to vector<64x128xbf16>
    %129 = vector.shape_cast %128 : vector<64x128xbf16> to vector<1x4x16x128xbf16>
    %c0_120 = arith.constant 0 : index
    %c0_121 = arith.constant 0 : index
    %c0_122 = arith.constant 0 : index
    %c0_123 = arith.constant 0 : index
    %130 = vector.load %arg9[%c0_120, %c0_121, %c0_122, %c0_123] : memref<1x4x16x128xbf16, #tpu.memory_space<vmem>>, vector<1x4x16x128xbf16>
    tpu.vector_store %arg9[%c0_120, %c0_121, %c0_122, %c0_123], %129 {strides = array<i32>} : memref<1x4x16x128xbf16, #tpu.memory_space<vmem>>, vector<1x4x16x128xbf16>,
    return
  }
  func.func @transform_1(%arg0: i32, %arg1: i32) -> (i32, i32) {
    %c0_i32 = arith.constant 0 : i32
    %c0_i32_0 = arith.constant 0 : i32
    %c0_i32_1 = arith.constant 0 : i32
    return %c0_i32, %c0_i32_0 : i32, i32
  }
  func.func @transform_2(%arg0: i32, %arg1: i32) -> (i32, i32) {
    %c0_i32 = arith.constant 0 : i32
    %c0_i32_0 = arith.constant 0 : i32
    %c0_i32_1 = arith.constant 0 : i32
    return %c0_i32, %c0_i32_0 : i32, i32
  }
  func.func @transform_3(%arg0: i32, %arg1: i32) -> (i32, i32, i32) {
    %c0_i32 = arith.constant 0 : i32
    %c0_i32_0 = arith.constant 0 : i32
    %c0_i32_1 = arith.constant 0 : i32
    %c0_i32_2 = arith.constant 0 : i32
    return %c0_i32, %c0_i32_0, %c0_i32_1 : i32, i32, i32
  }
  func.func @transform_4(%arg0: i32, %arg1: i32) -> (i32, i32) {
    %c0_i32 = arith.constant 0 : i32
    %c0_i32_0 = arith.constant 0 : i32
    %c0_i32_1 = arith.constant 0 : i32
    return %c0_i32, %c0_i32_0 : i32, i32
  }
  func.func @transform_5(%arg0: i32, %arg1: i32) -> (i32, i32) {
    %c0_i32 = arith.constant 0 : i32
    %c0_i32_0 = arith.constant 0 : i32
    %c0_i32_1 = arith.constant 0 : i32
    return %c0_i32, %c0_i32_0 : i32, i32
  }
  func.func @transform_6(%arg0: i32, %arg1: i32) -> (i32, i32) {
    %c0_i32 = arith.constant 0 : i32
    %c0_i32_0 = arith.constant 0 : i32
    %c0_i32_1 = arith.constant 0 : i32
    return %c0_i32, %c0_i32_0 : i32, i32
  }
  func.func @transform_7(%arg0: i32, %arg1: i32) -> (i32, i32, i32, i32) {
    %c0_i32 = arith.constant 0 : i32
    %c0_i32_0 = arith.constant 0 : i32
    %c0_i32_1 = arith.constant 0 : i32
    return %arg0, %arg1, %c0_i32, %c0_i32_0 : i32, i32, i32, i32
  }
}

</mosaic_0001>

<llo_original>
// kernel: _lambda_.1
$region0: #{_lambda_.1}
  #allocation0 [shape = 'u32[]', space=smem, size = 0x4, offset = 0x4, fixed_abs, tag = 'smem constant byte address 0x4 - core index']
  #allocation1 [shape = 'u32[144,128]{1,0:T(1,128)}', space=vmem, size = 0x12000, scoped, tag = 'internal scratch']
  #allocation2 [shape = 'bf16[6,16,128]{2,1,0:T(16,128)(2,1)}', space=vmem, size = 0x6000, scoped, tag = 'scratch operand']
  #allocation3 [shape = 'bf16[6,18,128]{2,1,0:T(8,128)(2,1)}', space=vmem, size = 0x9000, scoped, tag = 'scratch operand']
  #allocation4 [shape = 's32[3]{0}', space=sflag, size = 0xc, scoped, tag = 'scratch operand']
  #allocation5 [shape = 's32[]', space=sflag, size = 0x4, offset = 0, fixed_abs, tag = 'sflag constant byte address 0x0 - dummy sync flag']
  #allocation6 [shape = 's32[]', space=sflag, size = 0x4, offset = 0, fixed_abs, tag = 'sflag constant byte address 0x0 - dummy sync flag']
  #allocation7 [shape = 's32[]', space=sflag, size = 0x4, offset = 0, fixed_abs, tag = 'sflag constant byte address 0x0 - dummy sync flag']
  %s0 = inlined_call_operand.vmem [shape: bf16[2,16,16,128], index: 0, kind: input, shape index: {}]
  %s1 = inlined_call_operand.vmem [shape: bf16[128,128], index: 1, kind: input, shape index: {}]
  %s2 = inlined_call_operand.vmem [shape: f32[1,128], index: 2, kind: input, shape index: {}]
  %s3 = inlined_call_operand.vmem [shape: bf16[9,128,128], index: 3, kind: input, shape index: {}]
  %s4 = inlined_call_operand.vmem [shape: f32[1,128], index: 4, kind: input, shape index: {}]
  %s5 = inlined_call_operand.vmem [shape: bf16[128,128], index: 5, kind: input, shape index: {}]
  %s6 = inlined_call_operand.vmem [shape: f32[1,128], index: 6, kind: input, shape index: {}]
  %s7 = inlined_call_operand.vmem [shape: bf16[2,16,16,128], index: 7, kind: output, shape index: {}]
  %s8 = sld [smem:[#allocation0]]
  $region167: #{_lambda_.1} parent=0
    _
  %s10 = ssub.s32 1, %s8
  %s11 = scalar_select 0, %s10, %s8
  loop: start=0, step=1, limit=10
  $region2: #{_lambda_.1} parent=0 // loop_pre_header
    _
  $region3: #{_lambda_.1} parent=0 // loop_header
    %s13 = sphi 0, %s17
    %p14 = scmp.ge.s32.totalorder %s13, 10
    %s20 = sphi 0, %s32
    %s21 = sphi 0, %s28
    %s22 = sphi 0, %s20
    %s23 = sphi 0, %s21
    %s24 = sphi 0, %s22
    %s25 = sphi 0, %s23
    %s33 = sphi 0, %s33
    %s35 = sphi 0, %s33
    %s36 = sphi 0, %s35
    %s50 = sphi 0, %s36
    %s54 = sphi 0, %s54
    %s56 = sphi 0, %s54
    %s57 = sphi 0, %s56
    %s71 = sphi 0, %s57
    %s75 = sphi 0, %s75
    %s77 = sphi 0, %s75
    %s78 = sphi 0, %s77
    %s92 = sphi 0, %s78
    %s96 = sphi 0, %s96
    %s98 = sphi 0, %s96
    %s99 = sphi 0, %s98
    %s113 = sphi 0, %s99
    %s117 = sphi 0, %s117
    %s119 = sphi 0, %s117
    %s120 = sphi 0, %s119
    %s134 = sphi 0, %s120
    %s138 = sphi 0, %s138
    %s140 = sphi 0, %s138
    %s141 = sphi 0, %s140
    %s155 = sphi 0, %s141
    %s163 = sphi 0, %s165
    %s166 = sphi 0, %s163
    %s167 = sphi 0, %s166
    %s183 = sphi 0, %s167
  $region4: #{_lambda_.1} parent=0 // loop_header_branch
    %16 = sbr.rel (%p14) target = $region8
  $region5: #{_lambda_.1} parent=0 // loop_body
    %s18 = ssub.s32 %s13, 1
    %s19 = ssub.s32 %s13, 2
    %s26 = sadd.s32 1, %s21
    %p27 = scmp.ge.s32.totalorder %s26, 4
    %s28 = scalar_select %p27, 0, %s26
    %s29 = sadd.s32 1, %s20
    %s30 = scalar_select %p27, %s29, %s20
    %p31 = scmp.ge.s32.totalorder %s30, 2
    %s32 = scalar_select %p31, 0, %s30
    %s34 = sadd.s32 %s33, 1
    %p37 = scmp.eq.s32.totalorder %s13, 7
    %p38 = scmp.ne.s32.totalorder %s33, %s35
    %p39 = scmp.eq.s32.totalorder %s13, 0
    %p40 = por %p38, %p39
    %p41 = scmp.ne.s32.totalorder %s33, %s35
    %p42 = scmp.eq.s32.totalorder %s18, 7
    %p43 = por %p41, %p42
    %p44 = scmp.ne.s32.totalorder %s35, %s36
    %p45 = scmp.eq.s32.totalorder %s18, 0
    %p46 = por %p44, %p45
    %p47 = scmp.ne.s32.totalorder %s35, %s36
    %p48 = scmp.eq.s32.totalorder %s19, 7
    %p49 = por %p47, %p48
    %p51 = scmp.ne.s32.totalorder %s36, %s50
    %p52 = scmp.eq.s32.totalorder %s19, 0
    %p53 = por %p51, %p52
    %s55 = sadd.s32 %s54, 1
    %p58 = scmp.eq.s32.totalorder %s13, 7
    %p59 = scmp.ne.s32.totalorder %s54, %s56
    %p60 = scmp.eq.s32.totalorder %s13, 0
    %p61 = por %p59, %p60
    %p62 = scmp.ne.s32.totalorder %s54, %s56
    %p63 = scmp.eq.s32.totalorder %s18, 7
    %p64 = por %p62, %p63
    %p65 = scmp.ne.s32.totalorder %s56, %s57
    %p66 = scmp.eq.s32.totalorder %s18, 0
    %p67 = por %p65, %p66
    %p68 = scmp.ne.s32.totalorder %s56, %s57
    %p69 = scmp.eq.s32.totalorder %s19, 7
    %p70 = por %p68, %p69
    %p72 = scmp.ne.s32.totalorder %s57, %s71
    %p73 = scmp.eq.s32.totalorder %s19, 0
    %p74 = por %p72, %p73
    %s76 = sadd.s32 %s75, 1
    %p79 = scmp.eq.s32.totalorder %s13, 7
    %p80 = scmp.ne.s32.totalorder %s75, %s77
    %p81 = scmp.eq.s32.totalorder %s13, 0
    %p82 = por %p80, %p81
    %p83 = scmp.ne.s32.totalorder %s75, %s77
    %p84 = scmp.eq.s32.totalorder %s18, 7
    %p85 = por %p83, %p84
    %p86 = scmp.ne.s32.totalorder %s77, %s78
    %p87 = scmp.eq.s32.totalorder %s18, 0
    %p88 = por %p86, %p87
    %p89 = scmp.ne.s32.totalorder %s77, %s78
    %p90 = scmp.eq.s32.totalorder %s19, 7
    %p91 = por %p89, %p90
    %p93 = scmp.ne.s32.totalorder %s78, %s92
    %p94 = scmp.eq.s32.totalorder %s19, 0
    %p95 = por %p93, %p94
    %s97 = sadd.s32 %s96, 1
    %p100 = scmp.eq.s32.totalorder %s13, 7
    %p101 = scmp.ne.s32.totalorder %s96, %s98
    %p102 = scmp.eq.s32.totalorder %s13, 0
    %p103 = por %p101, %p102
    %p104 = scmp.ne.s32.totalorder %s96, %s98
    %p105 = scmp.eq.s32.totalorder %s18, 7
    %p106 = por %p104, %p105
    %p107 = scmp.ne.s32.totalorder %s98, %s99
    %p108 = scmp.eq.s32.totalorder %s18, 0
    %p109 = por %p107, %p108
    %p110 = scmp.ne.s32.totalorder %s98, %s99
    %p111 = scmp.eq.s32.totalorder %s19, 7
    %p112 = por %p110, %p111
    %p114 = scmp.ne.s32.totalorder %s99, %s113
    %p115 = scmp.eq.s32.totalorder %s19, 0
    %p116 = por %p114, %p115
    %s118 = sadd.s32 %s117, 1
    %p121 = scmp.eq.s32.totalorder %s13, 7
    %p122 = scmp.ne.s32.totalorder %s117, %s119
    %p123 = scmp.eq.s32.totalorder %s13, 0
    %p124 = por %p122, %p123
    %p125 = scmp.ne.s32.totalorder %s117, %s119
    %p126 = scmp.eq.s32.totalorder %s18, 7
    %p127 = por %p125, %p126
    %p128 = scmp.ne.s32.totalorder %s119, %s120
    %p129 = scmp.eq.s32.totalorder %s18, 0
    %p130 = por %p128, %p129
    %p131 = scmp.ne.s32.totalorder %s119, %s120
    %p132 = scmp.eq.s32.totalorder %s19, 7
    %p133 = por %p131, %p132
    %p135 = scmp.ne.s32.totalorder %s120, %s134
    %p136 = scmp.eq.s32.totalorder %s19, 0
    %p137 = por %p135, %p136
    %s139 = sadd.s32 %s138, 1
    %p142 = scmp.eq.s32.totalorder %s13, 7
    %p143 = scmp.ne.s32.totalorder %s138, %s140
    %p144 = scmp.eq.s32.totalorder %s13, 0
    %p145 = por %p143, %p144
    %p146 = scmp.ne.s32.totalorder %s138, %s140
    %p147 = scmp.eq.s32.totalorder %s18, 7
    %p148 = por %p146, %p147
    %p149 = scmp.ne.s32.totalorder %s140, %s141
    %p150 = scmp.eq.s32.totalorder %s18, 0
    %p151 = por %p149, %p150
    %p152 = scmp.ne.s32.totalorder %s140, %s141
    %p153 = scmp.eq.s32.totalorder %s19, 7
    %p154 = por %p152, %p153
    %p156 = scmp.ne.s32.totalorder %s141, %s155
    %p157 = scmp.eq.s32.totalorder %s19, 0
    %p158 = por %p156, %p157
    %s159 = ssub.s32 %s20, %s32
    %s160 = ssub.s32 %s21, %s28
    %s161 = sor.u32 %s159, %s160
    %p162 = scmp.eq.s32.totalorder %s161, 0
    %s164 = sadd.s32 %s163, 1
    %s165 = scalar_select %p162, %s163, %s164
    %p168 = pneg %p162
    %p169 = scmp.eq.s32.totalorder %s13, 7
    %p170 = por %p168, %p169
    %p171 = scmp.ne.s32.totalorder %s163, %s166
    %p172 = scmp.eq.s32.totalorder %s13, 0
    %p173 = por %p171, %p172
    %p174 = scmp.ne.s32.totalorder %s163, %s166
    %p175 = scmp.eq.s32.totalorder %s18, 7
    %p176 = por %p174, %p175
    %p177 = scmp.ne.s32.totalorder %s166, %s167
    %p178 = scmp.eq.s32.totalorder %s18, 0
    %p179 = por %p177, %p178
    %p180 = scmp.ne.s32.totalorder %s166, %s167
    %p181 = scmp.eq.s32.totalorder %s19, 7
    %p182 = por %p180, %p181
    %p184 = scmp.ne.s32.totalorder %s167, %s183
    %p185 = scmp.eq.s32.totalorder %s19, 0
    %p186 = por %p184, %p185
    %p187 = scmp.le.s32.totalorder 1, %s13
    %p188 = scmp.lt.s32.totalorder %s13, 9
    %p189 = pnand %p187, %p188
    %p190 = pneg %p189
    // Predicated region
    $region9: #{_lambda_.1} parent=5 // pred_check
      _
    $region10: #{_lambda_.1} parent=5 // pred_check_branch
      %192 = sbr.rel (%p189) target = $region12
    $region11: #{_lambda_.1} parent=5 // pred_region
      %s193 = ssub.s32 %s13, 1
      // Predicated region
      $region13: #{_lambda_.1} parent=11 // pred_check
        %p194 = pneg %p46
      $region14: #{_lambda_.1} parent=11 // pred_check_branch
        %196 = sbr.rel (%p194) target = $region16
      $region15: #{_lambda_.1} parent=11 // pred_region
        _
      $region16: #{_lambda_.1} parent=11 // pred_fallthru
        _
      // Predicated region
      $region17: #{_lambda_.1} parent=11 // pred_check
        %p197 = pneg %p67
      $region18: #{_lambda_.1} parent=11 // pred_check_branch
        %199 = sbr.rel (%p197) target = $region20
      $region19: #{_lambda_.1} parent=11 // pred_region
        _
      $region20: #{_lambda_.1} parent=11 // pred_fallthru
        _
      // Predicated region
      $region21: #{_lambda_.1} parent=11 // pred_check
        %p200 = pneg %p88
      $region22: #{_lambda_.1} parent=11 // pred_check_branch
        %202 = sbr.rel (%p200) target = $region24
      $region23: #{_lambda_.1} parent=11 // pred_region
        _
      $region24: #{_lambda_.1} parent=11 // pred_fallthru
        _
      // Predicated region
      $region25: #{_lambda_.1} parent=11 // pred_check
        %p203 = pneg %p109
      $region26: #{_lambda_.1} parent=11 // pred_check_branch
        %205 = sbr.rel (%p203) target = $region28
      $region27: #{_lambda_.1} parent=11 // pred_region
        _
      $region28: #{_lambda_.1} parent=11 // pred_fallthru
        _
      // Predicated region
      $region29: #{_lambda_.1} parent=11 // pred_check
        %p206 = pneg %p130
      $region30: #{_lambda_.1} parent=11 // pred_check_branch
        %208 = sbr.rel (%p206) target = $region32
      $region31: #{_lambda_.1} parent=11 // pred_region
        _
      $region32: #{_lambda_.1} parent=11 // pred_fallthru
        _
      // Predicated region
      $region33: #{_lambda_.1} parent=11 // pred_check
        %p209 = pneg %p151
      $region34: #{_lambda_.1} parent=11 // pred_check_branch
        %211 = sbr.rel (%p209) target = $region36
      $region35: #{_lambda_.1} parent=11 // pred_region
        _
      $region36: #{_lambda_.1} parent=11 // pred_fallthru
        _
    $region12: #{_lambda_.1} parent=5 // pred_fallthru
      _
    %p212 = scmp.lt.s32.totalorder %s13, 8
    // Predicated region
    $region37: #{_lambda_.1} parent=5 // pred_check
      %p213 = pneg %p212
    $region38: #{_lambda_.1} parent=5 // pred_check_branch
      %215 = sbr.rel (%p213) target = $region40
    $region39: #{_lambda_.1} parent=5 // pred_region
      _
    $region40: #{_lambda_.1} parent=5 // pred_fallthru
      _
    %p216 = scmp.le.s32.totalorder 1, %s13
    %p217 = scmp.lt.s32.totalorder %s13, 9
    %p218 = pnand %p216, %p217
    %p219 = pneg %p218
    // Predicated region
    $region41: #{_lambda_.1} parent=5 // pred_check
      _
    $region42: #{_lambda_.1} parent=5 // pred_check_branch
      %221 = sbr.rel (%p218) target = $region44
    $region43: #{_lambda_.1} parent=5 // pred_region
      %s222 = ssub.s32 %s13, 1
      %p223 = pneg %p46
      %p224 = pneg %p43
      %p225 = pneg %p67
      %p226 = pneg %p64
      %p227 = pneg %p88
      %p228 = pneg %p85
      %p229 = pneg %p109
      %p230 = pneg %p106
      %p231 = pneg %p130
      %p232 = pneg %p127
      %p233 = pneg %p151
      %p234 = pneg %p148
      %p235 = pneg %p179
      %p236 = pneg %p176
      %s237 = smul.u32 4, %s23
      %p238 = scmp.lt.s32.totalorder %s22, 1
      %s239 = scalar_select %p238, %s22, 1
      %p240 = scmp.lt.s32.totalorder %s237, 15
      %s241 = scalar_select %p240, %s237, 15
      %s242 = smul.addr %s241, 2
      %s243 = smul.addr %s239, 32
      %s244 = sadd.s32 %s242, %s243
      %s245 = smul.addr %s244, 4
      %s246 = scalar_lea.vmem %s7, %s245
      %s247 = smul.u32 4, %s23
      %p248 = scmp.lt.s32.totalorder %s22, 1
      %s249 = scalar_select %p248, %s22, 1
      %p250 = scmp.lt.s32.totalorder %s247, 15
      %s251 = scalar_select %p250, %s247, 15
      %s252 = smul.addr %s251, 2
      %s253 = smul.addr %s249, 32
      %s254 = sadd.s32 %s252, %s253
      %s255 = smul.addr %s254, 4
      %s256 = scalar_lea.vmem %s7, %s255
      %s257 = smul.u32 4, %s23
      %s259 = smul.u32 %s23, 4
      %s260 = ssub.s32 %s259, 1
      %p261 = scmp.gt.s32.totalorder %s260, 0
      %s262 = scalar_select %p261, %s260, 0
      %s263 = sadd.s32 %s259, 4
      %p264 = scmp.lt.s32.totalorder %s263, 15
      %s265 = scalar_select %p264, %s263, 15
      %s266 = smul.u32 %s262, 2
      %s267 = smul.u32 %s22, 32
      %s268 = sadd.s32 %s266, %s267
      %s269 = smul.addr %s268, 4
      %s270 = scalar_lea.vmem %s0, %s269
      %p272 = scmp.lt.u32.totalorder 8, 8
      %p273 = pneg %p272
      // Predicated region
      $region45: #{_lambda_.1} parent=43 // pred_check
        _
      $region46: #{_lambda_.1} parent=43 // pred_check_branch
        %275 = sbr.rel (%p272) target = $region48
      $region47: #{_lambda_.1} parent=43 // pred_region
        %s290 = sand.u32 8, 7
        %p291 = scmp.eq.s32.totalorder %s290, 0
        // Predicated region
        $region60: #{_lambda_.1} parent=47 // pred_check
          %p292 = pneg %p291
        $region61: #{_lambda_.1} parent=47 // pred_check_branch
          %294 = sbr.rel (%p292) target = $region63
        $region62: #{_lambda_.1} parent=47 // pred_region
          loop: start=0, step=1, limit=1
          $region64: #{_lambda_.1} parent=62 // loop_pre_header
            _
          $region65: #{_lambda_.1} parent=62 // loop_header
            %s296 = sphi 0, %s300
            %p297 = scmp.ge.s32.totalorder %s296, 1
            %s301 = sphi %s270, %s270
            %s302 = sphi [#allocation2], [#allocation2]
          $region66: #{_lambda_.1} parent=62 // loop_header_branch
            %299 = sbr.rel (%p297) target = $region70
          $region67: #{_lambda_.1} parent=62 // loop_body
            %v303 = vld [vmem:[%s301] sm:$0xff]
            %304 = vst [vmem:[%s302] sm:$0xff] %v303
          $region68: #{_lambda_.1} parent=62 // loop_footer
            %s300 = sadd.s32 1, %s296
          $region69: #{_lambda_.1} parent=62 // loop_footer_branch
            %295 = sbr.rel target = $region65
          $region70: #{_lambda_.1} parent=62 // loop_exit
            _
        $region63: #{_lambda_.1} parent=47 // pred_fallthru
          _
        %p305 = pneg %p291
        // Predicated region
        $region71: #{_lambda_.1} parent=47 // pred_check
          _
        $region72: #{_lambda_.1} parent=47 // pred_check_branch
          %307 = sbr.rel (%p291) target = $region74
        $region73: #{_lambda_.1} parent=47 // pred_region
          %s308 = sand.u32 8, 7
        $region74: #{_lambda_.1} parent=47 // pred_fallthru
          _
      $region48: #{_lambda_.1} parent=43 // pred_fallthru
        _
      // Predicated region
      $region49: #{_lambda_.1} parent=43 // pred_check
        %p276 = pneg %p272
      $region50: #{_lambda_.1} parent=43 // pred_check_branch
        %278 = sbr.rel (%p276) target = $region52
      $region51: #{_lambda_.1} parent=43 // pred_region
        %s279 = sshllo.u32 0, 8
        loop: start=0, step=1, limit=1
        $region53: #{_lambda_.1} parent=51 // loop_pre_header
          _
        $region54: #{_lambda_.1} parent=51 // loop_header
          %s281 = sphi 0, %s285
          %p282 = scmp.ge.s32.totalorder %s281, 1
          %s286 = sphi %s270, %s270
          %s287 = sphi [#allocation2], [#allocation2]
        $region55: #{_lambda_.1} parent=51 // loop_header_branch
          %284 = sbr.rel (%p282) target = $region59
        $region56: #{_lambda_.1} parent=51 // loop_body
          %v288 = vld [vmem:[%s286] sm:%s279]
          %289 = vst [vmem:[%s287] sm:%s279] %v288
        $region57: #{_lambda_.1} parent=51 // loop_footer
          %s285 = sadd.s32 1, %s281
        $region58: #{_lambda_.1} parent=51 // loop_footer_branch
          %280 = sbr.rel target = $region54
        $region59: #{_lambda_.1} parent=51 // loop_exit
          _
      $region52: #{_lambda_.1} parent=43 // pred_fallthru
        _
      // Predicated region
      $region75: #{_lambda_.1} parent=43 // pred_check
        _
      $region76: #{_lambda_.1} parent=43 // pred_check_branch
        %311 = sbr.rel (0) target = $region78
      $region77: #{_lambda_.1} parent=43 // pred_region
        %312 = vsyncadd [#allocation4], 128
      $region78: #{_lambda_.1} parent=43 // pred_fallthru
        _
      %s313 = smul.u32 %s259, 2
      %s314 = sadd.s32 %s313, %s267
      %s315 = smul.addr %s314, 4
      %s316 = scalar_lea.vmem %s0, %s315
      %s317 = scalar_lea.vmem [#allocation2], 8
      %s318 = scalar_lea.sflag [#allocation4], 1
      %p320 = scmp.lt.u32.totalorder 32, 8
      %p321 = pneg %p320
      // Predicated region
      $region79: #{_lambda_.1} parent=43 // pred_check
        _
      $region80: #{_lambda_.1} parent=43 // pred_check_branch
        %323 = sbr.rel (%p320) target = $region82
      $region81: #{_lambda_.1} parent=43 // pred_region
        %s338 = sand.u32 32, 7
        %p339 = scmp.eq.s32.totalorder %s338, 0
        // Predicated region
        $region94: #{_lambda_.1} parent=81 // pred_check
          %p340 = pneg %p339
        $region95: #{_lambda_.1} parent=81 // pred_check_branch
          %342 = sbr.rel (%p340) target = $region97
        $region96: #{_lambda_.1} parent=81 // pred_region
          loop: start=0, step=1, limit=1
          $region98: #{_lambda_.1} parent=96 // loop_pre_header
            _
          $region99: #{_lambda_.1} parent=96 // loop_header
            %s344 = sphi 0, %s348
            %p345 = scmp.ge.s32.totalorder %s344, 1
            %s349 = sphi %s316, %s316
            %s350 = sphi %s317, %s317
          $region100: #{_lambda_.1} parent=96 // loop_header_branch
            %347 = sbr.rel (%p345) target = $region104
          $region101: #{_lambda_.1} parent=96 // loop_body
            %v351 = vld [vmem:[%s349] sm:$0xff]
            %352 = vst [vmem:[%s350] sm:$0xff] %v351
            %v353 = vld [vmem:[%s349 + $0x8] sm:$0xff]
            %354 = vst [vmem:[%s350 + $0x8] sm:$0xff] %v353
            %v355 = vld [vmem:[%s349 + $0x10] sm:$0xff]
            %356 = vst [vmem:[%s350 + $0x10] sm:$0xff] %v355
            %v357 = vld [vmem:[%s349 + $0x18] sm:$0xff]
            %358 = vst [vmem:[%s350 + $0x18] sm:$0xff] %v357
          $region102: #{_lambda_.1} parent=96 // loop_footer
            %s348 = sadd.s32 1, %s344
          $region103: #{_lambda_.1} parent=96 // loop_footer_branch
            %343 = sbr.rel target = $region99
          $region104: #{_lambda_.1} parent=96 // loop_exit
            _
        $region97: #{_lambda_.1} parent=81 // pred_fallthru
          _
        %p359 = pneg %p339
        // Predicated region
        $region105: #{_lambda_.1} parent=81 // pred_check
          _
        $region106: #{_lambda_.1} parent=81 // pred_check_branch
          %361 = sbr.rel (%p339) target = $region108
        $region107: #{_lambda_.1} parent=81 // pred_region
          %s362 = sand.u32 32, 7
        $region108: #{_lambda_.1} parent=81 // pred_fallthru
          _
      $region82: #{_lambda_.1} parent=43 // pred_fallthru
        _
      // Predicated region
      $region83: #{_lambda_.1} parent=43 // pred_check
        %p324 = pneg %p320
      $region84: #{_lambda_.1} parent=43 // pred_check_branch
        %326 = sbr.rel (%p324) target = $region86
      $region85: #{_lambda_.1} parent=43 // pred_region
        %s327 = sshllo.u32 0, 32
        loop: start=0, step=1, limit=1
        $region87: #{_lambda_.1} parent=85 // loop_pre_header
          _
        $region88: #{_lambda_.1} parent=85 // loop_header
          %s329 = sphi 0, %s333
          %p330 = scmp.ge.s32.totalorder %s329, 1
          %s334 = sphi %s316, %s316
          %s335 = sphi %s317, %s317
        $region89: #{_lambda_.1} parent=85 // loop_header_branch
          %332 = sbr.rel (%p330) target = $region93
        $region90: #{_lambda_.1} parent=85 // loop_body
          %v336 = vld [vmem:[%s334] sm:%s327]
          %337 = vst [vmem:[%s335] sm:%s327] %v336
        $region91: #{_lambda_.1} parent=85 // loop_footer
          %s333 = sadd.s32 1, %s329
        $region92: #{_lambda_.1} parent=85 // loop_footer_branch
          %328 = sbr.rel target = $region88
        $region93: #{_lambda_.1} parent=85 // loop_exit
          _
      $region86: #{_lambda_.1} parent=43 // pred_fallthru
        _
      // Predicated region
      $region109: #{_lambda_.1} parent=43 // pred_check
        _
      $region110: #{_lambda_.1} parent=43 // pred_check_branch
        %365 = sbr.rel (0) target = $region112
      $region111: #{_lambda_.1} parent=43 // pred_region
        %366 = vsyncadd %s318, 512
      $region112: #{_lambda_.1} parent=43 // pred_fallthru
        _
      %s367 = smul.u32 %s265, 2
      %s368 = sadd.s32 %s367, %s267
      %s369 = smul.addr %s368, 4
      %s370 = scalar_lea.vmem %s0, %s369
      %s371 = scalar_lea.vmem [#allocation2], 40
      %s372 = scalar_lea.sflag [#allocation4], 2
      %p374 = scmp.lt.u32.totalorder 8, 8
      %p375 = pneg %p374
      // Predicated region
      $region113: #{_lambda_.1} parent=43 // pred_check
        _
      $region114: #{_lambda_.1} parent=43 // pred_check_branch
        %377 = sbr.rel (%p374) target = $region116
      $region115: #{_lambda_.1} parent=43 // pred_region
        %s392 = sand.u32 8, 7
        %p393 = scmp.eq.s32.totalorder %s392, 0
        // Predicated region
        $region128: #{_lambda_.1} parent=115 // pred_check
          %p394 = pneg %p393
        $region129: #{_lambda_.1} parent=115 // pred_check_branch
          %396 = sbr.rel (%p394) target = $region131
        $region130: #{_lambda_.1} parent=115 // pred_region
          loop: start=0, step=1, limit=1
          $region132: #{_lambda_.1} parent=130 // loop_pre_header
            _
          $region133: #{_lambda_.1} parent=130 // loop_header
            %s398 = sphi 0, %s402
            %p399 = scmp.ge.s32.totalorder %s398, 1
            %s403 = sphi %s370, %s370
            %s404 = sphi %s371, %s371
          $region134: #{_lambda_.1} parent=130 // loop_header_branch
            %401 = sbr.rel (%p399) target = $region138
          $region135: #{_lambda_.1} parent=130 // loop_body
            %v405 = vld [vmem:[%s403] sm:$0xff]
            %406 = vst [vmem:[%s404] sm:$0xff] %v405
          $region136: #{_lambda_.1} parent=130 // loop_footer
            %s402 = sadd.s32 1, %s398
          $region137: #{_lambda_.1} parent=130 // loop_footer_branch
            %397 = sbr.rel target = $region133
          $region138: #{_lambda_.1} parent=130 // loop_exit
            _
        $region131: #{_lambda_.1} parent=115 // pred_fallthru
          _
        %p407 = pneg %p393
        // Predicated region
        $region139: #{_lambda_.1} parent=115 // pred_check
          _
        $region140: #{_lambda_.1} parent=115 // pred_check_branch
          %409 = sbr.rel (%p393) target = $region142
        $region141: #{_lambda_.1} parent=115 // pred_region
          %s410 = sand.u32 8, 7
        $region142: #{_lambda_.1} parent=115 // pred_fallthru
          _
      $region116: #{_lambda_.1} parent=43 // pred_fallthru
        _
      // Predicated region
      $region117: #{_lambda_.1} parent=43 // pred_check
        %p378 = pneg %p374
      $region118: #{_lambda_.1} parent=43 // pred_check_branch
        %380 = sbr.rel (%p378) target = $region120
      $region119: #{_lambda_.1} parent=43 // pred_region
        %s381 = sshllo.u32 0, 8
        loop: start=0, step=1, limit=1
        $region121: #{_lambda_.1} parent=119 // loop_pre_header
          _
        $region122: #{_lambda_.1} parent=119 // loop_header
          %s383 = sphi 0, %s387
          %p384 = scmp.ge.s32.totalorder %s383, 1
          %s388 = sphi %s370, %s370
          %s389 = sphi %s371, %s371
        $region123: #{_lambda_.1} parent=119 // loop_header_branch
          %386 = sbr.rel (%p384) target = $region127
        $region124: #{_lambda_.1} parent=119 // loop_body
          %v390 = vld [vmem:[%s388] sm:%s381]
          %391 = vst [vmem:[%s389] sm:%s381] %v390
        $region125: #{_lambda_.1} parent=119 // loop_footer
          %s387 = sadd.s32 1, %s383
        $region126: #{_lambda_.1} parent=119 // loop_footer_branch
          %382 = sbr.rel target = $region122
        $region127: #{_lambda_.1} parent=119 // loop_exit
          _
      $region120: #{_lambda_.1} parent=43 // pred_fallthru
        _
      // Predicated region
      $region143: #{_lambda_.1} parent=43 // pred_check
        _
      $region144: #{_lambda_.1} parent=43 // pred_check_branch
        %413 = sbr.rel (0) target = $region146
      $region145: #{_lambda_.1} parent=43 // pred_region
        %414 = vsyncadd %s372, 128
      $region146: #{_lambda_.1} parent=43 // pred_fallthru
        _
      %s415 = smul.u32 4, 1
      %s416 = smul.u32 %s415, 2
      %s417 = smul.u32 %s416, 1
      %s418 = sshll.u32 %s417, 4
      %419 = dma.done [#allocation4], %s418
      %s420 = smul.u32 4, 4
      %s421 = smul.u32 %s420, 2
      %s422 = smul.u32 %s421, 1
      %s423 = sshll.u32 %s422, 4
      %424 = dma.done %s318, %s423
      %s425 = sshll.u32 %s417, 4
      %426 = dma.done %s372, %s425
      %v427 = vld [vmem:[#allocation2] sm:$0xff]
      %v428 = vld [vmem:[#allocation2 + $0x8] sm:$0xff]
      %v429 = vld [vmem:[#allocation2 + $0x10] sm:$0xff]
      %v430 = vld [vmem:[#allocation2 + $0x18] sm:$0xff]
      %v431 = vld [vmem:[#allocation2 + $0x20] sm:$0xff]
      %v432 = vld [vmem:[#allocation2 + $0x28] sm:$0xff]
      %v433 = vld [vmem:[%s1] sm:$0xf]
      %v434 = vld [vmem:[%s1 + $0x4] sm:$0xf]
      %v435 = vld [vmem:[%s1 + $0x8] sm:$0xf]
      %v436 = vld [vmem:[%s1 + $0xc] sm:$0xf]
      %v437 = vld [vmem:[%s1 + $0x10] sm:$0xf]
      %v438 = vld [vmem:[%s1 + $0x14] sm:$0xf]
      %v439 = vld [vmem:[%s1 + $0x18] sm:$0xf]
      %v440 = vld [vmem:[%s1 + $0x1c] sm:$0xf]
      %v441 = vld [vmem:[%s1 + $0x20] sm:$0xf]
      %v442 = vld [vmem:[%s1 + $0x24] sm:$0xf]
      %v443 = vld [vmem:[%s1 + $0x28] sm:$0xf]
      %v444 = vld [vmem:[%s1 + $0x2c] sm:$0xf]
      %v445 = vld [vmem:[%s1 + $0x30] sm:$0xf]
      %v446 = vld [vmem:[%s1 + $0x34] sm:$0xf]
      %v447 = vld [vmem:[%s1 + $0x38] sm:$0xf]
      %v448 = vld [vmem:[%s1 + $0x3c] sm:$0xf]
      %v449 = vld [vmem:[%s2] sm:$0x1]
      %v451 = vlaneseq
      %v452 = vshrl.u32 %v451, 7
      %v453 = vsub.s32 0, %v452
      %v454 = vrot.slane %v449, %v453
      %v472 = vunpack.c.l.b16 %v433
      %v473 = vunpack.c.l.b16 %v434
      %v474 = vunpack.c.l.b16 %v435
      %v475 = vunpack.c.l.b16 %v436
      %v476 = vunpack.c.l.b16 %v437
      %v477 = vunpack.c.l.b16 %v438
      %v478 = vunpack.c.l.b16 %v439
      %v479 = vunpack.c.l.b16 %v440
      %v480 = vunpack.c.l.b16 %v441
      %v481 = vunpack.c.l.b16 %v442
      %v482 = vunpack.c.l.b16 %v443
      %v483 = vunpack.c.l.b16 %v444
      %v484 = vunpack.c.l.b16 %v445
      %v485 = vunpack.c.l.b16 %v446
      %v486 = vunpack.c.l.b16 %v447
      %v487 = vunpack.c.l.b16 %v448
      %v488 = vpack.c.b16 %v473, %v472
      %v489 = vpack.c.b16 %v475, %v474
      %v490 = vpack.c.b16 %v477, %v476
      %v491 = vpack.c.b16 %v479, %v478
      %v492 = vpack.c.b16 %v481, %v480
      %v493 = vpack.c.b16 %v483, %v482
      %v494 = vpack.c.b16 %v485, %v484
      %v495 = vpack.c.b16 %v487, %v486
      %504 = vmatprep.subr.bf16.mxu0 0
      %505 = vmatpush1.bf16.msra.mxu0 %v488
      %506 = vmatprep.subr.bf16.mxu0 0
      %507 = vmatpush1.bf16.msra.mxu0 %v489
      %508 = vmatprep.subr.bf16.mxu0 0
      %509 = vmatpush1.bf16.msra.mxu0 %v490
      %510 = vmatprep.subr.bf16.mxu0 0
      %511 = vmatpush1.bf16.msra.mxu0 %v491
      %512 = vmatprep.subr.bf16.mxu0 0
      %513 = vmatpush1.bf16.msra.mxu0 %v492
      %514 = vmatprep.subr.bf16.mxu0 0
      %515 = vmatpush1.bf16.msra.mxu0 %v493
      %516 = vmatprep.subr.bf16.mxu0 0
      %517 = vmatpush1.bf16.msra.mxu0 %v494
      %518 = vmatprep.subr.bf16.mxu0 0
      %519 = vmatpush1.bf16.msra.mxu0 %v495
      %520 = vmatprep.subr.bf16.mxu0 0
      %521 = vmatpush1.bf16.msra.mxu0 0
      %522 = vmatprep.subr.bf16.mxu0 0
      %523 = vmatpush1.bf16.msra.mxu0 0
      %524 = vmatprep.subr.bf16.mxu0 0
      %525 = vmatpush1.bf16.msra.mxu0 0
      %526 = vmatprep.subr.bf16.mxu0 0
      %527 = vmatpush1.bf16.msra.mxu0 0
      %528 = vmatprep.subr.bf16.mxu0 0
      %529 = vmatpush1.bf16.msra.mxu0 0
      %530 = vmatprep.subr.bf16.mxu0 0
      %531 = vmatpush1.bf16.msra.mxu0 0
      %532 = vmatprep.subr.bf16.mxu0 0
      %533 = vmatpush1.bf16.msra.mxu0 0
      %534 = vmatprep.subr.bf16.mxu0 0
      %535 = vmatpush1.bf16.msra.mxu0 0
      %536 = vmatprep.mubr.bf16.mxu0 0
      %537 = vmatmul.mubr.bf16.gmra.mrb[0].mxu0 %v427
      %v538 = vpop.f32.mrb[0].mxu0
      %v539 = vadd.f32 %v454, %v538
      %v540 = vpop.f32.mrb[0].mxu0
      %v541 = vpop.f32.mrb[0].mxu0
      %v542 = vadd.f32 %v454, %v541
      %v543 = vpop.f32.mrb[0].mxu0
      %544 = vmatprep.mubr.bf16.mxu0 0
      %545 = vmatmul.mubr.bf16.gmra.mrb[0].mxu0 %v428
      %v546 = vpop.f32.mrb[0].mxu0
      %v547 = vadd.f32 %v454, %v546
      %v548 = vpop.f32.mrb[0].mxu0
      %v549 = vpop.f32.mrb[0].mxu0
      %v550 = vadd.f32 %v454, %v549
      %v551 = vpop.f32.mrb[0].mxu0
      %552 = vmatprep.mubr.bf16.mxu0 0
      %553 = vmatmul.mubr.bf16.gmra.mrb[0].mxu0 %v429
      %v554 = vpop.f32.mrb[0].mxu0
      %v555 = vadd.f32 %v454, %v554
      %v556 = vpop.f32.mrb[0].mxu0
      %v557 = vpop.f32.mrb[0].mxu0
      %v558 = vadd.f32 %v454, %v557
      %v559 = vpop.f32.mrb[0].mxu0
      %560 = vmatprep.mubr.bf16.mxu0 0
      %561 = vmatmul.mubr.bf16.gmra.mrb[0].mxu0 %v430
      %v562 = vpop.f32.mrb[0].mxu0
      %v563 = vadd.f32 %v454, %v562
      %v564 = vpop.f32.mrb[0].mxu0
      %v565 = vpop.f32.mrb[0].mxu0
      %v566 = vadd.f32 %v454, %v565
      %v567 = vpop.f32.mrb[0].mxu0
      %568 = vmatprep.mubr.bf16.mxu0 0
      %569 = vmatmul.mubr.bf16.gmra.mrb[0].mxu0 %v431
      %v570 = vpop.f32.mrb[0].mxu0
      %v571 = vadd.f32 %v454, %v570
      %v572 = vpop.f32.mrb[0].mxu0
      %v573 = vpop.f32.mrb[0].mxu0
      %v574 = vadd.f32 %v454, %v573
      %v575 = vpop.f32.mrb[0].mxu0
      %576 = vmatprep.mubr.bf16.mxu0 0
      %577 = vmatmul.mubr.bf16.gmra.mrb[0].mxu0 %v432
      %v578 = vpop.f32.mrb[0].mxu0
      %v579 = vadd.f32 %v454, %v578
      %v580 = vpop.f32.mrb[0].mxu0
      %v581 = vpop.f32.mrb[0].mxu0
      %v582 = vadd.f32 %v454, %v581
      %v583 = vpop.f32.mrb[0].mxu0
      %584 = vdwg.mxu0
      %v585 = vmax.f32 %v539, 0.0
      %v586 = vmax.f32 %v542, 0.0
      %v587 = vmax.f32 %v547, 0.0
      %v588 = vmax.f32 %v550, 0.0
      %v589 = vmax.f32 %v555, 0.0
      %v590 = vmax.f32 %v558, 0.0
      %v591 = vmax.f32 %v563, 0.0
      %v592 = vmax.f32 %v566, 0.0
      %v593 = vmax.f32 %v571, 0.0
      %v594 = vmax.f32 %v574, 0.0
      %v595 = vmax.f32 %v579, 0.0
      %v596 = vmax.f32 %v582, 0.0
      %v597 = vpack.c.bf16 %v586, %v585
      %v598 = vpack.c.bf16 %v588, %v587
      %v599 = vpack.c.bf16 %v590, %v589
      %v600 = vpack.c.bf16 %v592, %v591
      %v601 = vpack.c.bf16 %v594, %v593
      %v602 = vpack.c.bf16 %v596, %v595
      %603 = vst [vmem:[#allocation3] sm:$0xf] 0
      %604 = vst [vmem:[#allocation3 + $0x4] sm:$0xf] 0
      %605 = vst [vmem:[#allocation3 + $0x8] sm:$0x1] 0
      %606 = vst [vmem:[#allocation3 + $0xc] sm:$0xf] 0
      %607 = vst [vmem:[#allocation3 + $0x10] sm:$0xf] 0
      %608 = vst [vmem:[#allocation3 + $0x14] sm:$0x1] 0
      %609 = vst [vmem:[#allocation3 + $0x18] sm:$0xf] 0
      %610 = vst [vmem:[#allocation3 + $0x1c] sm:$0xf] 0
      %611 = vst [vmem:[#allocation3 + $0x20] sm:$0x1] 0
      %612 = vst [vmem:[#allocation3 + $0x24] sm:$0xf] 0
      %613 = vst [vmem:[#allocation3 + $0x28] sm:$0xf] 0
      %614 = vst [vmem:[#allocation3 + $0x2c] sm:$0x1] 0
      %615 = vst [vmem:[#allocation3 + $0x30] sm:$0xf] 0
      %616 = vst [vmem:[#allocation3 + $0x34] sm:$0xf] 0
      %617 = vst [vmem:[#allocation3 + $0x38] sm:$0x1] 0
      %618 = vst [vmem:[#allocation3 + $0x3c] sm:$0xf] 0
      %619 = vst [vmem:[#allocation3 + $0x40] sm:$0xf] 0
      %620 = vst [vmem:[#allocation3 + $0x44] sm:$0x1] 0
      %v627 = vunpack.c.l.b16 %v597
      %v628 = vunpack.c.h.b16 %v597
      %v629 = vunpack.c.l.b16 %v598
      %v630 = vunpack.c.h.b16 %v598
      %v631 = vunpack.c.l.b16 %v599
      %v632 = vunpack.c.h.b16 %v599
      %v633 = vunpack.c.l.b16 %v600
      %v634 = vunpack.c.h.b16 %v600
      %v635 = vunpack.c.l.b16 %v601
      %v636 = vunpack.c.h.b16 %v601
      %v637 = vunpack.c.l.b16 %v602
      %v638 = vunpack.c.h.b16 %v602
      %v639 = vpack.c.b16 %v627, %v627
      %v640 = vpack.c.b16 %v628, %v628
      %v641 = vpack.c.b16 %v629, %v629
      %v642 = vpack.c.b16 %v630, %v630
      %v643 = vpack.c.b16 %v631, %v631
      %v644 = vpack.c.b16 %v632, %v632
      %v645 = vpack.c.b16 %v633, %v633
      %v646 = vpack.c.b16 %v634, %v634
      %v647 = vpack.c.b16 %v635, %v635
      %v648 = vpack.c.b16 %v636, %v636
      %v649 = vpack.c.b16 %v637, %v637
      %v650 = vpack.c.b16 %v638, %v638
      %vm651 = vsmask.f32 256
      %vm652 = vsmask.f32 4368
      %vm653 = vmor %vm651, %vm652
      %v655 = vshrl.u32 %v639, 16
      %v657 = vrot.slane %v655, 7
      %v658 = vshll.u32 %v639, 16
      %v660 = vor.u32 %v657, %v658
      %v661 = vrot.slane %v657, 4
      %v663 = vshrl.u32 %v640, 16
      %v665 = vrot.slane %v663, 7
      %v666 = vshll.u32 %v640, 16
      %v668 = vor.u32 %v665, %v666
      %v669 = vsel %vm653, %v661, %v668
      %v670 = vrot.slane %v665, 4
      %v672 = vshrl.u32 %v641, 16
      %v674 = vrot.slane %v672, 7
      %v675 = vshll.u32 %v641, 16
      %v677 = vor.u32 %v674, %v675
      %v678 = vrot.slane %v674, 4
      %v680 = vshrl.u32 %v642, 16
      %v682 = vrot.slane %v680, 7
      %v683 = vshll.u32 %v642, 16
      %v685 = vor.u32 %v682, %v683
      %v686 = vsel %vm653, %v678, %v685
      %v687 = vrot.slane %v682, 4
      %v689 = vshrl.u32 %v643, 16
      %v691 = vrot.slane %v689, 7
      %v692 = vshll.u32 %v643, 16
      %v694 = vor.u32 %v691, %v692
      %v695 = vrot.slane %v691, 4
      %v697 = vshrl.u32 %v644, 16
      %v699 = vrot.slane %v697, 7
      %v700 = vshll.u32 %v644, 16
      %v702 = vor.u32 %v699, %v700
      %v703 = vsel %vm653, %v695, %v702
      %v704 = vrot.slane %v699, 4
      %v706 = vshrl.u32 %v645, 16
      %v708 = vrot.slane %v706, 7
      %v709 = vshll.u32 %v645, 16
      %v711 = vor.u32 %v708, %v709
      %v712 = vrot.slane %v708, 4
      %v714 = vshrl.u32 %v646, 16
      %v716 = vrot.slane %v714, 7
      %v717 = vshll.u32 %v646, 16
      %v719 = vor.u32 %v716, %v717
      %v720 = vsel %vm653, %v712, %v719
      %v721 = vrot.slane %v716, 4
      %v723 = vshrl.u32 %v647, 16
      %v725 = vrot.slane %v723, 7
      %v726 = vshll.u32 %v647, 16
      %v728 = vor.u32 %v725, %v726
      %v729 = vrot.slane %v725, 4
      %v731 = vshrl.u32 %v648, 16
      %v733 = vrot.slane %v731, 7
      %v734 = vshll.u32 %v648, 16
      %v736 = vor.u32 %v733, %v734
      %v737 = vsel %vm653, %v729, %v736
      %v738 = vrot.slane %v733, 4
      %v740 = vshrl.u32 %v649, 16
      %v742 = vrot.slane %v740, 7
      %v743 = vshll.u32 %v649, 16
      %v745 = vor.u32 %v742, %v743
      %v746 = vrot.slane %v742, 4
      %v748 = vshrl.u32 %v650, 16
      %v750 = vrot.slane %v748, 7
      %v751 = vshll.u32 %v650, 16
      %v753 = vor.u32 %v750, %v751
      %v754 = vsel %vm653, %v746, %v753
      %v755 = vrot.slane %v750, 4
      %vm774 = vcmask 1043456
      %vm775 = vsmask.f32 7938
      %vm776 = vmand %vm774, %vm775
      %v777 = vld [vmem:[#allocation3] sm:$0xf]
      %v778 = vsel %vm776, %v660, %v777
      %779 = vst [vmem:[#allocation3] sm:$0xf] %v778
      %780 = vst [vmem:[#allocation3 + $0x4] sm:$0xf] %v669
      %vm781 = vcmask 1040384
      %vm782 = vmand %vm781, %vm651
      %v783 = vld [vmem:[#allocation3 + $0x8] sm:$0x1]
      %v784 = vsel %vm782, %v670, %v783
      %785 = vst [vmem:[#allocation3 + $0x8] sm:$0x1] %v784
      %v786 = vld [vmem:[#allocation3 + $0xc] sm:$0xf]
      %v787 = vsel %vm776, %v677, %v786
      %788 = vst [vmem:[#allocation3 + $0xc] sm:$0xf] %v787
      %789 = vst [vmem:[#allocation3 + $0x10] sm:$0xf] %v686
      %v790 = vld [vmem:[#allocation3 + $0x14] sm:$0x1]
      %v791 = vsel %vm782, %v687, %v790
      %792 = vst [vmem:[#allocation3 + $0x14] sm:$0x1] %v791
      %v793 = vld [vmem:[#allocation3 + $0x18] sm:$0xf]
      %v794 = vsel %vm776, %v694, %v793
      %795 = vst [vmem:[#allocation3 + $0x18] sm:$0xf] %v794
      %796 = vst [vmem:[#allocation3 + $0x1c] sm:$0xf] %v703
      %v797 = vld [vmem:[#allocation3 + $0x20] sm:$0x1]
      %v798 = vsel %vm782, %v704, %v797
      %799 = vst [vmem:[#allocation3 + $0x20] sm:$0x1] %v798
      %v800 = vld [vmem:[#allocation3 + $0x24] sm:$0xf]
      %v801 = vsel %vm776, %v711, %v800
      %802 = vst [vmem:[#allocation3 + $0x24] sm:$0xf] %v801
      %803 = vst [vmem:[#allocation3 + $0x28] sm:$0xf] %v720
      %v804 = vld [vmem:[#allocation3 + $0x2c] sm:$0x1]
      %v805 = vsel %vm782, %v721, %v804
      %806 = vst [vmem:[#allocation3 + $0x2c] sm:$0x1] %v805
      %v807 = vld [vmem:[#allocation3 + $0x30] sm:$0xf]
      %v808 = vsel %vm776, %v728, %v807
      %809 = vst [vmem:[#allocation3 + $0x30] sm:$0xf] %v808
      %810 = vst [vmem:[#allocation3 + $0x34] sm:$0xf] %v737
      %v811 = vld [vmem:[#allocation3 + $0x38] sm:$0x1]
      %v812 = vsel %vm782, %v738, %v811
      %813 = vst [vmem:[#allocation3 + $0x38] sm:$0x1] %v812
      %v814 = vld [vmem:[#allocation3 + $0x3c] sm:$0xf]
      %v815 = vsel %vm776, %v745, %v814
      %816 = vst [vmem:[#allocation3 + $0x3c] sm:$0xf] %v815
      %817 = vst [vmem:[#allocation3 + $0x40] sm:$0xf] %v754
      %v818 = vld [vmem:[#allocation3 + $0x44] sm:$0x1]
      %v819 = vsel %vm782, %v755, %v818
      %820 = vst [vmem:[#allocation3 + $0x44] sm:$0x1] %v819
      %p821 = scmp.eq.s32.totalorder %s23, 0
      // Predicated region
      $region147: #{_lambda_.1} parent=43 // pred_check
        %p822 = pneg %p821
      $region148: #{_lambda_.1} parent=43 // pred_check_branch
        %824 = sbr.rel (%p822) target = $region150
      $region149: #{_lambda_.1} parent=43 // pred_region
        %825 = vst [vmem:[#allocation3] sm:$0xf] 0
        %826 = vst [vmem:[#allocation3 + $0x4] sm:$0xf] 0
        %827 = vst [vmem:[#allocation3 + $0x8] sm:$0x1] 0
      $region150: #{_lambda_.1} parent=43 // pred_fallthru
        _
      %p828 = scmp.eq.s32.totalorder %s23, 3
      // Predicated region
      $region151: #{_lambda_.1} parent=43 // pred_check
        %p829 = pneg %p828
      $region152: #{_lambda_.1} parent=43 // pred_check_branch
        %831 = sbr.rel (%p829) target = $region154
      $region153: #{_lambda_.1} parent=43 // pred_region
        %s832 = scalar_lea.vmem [#allocation3], 60
        %833 = vst [vmem:[%s832] sm:$0xf] 0
        %834 = vst [vmem:[%s832 + $0x4] sm:$0xf] 0
        %835 = vst [vmem:[%s832 + $0x8] sm:$0x1] 0
      $region154: #{_lambda_.1} parent=43 // pred_fallthru
        _
      %v836 = vld [vmem:[#allocation3] sm:$0xf]
      %v837 = vld [vmem:[#allocation3 + $0x4] sm:$0xf]
      %v838 = vld [vmem:[#allocation3 + $0xc] sm:$0xf]
      %v839 = vld [vmem:[#allocation3 + $0x10] sm:$0xf]
      %v840 = vld [vmem:[#allocation3 + $0x18] sm:$0xf]
      %v841 = vld [vmem:[#allocation3 + $0x1c] sm:$0xf]
      %v842 = vld [vmem:[#allocation3 + $0x24] sm:$0xf]
      %v843 = vld [vmem:[#allocation3 + $0x28] sm:$0xf]
      %v844 = vld [vmem:[%s3] sm:$0xf]
      %v845 = vld [vmem:[%s3 + $0x4] sm:$0xf]
      %v846 = vld [vmem:[%s3 + $0x8] sm:$0xf]
      %v847 = vld [vmem:[%s3 + $0xc] sm:$0xf]
      %v848 = vld [vmem:[%s3 + $0x10] sm:$0xf]
      %v849 = vld [vmem:[%s3 + $0x14] sm:$0xf]
      %v850 = vld [vmem:[%s3 + $0x18] sm:$0xf]
      %v851 = vld [vmem:[%s3 + $0x1c] sm:$0xf]
      %v852 = vld [vmem:[%s3 + $0x20] sm:$0xf]
      %v853 = vld [vmem:[%s3 + $0x24] sm:$0xf]
      %v854 = vld [vmem:[%s3 + $0x28] sm:$0xf]
      %v855 = vld [vmem:[%s3 + $0x2c] sm:$0xf]
      %v856 = vld [vmem:[%s3 + $0x30] sm:$0xf]
      %v857 = vld [vmem:[%s3 + $0x34] sm:$0xf]
      %v858 = vld [vmem:[%s3 + $0x38] sm:$0xf]
      %v859 = vld [vmem:[%s3 + $0x3c] sm:$0xf]
      %v860 = vld [vmem:[#allocation3 + $0x8] sm:$0x1]
      %v861 = vld [vmem:[#allocation3 + $0x14] sm:$0x1]
      %v862 = vld [vmem:[#allocation3 + $0x20] sm:$0x1]
      %v863 = vld [vmem:[#allocation3 + $0x2c] sm:$0x1]
      %vm864 = vsmask.f32 3328
      %vm865 = vsmask.f32 7440
      %vm866 = vmor %vm864, %vm865
      %v868 = vshrl.u32 %v836, 16
      %v870 = vrot.slane %v868, 4
      %v871 = vshll.u32 %v836, 16
      %v873 = vrot.slane %v871, 5
      %v874 = vor.u32 %v870, %v873
      %v875 = vrot.slane %v874, 4
      %v877 = vshll.u32 %v837, 16
      %v879 = vrot.slane %v877, 5
      %v880 = vsel %vm866, %v875, %v879
      %v881 = vshrl.u32 %v837, 16
      %v883 = vrot.slane %v881, 4
      %v884 = vor.u32 %v883, %v879
      %v885 = vrot.slane %v884, 4
      %v887 = vshll.u32 %v860, 16
      %v889 = vrot.slane %v887, 5
      %v890 = vsel %vm866, %v885, %v889
      %v892 = vshrl.u32 %v838, 16
      %v894 = vrot.slane %v892, 4
      %v895 = vshll.u32 %v838, 16
      %v897 = vrot.slane %v895, 5
      %v898 = vor.u32 %v894, %v897
      %v899 = vrot.slane %v898, 4
      %v901 = vshll.u32 %v839, 16
      %v903 = vrot.slane %v901, 5
      %v904 = vsel %vm866, %v899, %v903
      %v905 = vshrl.u32 %v839, 16
      %v907 = vrot.slane %v905, 4
      %v908 = vor.u32 %v907, %v903
      %v909 = vrot.slane %v908, 4
      %v911 = vshll.u32 %v861, 16
      %v913 = vrot.slane %v911, 5
      %v914 = vsel %vm866, %v909, %v913
      %v916 = vshrl.u32 %v840, 16
      %v918 = vrot.slane %v916, 4
      %v919 = vshll.u32 %v840, 16
      %v921 = vrot.slane %v919, 5
      %v922 = vor.u32 %v918, %v921
      %v923 = vrot.slane %v922, 4
      %v925 = vshll.u32 %v841, 16
      %v927 = vrot.slane %v925, 5
      %v928 = vsel %vm866, %v923, %v927
      %v929 = vshrl.u32 %v841, 16
      %v931 = vrot.slane %v929, 4
      %v932 = vor.u32 %v931, %v927
      %v933 = vrot.slane %v932, 4
      %v935 = vshll.u32 %v862, 16
      %v937 = vrot.slane %v935, 5
      %v938 = vsel %vm866, %v933, %v937
      %v940 = vshrl.u32 %v842, 16
      %v942 = vrot.slane %v940, 4
      %v943 = vshll.u32 %v842, 16
      %v945 = vrot.slane %v943, 5
      %v946 = vor.u32 %v942, %v945
      %v947 = vrot.slane %v946, 4
      %v949 = vshll.u32 %v843, 16
      %v951 = vrot.slane %v949, 5
      %v952 = vsel %vm866, %v947, %v951
      %v953 = vshrl.u32 %v843, 16
      %v955 = vrot.slane %v953, 4
      %v956 = vor.u32 %v955, %v951
      %v957 = vrot.slane %v956, 4
      %v959 = vshll.u32 %v863, 16
      %v961 = vrot.slane %v959, 5
      %v962 = vsel %vm866, %v957, %v961
      %s963 = scalar_lea.vmem %s3, 64
      %v964 = vld [vmem:[%s963] sm:$0xf]
      %v965 = vld [vmem:[%s963 + $0x4] sm:$0xf]
      %v966 = vld [vmem:[%s963 + $0x8] sm:$0xf]
      %v967 = vld [vmem:[%s963 + $0xc] sm:$0xf]
      %v968 = vld [vmem:[%s963 + $0x10] sm:$0xf]
      %v969 = vld [vmem:[%s963 + $0x14] sm:$0xf]
      %v970 = vld [vmem:[%s963 + $0x18] sm:$0xf]
      %v971 = vld [vmem:[%s963 + $0x1c] sm:$0xf]
      %v972 = vld [vmem:[%s963 + $0x20] sm:$0xf]
      %v973 = vld [vmem:[%s963 + $0x24] sm:$0xf]
      %v974 = vld [vmem:[%s963 + $0x28] sm:$0xf]
      %v975 = vld [vmem:[%s963 + $0x2c] sm:$0xf]
      %v976 = vld [vmem:[%s963 + $0x30] sm:$0xf]
      %v977 = vld [vmem:[%s963 + $0x34] sm:$0xf]
      %v978 = vld [vmem:[%s963 + $0x38] sm:$0xf]
      %v979 = vld [vmem:[%s963 + $0x3c] sm:$0xf]
      %v980 = vunpack.c.l.b16 %v880
      %v981 = vunpack.c.l.b16 %v890
      %v982 = vunpack.c.l.b16 %v904
      %v983 = vunpack.c.l.b16 %v914
      %v984 = vunpack.c.l.b16 %v928
      %v985 = vunpack.c.l.b16 %v938
      %v986 = vunpack.c.l.b16 %v952
      %v987 = vunpack.c.l.b16 %v962
      %v988 = vpack.c.b16 %v981, %v980
      %v989 = vpack.c.b16 %v983, %v982
      %v990 = vpack.c.b16 %v985, %v984
      %v991 = vpack.c.b16 %v987, %v986
      %v1012 = vunpack.c.l.b16 %v964
      %v1013 = vunpack.c.l.b16 %v965
      %v1014 = vunpack.c.l.b16 %v966
      %v1015 = vunpack.c.l.b16 %v967
      %v1016 = vunpack.c.l.b16 %v968
      %v1017 = vunpack.c.l.b16 %v969
      %v1018 = vunpack.c.l.b16 %v970
      %v1019 = vunpack.c.l.b16 %v971
      %v1020 = vunpack.c.l.b16 %v972
      %v1021 = vunpack.c.l.b16 %v973
      %v1022 = vunpack.c.l.b16 %v974
      %v1023 = vunpack.c.l.b16 %v975
      %v1024 = vunpack.c.l.b16 %v976
      %v1025 = vunpack.c.l.b16 %v977
      %v1026 = vunpack.c.l.b16 %v978
      %v1027 = vunpack.c.l.b16 %v979
      %v1028 = vpack.c.b16 %v1013, %v1012
      %v1029 = vpack.c.b16 %v1015, %v1014
      %v1030 = vpack.c.b16 %v1017, %v1016
      %v1031 = vpack.c.b16 %v1019, %v1018
      %v1032 = vpack.c.b16 %v1021, %v1020
      %v1033 = vpack.c.b16 %v1023, %v1022
      %v1034 = vpack.c.b16 %v1025, %v1024
      %v1035 = vpack.c.b16 %v1027, %v1026
      %1044 = vmatprep.subr.bf16.mxu0 0
      %1045 = vmatpush1.bf16.msra.mxu0 %v1028
      %1046 = vmatprep.subr.bf16.mxu0 0
      %1047 = vmatpush1.bf16.msra.mxu0 %v1029
      %1048 = vmatprep.subr.bf16.mxu0 0
      %1049 = vmatpush1.bf16.msra.mxu0 %v1030
      %1050 = vmatprep.subr.bf16.mxu0 0
      %1051 = vmatpush1.bf16.msra.mxu0 %v1031
      %1052 = vmatprep.subr.bf16.mxu0 0
      %1053 = vmatpush1.bf16.msra.mxu0 %v1032
      %1054 = vmatprep.subr.bf16.mxu0 0
      %1055 = vmatpush1.bf16.msra.mxu0 %v1033
      %1056 = vmatprep.subr.bf16.mxu0 0
      %1057 = vmatpush1.bf16.msra.mxu0 %v1034
      %1058 = vmatprep.subr.bf16.mxu0 0
      %1059 = vmatpush1.bf16.msra.mxu0 %v1035
      %1060 = vmatprep.subr.bf16.mxu0 0
      %1061 = vmatpush1.bf16.msra.mxu0 0
      %1062 = vmatprep.subr.bf16.mxu0 0
      %1063 = vmatpush1.bf16.msra.mxu0 0
      %1064 = vmatprep.subr.bf16.mxu0 0
      %1065 = vmatpush1.bf16.msra.mxu0 0
      %1066 = vmatprep.subr.bf16.mxu0 0
      %1067 = vmatpush1.bf16.msra.mxu0 0
      %1068 = vmatprep.subr.bf16.mxu0 0
      %1069 = vmatpush1.bf16.msra.mxu0 0
      %1070 = vmatprep.subr.bf16.mxu0 0
      %1071 = vmatpush1.bf16.msra.mxu0 0
      %1072 = vmatprep.subr.bf16.mxu0 0
      %1073 = vmatpush1.bf16.msra.mxu0 0
      %1074 = vmatprep.subr.bf16.mxu0 0
      %1075 = vmatpush1.bf16.msra.mxu0 0
      %1076 = vmatprep.mubr.bf16.mxu0 0
      %1077 = vmatmul.mubr.bf16.gmra.mrb[0].mxu0 %v988
      %v1078 = vpop.f32.mrb[0].mxu0
      %v1079 = vadd.f32 0.0, %v1078
      %v1080 = vpop.f32.mrb[0].mxu0
      %v1081 = vpop.f32.mrb[0].mxu0
      %v1082 = vadd.f32 0.0, %v1081
      %v1083 = vpop.f32.mrb[0].mxu0
      %1084 = vmatprep.mubr.bf16.mxu0 0
      %1085 = vmatmul.mubr.bf16.gmra.mrb[0].mxu0 %v989
      %v1086 = vpop.f32.mrb[0].mxu0
      %v1087 = vadd.f32 0.0, %v1086
      %v1088 = vpop.f32.mrb[0].mxu0
      %v1089 = vpop.f32.mrb[0].mxu0
      %v1090 = vadd.f32 0.0, %v1089
      %v1091 = vpop.f32.mrb[0].mxu0
      %1092 = vmatprep.mubr.bf16.mxu0 0
      %1093 = vmatmul.mubr.bf16.gmra.mrb[0].mxu0 %v990
      %v1094 = vpop.f32.mrb[0].mxu0
      %v1095 = vadd.f32 0.0, %v1094
      %v1096 = vpop.f32.mrb[0].mxu0
      %v1097 = vpop.f32.mrb[0].mxu0
      %v1098 = vadd.f32 0.0, %v1097
      %v1099 = vpop.f32.mrb[0].mxu0
      %1100 = vmatprep.mubr.bf16.mxu0 0
      %1101 = vmatmul.mubr.bf16.gmra.mrb[0].mxu0 %v991
      %v1102 = vpop.f32.mrb[0].mxu0
      %v1103 = vadd.f32 0.0, %v1102
      %v1104 = vpop.f32.mrb[0].mxu0
      %v1105 = vpop.f32.mrb[0].mxu0
      %v1106 = vadd.f32 0.0, %v1105
      %v1107 = vpop.f32.mrb[0].mxu0
      %1108 = vdwg.mxu0
      %v1117 = vunpack.c.l.b16 %v836
      %v1118 = vunpack.c.l.b16 %v837
      %v1119 = vunpack.c.l.b16 %v838
      %v1120 = vunpack.c.l.b16 %v839
      %v1121 = vunpack.c.l.b16 %v840
      %v1122 = vunpack.c.l.b16 %v841
      %v1123 = vunpack.c.l.b16 %v842
      %v1124 = vunpack.c.l.b16 %v843
      %v1125 = vpack.c.b16 %v1118, %v1117
      %v1126 = vpack.c.b16 %v1120, %v1119
      %v1127 = vpack.c.b16 %v1122, %v1121
      %v1128 = vpack.c.b16 %v1124, %v1123
      %v1149 = vunpack.c.l.b16 %v844
      %v1150 = vunpack.c.l.b16 %v845
      %v1151 = vunpack.c.l.b16 %v846
      %v1152 = vunpack.c.l.b16 %v847
      %v1153 = vunpack.c.l.b16 %v848
      %v1154 = vunpack.c.l.b16 %v849
      %v1155 = vunpack.c.l.b16 %v850
      %v1156 = vunpack.c.l.b16 %v851
      %v1157 = vunpack.c.l.b16 %v852
      %v1158 = vunpack.c.l.b16 %v853
      %v1159 = vunpack.c.l.b16 %v854
      %v1160 = vunpack.c.l.b16 %v855
      %v1161 = vunpack.c.l.b16 %v856
      %v1162 = vunpack.c.l.b16 %v857
      %v1163 = vunpack.c.l.b16 %v858
      %v1164 = vunpack.c.l.b16 %v859
      %v1165 = vpack.c.b16 %v1150, %v1149
      %v1166 = vpack.c.b16 %v1152, %v1151
      %v1167 = vpack.c.b16 %v1154, %v1153
      %v1168 = vpack.c.b16 %v1156, %v1155
      %v1169 = vpack.c.b16 %v1158, %v1157
      %v1170 = vpack.c.b16 %v1160, %v1159
      %v1171 = vpack.c.b16 %v1162, %v1161
      %v1172 = vpack.c.b16 %v1164, %v1163
      %1181 = vmatprep.subr.bf16.mxu0 0
      %1182 = vmatpush1.bf16.msra.mxu0 %v1165
      %1183 = vmatprep.subr.bf16.mxu0 0
      %1184 = vmatpush1.bf16.msra.mxu0 %v1166
      %1185 = vmatprep.subr.bf16.mxu0 0
      %1186 = vmatpush1.bf16.msra.mxu0 %v1167
      %1187 = vmatprep.subr.bf16.mxu0 0
      %1188 = vmatpush1.bf16.msra.mxu0 %v1168
      %1189 = vmatprep.subr.bf16.mxu0 0
      %1190 = vmatpush1.bf16.msra.mxu0 %v1169
      %1191 = vmatprep.subr.bf16.mxu0 0
      %1192 = vmatpush1.bf16.msra.mxu0 %v1170
      %1193 = vmatprep.subr.bf16.mxu0 0
      %1194 = vmatpush1.bf16.msra.mxu0 %v1171
      %1195 = vmatprep.subr.bf16.mxu0 0
      %1196 = vmatpush1.bf16.msra.mxu0 %v1172
      %1197 = vmatprep.subr.bf16.mxu0 0
      %1198 = vmatpush1.bf16.msra.mxu0 0
      %1199 = vmatprep.subr.bf16.mxu0 0
      %1200 = vmatpush1.bf16.msra.mxu0 0
      %1201 = vmatprep.subr.bf16.mxu0 0
      %1202 = vmatpush1.bf16.msra.mxu0 0
      %1203 = vmatprep.subr.bf16.mxu0 0
      %1204 = vmatpush1.bf16.msra.mxu0 0
      %1205 = vmatprep.subr.bf16.mxu0 0
      %1206 = vmatpush1.bf16.msra.mxu0 0
      %1207 = vmatprep.subr.bf16.mxu0 0
      %1208 = vmatpush1.bf16.msra.mxu0 0
      %1209 = vmatprep.subr.bf16.mxu0 0
      %1210 = vmatpush1.bf16.msra.mxu0 0
      %1211 = vmatprep.subr.bf16.mxu0 0
      %1212 = vmatpush1.bf16.msra.mxu0 0
      %1213 = vmatprep.mubr.bf16.mxu0 0
      %1214 = vmatmul.mubr.bf16.gmra.mrb[0].mxu0 %v1125
      %v1215 = vpop.f32.mrb[0].mxu0
      %v1216 = vadd.f32 %v1079, %v1215
      %v1217 = vpop.f32.mrb[0].mxu0
      %v1218 = vpop.f32.mrb[0].mxu0
      %v1219 = vadd.f32 %v1082, %v1218
      %v1220 = vpop.f32.mrb[0].mxu0
      %1221 = vmatprep.mubr.bf16.mxu0 0
      %1222 = vmatmul.mubr.bf16.gmra.mrb[0].mxu0 %v1126
      %v1223 = vpop.f32.mrb[0].mxu0
      %v1224 = vadd.f32 %v1087, %v1223
      %v1225 = vpop.f32.mrb[0].mxu0
      %v1226 = vpop.f32.mrb[0].mxu0
      %v1227 = vadd.f32 %v1090, %v1226
      %v1228 = vpop.f32.mrb[0].mxu0
      %1229 = vmatprep.mubr.bf16.mxu0 0
      %1230 = vmatmul.mubr.bf16.gmra.mrb[0].mxu0 %v1127
      %v1231 = vpop.f32.mrb[0].mxu0
      %v1232 = vadd.f32 %v1095, %v1231
      %v1233 = vpop.f32.mrb[0].mxu0
      %v1234 = vpop.f32.mrb[0].mxu0
      %v1235 = vadd.f32 %v1098, %v1234
      %v1236 = vpop.f32.mrb[0].mxu0
      %1237 = vmatprep.mubr.bf16.mxu0 0
      %1238 = vmatmul.mubr.bf16.gmra.mrb[0].mxu0 %v1128
      %v1239 = vpop.f32.mrb[0].mxu0
      %v1240 = vadd.f32 %v1103, %v1239
      %v1241 = vpop.f32.mrb[0].mxu0
      %v1242 = vpop.f32.mrb[0].mxu0
      %v1243 = vadd.f32 %v1106, %v1242
      %v1244 = vpop.f32.mrb[0].mxu0
      %1245 = vdwg.mxu0
      %v1246 = vld [vmem:[#allocation3] sm:$0xe]
      %v1247 = vld [vmem:[#allocation3 + $0xc] sm:$0xe]
      %v1248 = vld [vmem:[#allocation3 + $0x18] sm:$0xe]
      %v1249 = vld [vmem:[#allocation3 + $0x24] sm:$0xe]
      %vm1258 = vcmask 1042432
      %vm1259 = vcmask 1046532
      %vm1260 = vmor %vm1258, %vm1259
      %v1261 = vrot.slane %v1246, 5
      %v1262 = vrot.slane %v1261, 4
      %v1263 = vrot.slane %v837, 5
      %v1264 = vsel %vm1260, %v1262, %v1263
      %v1265 = vrot.slane %v1263, 4
      %v1266 = vrot.slane %v860, 5
      %v1267 = vsel %vm1260, %v1265, %v1266
      %v1268 = vrot.slane %v1247, 5
      %v1269 = vrot.slane %v1268, 4
      %v1270 = vrot.slane %v839, 5
      %v1271 = vsel %vm1260, %v1269, %v1270
      %v1272 = vrot.slane %v1270, 4
      %v1273 = vrot.slane %v861, 5
      %v1274 = vsel %vm1260, %v1272, %v1273
      %v1275 = vrot.slane %v1248, 5
      %v1276 = vrot.slane %v1275, 4
      %v1277 = vrot.slane %v841, 5
      %v1278 = vsel %vm1260, %v1276, %v1277
      %v1279 = vrot.slane %v1277, 4
      %v1280 = vrot.slane %v862, 5
      %v1281 = vsel %vm1260, %v1279, %v1280
      %v1282 = vrot.slane %v1249, 5
      %v1283 = vrot.slane %v1282, 4
      %v1284 = vrot.slane %v843, 5
      %v1285 = vsel %vm1260, %v1283, %v1284
      %v1286 = vrot.slane %v1284, 4
      %v1287 = vrot.slane %v863, 5
      %v1288 = vsel %vm1260, %v1286, %v1287
      %s1289 = scalar_lea.vmem %s3, 128
      %v1290 = vld [vmem:[%s1289] sm:$0xf]
      %v1291 = vld [vmem:[%s1289 + $0x4] sm:$0xf]
      %v1292 = vld [vmem:[%s1289 + $0x8] sm:$0xf]
      %v1293 = vld [vmem:[%s1289 + $0xc] sm:$0xf]
      %v1294 = vld [vmem:[%s1289 + $0x10] sm:$0xf]
      %v1295 = vld [vmem:[%s1289 + $0x14] sm:$0xf]
      %v1296 = vld [vmem:[%s1289 + $0x18] sm:$0xf]
      %v1297 = vld [vmem:[%s1289 + $0x1c] sm:$0xf]
      %v1298 = vld [vmem:[%s1289 + $0x20] sm:$0xf]
      %v1299 = vld [vmem:[%s1289 + $0x24] sm:$0xf]
      %v1300 = vld [vmem:[%s1289 + $0x28] sm:$0xf]
      %v1301 = vld [vmem:[%s1289 + $0x2c] sm:$0xf]
      %v1302 = vld [vmem:[%s1289 + $0x30] sm:$0xf]
      %v1303 = vld [vmem:[%s1289 + $0x34] sm:$0xf]
      %v1304 = vld [vmem:[%s1289 + $0x38] sm:$0xf]
      %v1305 = vld [vmem:[%s1289 + $0x3c] sm:$0xf]
      %v1306 = vunpack.c.l.b16 %v1264
      %v1307 = vunpack.c.l.b16 %v1267
      %v1308 = vunpack.c.l.b16 %v1271
      %v1309 = vunpack.c.l.b16 %v1274
      %v1310 = vunpack.c.l.b16 %v1278
      %v1311 = vunpack.c.l.b16 %v1281
      %v1312 = vunpack.c.l.b16 %v1285
      %v1313 = vunpack.c.l.b16 %v1288
      %v1314 = vpack.c.b16 %v1307, %v1306
      %v1315 = vpack.c.b16 %v1309, %v1308
      %v1316 = vpack.c.b16 %v1311, %v1310
      %v1317 = vpack.c.b16 %v1313, %v1312
      %v1338 = vunpack.c.l.b16 %v1290
      %v1339 = vunpack.c.l.b16 %v1291
      %v1340 = vunpack.c.l.b16 %v1292
      %v1341 = vunpack.c.l.b16 %v1293
      %v1342 = vunpack.c.l.b16 %v1294
      %v1343 = vunpack.c.l.b16 %v1295
      %v1344 = vunpack.c.l.b16 %v1296
      %v1345 = vunpack.c.l.b16 %v1297
      %v1346 = vunpack.c.l.b16 %v1298
      %v1347 = vunpack.c.l.b16 %v1299
      %v1348 = vunpack.c.l.b16 %v1300
      %v1349 = vunpack.c.l.b16 %v1301
      %v1350 = vunpack.c.l.b16 %v1302
      %v1351 = vunpack.c.l.b16 %v1303
      %v1352 = vunpack.c.l.b16 %v1304
      %v1353 = vunpack.c.l.b16 %v1305
      %v1354 = vpack.c.b16 %v1339, %v1338
      %v1355 = vpack.c.b16 %v1341, %v1340
      %v1356 = vpack.c.b16 %v1343, %v1342
      %v1357 = vpack.c.b16 %v1345, %v1344
      %v1358 = vpack.c.b16 %v1347, %v1346
      %v1359 = vpack.c.b16 %v1349, %v1348
      %v1360 = vpack.c.b16 %v1351, %v1350
      %v1361 = vpack.c.b16 %v1353, %v1352
      %1370 = vmatprep.subr.bf16.mxu0 0
      %1371 = vmatpush1.bf16.msra.mxu0 %v1354
      %1372 = vmatprep.subr.bf16.mxu0 0
      %1373 = vmatpush1.bf16.msra.mxu0 %v1355
      %1374 = vmatprep.subr.bf16.mxu0 0
      %1375 = vmatpush1.bf16.msra.mxu0 %v1356
      %1376 = vmatprep.subr.bf16.mxu0 0
      %1377 = vmatpush1.bf16.msra.mxu0 %v1357
      %1378 = vmatprep.subr.bf16.mxu0 0
      %1379 = vmatpush1.bf16.msra.mxu0 %v1358
      %1380 = vmatprep.subr.bf16.mxu0 0
      %1381 = vmatpush1.bf16.msra.mxu0 %v1359
      %1382 = vmatprep.subr.bf16.mxu0 0
      %1383 = vmatpush1.bf16.msra.mxu0 %v1360
      %1384 = vmatprep.subr.bf16.mxu0 0
      %1385 = vmatpush1.bf16.msra.mxu0 %v1361
      %1386 = vmatprep.subr.bf16.mxu0 0
      %1387 = vmatpush1.bf16.msra.mxu0 0
      %1388 = vmatprep.subr.bf16.mxu0 0
      %1389 = vmatpush1.bf16.msra.mxu0 0
      %1390 = vmatprep.subr.bf16.mxu0 0
      %1391 = vmatpush1.bf16.msra.mxu0 0
      %1392 = vmatprep.subr.bf16.mxu0 0
      %1393 = vmatpush1.bf16.msra.mxu0 0
      %1394 = vmatprep.subr.bf16.mxu0 0
      %1395 = vmatpush1.bf16.msra.mxu0 0
      %1396 = vmatprep.subr.bf16.mxu0 0
      %1397 = vmatpush1.bf16.msra.mxu0 0
      %1398 = vmatprep.subr.bf16.mxu0 0
      %1399 = vmatpush1.bf16.msra.mxu0 0
      %1400 = vmatprep.subr.bf16.mxu0 0
      %1401 = vmatpush1.bf16.msra.mxu0 0
      %1402 = vmatprep.mubr.bf16.mxu0 0
      %1403 = vmatmul.mubr.bf16.gmra.mrb[0].mxu0 %v1314
      %v1404 = vpop.f32.mrb[0].mxu0
      %v1405 = vadd.f32 0.0, %v1404
      %v1406 = vpop.f32.mrb[0].mxu0
      %v1407 = vpop.f32.mrb[0].mxu0
      %v1408 = vadd.f32 0.0, %v1407
      %v1409 = vpop.f32.mrb[0].mxu0
      %1410 = vmatprep.mubr.bf16.mxu0 0
      %1411 = vmatmul.mubr.bf16.gmra.mrb[0].mxu0 %v1315
      %v1412 = vpop.f32.mrb[0].mxu0
      %v1413 = vadd.f32 0.0, %v1412
      %v1414 = vpop.f32.mrb[0].mxu0
      %v1415 = vpop.f32.mrb[0].mxu0
      %v1416 = vadd.f32 0.0, %v1415
      %v1417 = vpop.f32.mrb[0].mxu0
      %1418 = vmatprep.mubr.bf16.mxu0 0
      %1419 = vmatmul.mubr.bf16.gmra.mrb[0].mxu0 %v1316
      %v1420 = vpop.f32.mrb[0].mxu0
      %v1421 = vadd.f32 0.0, %v1420
      %v1422 = vpop.f32.mrb[0].mxu0
      %v1423 = vpop.f32.mrb[0].mxu0
      %v1424 = vadd.f32 0.0, %v1423
      %v1425 = vpop.f32.mrb[0].mxu0
      %1426 = vmatprep.mubr.bf16.mxu0 0
      %1427 = vmatmul.mubr.bf16.gmra.mrb[0].mxu0 %v1317
      %v1428 = vpop.f32.mrb[0].mxu0
      %v1429 = vadd.f32 0.0, %v1428
      %v1430 = vpop.f32.mrb[0].mxu0
      %v1431 = vpop.f32.mrb[0].mxu0
      %v1432 = vadd.f32 0.0, %v1431
      %v1433 = vpop.f32.mrb[0].mxu0
      %1434 = vdwg.mxu0
      %v1435 = vadd.f32 %v1216, %v1405
      %v1436 = vadd.f32 %v1219, %v1408
      %v1437 = vadd.f32 %v1224, %v1413
      %v1438 = vadd.f32 %v1227, %v1416
      %v1439 = vadd.f32 %v1232, %v1421
      %v1440 = vadd.f32 %v1235, %v1424
      %v1441 = vadd.f32 %v1240, %v1429
      %v1442 = vadd.f32 %v1243, %v1432
      %s1443 = scalar_lea.vmem [#allocation3], 12
      %v1444 = vld [vmem:[%s1443] sm:$0xf]
      %v1445 = vld [vmem:[%s1443 + $0x4] sm:$0xf]
      %v1446 = vld [vmem:[%s1443 + $0xc] sm:$0xf]
      %v1447 = vld [vmem:[%s1443 + $0x10] sm:$0xf]
      %v1448 = vld [vmem:[%s1443 + $0x18] sm:$0xf]
      %v1449 = vld [vmem:[%s1443 + $0x1c] sm:$0xf]
      %v1450 = vld [vmem:[%s1443 + $0x24] sm:$0xf]
      %v1451 = vld [vmem:[%s1443 + $0x28] sm:$0xf]
      %s1452 = scalar_lea.vmem %s3, 192
      %v1453 = vld [vmem:[%s1452] sm:$0xf]
      %v1454 = vld [vmem:[%s1452 + $0x4] sm:$0xf]
      %v1455 = vld [vmem:[%s1452 + $0x8] sm:$0xf]
      %v1456 = vld [vmem:[%s1452 + $0xc] sm:$0xf]
      %v1457 = vld [vmem:[%s1452 + $0x10] sm:$0xf]
      %v1458 = vld [vmem:[%s1452 + $0x14] sm:$0xf]
      %v1459 = vld [vmem:[%s1452 + $0x18] sm:$0xf]
      %v1460 = vld [vmem:[%s1452 + $0x1c] sm:$0xf]
      %v1461 = vld [vmem:[%s1452 + $0x20] sm:$0xf]
      %v1462 = vld [vmem:[%s1452 + $0x24] sm:$0xf]
      %v1463 = vld [vmem:[%s1452 + $0x28] sm:$0xf]
      %v1464 = vld [vmem:[%s1452 + $0x2c] sm:$0xf]
      %v1465 = vld [vmem:[%s1452 + $0x30] sm:$0xf]
      %v1466 = vld [vmem:[%s1452 + $0x34] sm:$0xf]
      %v1467 = vld [vmem:[%s1452 + $0x38] sm:$0xf]
      %v1468 = vld [vmem:[%s1452 + $0x3c] sm:$0xf]
      %v1477 = vunpack.c.l.b16 %v1444
      %v1478 = vunpack.c.l.b16 %v1445
      %v1479 = vunpack.c.l.b16 %v1446
      %v1480 = vunpack.c.l.b16 %v1447
      %v1481 = vunpack.c.l.b16 %v1448
      %v1482 = vunpack.c.l.b16 %v1449
      %v1483 = vunpack.c.l.b16 %v1450
      %v1484 = vunpack.c.l.b16 %v1451
      %v1485 = vpack.c.b16 %v1478, %v1477
      %v1486 = vpack.c.b16 %v1480, %v1479
      %v1487 = vpack.c.b16 %v1482, %v1481
      %v1488 = vpack.c.b16 %v1484, %v1483
      %v1509 = vunpack.c.l.b16 %v1453
      %v1510 = vunpack.c.l.b16 %v1454
      %v1511 = vunpack.c.l.b16 %v1455
      %v1512 = vunpack.c.l.b16 %v1456
      %v1513 = vunpack.c.l.b16 %v1457
      %v1514 = vunpack.c.l.b16 %v1458
      %v1515 = vunpack.c.l.b16 %v1459
      %v1516 = vunpack.c.l.b16 %v1460
      %v1517 = vunpack.c.l.b16 %v1461
      %v1518 = vunpack.c.l.b16 %v1462
      %v1519 = vunpack.c.l.b16 %v1463
      %v1520 = vunpack.c.l.b16 %v1464
      %v1521 = vunpack.c.l.b16 %v1465
      %v1522 = vunpack.c.l.b16 %v1466
      %v1523 = vunpack.c.l.b16 %v1467
      %v1524 = vunpack.c.l.b16 %v1468
      %v1525 = vpack.c.b16 %v1510, %v1509
      %v1526 = vpack.c.b16 %v1512, %v1511
      %v1527 = vpack.c.b16 %v1514, %v1513
      %v1528 = vpack.c.b16 %v1516, %v1515
      %v1529 = vpack.c.b16 %v1518, %v1517
      %v1530 = vpack.c.b16 %v1520, %v1519
      %v1531 = vpack.c.b16 %v1522, %v1521
      %v1532 = vpack.c.b16 %v1524, %v1523
      %1541 = vmatprep.subr.bf16.mxu0 0
      %1542 = vmatpush1.bf16.msra.mxu0 %v1525
      %1543 = vmatprep.subr.bf16.mxu0 0
      %1544 = vmatpush1.bf16.msra.mxu0 %v1526
      %1545 = vmatprep.subr.bf16.mxu0 0
      %1546 = vmatpush1.bf16.msra.mxu0 %v1527
      %1547 = vmatprep.subr.bf16.mxu0 0
      %1548 = vmatpush1.bf16.msra.mxu0 %v1528
      %1549 = vmatprep.subr.bf16.mxu0 0
      %1550 = vmatpush1.bf16.msra.mxu0 %v1529
      %1551 = vmatprep.subr.bf16.mxu0 0
      %1552 = vmatpush1.bf16.msra.mxu0 %v1530
      %1553 = vmatprep.subr.bf16.mxu0 0
      %1554 = vmatpush1.bf16.msra.mxu0 %v1531
      %1555 = vmatprep.subr.bf16.mxu0 0
      %1556 = vmatpush1.bf16.msra.mxu0 %v1532
      %1557 = vmatprep.subr.bf16.mxu0 0
      %1558 = vmatpush1.bf16.msra.mxu0 0
      %1559 = vmatprep.subr.bf16.mxu0 0
      %1560 = vmatpush1.bf16.msra.mxu0 0
      %1561 = vmatprep.subr.bf16.mxu0 0
      %1562 = vmatpush1.bf16.msra.mxu0 0
      %1563 = vmatprep.subr.bf16.mxu0 0
      %1564 = vmatpush1.bf16.msra.mxu0 0
      %1565 = vmatprep.subr.bf16.mxu0 0
      %1566 = vmatpush1.bf16.msra.mxu0 0
      %1567 = vmatprep.subr.bf16.mxu0 0
      %1568 = vmatpush1.bf16.msra.mxu0 0
      %1569 = vmatprep.subr.bf16.mxu0 0
      %1570 = vmatpush1.bf16.msra.mxu0 0
      %1571 = vmatprep.subr.bf16.mxu0 0
      %1572 = vmatpush1.bf16.msra.mxu0 0
      %1573 = vmatprep.mubr.bf16.mxu0 0
      %1574 = vmatmul.mubr.bf16.gmra.mrb[0].mxu0 %v1485
      %v1575 = vpop.f32.mrb[0].mxu0
      %v1576 = vadd.f32 0.0, %v1575
      %v1577 = vpop.f32.mrb[0].mxu0
      %v1578 = vpop.f32.mrb[0].mxu0
      %v1579 = vadd.f32 0.0, %v1578
      %v1580 = vpop.f32.mrb[0].mxu0
      %1581 = vmatprep.mubr.bf16.mxu0 0
      %1582 = vmatmul.mubr.bf16.gmra.mrb[0].mxu0 %v1486
      %v1583 = vpop.f32.mrb[0].mxu0
      %v1584 = vadd.f32 0.0, %v1583
      %v1585 = vpop.f32.mrb[0].mxu0
      %v1586 = vpop.f32.mrb[0].mxu0
      %v1587 = vadd.f32 0.0, %v1586
      %v1588 = vpop.f32.mrb[0].mxu0
      %1589 = vmatprep.mubr.bf16.mxu0 0
      %1590 = vmatmul.mubr.bf16.gmra.mrb[0].mxu0 %v1487
      %v1591 = vpop.f32.mrb[0].mxu0
      %v1592 = vadd.f32 0.0, %v1591
      %v1593 = vpop.f32.mrb[0].mxu0
      %v1594 = vpop.f32.mrb[0].mxu0
      %v1595 = vadd.f32 0.0, %v1594
      %v1596 = vpop.f32.mrb[0].mxu0
      %1597 = vmatprep.mubr.bf16.mxu0 0
      %1598 = vmatmul.mubr.bf16.gmra.mrb[0].mxu0 %v1488
      %v1599 = vpop.f32.mrb[0].mxu0
      %v1600 = vadd.f32 0.0, %v1599
      %v1601 = vpop.f32.mrb[0].mxu0
      %v1602 = vpop.f32.mrb[0].mxu0
      %v1603 = vadd.f32 0.0, %v1602
      %v1604 = vpop.f32.mrb[0].mxu0
      %1605 = vdwg.mxu0
      %v1606 = vadd.f32 %v1435, %v1576
      %v1607 = vadd.f32 %v1436, %v1579
      %v1608 = vadd.f32 %v1437, %v1584
      %v1609 = vadd.f32 %v1438, %v1587
      %v1610 = vadd.f32 %v1439, %v1592
      %v1611 = vadd.f32 %v1440, %v1595
      %v1612 = vadd.f32 %v1441, %v1600
      %v1613 = vadd.f32 %v1442, %v1603
      %v1614 = vld [vmem:[%s1443] sm:$0xf]
      %v1615 = vld [vmem:[%s1443 + $0x4] sm:$0xf]
      %v1616 = vld [vmem:[%s1443 + $0x8] sm:$0x1]
      %v1617 = vld [vmem:[%s1443 + $0xc] sm:$0xf]
      %v1618 = vld [vmem:[%s1443 + $0x10] sm:$0xf]
      %v1619 = vld [vmem:[%s1443 + $0x14] sm:$0x1]
      %v1620 = vld [vmem:[%s1443 + $0x18] sm:$0xf]
      %v1621 = vld [vmem:[%s1443 + $0x1c] sm:$0xf]
      %v1622 = vld [vmem:[%s1443 + $0x20] sm:$0x1]
      %v1623 = vld [vmem:[%s1443 + $0x24] sm:$0xf]
      %v1624 = vld [vmem:[%s1443 + $0x28] sm:$0xf]
      %v1625 = vld [vmem:[%s1443 + $0x2c] sm:$0x1]
      %v1627 = vshrl.u32 %v1614, 16
      %v1629 = vrot.slane %v1627, 4
      %v1630 = vshll.u32 %v1614, 16
      %v1632 = vrot.slane %v1630, 5
      %v1633 = vor.u32 %v1629, %v1632
      %v1634 = vrot.slane %v1633, 4
      %v1636 = vshll.u32 %v1615, 16
      %v1638 = vrot.slane %v1636, 5
      %v1639 = vsel %vm866, %v1634, %v1638
      %v1640 = vshrl.u32 %v1615, 16
      %v1642 = vrot.slane %v1640, 4
      %v1643 = vor.u32 %v1642, %v1638
      %v1644 = vrot.slane %v1643, 4
      %v1646 = vshll.u32 %v1616, 16
      %v1648 = vrot.slane %v1646, 5
      %v1649 = vsel %vm866, %v1644, %v1648
      %v1651 = vshrl.u32 %v1617, 16
      %v1653 = vrot.slane %v1651, 4
      %v1654 = vshll.u32 %v1617, 16
      %v1656 = vrot.slane %v1654, 5
      %v1657 = vor.u32 %v1653, %v1656
      %v1658 = vrot.slane %v1657, 4
      %v1660 = vshll.u32 %v1618, 16
      %v1662 = vrot.slane %v1660, 5
      %v1663 = vsel %vm866, %v1658, %v1662
      %v1664 = vshrl.u32 %v1618, 16
      %v1666 = vrot.slane %v1664, 4
      %v1667 = vor.u32 %v1666, %v1662
      %v1668 = vrot.slane %v1667, 4
      %v1670 = vshll.u32 %v1619, 16
      %v1672 = vrot.slane %v1670, 5
      %v1673 = vsel %vm866, %v1668, %v1672
      %v1675 = vshrl.u32 %v1620, 16
      %v1677 = vrot.slane %v1675, 4
      %v1678 = vshll.u32 %v1620, 16
      %v1680 = vrot.slane %v1678, 5
      %v1681 = vor.u32 %v1677, %v1680
      %v1682 = vrot.slane %v1681, 4
      %v1684 = vshll.u32 %v1621, 16
      %v1686 = vrot.slane %v1684, 5
      %v1687 = vsel %vm866, %v1682, %v1686
      %v1688 = vshrl.u32 %v1621, 16
      %v1690 = vrot.slane %v1688, 4
      %v1691 = vor.u32 %v1690, %v1686
      %v1692 = vrot.slane %v1691, 4
      %v1694 = vshll.u32 %v1622, 16
      %v1696 = vrot.slane %v1694, 5
      %v1697 = vsel %vm866, %v1692, %v1696
      %v1699 = vshrl.u32 %v1623, 16
      %v1701 = vrot.slane %v1699, 4
      %v1702 = vshll.u32 %v1623, 16
      %v1704 = vrot.slane %v1702, 5
      %v1705 = vor.u32 %v1701, %v1704
      %v1706 = vrot.slane %v1705, 4
      %v1708 = vshll.u32 %v1624, 16
      %v1710 = vrot.slane %v1708, 5
      %v1711 = vsel %vm866, %v1706, %v1710
      %v1712 = vshrl.u32 %v1624, 16
      %v1714 = vrot.slane %v1712, 4
      %v1715 = vor.u32 %v1714, %v1710
      %v1716 = vrot.slane %v1715, 4
      %v1718 = vshll.u32 %v1625, 16
      %v1720 = vrot.slane %v1718, 5
      %v1721 = vsel %vm866, %v1716, %v1720
      %s1722 = scalar_lea.vmem %s3, 256
      %v1723 = vld [vmem:[%s1722] sm:$0xf]
      %v1724 = vld [vmem:[%s1722 + $0x4] sm:$0xf]
      %v1725 = vld [vmem:[%s1722 + $0x8] sm:$0xf]
      %v1726 = vld [vmem:[%s1722 + $0xc] sm:$0xf]
      %v1727 = vld [vmem:[%s1722 + $0x10] sm:$0xf]
      %v1728 = vld [vmem:[%s1722 + $0x14] sm:$0xf]
      %v1729 = vld [vmem:[%s1722 + $0x18] sm:$0xf]
      %v1730 = vld [vmem:[%s1722 + $0x1c] sm:$0xf]
      %v1731 = vld [vmem:[%s1722 + $0x20] sm:$0xf]
      %v1732 = vld [vmem:[%s1722 + $0x24] sm:$0xf]
      %v1733 = vld [vmem:[%s1722 + $0x28] sm:$0xf]
      %v1734 = vld [vmem:[%s1722 + $0x2c] sm:$0xf]
      %v1735 = vld [vmem:[%s1722 + $0x30] sm:$0xf]
      %v1736 = vld [vmem:[%s1722 + $0x34] sm:$0xf]
      %v1737 = vld [vmem:[%s1722 + $0x38] sm:$0xf]
      %v1738 = vld [vmem:[%s1722 + $0x3c] sm:$0xf]
      %v1739 = vunpack.c.l.b16 %v1639
      %v1740 = vunpack.c.l.b16 %v1649
      %v1741 = vunpack.c.l.b16 %v1663
      %v1742 = vunpack.c.l.b16 %v1673
      %v1743 = vunpack.c.l.b16 %v1687
      %v1744 = vunpack.c.l.b16 %v1697
      %v1745 = vunpack.c.l.b16 %v1711
      %v1746 = vunpack.c.l.b16 %v1721
      %v1747 = vpack.c.b16 %v1740, %v1739
      %v1748 = vpack.c.b16 %v1742, %v1741
      %v1749 = vpack.c.b16 %v1744, %v1743
      %v1750 = vpack.c.b16 %v1746, %v1745
      %v1771 = vunpack.c.l.b16 %v1723
      %v1772 = vunpack.c.l.b16 %v1724
      %v1773 = vunpack.c.l.b16 %v1725
      %v1774 = vunpack.c.l.b16 %v1726
      %v1775 = vunpack.c.l.b16 %v1727
      %v1776 = vunpack.c.l.b16 %v1728
      %v1777 = vunpack.c.l.b16 %v1729
      %v1778 = vunpack.c.l.b16 %v1730
      %v1779 = vunpack.c.l.b16 %v1731
      %v1780 = vunpack.c.l.b16 %v1732
      %v1781 = vunpack.c.l.b16 %v1733
      %v1782 = vunpack.c.l.b16 %v1734
      %v1783 = vunpack.c.l.b16 %v1735
      %v1784 = vunpack.c.l.b16 %v1736
      %v1785 = vunpack.c.l.b16 %v1737
      %v1786 = vunpack.c.l.b16 %v1738
      %v1787 = vpack.c.b16 %v1772, %v1771
      %v1788 = vpack.c.b16 %v1774, %v1773
      %v1789 = vpack.c.b16 %v1776, %v1775
      %v1790 = vpack.c.b16 %v1778, %v1777
      %v1791 = vpack.c.b16 %v1780, %v1779
      %v1792 = vpack.c.b16 %v1782, %v1781
      %v1793 = vpack.c.b16 %v1784, %v1783
      %v1794 = vpack.c.b16 %v1786, %v1785
      %1803 = vmatprep.subr.bf16.mxu0 0
      %1804 = vmatpush1.bf16.msra.mxu0 %v1787
      %1805 = vmatprep.subr.bf16.mxu0 0
      %1806 = vmatpush1.bf16.msra.mxu0 %v1788
      %1807 = vmatprep.subr.bf16.mxu0 0
      %1808 = vmatpush1.bf16.msra.mxu0 %v1789
      %1809 = vmatprep.subr.bf16.mxu0 0
      %1810 = vmatpush1.bf16.msra.mxu0 %v1790
      %1811 = vmatprep.subr.bf16.mxu0 0
      %1812 = vmatpush1.bf16.msra.mxu0 %v1791
      %1813 = vmatprep.subr.bf16.mxu0 0
      %1814 = vmatpush1.bf16.msra.mxu0 %v1792
      %1815 = vmatprep.subr.bf16.mxu0 0
      %1816 = vmatpush1.bf16.msra.mxu0 %v1793
      %1817 = vmatprep.subr.bf16.mxu0 0
      %1818 = vmatpush1.bf16.msra.mxu0 %v1794
      %1819 = vmatprep.subr.bf16.mxu0 0
      %1820 = vmatpush1.bf16.msra.mxu0 0
      %1821 = vmatprep.subr.bf16.mxu0 0
      %1822 = vmatpush1.bf16.msra.mxu0 0
      %1823 = vmatprep.subr.bf16.mxu0 0
      %1824 = vmatpush1.bf16.msra.mxu0 0
      %1825 = vmatprep.subr.bf16.mxu0 0
      %1826 = vmatpush1.bf16.msra.mxu0 0
      %1827 = vmatprep.subr.bf16.mxu0 0
      %1828 = vmatpush1.bf16.msra.mxu0 0
      %1829 = vmatprep.subr.bf16.mxu0 0
      %1830 = vmatpush1.bf16.msra.mxu0 0
      %1831 = vmatprep.subr.bf16.mxu0 0
      %1832 = vmatpush1.bf16.msra.mxu0 0
      %1833 = vmatprep.subr.bf16.mxu0 0
      %1834 = vmatpush1.bf16.msra.mxu0 0
      %1835 = vmatprep.mubr.bf16.mxu0 0
      %1836 = vmatmul.mubr.bf16.gmra.mrb[0].mxu0 %v1747
      %v1837 = vpop.f32.mrb[0].mxu0
      %v1838 = vadd.f32 0.0, %v1837
      %v1839 = vpop.f32.mrb[0].mxu0
      %v1840 = vpop.f32.mrb[0].mxu0
      %v1841 = vadd.f32 0.0, %v1840
      %v1842 = vpop.f32.mrb[0].mxu0
      %1843 = vmatprep.mubr.bf16.mxu0 0
      %1844 = vmatmul.mubr.bf16.gmra.mrb[0].mxu0 %v1748
      %v1845 = vpop.f32.mrb[0].mxu0
      %v1846 = vadd.f32 0.0, %v1845
      %v1847 = vpop.f32.mrb[0].mxu0
      %v1848 = vpop.f32.mrb[0].mxu0
      %v1849 = vadd.f32 0.0, %v1848
      %v1850 = vpop.f32.mrb[0].mxu0
      %1851 = vmatprep.mubr.bf16.mxu0 0
      %1852 = vmatmul.mubr.bf16.gmra.mrb[0].mxu0 %v1749
      %v1853 = vpop.f32.mrb[0].mxu0
      %v1854 = vadd.f32 0.0, %v1853
      %v1855 = vpop.f32.mrb[0].mxu0
      %v1856 = vpop.f32.mrb[0].mxu0
      %v1857 = vadd.f32 0.0, %v1856
      %v1858 = vpop.f32.mrb[0].mxu0
      %1859 = vmatprep.mubr.bf16.mxu0 0
      %1860 = vmatmul.mubr.bf16.gmra.mrb[0].mxu0 %v1750
      %v1861 = vpop.f32.mrb[0].mxu0
      %v1862 = vadd.f32 0.0, %v1861
      %v1863 = vpop.f32.mrb[0].mxu0
      %v1864 = vpop.f32.mrb[0].mxu0
      %v1865 = vadd.f32 0.0, %v1864
      %v1866 = vpop.f32.mrb[0].mxu0
      %1867 = vdwg.mxu0
      %v1868 = vadd.f32 %v1606, %v1838
      %v1869 = vadd.f32 %v1607, %v1841
      %v1870 = vadd.f32 %v1608, %v1846
      %v1871 = vadd.f32 %v1609, %v1849
      %v1872 = vadd.f32 %v1610, %v1854
      %v1873 = vadd.f32 %v1611, %v1857
      %v1874 = vadd.f32 %v1612, %v1862
      %v1875 = vadd.f32 %v1613, %v1865
      %v1876 = vld [vmem:[%s1443] sm:$0xe]
      %v1877 = vld [vmem:[%s1443 + $0xc] sm:$0xe]
      %v1878 = vld [vmem:[%s1443 + $0x18] sm:$0xe]
      %v1879 = vld [vmem:[%s1443 + $0x24] sm:$0xe]
      %v1892 = vrot.slane %v1876, 5
      %v1893 = vrot.slane %v1892, 4
      %v1894 = vrot.slane %v1615, 5
      %v1895 = vsel %vm1260, %v1893, %v1894
      %v1896 = vrot.slane %v1894, 4
      %v1897 = vrot.slane %v1616, 5
      %v1898 = vsel %vm1260, %v1896, %v1897
      %v1899 = vrot.slane %v1877, 5
      %v1900 = vrot.slane %v1899, 4
      %v1901 = vrot.slane %v1618, 5
      %v1902 = vsel %vm1260, %v1900, %v1901
      %v1903 = vrot.slane %v1901, 4
      %v1904 = vrot.slane %v1619, 5
      %v1905 = vsel %vm1260, %v1903, %v1904
      %v1906 = vrot.slane %v1878, 5
      %v1907 = vrot.slane %v1906, 4
      %v1908 = vrot.slane %v1621, 5
      %v1909 = vsel %vm1260, %v1907, %v1908
      %v1910 = vrot.slane %v1908, 4
      %v1911 = vrot.slane %v1622, 5
      %v1912 = vsel %vm1260, %v1910, %v1911
      %v1913 = vrot.slane %v1879, 5
      %v1914 = vrot.slane %v1913, 4
      %v1915 = vrot.slane %v1624, 5
      %v1916 = vsel %vm1260, %v1914, %v1915
      %v1917 = vrot.slane %v1915, 4
      %v1918 = vrot.slane %v1625, 5
      %v1919 = vsel %vm1260, %v1917, %v1918
      %s1920 = scalar_lea.vmem %s3, 320
      %v1921 = vld [vmem:[%s1920] sm:$0xf]
      %v1922 = vld [vmem:[%s1920 + $0x4] sm:$0xf]
      %v1923 = vld [vmem:[%s1920 + $0x8] sm:$0xf]
      %v1924 = vld [vmem:[%s1920 + $0xc] sm:$0xf]
      %v1925 = vld [vmem:[%s1920 + $0x10] sm:$0xf]
      %v1926 = vld [vmem:[%s1920 + $0x14] sm:$0xf]
      %v1927 = vld [vmem:[%s1920 + $0x18] sm:$0xf]
      %v1928 = vld [vmem:[%s1920 + $0x1c] sm:$0xf]
      %v1929 = vld [vmem:[%s1920 + $0x20] sm:$0xf]
      %v1930 = vld [vmem:[%s1920 + $0x24] sm:$0xf]
      %v1931 = vld [vmem:[%s1920 + $0x28] sm:$0xf]
      %v1932 = vld [vmem:[%s1920 + $0x2c] sm:$0xf]
      %v1933 = vld [vmem:[%s1920 + $0x30] sm:$0xf]
      %v1934 = vld [vmem:[%s1920 + $0x34] sm:$0xf]
      %v1935 = vld [vmem:[%s1920 + $0x38] sm:$0xf]
      %v1936 = vld [vmem:[%s1920 + $0x3c] sm:$0xf]
      %v1937 = vunpack.c.l.b16 %v1895
      %v1938 = vunpack.c.l.b16 %v1898
      %v1939 = vunpack.c.l.b16 %v1902
      %v1940 = vunpack.c.l.b16 %v1905
      %v1941 = vunpack.c.l.b16 %v1909
      %v1942 = vunpack.c.l.b16 %v1912
      %v1943 = vunpack.c.l.b16 %v1916
      %v1944 = vunpack.c.l.b16 %v1919
      %v1945 = vpack.c.b16 %v1938, %v1937
      %v1946 = vpack.c.b16 %v1940, %v1939
      %v1947 = vpack.c.b16 %v1942, %v1941
      %v1948 = vpack.c.b16 %v1944, %v1943
      %v1969 = vunpack.c.l.b16 %v1921
      %v1970 = vunpack.c.l.b16 %v1922
      %v1971 = vunpack.c.l.b16 %v1923
      %v1972 = vunpack.c.l.b16 %v1924
      %v1973 = vunpack.c.l.b16 %v1925
      %v1974 = vunpack.c.l.b16 %v1926
      %v1975 = vunpack.c.l.b16 %v1927
      %v1976 = vunpack.c.l.b16 %v1928
      %v1977 = vunpack.c.l.b16 %v1929
      %v1978 = vunpack.c.l.b16 %v1930
      %v1979 = vunpack.c.l.b16 %v1931
      %v1980 = vunpack.c.l.b16 %v1932
      %v1981 = vunpack.c.l.b16 %v1933
      %v1982 = vunpack.c.l.b16 %v1934
      %v1983 = vunpack.c.l.b16 %v1935
      %v1984 = vunpack.c.l.b16 %v1936
      %v1985 = vpack.c.b16 %v1970, %v1969
      %v1986 = vpack.c.b16 %v1972, %v1971
      %v1987 = vpack.c.b16 %v1974, %v1973
      %v1988 = vpack.c.b16 %v1976, %v1975
      %v1989 = vpack.c.b16 %v1978, %v1977
      %v1990 = vpack.c.b16 %v1980, %v1979
      %v1991 = vpack.c.b16 %v1982, %v1981
      %v1992 = vpack.c.b16 %v1984, %v1983
      %2001 = vmatprep.subr.bf16.mxu0 0
      %2002 = vmatpush1.bf16.msra.mxu0 %v1985
      %2003 = vmatprep.subr.bf16.mxu0 0
      %2004 = vmatpush1.bf16.msra.mxu0 %v1986
      %2005 = vmatprep.subr.bf16.mxu0 0
      %2006 = vmatpush1.bf16.msra.mxu0 %v1987
      %2007 = vmatprep.subr.bf16.mxu0 0
      %2008 = vmatpush1.bf16.msra.mxu0 %v1988
      %2009 = vmatprep.subr.bf16.mxu0 0
      %2010 = vmatpush1.bf16.msra.mxu0 %v1989
      %2011 = vmatprep.subr.bf16.mxu0 0
      %2012 = vmatpush1.bf16.msra.mxu0 %v1990
      %2013 = vmatprep.subr.bf16.mxu0 0
      %2014 = vmatpush1.bf16.msra.mxu0 %v1991
      %2015 = vmatprep.subr.bf16.mxu0 0
      %2016 = vmatpush1.bf16.msra.mxu0 %v1992
      %2017 = vmatprep.subr.bf16.mxu0 0
      %2018 = vmatpush1.bf16.msra.mxu0 0
      %2019 = vmatprep.subr.bf16.mxu0 0
      %2020 = vmatpush1.bf16.msra.mxu0 0
      %2021 = vmatprep.subr.bf16.mxu0 0
      %2022 = vmatpush1.bf16.msra.mxu0 0
      %2023 = vmatprep.subr.bf16.mxu0 0
      %2024 = vmatpush1.bf16.msra.mxu0 0
      %2025 = vmatprep.subr.bf16.mxu0 0
      %2026 = vmatpush1.bf16.msra.mxu0 0
      %2027 = vmatprep.subr.bf16.mxu0 0
      %2028 = vmatpush1.bf16.msra.mxu0 0
      %2029 = vmatprep.subr.bf16.mxu0 0
      %2030 = vmatpush1.bf16.msra.mxu0 0
      %2031 = vmatprep.subr.bf16.mxu0 0
      %2032 = vmatpush1.bf16.msra.mxu0 0
      %2033 = vmatprep.mubr.bf16.mxu0 0
      %2034 = vmatmul.mubr.bf16.gmra.mrb[0].mxu0 %v1945
      %v2035 = vpop.f32.mrb[0].mxu0
      %v2036 = vadd.f32 0.0, %v2035
      %v2037 = vpop.f32.mrb[0].mxu0
      %v2038 = vpop.f32.mrb[0].mxu0
      %v2039 = vadd.f32 0.0, %v2038
      %v2040 = vpop.f32.mrb[0].mxu0
      %2041 = vmatprep.mubr.bf16.mxu0 0
      %2042 = vmatmul.mubr.bf16.gmra.mrb[0].mxu0 %v1946
      %v2043 = vpop.f32.mrb[0].mxu0
      %v2044 = vadd.f32 0.0, %v2043
      %v2045 = vpop.f32.mrb[0].mxu0
      %v2046 = vpop.f32.mrb[0].mxu0
      %v2047 = vadd.f32 0.0, %v2046
      %v2048 = vpop.f32.mrb[0].mxu0
      %2049 = vmatprep.mubr.bf16.mxu0 0
      %2050 = vmatmul.mubr.bf16.gmra.mrb[0].mxu0 %v1947
      %v2051 = vpop.f32.mrb[0].mxu0
      %v2052 = vadd.f32 0.0, %v2051
      %v2053 = vpop.f32.mrb[0].mxu0
      %v2054 = vpop.f32.mrb[0].mxu0
      %v2055 = vadd.f32 0.0, %v2054
      %v2056 = vpop.f32.mrb[0].mxu0
      %2057 = vmatprep.mubr.bf16.mxu0 0
      %2058 = vmatmul.mubr.bf16.gmra.mrb[0].mxu0 %v1948
      %v2059 = vpop.f32.mrb[0].mxu0
      %v2060 = vadd.f32 0.0, %v2059
      %v2061 = vpop.f32.mrb[0].mxu0
      %v2062 = vpop.f32.mrb[0].mxu0
      %v2063 = vadd.f32 0.0, %v2062
      %v2064 = vpop.f32.mrb[0].mxu0
      %2065 = vdwg.mxu0
      %v2066 = vadd.f32 %v1868, %v2036
      %v2067 = vadd.f32 %v1869, %v2039
      %v2068 = vadd.f32 %v1870, %v2044
      %v2069 = vadd.f32 %v1871, %v2047
      %v2070 = vadd.f32 %v1872, %v2052
      %v2071 = vadd.f32 %v1873, %v2055
      %v2072 = vadd.f32 %v1874, %v2060
      %v2073 = vadd.f32 %v1875, %v2063
      %s2074 = scalar_lea.vmem [#allocation3], 24
      %v2075 = vld [vmem:[%s2074] sm:$0xf]
      %v2076 = vld [vmem:[%s2074 + $0x4] sm:$0xf]
      %v2077 = vld [vmem:[%s2074 + $0xc] sm:$0xf]
      %v2078 = vld [vmem:[%s2074 + $0x10] sm:$0xf]
      %v2079 = vld [vmem:[%s2074 + $0x18] sm:$0xf]
      %v2080 = vld [vmem:[%s2074 + $0x1c] sm:$0xf]
      %v2081 = vld [vmem:[%s2074 + $0x24] sm:$0xf]
      %v2082 = vld [vmem:[%s2074 + $0x28] sm:$0xf]
      %s2083 = scalar_lea.vmem %s3, 384
      %v2084 = vld [vmem:[%s2083] sm:$0xf]
      %v2085 = vld [vmem:[%s2083 + $0x4] sm:$0xf]
      %v2086 = vld [vmem:[%s2083 + $0x8] sm:$0xf]
      %v2087 = vld [vmem:[%s2083 + $0xc] sm:$0xf]
      %v2088 = vld [vmem:[%s2083 + $0x10] sm:$0xf]
      %v2089 = vld [vmem:[%s2083 + $0x14] sm:$0xf]
      %v2090 = vld [vmem:[%s2083 + $0x18] sm:$0xf]
      %v2091 = vld [vmem:[%s2083 + $0x1c] sm:$0xf]
      %v2092 = vld [vmem:[%s2083 + $0x20] sm:$0xf]
      %v2093 = vld [vmem:[%s2083 + $0x24] sm:$0xf]
      %v2094 = vld [vmem:[%s2083 + $0x28] sm:$0xf]
      %v2095 = vld [vmem:[%s2083 + $0x2c] sm:$0xf]
      %v2096 = vld [vmem:[%s2083 + $0x30] sm:$0xf]
      %v2097 = vld [vmem:[%s2083 + $0x34] sm:$0xf]
      %v2098 = vld [vmem:[%s2083 + $0x38] sm:$0xf]
      %v2099 = vld [vmem:[%s2083 + $0x3c] sm:$0xf]
      %v2108 = vunpack.c.l.b16 %v2075
      %v2109 = vunpack.c.l.b16 %v2076
      %v2110 = vunpack.c.l.b16 %v2077
      %v2111 = vunpack.c.l.b16 %v2078
      %v2112 = vunpack.c.l.b16 %v2079
      %v2113 = vunpack.c.l.b16 %v2080
      %v2114 = vunpack.c.l.b16 %v2081
      %v2115 = vunpack.c.l.b16 %v2082
      %v2116 = vpack.c.b16 %v2109, %v2108
      %v2117 = vpack.c.b16 %v2111, %v2110
      %v2118 = vpack.c.b16 %v2113, %v2112
      %v2119 = vpack.c.b16 %v2115, %v2114
      %v2140 = vunpack.c.l.b16 %v2084
      %v2141 = vunpack.c.l.b16 %v2085
      %v2142 = vunpack.c.l.b16 %v2086
      %v2143 = vunpack.c.l.b16 %v2087
      %v2144 = vunpack.c.l.b16 %v2088
      %v2145 = vunpack.c.l.b16 %v2089
      %v2146 = vunpack.c.l.b16 %v2090
      %v2147 = vunpack.c.l.b16 %v2091
      %v2148 = vunpack.c.l.b16 %v2092
      %v2149 = vunpack.c.l.b16 %v2093
      %v2150 = vunpack.c.l.b16 %v2094
      %v2151 = vunpack.c.l.b16 %v2095
      %v2152 = vunpack.c.l.b16 %v2096
      %v2153 = vunpack.c.l.b16 %v2097
      %v2154 = vunpack.c.l.b16 %v2098
      %v2155 = vunpack.c.l.b16 %v2099
      %v2156 = vpack.c.b16 %v2141, %v2140
      %v2157 = vpack.c.b16 %v2143, %v2142
      %v2158 = vpack.c.b16 %v2145, %v2144
      %v2159 = vpack.c.b16 %v2147, %v2146
      %v2160 = vpack.c.b16 %v2149, %v2148
      %v2161 = vpack.c.b16 %v2151, %v2150
      %v2162 = vpack.c.b16 %v2153, %v2152
      %v2163 = vpack.c.b16 %v2155, %v2154
      %2172 = vmatprep.subr.bf16.mxu0 0
      %2173 = vmatpush1.bf16.msra.mxu0 %v2156
      %2174 = vmatprep.subr.bf16.mxu0 0
      %2175 = vmatpush1.bf16.msra.mxu0 %v2157
      %2176 = vmatprep.subr.bf16.mxu0 0
      %2177 = vmatpush1.bf16.msra.mxu0 %v2158
      %2178 = vmatprep.subr.bf16.mxu0 0
      %2179 = vmatpush1.bf16.msra.mxu0 %v2159
      %2180 = vmatprep.subr.bf16.mxu0 0
      %2181 = vmatpush1.bf16.msra.mxu0 %v2160
      %2182 = vmatprep.subr.bf16.mxu0 0
      %2183 = vmatpush1.bf16.msra.mxu0 %v2161
      %2184 = vmatprep.subr.bf16.mxu0 0
      %2185 = vmatpush1.bf16.msra.mxu0 %v2162
      %2186 = vmatprep.subr.bf16.mxu0 0
      %2187 = vmatpush1.bf16.msra.mxu0 %v2163
      %2188 = vmatprep.subr.bf16.mxu0 0
      %2189 = vmatpush1.bf16.msra.mxu0 0
      %2190 = vmatprep.subr.bf16.mxu0 0
      %2191 = vmatpush1.bf16.msra.mxu0 0
      %2192 = vmatprep.subr.bf16.mxu0 0
      %2193 = vmatpush1.bf16.msra.mxu0 0
      %2194 = vmatprep.subr.bf16.mxu0 0
      %2195 = vmatpush1.bf16.msra.mxu0 0
      %2196 = vmatprep.subr.bf16.mxu0 0
      %2197 = vmatpush1.bf16.msra.mxu0 0
      %2198 = vmatprep.subr.bf16.mxu0 0
      %2199 = vmatpush1.bf16.msra.mxu0 0
      %2200 = vmatprep.subr.bf16.mxu0 0
      %2201 = vmatpush1.bf16.msra.mxu0 0
      %2202 = vmatprep.subr.bf16.mxu0 0
      %2203 = vmatpush1.bf16.msra.mxu0 0
      %2204 = vmatprep.mubr.bf16.mxu0 0
      %2205 = vmatmul.mubr.bf16.gmra.mrb[0].mxu0 %v2116
      %v2206 = vpop.f32.mrb[0].mxu0
      %v2207 = vadd.f32 0.0, %v2206
      %v2208 = vpop.f32.mrb[0].mxu0
      %v2209 = vpop.f32.mrb[0].mxu0
      %v2210 = vadd.f32 0.0, %v2209
      %v2211 = vpop.f32.mrb[0].mxu0
      %2212 = vmatprep.mubr.bf16.mxu0 0
      %2213 = vmatmul.mubr.bf16.gmra.mrb[0].mxu0 %v2117
      %v2214 = vpop.f32.mrb[0].mxu0
      %v2215 = vadd.f32 0.0, %v2214
      %v2216 = vpop.f32.mrb[0].mxu0
      %v2217 = vpop.f32.mrb[0].mxu0
      %v2218 = vadd.f32 0.0, %v2217
      %v2219 = vpop.f32.mrb[0].mxu0
      %2220 = vmatprep.mubr.bf16.mxu0 0
      %2221 = vmatmul.mubr.bf16.gmra.mrb[0].mxu0 %v2118
      %v2222 = vpop.f32.mrb[0].mxu0
      %v2223 = vadd.f32 0.0, %v2222
      %v2224 = vpop.f32.mrb[0].mxu0
      %v2225 = vpop.f32.mrb[0].mxu0
      %v2226 = vadd.f32 0.0, %v2225
      %v2227 = vpop.f32.mrb[0].mxu0
      %2228 = vmatprep.mubr.bf16.mxu0 0
      %2229 = vmatmul.mubr.bf16.gmra.mrb[0].mxu0 %v2119
      %v2230 = vpop.f32.mrb[0].mxu0
      %v2231 = vadd.f32 0.0, %v2230
      %v2232 = vpop.f32.mrb[0].mxu0
      %v2233 = vpop.f32.mrb[0].mxu0
      %v2234 = vadd.f32 0.0, %v2233
      %v2235 = vpop.f32.mrb[0].mxu0
      %2236 = vdwg.mxu0
      %v2237 = vadd.f32 %v2066, %v2207
      %v2238 = vadd.f32 %v2067, %v2210
      %v2239 = vadd.f32 %v2068, %v2215
      %v2240 = vadd.f32 %v2069, %v2218
      %v2241 = vadd.f32 %v2070, %v2223
      %v2242 = vadd.f32 %v2071, %v2226
      %v2243 = vadd.f32 %v2072, %v2231
      %v2244 = vadd.f32 %v2073, %v2234
      %v2245 = vld [vmem:[%s2074] sm:$0xf]
      %v2246 = vld [vmem:[%s2074 + $0x4] sm:$0xf]
      %v2247 = vld [vmem:[%s2074 + $0x8] sm:$0x1]
      %v2248 = vld [vmem:[%s2074 + $0xc] sm:$0xf]
      %v2249 = vld [vmem:[%s2074 + $0x10] sm:$0xf]
      %v2250 = vld [vmem:[%s2074 + $0x14] sm:$0x1]
      %v2251 = vld [vmem:[%s2074 + $0x18] sm:$0xf]
      %v2252 = vld [vmem:[%s2074 + $0x1c] sm:$0xf]
      %v2253 = vld [vmem:[%s2074 + $0x20] sm:$0x1]
      %v2254 = vld [vmem:[%s2074 + $0x24] sm:$0xf]
      %v2255 = vld [vmem:[%s2074 + $0x28] sm:$0xf]
      %v2256 = vld [vmem:[%s2074 + $0x2c] sm:$0x1]
      %v2258 = vshrl.u32 %v2245, 16
      %v2260 = vrot.slane %v2258, 4
      %v2261 = vshll.u32 %v2245, 16
      %v2263 = vrot.slane %v2261, 5
      %v2264 = vor.u32 %v2260, %v2263
      %v2265 = vrot.slane %v2264, 4
      %v2267 = vshll.u32 %v2246, 16
      %v2269 = vrot.slane %v2267, 5
      %v2270 = vsel %vm866, %v2265, %v2269
      %v2271 = vshrl.u32 %v2246, 16
      %v2273 = vrot.slane %v2271, 4
      %v2274 = vor.u32 %v2273, %v2269
      %v2275 = vrot.slane %v2274, 4
      %v2277 = vshll.u32 %v2247, 16
      %v2279 = vrot.slane %v2277, 5
      %v2280 = vsel %vm866, %v2275, %v2279
      %v2282 = vshrl.u32 %v2248, 16
      %v2284 = vrot.slane %v2282, 4
      %v2285 = vshll.u32 %v2248, 16
      %v2287 = vrot.slane %v2285, 5
      %v2288 = vor.u32 %v2284, %v2287
      %v2289 = vrot.slane %v2288, 4
      %v2291 = vshll.u32 %v2249, 16
      %v2293 = vrot.slane %v2291, 5
      %v2294 = vsel %vm866, %v2289, %v2293
      %v2295 = vshrl.u32 %v2249, 16
      %v2297 = vrot.slane %v2295, 4
      %v2298 = vor.u32 %v2297, %v2293
      %v2299 = vrot.slane %v2298, 4
      %v2301 = vshll.u32 %v2250, 16
      %v2303 = vrot.slane %v2301, 5
      %v2304 = vsel %vm866, %v2299, %v2303
      %v2306 = vshrl.u32 %v2251, 16
      %v2308 = vrot.slane %v2306, 4
      %v2309 = vshll.u32 %v2251, 16
      %v2311 = vrot.slane %v2309, 5
      %v2312 = vor.u32 %v2308, %v2311
      %v2313 = vrot.slane %v2312, 4
      %v2315 = vshll.u32 %v2252, 16
      %v2317 = vrot.slane %v2315, 5
      %v2318 = vsel %vm866, %v2313, %v2317
      %v2319 = vshrl.u32 %v2252, 16
      %v2321 = vrot.slane %v2319, 4
      %v2322 = vor.u32 %v2321, %v2317
      %v2323 = vrot.slane %v2322, 4
      %v2325 = vshll.u32 %v2253, 16
      %v2327 = vrot.slane %v2325, 5
      %v2328 = vsel %vm866, %v2323, %v2327
      %v2330 = vshrl.u32 %v2254, 16
      %v2332 = vrot.slane %v2330, 4
      %v2333 = vshll.u32 %v2254, 16
      %v2335 = vrot.slane %v2333, 5
      %v2336 = vor.u32 %v2332, %v2335
      %v2337 = vrot.slane %v2336, 4
      %v2339 = vshll.u32 %v2255, 16
      %v2341 = vrot.slane %v2339, 5
      %v2342 = vsel %vm866, %v2337, %v2341
      %v2343 = vshrl.u32 %v2255, 16
      %v2345 = vrot.slane %v2343, 4
      %v2346 = vor.u32 %v2345, %v2341
      %v2347 = vrot.slane %v2346, 4
      %v2349 = vshll.u32 %v2256, 16
      %v2351 = vrot.slane %v2349, 5
      %v2352 = vsel %vm866, %v2347, %v2351
      %s2353 = scalar_lea.vmem %s3, 448
      %v2354 = vld [vmem:[%s2353] sm:$0xf]
      %v2355 = vld [vmem:[%s2353 + $0x4] sm:$0xf]
      %v2356 = vld [vmem:[%s2353 + $0x8] sm:$0xf]
      %v2357 = vld [vmem:[%s2353 + $0xc] sm:$0xf]
      %v2358 = vld [vmem:[%s2353 + $0x10] sm:$0xf]
      %v2359 = vld [vmem:[%s2353 + $0x14] sm:$0xf]
      %v2360 = vld [vmem:[%s2353 + $0x18] sm:$0xf]
      %v2361 = vld [vmem:[%s2353 + $0x1c] sm:$0xf]
      %v2362 = vld [vmem:[%s2353 + $0x20] sm:$0xf]
      %v2363 = vld [vmem:[%s2353 + $0x24] sm:$0xf]
      %v2364 = vld [vmem:[%s2353 + $0x28] sm:$0xf]
      %v2365 = vld [vmem:[%s2353 + $0x2c] sm:$0xf]
      %v2366 = vld [vmem:[%s2353 + $0x30] sm:$0xf]
      %v2367 = vld [vmem:[%s2353 + $0x34] sm:$0xf]
      %v2368 = vld [vmem:[%s2353 + $0x38] sm:$0xf]
      %v2369 = vld [vmem:[%s2353 + $0x3c] sm:$0xf]
      %v2370 = vunpack.c.l.b16 %v2270
      %v2371 = vunpack.c.l.b16 %v2280
      %v2372 = vunpack.c.l.b16 %v2294
      %v2373 = vunpack.c.l.b16 %v2304
      %v2374 = vunpack.c.l.b16 %v2318
      %v2375 = vunpack.c.l.b16 %v2328
      %v2376 = vunpack.c.l.b16 %v2342
      %v2377 = vunpack.c.l.b16 %v2352
      %v2378 = vpack.c.b16 %v2371, %v2370
      %v2379 = vpack.c.b16 %v2373, %v2372
      %v2380 = vpack.c.b16 %v2375, %v2374
      %v2381 = vpack.c.b16 %v2377, %v2376
      %v2402 = vunpack.c.l.b16 %v2354
      %v2403 = vunpack.c.l.b16 %v2355
      %v2404 = vunpack.c.l.b16 %v2356
      %v2405 = vunpack.c.l.b16 %v2357
      %v2406 = vunpack.c.l.b16 %v2358
      %v2407 = vunpack.c.l.b16 %v2359
      %v2408 = vunpack.c.l.b16 %v2360
      %v2409 = vunpack.c.l.b16 %v2361
      %v2410 = vunpack.c.l.b16 %v2362
      %v2411 = vunpack.c.l.b16 %v2363
      %v2412 = vunpack.c.l.b16 %v2364
      %v2413 = vunpack.c.l.b16 %v2365
      %v2414 = vunpack.c.l.b16 %v2366
      %v2415 = vunpack.c.l.b16 %v2367
      %v2416 = vunpack.c.l.b16 %v2368
      %v2417 = vunpack.c.l.b16 %v2369
      %v2418 = vpack.c.b16 %v2403, %v2402
      %v2419 = vpack.c.b16 %v2405, %v2404
      %v2420 = vpack.c.b16 %v2407, %v2406
      %v2421 = vpack.c.b16 %v2409, %v2408
      %v2422 = vpack.c.b16 %v2411, %v2410
      %v2423 = vpack.c.b16 %v2413, %v2412
      %v2424 = vpack.c.b16 %v2415, %v2414
      %v2425 = vpack.c.b16 %v2417, %v2416
      %2434 = vmatprep.subr.bf16.mxu0 0
      %2435 = vmatpush1.bf16.msra.mxu0 %v2418
      %2436 = vmatprep.subr.bf16.mxu0 0
      %2437 = vmatpush1.bf16.msra.mxu0 %v2419
      %2438 = vmatprep.subr.bf16.mxu0 0
      %2439 = vmatpush1.bf16.msra.mxu0 %v2420
      %2440 = vmatprep.subr.bf16.mxu0 0
      %2441 = vmatpush1.bf16.msra.mxu0 %v2421
      %2442 = vmatprep.subr.bf16.mxu0 0
      %2443 = vmatpush1.bf16.msra.mxu0 %v2422
      %2444 = vmatprep.subr.bf16.mxu0 0
      %2445 = vmatpush1.bf16.msra.mxu0 %v2423
      %2446 = vmatprep.subr.bf16.mxu0 0
      %2447 = vmatpush1.bf16.msra.mxu0 %v2424
      %2448 = vmatprep.subr.bf16.mxu0 0
      %2449 = vmatpush1.bf16.msra.mxu0 %v2425
      %2450 = vmatprep.subr.bf16.mxu0 0
      %2451 = vmatpush1.bf16.msra.mxu0 0
      %2452 = vmatprep.subr.bf16.mxu0 0
      %2453 = vmatpush1.bf16.msra.mxu0 0
      %2454 = vmatprep.subr.bf16.mxu0 0
      %2455 = vmatpush1.bf16.msra.mxu0 0
      %2456 = vmatprep.subr.bf16.mxu0 0
      %2457 = vmatpush1.bf16.msra.mxu0 0
      %2458 = vmatprep.subr.bf16.mxu0 0
      %2459 = vmatpush1.bf16.msra.mxu0 0
      %2460 = vmatprep.subr.bf16.mxu0 0
      %2461 = vmatpush1.bf16.msra.mxu0 0
      %2462 = vmatprep.subr.bf16.mxu0 0
      %2463 = vmatpush1.bf16.msra.mxu0 0
      %2464 = vmatprep.subr.bf16.mxu0 0
      %2465 = vmatpush1.bf16.msra.mxu0 0
      %2466 = vmatprep.mubr.bf16.mxu0 0
      %2467 = vmatmul.mubr.bf16.gmra.mrb[0].mxu0 %v2378
      %v2468 = vpop.f32.mrb[0].mxu0
      %v2469 = vadd.f32 0.0, %v2468
      %v2470 = vpop.f32.mrb[0].mxu0
      %v2471 = vpop.f32.mrb[0].mxu0
      %v2472 = vadd.f32 0.0, %v2471
      %v2473 = vpop.f32.mrb[0].mxu0
      %2474 = vmatprep.mubr.bf16.mxu0 0
      %2475 = vmatmul.mubr.bf16.gmra.mrb[0].mxu0 %v2379
      %v2476 = vpop.f32.mrb[0].mxu0
      %v2477 = vadd.f32 0.0, %v2476
      %v2478 = vpop.f32.mrb[0].mxu0
      %v2479 = vpop.f32.mrb[0].mxu0
      %v2480 = vadd.f32 0.0, %v2479
      %v2481 = vpop.f32.mrb[0].mxu0
      %2482 = vmatprep.mubr.bf16.mxu0 0
      %2483 = vmatmul.mubr.bf16.gmra.mrb[0].mxu0 %v2380
      %v2484 = vpop.f32.mrb[0].mxu0
      %v2485 = vadd.f32 0.0, %v2484
      %v2486 = vpop.f32.mrb[0].mxu0
      %v2487 = vpop.f32.mrb[0].mxu0
      %v2488 = vadd.f32 0.0, %v2487
      %v2489 = vpop.f32.mrb[0].mxu0
      %2490 = vmatprep.mubr.bf16.mxu0 0
      %2491 = vmatmul.mubr.bf16.gmra.mrb[0].mxu0 %v2381
      %v2492 = vpop.f32.mrb[0].mxu0
      %v2493 = vadd.f32 0.0, %v2492
      %v2494 = vpop.f32.mrb[0].mxu0
      %v2495 = vpop.f32.mrb[0].mxu0
      %v2496 = vadd.f32 0.0, %v2495
      %v2497 = vpop.f32.mrb[0].mxu0
      %2498 = vdwg.mxu0
      %v2499 = vadd.f32 %v2237, %v2469
      %v2500 = vadd.f32 %v2238, %v2472
      %v2501 = vadd.f32 %v2239, %v2477
      %v2502 = vadd.f32 %v2240, %v2480
      %v2503 = vadd.f32 %v2241, %v2485
      %v2504 = vadd.f32 %v2242, %v2488
      %v2505 = vadd.f32 %v2243, %v2493
      %v2506 = vadd.f32 %v2244, %v2496
      %v2507 = vld [vmem:[%s2074] sm:$0xe]
      %v2508 = vld [vmem:[%s2074 + $0xc] sm:$0xe]
      %v2509 = vld [vmem:[%s2074 + $0x18] sm:$0xe]
      %v2510 = vld [vmem:[%s2074 + $0x24] sm:$0xe]
      %v2523 = vrot.slane %v2507, 5
      %v2524 = vrot.slane %v2523, 4
      %v2525 = vrot.slane %v2246, 5
      %v2526 = vsel %vm1260, %v2524, %v2525
      %v2527 = vrot.slane %v2525, 4
      %v2528 = vrot.slane %v2247, 5
      %v2529 = vsel %vm1260, %v2527, %v2528
      %v2530 = vrot.slane %v2508, 5
      %v2531 = vrot.slane %v2530, 4
      %v2532 = vrot.slane %v2249, 5
      %v2533 = vsel %vm1260, %v2531, %v2532
      %v2534 = vrot.slane %v2532, 4
      %v2535 = vrot.slane %v2250, 5
      %v2536 = vsel %vm1260, %v2534, %v2535
      %v2537 = vrot.slane %v2509, 5
      %v2538 = vrot.slane %v2537, 4
      %v2539 = vrot.slane %v2252, 5
      %v2540 = vsel %vm1260, %v2538, %v2539
      %v2541 = vrot.slane %v2539, 4
      %v2542 = vrot.slane %v2253, 5
      %v2543 = vsel %vm1260, %v2541, %v2542
      %v2544 = vrot.slane %v2510, 5
      %v2545 = vrot.slane %v2544, 4
      %v2546 = vrot.slane %v2255, 5
      %v2547 = vsel %vm1260, %v2545, %v2546
      %v2548 = vrot.slane %v2546, 4
      %v2549 = vrot.slane %v2256, 5
      %v2550 = vsel %vm1260, %v2548, %v2549
      %s2551 = scalar_lea.vmem %s3, 512
      %v2552 = vld [vmem:[%s2551] sm:$0xf]
      %v2553 = vld [vmem:[%s2551 + $0x4] sm:$0xf]
      %v2554 = vld [vmem:[%s2551 + $0x8] sm:$0xf]
      %v2555 = vld [vmem:[%s2551 + $0xc] sm:$0xf]
      %v2556 = vld [vmem:[%s2551 + $0x10] sm:$0xf]
      %v2557 = vld [vmem:[%s2551 + $0x14] sm:$0xf]
      %v2558 = vld [vmem:[%s2551 + $0x18] sm:$0xf]
      %v2559 = vld [vmem:[%s2551 + $0x1c] sm:$0xf]
      %v2560 = vld [vmem:[%s2551 + $0x20] sm:$0xf]
      %v2561 = vld [vmem:[%s2551 + $0x24] sm:$0xf]
      %v2562 = vld [vmem:[%s2551 + $0x28] sm:$0xf]
      %v2563 = vld [vmem:[%s2551 + $0x2c] sm:$0xf]
      %v2564 = vld [vmem:[%s2551 + $0x30] sm:$0xf]
      %v2565 = vld [vmem:[%s2551 + $0x34] sm:$0xf]
      %v2566 = vld [vmem:[%s2551 + $0x38] sm:$0xf]
      %v2567 = vld [vmem:[%s2551 + $0x3c] sm:$0xf]
      %v2568 = vunpack.c.l.b16 %v2526
      %v2569 = vunpack.c.l.b16 %v2529
      %v2570 = vunpack.c.l.b16 %v2533
      %v2571 = vunpack.c.l.b16 %v2536
      %v2572 = vunpack.c.l.b16 %v2540
      %v2573 = vunpack.c.l.b16 %v2543
      %v2574 = vunpack.c.l.b16 %v2547
      %v2575 = vunpack.c.l.b16 %v2550
      %v2576 = vpack.c.b16 %v2569, %v2568
      %v2577 = vpack.c.b16 %v2571, %v2570
      %v2578 = vpack.c.b16 %v2573, %v2572
      %v2579 = vpack.c.b16 %v2575, %v2574
      %v2600 = vunpack.c.l.b16 %v2552
      %v2601 = vunpack.c.l.b16 %v2553
      %v2602 = vunpack.c.l.b16 %v2554
      %v2603 = vunpack.c.l.b16 %v2555
      %v2604 = vunpack.c.l.b16 %v2556
      %v2605 = vunpack.c.l.b16 %v2557
      %v2606 = vunpack.c.l.b16 %v2558
      %v2607 = vunpack.c.l.b16 %v2559
      %v2608 = vunpack.c.l.b16 %v2560
      %v2609 = vunpack.c.l.b16 %v2561
      %v2610 = vunpack.c.l.b16 %v2562
      %v2611 = vunpack.c.l.b16 %v2563
      %v2612 = vunpack.c.l.b16 %v2564
      %v2613 = vunpack.c.l.b16 %v2565
      %v2614 = vunpack.c.l.b16 %v2566
      %v2615 = vunpack.c.l.b16 %v2567
      %v2616 = vpack.c.b16 %v2601, %v2600
      %v2617 = vpack.c.b16 %v2603, %v2602
      %v2618 = vpack.c.b16 %v2605, %v2604
      %v2619 = vpack.c.b16 %v2607, %v2606
      %v2620 = vpack.c.b16 %v2609, %v2608
      %v2621 = vpack.c.b16 %v2611, %v2610
      %v2622 = vpack.c.b16 %v2613, %v2612
      %v2623 = vpack.c.b16 %v2615, %v2614
      %2632 = vmatprep.subr.bf16.mxu0 0
      %2633 = vmatpush1.bf16.msra.mxu0 %v2616
      %2634 = vmatprep.subr.bf16.mxu0 0
      %2635 = vmatpush1.bf16.msra.mxu0 %v2617
      %2636 = vmatprep.subr.bf16.mxu0 0
      %2637 = vmatpush1.bf16.msra.mxu0 %v2618
      %2638 = vmatprep.subr.bf16.mxu0 0
      %2639 = vmatpush1.bf16.msra.mxu0 %v2619
      %2640 = vmatprep.subr.bf16.mxu0 0
      %2641 = vmatpush1.bf16.msra.mxu0 %v2620
      %2642 = vmatprep.subr.bf16.mxu0 0
      %2643 = vmatpush1.bf16.msra.mxu0 %v2621
      %2644 = vmatprep.subr.bf16.mxu0 0
      %2645 = vmatpush1.bf16.msra.mxu0 %v2622
      %2646 = vmatprep.subr.bf16.mxu0 0
      %2647 = vmatpush1.bf16.msra.mxu0 %v2623
      %2648 = vmatprep.subr.bf16.mxu0 0
      %2649 = vmatpush1.bf16.msra.mxu0 0
      %2650 = vmatprep.subr.bf16.mxu0 0
      %2651 = vmatpush1.bf16.msra.mxu0 0
      %2652 = vmatprep.subr.bf16.mxu0 0
      %2653 = vmatpush1.bf16.msra.mxu0 0
      %2654 = vmatprep.subr.bf16.mxu0 0
      %2655 = vmatpush1.bf16.msra.mxu0 0
      %2656 = vmatprep.subr.bf16.mxu0 0
      %2657 = vmatpush1.bf16.msra.mxu0 0
      %2658 = vmatprep.subr.bf16.mxu0 0
      %2659 = vmatpush1.bf16.msra.mxu0 0
      %2660 = vmatprep.subr.bf16.mxu0 0
      %2661 = vmatpush1.bf16.msra.mxu0 0
      %2662 = vmatprep.subr.bf16.mxu0 0
      %2663 = vmatpush1.bf16.msra.mxu0 0
      %2664 = vmatprep.mubr.bf16.mxu0 0
      %2665 = vmatmul.mubr.bf16.gmra.mrb[0].mxu0 %v2576
      %v2666 = vpop.f32.mrb[0].mxu0
      %v2667 = vadd.f32 0.0, %v2666
      %v2668 = vpop.f32.mrb[0].mxu0
      %v2669 = vpop.f32.mrb[0].mxu0
      %v2670 = vadd.f32 0.0, %v2669
      %v2671 = vpop.f32.mrb[0].mxu0
      %2672 = vmatprep.mubr.bf16.mxu0 0
      %2673 = vmatmul.mubr.bf16.gmra.mrb[0].mxu0 %v2577
      %v2674 = vpop.f32.mrb[0].mxu0
      %v2675 = vadd.f32 0.0, %v2674
      %v2676 = vpop.f32.mrb[0].mxu0
      %v2677 = vpop.f32.mrb[0].mxu0
      %v2678 = vadd.f32 0.0, %v2677
      %v2679 = vpop.f32.mrb[0].mxu0
      %2680 = vmatprep.mubr.bf16.mxu0 0
      %2681 = vmatmul.mubr.bf16.gmra.mrb[0].mxu0 %v2578
      %v2682 = vpop.f32.mrb[0].mxu0
      %v2683 = vadd.f32 0.0, %v2682
      %v2684 = vpop.f32.mrb[0].mxu0
      %v2685 = vpop.f32.mrb[0].mxu0
      %v2686 = vadd.f32 0.0, %v2685
      %v2687 = vpop.f32.mrb[0].mxu0
      %2688 = vmatprep.mubr.bf16.mxu0 0
      %2689 = vmatmul.mubr.bf16.gmra.mrb[0].mxu0 %v2579
      %v2690 = vpop.f32.mrb[0].mxu0
      %v2691 = vadd.f32 0.0, %v2690
      %v2692 = vpop.f32.mrb[0].mxu0
      %v2693 = vpop.f32.mrb[0].mxu0
      %v2694 = vadd.f32 0.0, %v2693
      %v2695 = vpop.f32.mrb[0].mxu0
      %2696 = vdwg.mxu0
      %v2697 = vadd.f32 %v2499, %v2667
      %v2698 = vadd.f32 %v2500, %v2670
      %v2699 = vadd.f32 %v2501, %v2675
      %v2700 = vadd.f32 %v2502, %v2678
      %v2701 = vadd.f32 %v2503, %v2683
      %v2702 = vadd.f32 %v2504, %v2686
      %v2703 = vadd.f32 %v2505, %v2691
      %v2704 = vadd.f32 %v2506, %v2694
      %v2705 = vld [vmem:[%s4] sm:$0x1]
      %v2707 = vlaneseq
      %v2708 = vshrl.u32 %v2707, 7
      %v2709 = vsub.s32 0, %v2708
      %v2710 = vrot.slane %v2705, %v2709
      %v2712 = vadd.f32 %v2697, %v2710
      %v2713 = vadd.f32 %v2698, %v2710
      %v2714 = vadd.f32 %v2699, %v2710
      %v2715 = vadd.f32 %v2700, %v2710
      %v2716 = vadd.f32 %v2701, %v2710
      %v2717 = vadd.f32 %v2702, %v2710
      %v2718 = vadd.f32 %v2703, %v2710
      %v2719 = vadd.f32 %v2704, %v2710
      %v2720 = vmax.f32 %v2712, 0.0
      %v2721 = vmax.f32 %v2713, 0.0
      %v2722 = vmax.f32 %v2714, 0.0
      %v2723 = vmax.f32 %v2715, 0.0
      %v2724 = vmax.f32 %v2716, 0.0
      %v2725 = vmax.f32 %v2717, 0.0
      %v2726 = vmax.f32 %v2718, 0.0
      %v2727 = vmax.f32 %v2719, 0.0
      %v2728 = vpack.c.bf16 %v2721, %v2720
      %v2729 = vpack.c.bf16 %v2723, %v2722
      %v2730 = vpack.c.bf16 %v2725, %v2724
      %v2731 = vpack.c.bf16 %v2727, %v2726
      %v2732 = vld [vmem:[%s5] sm:$0xf]
      %v2733 = vld [vmem:[%s5 + $0x4] sm:$0xf]
      %v2734 = vld [vmem:[%s5 + $0x8] sm:$0xf]
      %v2735 = vld [vmem:[%s5 + $0xc] sm:$0xf]
      %v2736 = vld [vmem:[%s5 + $0x10] sm:$0xf]
      %v2737 = vld [vmem:[%s5 + $0x14] sm:$0xf]
      %v2738 = vld [vmem:[%s5 + $0x18] sm:$0xf]
      %v2739 = vld [vmem:[%s5 + $0x1c] sm:$0xf]
      %v2740 = vld [vmem:[%s5 + $0x20] sm:$0xf]
      %v2741 = vld [vmem:[%s5 + $0x24] sm:$0xf]
      %v2742 = vld [vmem:[%s5 + $0x28] sm:$0xf]
      %v2743 = vld [vmem:[%s5 + $0x2c] sm:$0xf]
      %v2744 = vld [vmem:[%s5 + $0x30] sm:$0xf]
      %v2745 = vld [vmem:[%s5 + $0x34] sm:$0xf]
      %v2746 = vld [vmem:[%s5 + $0x38] sm:$0xf]
      %v2747 = vld [vmem:[%s5 + $0x3c] sm:$0xf]
      %v2748 = vld [vmem:[%s6] sm:$0x1]
      %v2750 = vlaneseq
      %v2751 = vshrl.u32 %v2750, 7
      %v2752 = vsub.s32 0, %v2751
      %v2753 = vrot.slane %v2748, %v2752
      %v2771 = vunpack.c.l.b16 %v2732
      %v2772 = vunpack.c.l.b16 %v2733
      %v2773 = vunpack.c.l.b16 %v2734
      %v2774 = vunpack.c.l.b16 %v2735
      %v2775 = vunpack.c.l.b16 %v2736
      %v2776 = vunpack.c.l.b16 %v2737
      %v2777 = vunpack.c.l.b16 %v2738
      %v2778 = vunpack.c.l.b16 %v2739
      %v2779 = vunpack.c.l.b16 %v2740
      %v2780 = vunpack.c.l.b16 %v2741
      %v2781 = vunpack.c.l.b16 %v2742
      %v2782 = vunpack.c.l.b16 %v2743
      %v2783 = vunpack.c.l.b16 %v2744
      %v2784 = vunpack.c.l.b16 %v2745
      %v2785 = vunpack.c.l.b16 %v2746
      %v2786 = vunpack.c.l.b16 %v2747
      %v2787 = vpack.c.b16 %v2772, %v2771
      %v2788 = vpack.c.b16 %v2774, %v2773
      %v2789 = vpack.c.b16 %v2776, %v2775
      %v2790 = vpack.c.b16 %v2778, %v2777
      %v2791 = vpack.c.b16 %v2780, %v2779
      %v2792 = vpack.c.b16 %v2782, %v2781
      %v2793 = vpack.c.b16 %v2784, %v2783
      %v2794 = vpack.c.b16 %v2786, %v2785
      %2803 = vmatprep.subr.bf16.mxu0 0
      %2804 = vmatpush1.bf16.msra.mxu0 %v2787
      %2805 = vmatprep.subr.bf16.mxu0 0
      %2806 = vmatpush1.bf16.msra.mxu0 %v2788
      %2807 = vmatprep.subr.bf16.mxu0 0
      %2808 = vmatpush1.bf16.msra.mxu0 %v2789
      %2809 = vmatprep.subr.bf16.mxu0 0
      %2810 = vmatpush1.bf16.msra.mxu0 %v2790
      %2811 = vmatprep.subr.bf16.mxu0 0
      %2812 = vmatpush1.bf16.msra.mxu0 %v2791
      %2813 = vmatprep.subr.bf16.mxu0 0
      %2814 = vmatpush1.bf16.msra.mxu0 %v2792
      %2815 = vmatprep.subr.bf16.mxu0 0
      %2816 = vmatpush1.bf16.msra.mxu0 %v2793
      %2817 = vmatprep.subr.bf16.mxu0 0
      %2818 = vmatpush1.bf16.msra.mxu0 %v2794
      %2819 = vmatprep.subr.bf16.mxu0 0
      %2820 = vmatpush1.bf16.msra.mxu0 0
      %2821 = vmatprep.subr.bf16.mxu0 0
      %2822 = vmatpush1.bf16.msra.mxu0 0
      %2823 = vmatprep.subr.bf16.mxu0 0
      %2824 = vmatpush1.bf16.msra.mxu0 0
      %2825 = vmatprep.subr.bf16.mxu0 0
      %2826 = vmatpush1.bf16.msra.mxu0 0
      %2827 = vmatprep.subr.bf16.mxu0 0
      %2828 = vmatpush1.bf16.msra.mxu0 0
      %2829 = vmatprep.subr.bf16.mxu0 0
      %2830 = vmatpush1.bf16.msra.mxu0 0
      %2831 = vmatprep.subr.bf16.mxu0 0
      %2832 = vmatpush1.bf16.msra.mxu0 0
      %2833 = vmatprep.subr.bf16.mxu0 0
      %2834 = vmatpush1.bf16.msra.mxu0 0
      %2835 = vmatprep.mubr.bf16.mxu0 0
      %2836 = vmatmul.mubr.bf16.gmra.mrb[0].mxu0 %v2728
      %v2837 = vpop.f32.mrb[0].mxu0
      %v2838 = vadd.f32 %v2753, %v2837
      %v2839 = vpop.f32.mrb[0].mxu0
      %v2840 = vpop.f32.mrb[0].mxu0
      %v2841 = vadd.f32 %v2753, %v2840
      %v2842 = vpop.f32.mrb[0].mxu0
      %2843 = vmatprep.mubr.bf16.mxu0 0
      %2844 = vmatmul.mubr.bf16.gmra.mrb[0].mxu0 %v2729
      %v2845 = vpop.f32.mrb[0].mxu0
      %v2846 = vadd.f32 %v2753, %v2845
      %v2847 = vpop.f32.mrb[0].mxu0
      %v2848 = vpop.f32.mrb[0].mxu0
      %v2849 = vadd.f32 %v2753, %v2848
      %v2850 = vpop.f32.mrb[0].mxu0
      %2851 = vmatprep.mubr.bf16.mxu0 0
      %2852 = vmatmul.mubr.bf16.gmra.mrb[0].mxu0 %v2730
      %v2853 = vpop.f32.mrb[0].mxu0
      %v2854 = vadd.f32 %v2753, %v2853
      %v2855 = vpop.f32.mrb[0].mxu0
      %v2856 = vpop.f32.mrb[0].mxu0
      %v2857 = vadd.f32 %v2753, %v2856
      %v2858 = vpop.f32.mrb[0].mxu0
      %2859 = vmatprep.mubr.bf16.mxu0 0
      %2860 = vmatmul.mubr.bf16.gmra.mrb[0].mxu0 %v2731
      %v2861 = vpop.f32.mrb[0].mxu0
      %v2862 = vadd.f32 %v2753, %v2861
      %v2863 = vpop.f32.mrb[0].mxu0
      %v2864 = vpop.f32.mrb[0].mxu0
      %v2865 = vadd.f32 %v2753, %v2864
      %v2866 = vpop.f32.mrb[0].mxu0
      %2867 = vdwg.mxu0
      %v2868 = vld [vmem:[%s317] sm:$0xff]
      %v2869 = vld [vmem:[%s317 + $0x8] sm:$0xff]
      %v2870 = vld [vmem:[%s317 + $0x10] sm:$0xff]
      %v2871 = vld [vmem:[%s317 + $0x18] sm:$0xff]
      %v2872 = vunpack.c.l.bf16 %v2868
      %v2873 = vunpack.c.h.bf16 %v2868
      %v2874 = vunpack.c.l.bf16 %v2869
      %v2875 = vunpack.c.h.bf16 %v2869
      %v2876 = vunpack.c.l.bf16 %v2870
      %v2877 = vunpack.c.h.bf16 %v2870
      %v2878 = vunpack.c.l.bf16 %v2871
      %v2879 = vunpack.c.h.bf16 %v2871
      %v2880 = vadd.f32 %v2838, %v2872
      %v2881 = vadd.f32 %v2841, %v2873
      %v2882 = vadd.f32 %v2846, %v2874
      %v2883 = vadd.f32 %v2849, %v2875
      %v2884 = vadd.f32 %v2854, %v2876
      %v2885 = vadd.f32 %v2857, %v2877
      %v2886 = vadd.f32 %v2862, %v2878
      %v2887 = vadd.f32 %v2865, %v2879
      %v2888 = vmax.f32 %v2880, 0.0
      %v2889 = vmax.f32 %v2881, 0.0
      %v2890 = vmax.f32 %v2882, 0.0
      %v2891 = vmax.f32 %v2883, 0.0
      %v2892 = vmax.f32 %v2884, 0.0
      %v2893 = vmax.f32 %v2885, 0.0
      %v2894 = vmax.f32 %v2886, 0.0
      %v2895 = vmax.f32 %v2887, 0.0
      %v2896 = vpack.c.bf16 %v2889, %v2888
      %v2897 = vpack.c.bf16 %v2891, %v2890
      %v2898 = vpack.c.bf16 %v2893, %v2892
      %v2899 = vpack.c.bf16 %v2895, %v2894
      %v2904 = vunpack.c.l.b16 %v2896
      %v2905 = vunpack.c.h.b16 %v2896
      %v2906 = vunpack.c.l.b16 %v2897
      %v2907 = vunpack.c.h.b16 %v2897
      %v2908 = vunpack.c.l.b16 %v2898
      %v2909 = vunpack.c.h.b16 %v2898
      %v2910 = vunpack.c.l.b16 %v2899
      %v2911 = vunpack.c.h.b16 %v2899
      %v2912 = vpack.c.b16 %v2904, %v2904
      %v2913 = vpack.c.b16 %v2905, %v2905
      %v2914 = vpack.c.b16 %v2906, %v2906
      %v2915 = vpack.c.b16 %v2907, %v2907
      %v2916 = vpack.c.b16 %v2908, %v2908
      %v2917 = vpack.c.b16 %v2909, %v2909
      %v2918 = vpack.c.b16 %v2910, %v2910
      %v2919 = vpack.c.b16 %v2911, %v2911
      %2928 = vst [vmem:[%s256] sm:$0xf] %v2912
      %2929 = vst [vmem:[%s256 + $0x4] sm:$0xf] %v2913
      %2930 = vst [vmem:[%s256 + $0x8] sm:$0xf] %v2914
      %2931 = vst [vmem:[%s256 + $0xc] sm:$0xf] %v2915
      %2932 = vst [vmem:[%s256 + $0x10] sm:$0xf] %v2916
      %2933 = vst [vmem:[%s256 + $0x14] sm:$0xf] %v2917
      %2934 = vst [vmem:[%s256 + $0x18] sm:$0xf] %v2918
      %2935 = vst [vmem:[%s256 + $0x1c] sm:$0xf] %v2919
      %s2936 = smul.u32 4, %s23
      %p2937 = scmp.lt.s32.totalorder %s22, 1
      %s2938 = scalar_select %p2937, %s22, 1
      %p2939 = scmp.lt.s32.totalorder %s2936, 15
      %s2940 = scalar_select %p2939, %s2936, 15
      %s2941 = smul.addr %s2940, 2
      %s2942 = smul.addr %s2938, 32
      %s2943 = sadd.s32 %s2941, %s2942
      %s2944 = smul.addr %s2943, 4
      %s2945 = scalar_lea.vmem %s7, %s2944
      // Predicated region
      $region155: #{_lambda_.1} parent=43 // pred_check
        %p2946 = pneg %p176
      $region156: #{_lambda_.1} parent=43 // pred_check_branch
        %2948 = sbr.rel (%p2946) target = $region158
      $region157: #{_lambda_.1} parent=43 // pred_region
        %s2949 = smul.u32 4, %s23
      $region158: #{_lambda_.1} parent=43 // pred_fallthru
        _
    $region44: #{_lambda_.1} parent=5 // pred_fallthru
      _
    %p2950 = scmp.le.s32.totalorder 2, %s13
    // Predicated region
    $region159: #{_lambda_.1} parent=5 // pred_check
      %p2951 = pneg %p2950
    $region160: #{_lambda_.1} parent=5 // pred_check_branch
      %2953 = sbr.rel (%p2951) target = $region162
    $region161: #{_lambda_.1} parent=5 // pred_region
      %s2954 = ssub.s32 %s13, 2
      // Predicated region
      $region163: #{_lambda_.1} parent=161 // pred_check
        %p2955 = pneg %p182
      $region164: #{_lambda_.1} parent=161 // pred_check_branch
        %2957 = sbr.rel (%p2955) target = $region166
      $region165: #{_lambda_.1} parent=161 // pred_region
        %s2958 = smul.u32 4, %s25
        %p2959 = scmp.lt.s32.totalorder %s24, 1
        %s2960 = scalar_select %p2959, %s24, 1
        %p2961 = scmp.lt.s32.totalorder %s2958, 15
        %s2962 = scalar_select %p2961, %s2958, 15
        %s2963 = smul.addr %s2962, 2
        %s2964 = smul.addr %s2960, 32
        %s2965 = sadd.s32 %s2963, %s2964
        %s2966 = smul.addr %s2965, 4
        %s2967 = scalar_lea.vmem %s7, %s2966
      $region166: #{_lambda_.1} parent=161 // pred_fallthru
        _
    $region162: #{_lambda_.1} parent=5 // pred_fallthru
      _
  $region6: #{_lambda_.1} parent=0 // loop_footer
    %s17 = sadd.s32 1, %s13
  $region7: #{_lambda_.1} parent=0 // loop_footer_branch
    %12 = sbr.rel target = $region3
  $region8: #{_lambda_.1} parent=0 // loop_exit
    _
  %2968 = vsyncmov [#allocation4]
  %s2969 = vpop.sfrf %2968
  %p2970 = scmp.eq.s32.totalorder %s2969, 0
  %p2971 = pneg %p2970
  %2973 = shalt.err (%p2971)
  %s2974 = scalar_lea.sflag [#allocation4], 1
  %2975 = vsyncmov %s2974
  %s2976 = vpop.sfrf %2975
  %p2977 = scmp.eq.s32.totalorder %s2976, 0
  %p2978 = pneg %p2977
  %2980 = shalt.err (%p2978)
  %s2981 = scalar_lea.sflag [#allocation4], 2
  %2982 = vsyncmov %s2981
  %s2983 = vpop.sfrf %2982
  %p2984 = scmp.eq.s32.totalorder %s2983, 0
  %p2985 = pneg %p2984
  %2987 = shalt.err (%p2985)

// kernel: _lambda_.1
$region0: #{_lambda_.1}
  #allocation0 [shape = 'u32[]', space=smem, size = 0x4, offset = 0x4, fixed_abs, tag = 'smem constant byte address 0x4 - core index']
  #allocation1 [shape = 'u32[144,128]{1,0:T(1,128)}', space=vmem, size = 0x12000, scoped, tag = 'internal scratch']
  #allocation2 [shape = 'bf16[6,16,128]{2,1,0:T(16,128)(2,1)}', space=vmem, size = 0x6000, scoped, tag = 'scratch operand']
  #allocation3 [shape = 'bf16[6,18,128]{2,1,0:T(8,128)(2,1)}', space=vmem, size = 0x9000, scoped, tag = 'scratch operand']
  #allocation4 [shape = 's32[3]{0}', space=sflag, size = 0xc, scoped, tag = 'scratch operand']
  #allocation5 [shape = 's32[]', space=sflag, size = 0x4, offset = 0, fixed_abs, tag = 'sflag constant byte address 0x0 - dummy sync flag']
  #allocation6 [shape = 's32[]', space=sflag, size = 0x4, offset = 0, fixed_abs, tag = 'sflag constant byte address 0x0 - dummy sync flag']
  #allocation7 [shape = 's32[]', space=sflag, size = 0x4, offset = 0, fixed_abs, tag = 'sflag constant byte address 0x0 - dummy sync flag']
  %s0 = inlined_call_operand.vmem [shape: bf16[2,16,16,128], index: 0, kind: input, shape index: {}]
  %s1 = inlined_call_operand.vmem [shape: bf16[128,128], index: 1, kind: input, shape index: {}]
  %s2 = inlined_call_operand.vmem [shape: f32[1,128], index: 2, kind: input, shape index: {}]
  %s3 = inlined_call_operand.vmem [shape: bf16[9,128,128], index: 3, kind: input, shape index: {}]
  %s4 = inlined_call_operand.vmem [shape: f32[1,128], index: 4, kind: input, shape index: {}]
  %s5 = inlined_call_operand.vmem [shape: bf16[128,128], index: 5, kind: input, shape index: {}]
  %s6 = inlined_call_operand.vmem [shape: f32[1,128], index: 6, kind: input, shape index: {}]
  %s7 = inlined_call_operand.vmem [shape: bf16[2,16,16,128], index: 7, kind: output, shape index: {}]
  %s8 = sld [smem:[#allocation0]]
  $region167: #{_lambda_.1} parent=0
    _
  %s10 = ssub.s32 1, %s8
  %s11 = scalar_select 0, %s10, %s8
  loop: start=0, step=1, limit=10
  $region2: #{_lambda_.1} parent=0 // loop_pre_header
    _
  $region3: #{_lambda_.1} parent=0 // loop_header
    %s13 = sphi 0, %s17
    %p14 = scmp.ge.s32.totalorder %s13, 10
    %s20 = sphi 0, %s32
    %s21 = sphi 0, %s28
    %s22 = sphi 0, %s20
    %s23 = sphi 0, %s21
    %s24 = sphi 0, %s22
    %s25 = sphi 0, %s23
    %s33 = sphi 0, %s33
    %s35 = sphi 0, %s33
    %s36 = sphi 0, %s35
    %s50 = sphi 0, %s36
    %s54 = sphi 0, %s54
    %s56 = sphi 0, %s54
    %s57 = sphi 0, %s56
    %s71 = sphi 0, %s57
    %s75 = sphi 0, %s75
    %s77 = sphi 0, %s75
    %s78 = sphi 0, %s77
    %s92 = sphi 0, %s78
    %s96 = sphi 0, %s96
    %s98 = sphi 0, %s96
    %s99 = sphi 0, %s98
    %s113 = sphi 0, %s99
    %s117 = sphi 0, %s117
    %s119 = sphi 0, %s117
    %s120 = sphi 0, %s119
    %s134 = sphi 0, %s120
    %s138 = sphi 0, %s138
    %s140 = sphi 0, %s138
    %s141 = sphi 0, %s140
    %s155 = sphi 0, %s141
    %s163 = sphi 0, %s165
    %s166 = sphi 0, %s163
    %s167 = sphi 0, %s166
    %s183 = sphi 0, %s167
  $region4: #{_lambda_.1} parent=0 // loop_header_branch
    %16 = sbr.rel (%p14) target = $region8
  $region5: #{_lambda_.1} parent=0 // loop_body
    %s18 = ssub.s32 %s13, 1
    %s19 = ssub.s32 %s13, 2
    %s26 = sadd.s32 1, %s21
    %p27 = scmp.ge.s32.totalorder %s26, 4
    %s28 = scalar_select %p27, 0, %s26
    %s29 = sadd.s32 1, %s20
    %s30 = scalar_select %p27, %s29, %s20
    %p31 = scmp.ge.s32.totalorder %s30, 2
    %s32 = scalar_select %p31, 0, %s30
    %s34 = sadd.s32 %s33, 1
    %p37 = scmp.eq.s32.totalorder %s13, 7
    %p38 = scmp.ne.s32.totalorder %s33, %s35
    %p39 = scmp.eq.s32.totalorder %s13, 0
    %p40 = por %p38, %p39
    %p41 = scmp.ne.s32.totalorder %s33, %s35
    %p42 = scmp.eq.s32.totalorder %s18, 7
    %p43 = por %p41, %p42
    %p44 = scmp.ne.s32.totalorder %s35, %s36
    %p45 = scmp.eq.s32.totalorder %s18, 0
    %p46 = por %p44, %p45
    %p47 = scmp.ne.s32.totalorder %s35, %s36
    %p48 = scmp.eq.s32.totalorder %s19, 7
    %p49 = por %p47, %p48
    %p51 = scmp.ne.s32.totalorder %s36, %s50
    %p52 = scmp.eq.s32.totalorder %s19, 0
    %p53 = por %p51, %p52
    %s55 = sadd.s32 %s54, 1
    %p58 = scmp.eq.s32.totalorder %s13, 7
    %p59 = scmp.ne.s32.totalorder %s54, %s56
    %p60 = scmp.eq.s32.totalorder %s13, 0
    %p61 = por %p59, %p60
    %p62 = scmp.ne.s32.totalorder %s54, %s56
    %p63 = scmp.eq.s32.totalorder %s18, 7
    %p64 = por %p62, %p63
    %p65 = scmp.ne.s32.totalorder %s56, %s57
    %p66 = scmp.eq.s32.totalorder %s18, 0
    %p67 = por %p65, %p66
    %p68 = scmp.ne.s32.totalorder %s56, %s57
    %p69 = scmp.eq.s32.totalorder %s19, 7
    %p70 = por %p68, %p69
    %p72 = scmp.ne.s32.totalorder %s57, %s71
    %p73 = scmp.eq.s32.totalorder %s19, 0
    %p74 = por %p72, %p73
    %s76 = sadd.s32 %s75, 1
    %p79 = scmp.eq.s32.totalorder %s13, 7
    %p80 = scmp.ne.s32.totalorder %s75, %s77
    %p81 = scmp.eq.s32.totalorder %s13, 0
    %p82 = por %p80, %p81
    %p83 = scmp.ne.s32.totalorder %s75, %s77
    %p84 = scmp.eq.s32.totalorder %s18, 7
    %p85 = por %p83, %p84
    %p86 = scmp.ne.s32.totalorder %s77, %s78
    %p87 = scmp.eq.s32.totalorder %s18, 0
    %p88 = por %p86, %p87
    %p89 = scmp.ne.s32.totalorder %s77, %s78
    %p90 = scmp.eq.s32.totalorder %s19, 7
    %p91 = por %p89, %p90
    %p93 = scmp.ne.s32.totalorder %s78, %s92
    %p94 = scmp.eq.s32.totalorder %s19, 0
    %p95 = por %p93, %p94
    %s97 = sadd.s32 %s96, 1
    %p100 = scmp.eq.s32.totalorder %s13, 7
    %p101 = scmp.ne.s32.totalorder %s96, %s98
    %p102 = scmp.eq.s32.totalorder %s13, 0
    %p103 = por %p101, %p102
    %p104 = scmp.ne.s32.totalorder %s96, %s98
    %p105 = scmp.eq.s32.totalorder %s18, 7
    %p106 = por %p104, %p105
    %p107 = scmp.ne.s32.totalorder %s98, %s99
    %p108 = scmp.eq.s32.totalorder %s18, 0
    %p109 = por %p107, %p108
    %p110 = scmp.ne.s32.totalorder %s98, %s99
    %p111 = scmp.eq.s32.totalorder %s19, 7
    %p112 = por %p110, %p111
    %p114 = scmp.ne.s32.totalorder %s99, %s113
    %p115 = scmp.eq.s32.totalorder %s19, 0
    %p116 = por %p114, %p115
    %s118 = sadd.s32 %s117, 1
    %p121 = scmp.eq.s32.totalorder %s13, 7
    %p122 = scmp.ne.s32.totalorder %s117, %s119
    %p123 = scmp.eq.s32.totalorder %s13, 0
    %p124 = por %p122, %p123
    %p125 = scmp.ne.s32.totalorder %s117, %s119
    %p126 = scmp.eq.s32.totalorder %s18, 7
    %p127 = por %p125, %p126
    %p128 = scmp.ne.s32.totalorder %s119, %s120
    %p129 = scmp.eq.s32.totalorder %s18, 0
    %p130 = por %p128, %p129
    %p131 = scmp.ne.s32.totalorder %s119, %s120
    %p132 = scmp.eq.s32.totalorder %s19, 7
    %p133 = por %p131, %p132
    %p135 = scmp.ne.s32.totalorder %s120, %s134
    %p136 = scmp.eq.s32.totalorder %s19, 0
    %p137 = por %p135, %p136
    %s139 = sadd.s32 %s138, 1
    %p142 = scmp.eq.s32.totalorder %s13, 7
    %p143 = scmp.ne.s32.totalorder %s138, %s140
    %p144 = scmp.eq.s32.totalorder %s13, 0
    %p145 = por %p143, %p144
    %p146 = scmp.ne.s32.totalorder %s138, %s140
    %p147 = scmp.eq.s32.totalorder %s18, 7
    %p148 = por %p146, %p147
    %p149 = scmp.ne.s32.totalorder %s140, %s141
    %p150 = scmp.eq.s32.totalorder %s18, 0
    %p151 = por %p149, %p150
    %p152 = scmp.ne.s32.totalorder %s140, %s141
    %p153 = scmp.eq.s32.totalorder %s19, 7
    %p154 = por %p152, %p153
    %p156 = scmp.ne.s32.totalorder %s141, %s155
    %p157 = scmp.eq.s32.totalorder %s19, 0
    %p158 = por %p156, %p157
    %s159 = ssub.s32 %s20, %s32
    %s160 = ssub.s32 %s21, %s28
    %s161 = sor.u32 %s159, %s160
    %p162 = scmp.eq.s32.totalorder %s161, 0
    %s164 = sadd.s32 %s163, 1
    %s165 = scalar_select %p162, %s163, %s164
    %p168 = pneg %p162
    %p169 = scmp.eq.s32.totalorder %s13, 7
    %p170 = por %p168, %p169
    %p171 = scmp.ne.s32.totalorder %s163, %s166
    %p172 = scmp.eq.s32.totalorder %s13, 0
    %p173 = por %p171, %p172
    %p174 = scmp.ne.s32.totalorder %s163, %s166
    %p175 = scmp.eq.s32.totalorder %s18, 7
    %p176 = por %p174, %p175
    %p177 = scmp.ne.s32.totalorder %s166, %s167
    %p178 = scmp.eq.s32.totalorder %s18, 0
    %p179 = por %p177, %p178
    %p180 = scmp.ne.s32.totalorder %s166, %s167
    %p181 = scmp.eq.s32.totalorder %s19, 7
    %p182 = por %p180, %p181
    %p184 = scmp.ne.s32.totalorder %s167, %s183
    %p185 = scmp.eq.s32.totalorder %s19, 0
    %p186 = por %p184, %p185
    %p187 = scmp.le.s32.totalorder 1, %s13
    %p188 = scmp.lt.s32.totalorder %s13, 9
    %p189 = pnand %p187, %p188
    %p190 = pneg %p189
    // Predicated region
    $region9: #{_lambda_.1} parent=5 // pred_check
      _
    $region10: #{_lambda_.1} parent=5 // pred_check_branch
      %192 = sbr.rel (%p189) target = $region12
    $region11: #{_lambda_.1} parent=5 // pred_region
      %s193 = ssub.s32 %s13, 1
      // Predicated region
      $region13: #{_lambda_.1} parent=11 // pred_check
        %p194 = pneg %p46
      $region14: #{_lambda_.1} parent=11 // pred_check_branch
        %196 = sbr.rel (%p194) target = $region16
      $region15: #{_lambda_.1} parent=11 // pred_region
        _
      $region16: #{_lambda_.1} parent=11 // pred_fallthru
        _
      // Predicated region
      $region17: #{_lambda_.1} parent=11 // pred_check
        %p197 = pneg %p67
      $region18: #{_lambda_.1} parent=11 // pred_check_branch
        %199 = sbr.rel (%p197) target = $region20
      $region19: #{_lambda_.1} parent=11 // pred_region
        _
      $region20: #{_lambda_.1} parent=11 // pred_fallthru
        _
      // Predicated region
      $region21: #{_lambda_.1} parent=11 // pred_check
        %p200 = pneg %p88
      $region22: #{_lambda_.1} parent=11 // pred_check_branch
        %202 = sbr.rel (%p200) target = $region24
      $region23: #{_lambda_.1} parent=11 // pred_region
        _
      $region24: #{_lambda_.1} parent=11 // pred_fallthru
        _
      // Predicated region
      $region25: #{_lambda_.1} parent=11 // pred_check
        %p203 = pneg %p109
      $region26: #{_lambda_.1} parent=11 // pred_check_branch
        %205 = sbr.rel (%p203) target = $region28
      $region27: #{_lambda_.1} parent=11 // pred_region
        _
      $region28: #{_lambda_.1} parent=11 // pred_fallthru
        _
      // Predicated region
      $region29: #{_lambda_.1} parent=11 // pred_check
        %p206 = pneg %p130
      $region30: #{_lambda_.1} parent=11 // pred_check_branch
        %208 = sbr.rel (%p206) target = $region32
      $region31: #{_lambda_.1} parent=11 // pred_region
        _
      $region32: #{_lambda_.1} parent=11 // pred_fallthru
        _
      // Predicated region
      $region33: #{_lambda_.1} parent=11 // pred_check
        %p209 = pneg %p151
      $region34: #{_lambda_.1} parent=11 // pred_check_branch
        %211 = sbr.rel (%p209) target = $region36
      $region35: #{_lambda_.1} parent=11 // pred_region
        _
      $region36: #{_lambda_.1} parent=11 // pred_fallthru
        _
    $region12: #{_lambda_.1} parent=5 // pred_fallthru
      _
    %p212 = scmp.lt.s32.totalorder %s13, 8
    // Predicated region
    $region37: #{_lambda_.1} parent=5 // pred_check
      %p213 = pneg %p212
    $region38: #{_lambda_.1} parent=5 // pred_check_branch
      %215 = sbr.rel (%p213) target = $region40
    $region39: #{_lambda_.1} parent=5 // pred_region
      _
    $region40: #{_lambda_.1} parent=5 // pred_fallthru
      _
    %p216 = scmp.le.s32.totalorder 1, %s13
    %p217 = scmp.lt.s32.totalorder %s13, 9
    %p218 = pnand %p216, %p217
    %p219 = pneg %p218
    // Predicated region
    $region41: #{_lambda_.1} parent=5 // pred_check
      _
    $region42: #{_lambda_.1} parent=5 // pred_check_branch
      %221 = sbr.rel (%p218) target = $region44
    $region43: #{_lambda_.1} parent=5 // pred_region
      %s222 = ssub.s32 %s13, 1
      %p223 = pneg %p46
      %p224 = pneg %p43
      %p225 = pneg %p67
      %p226 = pneg %p64
      %p227 = pneg %p88
      %p228 = pneg %p85
      %p229 = pneg %p109
      %p230 = pneg %p106
      %p231 = pneg %p130
      %p232 = pneg %p127
      %p233 = pneg %p151
      %p234 = pneg %p148
      %p235 = pneg %p179
      %p236 = pneg %p176
      %s237 = smul.u32 4, %s23
      %p238 = scmp.lt.s32.totalorder %s22, 1
      %s239 = scalar_select %p238, %s22, 1
      %p240 = scmp.lt.s32.totalorder %s237, 15
      %s241 = scalar_select %p240, %s237, 15
      %s242 = smul.addr %s241, 2
      %s243 = smul.addr %s239, 32
      %s244 = sadd.s32 %s242, %s243
      %s245 = smul.addr %s244, 4
      %s246 = scalar_lea.vmem %s7, %s245
      %s247 = smul.u32 4, %s23
      %p248 = scmp.lt.s32.totalorder %s22, 1
      %s249 = scalar_select %p248, %s22, 1
      %p250 = scmp.lt.s32.totalorder %s247, 15
      %s251 = scalar_select %p250, %s247, 15
      %s252 = smul.addr %s251, 2
      %s253 = smul.addr %s249, 32
      %s254 = sadd.s32 %s252, %s253
      %s255 = smul.addr %s254, 4
      %s256 = scalar_lea.vmem %s7, %s255
      %s257 = smul.u32 4, %s23
      %s259 = smul.u32 %s23, 4
      %s260 = ssub.s32 %s259, 1
      %p261 = scmp.gt.s32.totalorder %s260, 0
      %s262 = scalar_select %p261, %s260, 0
      %s263 = sadd.s32 %s259, 4
      %p264 = scmp.lt.s32.totalorder %s263, 15
      %s265 = scalar_select %p264, %s263, 15
      %s266 = smul.u32 %s262, 2
      %s267 = smul.u32 %s22, 32
      %s268 = sadd.s32 %s266, %s267
      %s269 = smul.addr %s268, 4
      %s270 = scalar_lea.vmem %s0, %s269
      %p272 = scmp.lt.u32.totalorder 8, 8
      %p273 = pneg %p272
      // Predicated region
      $region45: #{_lambda_.1} parent=43 // pred_check
        _
      $region46: #{_lambda_.1} parent=43 // pred_check_branch
        %275 = sbr.rel (%p272) target = $region48
      $region47: #{_lambda_.1} parent=43 // pred_region
        %s290 = sand.u32 8, 7
        %p291 = scmp.eq.s32.totalorder %s290, 0
        // Predicated region
        $region60: #{_lambda_.1} parent=47 // pred_check
          %p292 = pneg %p291
        $region61: #{_lambda_.1} parent=47 // pred_check_branch
          %294 = sbr.rel (%p292) target = $region63
        $region62: #{_lambda_.1} parent=47 // pred_region
          loop: start=0, step=1, limit=1
          $region64: #{_lambda_.1} parent=62 // loop_pre_header
            _
          $region65: #{_lambda_.1} parent=62 // loop_header
            %s296 = sphi 0, %s300
            %p297 = scmp.ge.s32.totalorder %s296, 1
            %s301 = sphi %s270, %s270
            %s302 = sphi [#allocation2], [#allocation2]
          $region66: #{_lambda_.1} parent=62 // loop_header_branch
            %299 = sbr.rel (%p297) target = $region70
          $region67: #{_lambda_.1} parent=62 // loop_body
            %v303 = vld [vmem:[%s301] sm:$0xff]
            %304 = vst [vmem:[%s302] sm:$0xff] %v303
          $region68: #{_lambda_.1} parent=62 // loop_footer
            %s300 = sadd.s32 1, %s296
          $region69: #{_lambda_.1} parent=62 // loop_footer_branch
            %295 = sbr.rel target = $region65
          $region70: #{_lambda_.1} parent=62 // loop_exit
            _
        $region63: #{_lambda_.1} parent=47 // pred_fallthru
          _
        %p305 = pneg %p291
        // Predicated region
        $region71: #{_lambda_.1} parent=47 // pred_check
          _
        $region72: #{_lambda_.1} parent=47 // pred_check_branch
          %307 = sbr.rel (%p291) target = $region74
        $region73: #{_lambda_.1} parent=47 // pred_region
          %s308 = sand.u32 8, 7
        $region74: #{_lambda_.1} parent=47 // pred_fallthru
          _
      $region48: #{_lambda_.1} parent=43 // pred_fallthru
        _
      // Predicated region
      $region49: #{_lambda_.1} parent=43 // pred_check
        %p276 = pneg %p272
      $region50: #{_lambda_.1} parent=43 // pred_check_branch
        %278 = sbr.rel (%p276) target = $region52
      $region51: #{_lambda_.1} parent=43 // pred_region
        %s279 = sshllo.u32 0, 8
        loop: start=0, step=1, limit=1
        $region53: #{_lambda_.1} parent=51 // loop_pre_header
          _
        $region54: #{_lambda_.1} parent=51 // loop_header
          %s281 = sphi 0, %s285
          %p282 = scmp.ge.s32.totalorder %s281, 1
          %s286 = sphi %s270, %s270
          %s287 = sphi [#allocation2], [#allocation2]
        $region55: #{_lambda_.1} parent=51 // loop_header_branch
          %284 = sbr.rel (%p282) target = $region59
        $region56: #{_lambda_.1} parent=51 // loop_body
          %v288 = vld [vmem:[%s286] sm:%s279]
          %289 = vst [vmem:[%s287] sm:%s279] %v288
        $region57: #{_lambda_.1} parent=51 // loop_footer
          %s285 = sadd.s32 1, %s281
        $region58: #{_lambda_.1} parent=51 // loop_footer_branch
          %280 = sbr.rel target = $region54
        $region59: #{_lambda_.1} parent=51 // loop_exit
          _
      $region52: #{_lambda_.1} parent=43 // pred_fallthru
        _
      // Predicated region
      $region75: #{_lambda_.1} parent=43 // pred_check
        _
      $region76: #{_lambda_.1} parent=43 // pred_check_branch
        %311 = sbr.rel (0) target = $region78
      $region77: #{_lambda_.1} parent=43 // pred_region
        %312 = vsyncadd [#allocation4], 128
      $region78: #{_lambda_.1} parent=43 // pred_fallthru
        _
      %s313 = smul.u32 %s259, 2
      %s314 = sadd.s32 %s313, %s267
      %s315 = smul.addr %s314, 4
      %s316 = scalar_lea.vmem %s0, %s315
      %s317 = scalar_lea.vmem [#allocation2], 8
      %s318 = scalar_lea.sflag [#allocation4], 1
      %p320 = scmp.lt.u32.totalorder 32, 8
      %p321 = pneg %p320
      // Predicated region
      $region79: #{_lambda_.1} parent=43 // pred_check
        _
      $region80: #{_lambda_.1} parent=43 // pred_check_branch
        %323 = sbr.rel (%p320) target = $region82
      $region81: #{_lambda_.1} parent=43 // pred_region
        %s338 = sand.u32 32, 7
        %p339 = scmp.eq.s32.totalorder %s338, 0
        // Predicated region
        $region94: #{_lambda_.1} parent=81 // pred_check
          %p340 = pneg %p339
        $region95: #{_lambda_.1} parent=81 // pred_check_branch
          %342 = sbr.rel (%p340) target = $region97
        $region96: #{_lambda_.1} parent=81 // pred_region
          loop: start=0, step=1, limit=1
          $region98: #{_lambda_.1} parent=96 // loop_pre_header
            _
          $region99: #{_lambda_.1} parent=96 // loop_header
            %s344 = sphi 0, %s348
            %p345 = scmp.ge.s32.totalorder %s344, 1
            %s349 = sphi %s316, %s316
            %s350 = sphi %s317, %s317
          $region100: #{_lambda_.1} parent=96 // loop_header_branch
            %347 = sbr.rel (%p345) target = $region104
          $region101: #{_lambda_.1} parent=96 // loop_body
            %v351 = vld [vmem:[%s349] sm:$0xff]
            %352 = vst [vmem:[%s350] sm:$0xff] %v351
            %v353 = vld [vmem:[%s349 + $0x8] sm:$0xff]
            %354 = vst [vmem:[%s350 + $0x8] sm:$0xff] %v353
            %v355 = vld [vmem:[%s349 + $0x10] sm:$0xff]
            %356 = vst [vmem:[%s350 + $0x10] sm:$0xff] %v355
            %v357 = vld [vmem:[%s349 + $0x18] sm:$0xff]
            %358 = vst [vmem:[%s350 + $0x18] sm:$0xff] %v357
          $region102: #{_lambda_.1} parent=96 // loop_footer
            %s348 = sadd.s32 1, %s344
          $region103: #{_lambda_.1} parent=96 // loop_footer_branch
            %343 = sbr.rel target = $region99
          $region104: #{_lambda_.1} parent=96 // loop_exit
            _
        $region97: #{_lambda_.1} parent=81 // pred_fallthru
          _
        %p359 = pneg %p339
        // Predicated region
        $region105: #{_lambda_.1} parent=81 // pred_check
          _
        $region106: #{_lambda_.1} parent=81 // pred_check_branch
          %361 = sbr.rel (%p339) target = $region108
        $region107: #{_lambda_.1} parent=81 // pred_region
          %s362 = sand.u32 32, 7
        $region108: #{_lambda_.1} parent=81 // pred_fallthru
          _
      $region82: #{_lambda_.1} parent=43 // pred_fallthru
        _
      // Predicated region
      $region83: #{_lambda_.1} parent=43 // pred_check
        %p324 = pneg %p320
      $region84: #{_lambda_.1} parent=43 // pred_check_branch
        %326 = sbr.rel (%p324) target = $region86
      $region85: #{_lambda_.1} parent=43 // pred_region
        %s327 = sshllo.u32 0, 32
        loop: start=0, step=1, limit=1
        $region87: #{_lambda_.1} parent=85 // loop_pre_header
          _
        $region88: #{_lambda_.1} parent=85 // loop_header
          %s329 = sphi 0, %s333
          %p330 = scmp.ge.s32.totalorder %s329, 1
          %s334 = sphi %s316, %s316
          %s335 = sphi %s317, %s317
        $region89: #{_lambda_.1} parent=85 // loop_header_branch
          %332 = sbr.rel (%p330) target = $region93
        $region90: #{_lambda_.1} parent=85 // loop_body
          %v336 = vld [vmem:[%s334] sm:%s327]
          %337 = vst [vmem:[%s335] sm:%s327] %v336
        $region91: #{_lambda_.1} parent=85 // loop_footer
          %s333 = sadd.s32 1, %s329
        $region92: #{_lambda_.1} parent=85 // loop_footer_branch
          %328 = sbr.rel target = $region88
        $region93: #{_lambda_.1} parent=85 // loop_exit
          _
      $region86: #{_lambda_.1} parent=43 // pred_fallthru
        _
      // Predicated region
      $region109: #{_lambda_.1} parent=43 // pred_check
        _
      $region110: #{_lambda_.1} parent=43 // pred_check_branch
        %365 = sbr.rel (0) target = $region112
      $region111: #{_lambda_.1} parent=43 // pred_region
        %366 = vsyncadd %s318, 512
      $region112: #{_lambda_.1} parent=43 // pred_fallthru
        _
      %s367 = smul.u32 %s265, 2
      %s368 = sadd.s32 %s367, %s267
      %s369 = smul.addr %s368, 4
      %s370 = scalar_lea.vmem %s0, %s369
      %s371 = scalar_lea.vmem [#allocation2], 40
      %s372 = scalar_lea.sflag [#allocation4], 2
      %p374 = scmp.lt.u32.totalorder 8, 8
      %p375 = pneg %p374
      // Predicated region
      $region113: #{_lambda_.1} parent=43 // pred_check
        _
      $region114: #{_lambda_.1} parent=43 // pred_check_branch
        %377 = sbr.rel (%p374) target = $region116
      $region115: #{_lambda_.1} parent=43 // pred_region
        %s392 = sand.u32 8, 7
        %p393 = scmp.eq.s32.totalorder %s392, 0
        // Predicated region
        $region128: #{_lambda_.1} parent=115 // pred_check
          %p394 = pneg %p393
        $region129: #{_lambda_.1} parent=115 // pred_check_branch
          %396 = sbr.rel (%p394) target = $region131
        $region130: #{_lambda_.1} parent=115 // pred_region
          loop: start=0, step=1, limit=1
          $region132: #{_lambda_.1} parent=130 // loop_pre_header
            _
          $region133: #{_lambda_.1} parent=130 // loop_header
            %s398 = sphi 0, %s402
            %p399 = scmp.ge.s32.totalorder %s398, 1
            %s403 = sphi %s370, %s370
            %s404 = sphi %s371, %s371
          $region134: #{_lambda_.1} parent=130 // loop_header_branch
            %401 = sbr.rel (%p399) target = $region138
          $region135: #{_lambda_.1} parent=130 // loop_body
            %v405 = vld [vmem:[%s403] sm:$0xff]
            %406 = vst [vmem:[%s404] sm:$0xff] %v405
          $region136: #{_lambda_.1} parent=130 // loop_footer
            %s402 = sadd.s32 1, %s398
          $region137: #{_lambda_.1} parent=130 // loop_footer_branch
            %397 = sbr.rel target = $region133
          $region138: #{_lambda_.1} parent=130 // loop_exit
            _
        $region131: #{_lambda_.1} parent=115 // pred_fallthru
          _
        %p407 = pneg %p393
        // Predicated region
        $region139: #{_lambda_.1} parent=115 // pred_check
          _
        $region140: #{_lambda_.1} parent=115 // pred_check_branch
          %409 = sbr.rel (%p393) target = $region142
        $region141: #{_lambda_.1} parent=115 // pred_region
          %s410 = sand.u32 8, 7
        $region142: #{_lambda_.1} parent=115 // pred_fallthru
          _
      $region116: #{_lambda_.1} parent=43 // pred_fallthru
        _
      // Predicated region
      $region117: #{_lambda_.1} parent=43 // pred_check
        %p378 = pneg %p374
      $region118: #{_lambda_.1} parent=43 // pred_check_branch
        %380 = sbr.rel (%p378) target = $region120
      $region119: #{_lambda_.1} parent=43 // pred_region
        %s381 = sshllo.u32 0, 8
        loop: start=0, step=1, limit=1
        $region121: #{_lambda_.1} parent=119 // loop_pre_header
          _
        $region122: #{_lambda_.1} parent=119 // loop_header
          %s383 = sphi 0, %s387
          %p384 = scmp.ge.s32.totalorder %s383, 1
          %s388 = sphi %s370, %s370
          %s389 = sphi %s371, %s371
        $region123: #{_lambda_.1} parent=119 // loop_header_branch
          %386 = sbr.rel (%p384) target = $region127
        $region124: #{_lambda_.1} parent=119 // loop_body
          %v390 = vld [vmem:[%s388] sm:%s381]
          %391 = vst [vmem:[%s389] sm:%s381] %v390
        $region125: #{_lambda_.1} parent=119 // loop_footer
          %s387 = sadd.s32 1, %s383
        $region126: #{_lambda_.1} parent=119 // loop_footer_branch
          %382 = sbr.rel target = $region122
        $region127: #{_lambda_.1} parent=119 // loop_exit
          _
      $region120: #{_lambda_.1} parent=43 // pred_fallthru
        _
      // Predicated region
      $region143: #{_lambda_.1} parent=43 // pred_check
        _
      $region144: #{_lambda_.1} parent=43 // pred_check_branch
        %413 = sbr.rel (0) target = $region146
      $region145: #{_lambda_.1} parent=43 // pred_region
        %414 = vsyncadd %s372, 128
      $region146: #{_lambda_.1} parent=43 // pred_fallthru
        _
      %s415 = smul.u32 4, 1
      %s416 = smul.u32 %s415, 2
      %s417 = smul.u32 %s416, 1
      %s418 = sshll.u32 %s417, 4
      %419 = dma.done [#allocation4], %s418
      %s420 = smul.u32 4, 4
      %s421 = smul.u32 %s420, 2
      %s422 = smul.u32 %s421, 1
      %s423 = sshll.u32 %s422, 4
      %424 = dma.done %s318, %s423
      %s425 = sshll.u32 %s417, 4
      %426 = dma.done %s372, %s425
      %v427 = vld [vmem:[#allocation2] sm:$0xff]
      %v428 = vld [vmem:[#allocation2 + $0x8] sm:$0xff]
      %v429 = vld [vmem:[#allocation2 + $0x10] sm:$0xff]
      %v430 = vld [vmem:[#allocation2 + $0x18] sm:$0xff]
      %v431 = vld [vmem:[#allocation2 + $0x20] sm:$0xff]
      %v432 = vld [vmem:[#allocation2 + $0x28] sm:$0xff]
      %v433 = vld [vmem:[%s1] sm:$0xf]
      %v434 = vld [vmem:[%s1 + $0x4] sm:$0xf]
      %v435 = vld [vmem:[%s1 + $0x8] sm:$0xf]
      %v436 = vld [vmem:[%s1 + $0xc] sm:$0xf]
      %v437 = vld [vmem:[%s1 + $0x10] sm:$0xf]
      %v438 = vld [vmem:[%s1 + $0x14] sm:$0xf]
      %v439 = vld [vmem:[%s1 + $0x18] sm:$0xf]
      %v440 = vld [vmem:[%s1 + $0x1c] sm:$0xf]
      %v441 = vld [vmem:[%s1 + $0x20] sm:$0xf]
      %v442 = vld [vmem:[%s1 + $0x24] sm:$0xf]
      %v443 = vld [vmem:[%s1 + $0x28] sm:$0xf]
      %v444 = vld [vmem:[%s1 + $0x2c] sm:$0xf]
      %v445 = vld [vmem:[%s1 + $0x30] sm:$0xf]
      %v446 = vld [vmem:[%s1 + $0x34] sm:$0xf]
      %v447 = vld [vmem:[%s1 + $0x38] sm:$0xf]
      %v448 = vld [vmem:[%s1 + $0x3c] sm:$0xf]
      %v449 = vld [vmem:[%s2] sm:$0x1]
      %v451 = vlaneseq
      %v452 = vshrl.u32 %v451, 7
      %v453 = vsub.s32 0, %v452
      %v454 = vrot.slane %v449, %v453
      %v472 = vunpack.c.l.b16 %v433
      %v473 = vunpack.c.l.b16 %v434
      %v474 = vunpack.c.l.b16 %v435
      %v475 = vunpack.c.l.b16 %v436
      %v476 = vunpack.c.l.b16 %v437
      %v477 = vunpack.c.l.b16 %v438
      %v478 = vunpack.c.l.b16 %v439
      %v479 = vunpack.c.l.b16 %v440
      %v480 = vunpack.c.l.b16 %v441
      %v481 = vunpack.c.l.b16 %v442
      %v482 = vunpack.c.l.b16 %v443
      %v483 = vunpack.c.l.b16 %v444
      %v484 = vunpack.c.l.b16 %v445
      %v485 = vunpack.c.l.b16 %v446
      %v486 = vunpack.c.l.b16 %v447
      %v487 = vunpack.c.l.b16 %v448
      %v488 = vpack.c.b16 %v473, %v472
      %v489 = vpack.c.b16 %v475, %v474
      %v490 = vpack.c.b16 %v477, %v476
      %v491 = vpack.c.b16 %v479, %v478
      %v492 = vpack.c.b16 %v481, %v480
      %v493 = vpack.c.b16 %v483, %v482
      %v494 = vpack.c.b16 %v485, %v484
      %v495 = vpack.c.b16 %v487, %v486
      %504 = vmatprep.subr.bf16.mxu0 0
      %505 = vmatpush1.bf16.msra.mxu0 %v488
      %506 = vmatprep.subr.bf16.mxu0 0
      %507 = vmatpush1.bf16.msra.mxu0 %v489
      %508 = vmatprep.subr.bf16.mxu0 0
      %509 = vmatpush1.bf16.msra.mxu0 %v490
      %510 = vmatprep.subr.bf16.mxu0 0
      %511 = vmatpush1.bf16.msra.mxu0 %v491
      %512 = vmatprep.subr.bf16.mxu0 0
      %513 = vmatpush1.bf16.msra.mxu0 %v492
      %514 = vmatprep.subr.bf16.mxu0 0
      %515 = vmatpush1.bf16.msra.mxu0 %v493
      %516 = vmatprep.subr.bf16.mxu0 0
      %517 = vmatpush1.bf16.msra.mxu0 %v494
      %518 = vmatprep.subr.bf16.mxu0 0
      %519 = vmatpush1.bf16.msra.mxu0 %v495
      %520 = vmatprep.subr.bf16.mxu0 0
      %521 = vmatpush1.bf16.msra.mxu0 0
      %522 = vmatprep.subr.bf16.mxu0 0
      %523 = vmatpush1.bf16.msra.mxu0 0
      %524 = vmatprep.subr.bf16.mxu0 0
      %525 = vmatpush1.bf16.msra.mxu0 0
      %526 = vmatprep.subr.bf16.mxu0 0
      %527 = vmatpush1.bf16.msra.mxu0 0
      %528 = vmatprep.subr.bf16.mxu0 0
      %529 = vmatpush1.bf16.msra.mxu0 0
      %530 = vmatprep.subr.bf16.mxu0 0
      %531 = vmatpush1.bf16.msra.mxu0 0
      %532 = vmatprep.subr.bf16.mxu0 0
      %533 = vmatpush1.bf16.msra.mxu0 0
      %534 = vmatprep.subr.bf16.mxu0 0
      %535 = vmatpush1.bf16.msra.mxu0 0
      %536 = vmatprep.mubr.bf16.mxu0 0
      %537 = vmatmul.mubr.bf16.gmra.mrb[0].mxu0 %v427
      %v538 = vpop.f32.mrb[0].mxu0
      %v539 = vadd.f32 %v454, %v538
      %v540 = vpop.f32.mrb[0].mxu0
      %v541 = vpop.f32.mrb[0].mxu0
      %v542 = vadd.f32 %v454, %v541
      %v543 = vpop.f32.mrb[0].mxu0
      %544 = vmatprep.mubr.bf16.mxu0 0
      %545 = vmatmul.mubr.bf16.gmra.mrb[0].mxu0 %v428
      %v546 = vpop.f32.mrb[0].mxu0
      %v547 = vadd.f32 %v454, %v546
      %v548 = vpop.f32.mrb[0].mxu0
      %v549 = vpop.f32.mrb[0].mxu0
      %v550 = vadd.f32 %v454, %v549
      %v551 = vpop.f32.mrb[0].mxu0
      %552 = vmatprep.mubr.bf16.mxu0 0
      %553 = vmatmul.mubr.bf16.gmra.mrb[0].mxu0 %v429
      %v554 = vpop.f32.mrb[0].mxu0
      %v555 = vadd.f32 %v454, %v554
      %v556 = vpop.f32.mrb[0].mxu0
      %v557 = vpop.f32.mrb[0].mxu0
      %v558 = vadd.f32 %v454, %v557
      %v559 = vpop.f32.mrb[0].mxu0
      %560 = vmatprep.mubr.bf16.mxu0 0
      %561 = vmatmul.mubr.bf16.gmra.mrb[0].mxu0 %v430
      %v562 = vpop.f32.mrb[0].mxu0
      %v563 = vadd.f32 %v454, %v562
      %v564 = vpop.f32.mrb[0].mxu0
      %v565 = vpop.f32.mrb[0].mxu0
      %v566 = vadd.f32 %v454, %v565
      %v567 = vpop.f32.mrb[0].mxu0
      %568 = vmatprep.mubr.bf16.mxu0 0
      %569 = vmatmul.mubr.bf16.gmra.mrb[0].mxu0 %v431
      %v570 = vpop.f32.mrb[0].mxu0
      %v571 = vadd.f32 %v454, %v570
      %v572 = vpop.f32.mrb[0].mxu0
      %v573 = vpop.f32.mrb[0].mxu0
      %v574 = vadd.f32 %v454, %v573
      %v575 = vpop.f32.mrb[0].mxu0
      %576 = vmatprep.mubr.bf16.mxu0 0
      %577 = vmatmul.mubr.bf16.gmra.mrb[0].mxu0 %v432
      %v578 = vpop.f32.mrb[0].mxu0
      %v579 = vadd.f32 %v454, %v578
      %v580 = vpop.f32.mrb[0].mxu0
      %v581 = vpop.f32.mrb[0].mxu0
      %v582 = vadd.f32 %v454, %v581
      %v583 = vpop.f32.mrb[0].mxu0
      %584 = vdwg.mxu0
      %v585 = vmax.f32 %v539, 0.0
      %v586 = vmax.f32 %v542, 0.0
      %v587 = vmax.f32 %v547, 0.0
      %v588 = vmax.f32 %v550, 0.0
      %v589 = vmax.f32 %v555, 0.0
      %v590 = vmax.f32 %v558, 0.0
      %v591 = vmax.f32 %v563, 0.0
      %v592 = vmax.f32 %v566, 0.0
      %v593 = vmax.f32 %v571, 0.0
      %v594 = vmax.f32 %v574, 0.0
      %v595 = vmax.f32 %v579, 0.0
      %v596 = vmax.f32 %v582, 0.0
      %v597 = vpack.c.bf16 %v586, %v585
      %v598 = vpack.c.bf16 %v588, %v587
      %v599 = vpack.c.bf16 %v590, %v589
      %v600 = vpack.c.bf16 %v592, %v591
      %v601 = vpack.c.bf16 %v594, %v593
      %v602 = vpack.c.bf16 %v596, %v595
      %603 = vst [vmem:[#allocation3] sm:$0xf] 0
      %604 = vst [vmem:[#allocation3 + $0x4] sm:$0xf] 0
      %605 = vst [vmem:[#allocation3 + $0x8] sm:$0x1] 0
      %606 = vst [vmem:[#allocation3 + $0xc] sm:$0xf] 0
      %607 = vst [vmem:[#allocation3 + $0x10] sm:$0xf] 0
      %608 = vst [vmem:[#allocation3 + $0x14] sm:$0x1] 0
      %609 = vst [vmem:[#allocation3 + $0x18] sm:$0xf] 0
      %610 = vst [vmem:[#allocation3 + $0x1c] sm:$0xf] 0
      %611 = vst [vmem:[#allocation3 + $0x20] sm:$0x1] 0
      %612 = vst [vmem:[#allocation3 + $0x24] sm:$0xf] 0
      %613 = vst [vmem:[#allocation3 + $0x28] sm:$0xf] 0
      %614 = vst [vmem:[#allocation3 + $0x2c] sm:$0x1] 0
      %615 = vst [vmem:[#allocation3 + $0x30] sm:$0xf] 0
      %616 = vst [vmem:[#allocation3 + $0x34] sm:$0xf] 0
      %617 = vst [vmem:[#allocation3 + $0x38] sm:$0x1] 0
      %618 = vst [vmem:[#allocation3 + $0x3c] sm:$0xf] 0
      %619 = vst [vmem:[#allocation3 + $0x40] sm:$0xf] 0
      %620 = vst [vmem:[#allocation3 + $0x44] sm:$0x1] 0
      %v627 = vunpack.c.l.b16 %v597
      %v628 = vunpack.c.h.b16 %v597
      %v629 = vunpack.c.l.b16 %v598
      %v630 = vunpack.c.h.b16 %v598
      %v631 = vunpack.c.l.b16 %v599
      %v632 = vunpack.c.h.b16 %v599
      %v633 = vunpack.c.l.b16 %v600
      %v634 = vunpack.c.h.b16 %v600
      %v635 = vunpack.c.l.b16 %v601
      %v636 = vunpack.c.h.b16 %v601
      %v637 = vunpack.c.l.b16 %v602
      %v638 = vunpack.c.h.b16 %v602
      %v639 = vpack.c.b16 %v627, %v627
      %v640 = vpack.c.b16 %v628, %v628
      %v641 = vpack.c.b16 %v629, %v629
      %v642 = vpack.c.b16 %v630, %v630
      %v643 = vpack.c.b16 %v631, %v631
      %v644 = vpack.c.b16 %v632, %v632
      %v645 = vpack.c.b16 %v633, %v633
      %v646 = vpack.c.b16 %v634, %v634
      %v647 = vpack.c.b16 %v635, %v635
      %v648 = vpack.c.b16 %v636, %v636
      %v649 = vpack.c.b16 %v637, %v637
      %v650 = vpack.c.b16 %v638, %v638
      %vm651 = vsmask.f32 256
      %vm652 = vsmask.f32 4368
      %vm653 = vmor %vm651, %vm652
      %v655 = vshrl.u32 %v639, 16
      %v657 = vrot.slane %v655, 7
      %v658 = vshll.u32 %v639, 16
      %v660 = vor.u32 %v657, %v658
      %v661 = vrot.slane %v657, 4
      %v663 = vshrl.u32 %v640, 16
      %v665 = vrot.slane %v663, 7
      %v666 = vshll.u32 %v640, 16
      %v668 = vor.u32 %v665, %v666
      %v669 = vsel %vm653, %v661, %v668
      %v670 = vrot.slane %v665, 4
      %v672 = vshrl.u32 %v641, 16
      %v674 = vrot.slane %v672, 7
      %v675 = vshll.u32 %v641, 16
      %v677 = vor.u32 %v674, %v675
      %v678 = vrot.slane %v674, 4
      %v680 = vshrl.u32 %v642, 16
      %v682 = vrot.slane %v680, 7
      %v683 = vshll.u32 %v642, 16
      %v685 = vor.u32 %v682, %v683
      %v686 = vsel %vm653, %v678, %v685
      %v687 = vrot.slane %v682, 4
      %v689 = vshrl.u32 %v643, 16
      %v691 = vrot.slane %v689, 7
      %v692 = vshll.u32 %v643, 16
      %v694 = vor.u32 %v691, %v692
      %v695 = vrot.slane %v691, 4
      %v697 = vshrl.u32 %v644, 16
      %v699 = vrot.slane %v697, 7
      %v700 = vshll.u32 %v644, 16
      %v702 = vor.u32 %v699, %v700
      %v703 = vsel %vm653, %v695, %v702
      %v704 = vrot.slane %v699, 4
      %v706 = vshrl.u32 %v645, 16
      %v708 = vrot.slane %v706, 7
      %v709 = vshll.u32 %v645, 16
      %v711 = vor.u32 %v708, %v709
      %v712 = vrot.slane %v708, 4
      %v714 = vshrl.u32 %v646, 16
      %v716 = vrot.slane %v714, 7
      %v717 = vshll.u32 %v646, 16
      %v719 = vor.u32 %v716, %v717
      %v720 = vsel %vm653, %v712, %v719
      %v721 = vrot.slane %v716, 4
      %v723 = vshrl.u32 %v647, 16
      %v725 = vrot.slane %v723, 7
      %v726 = vshll.u32 %v647, 16
      %v728 = vor.u32 %v725, %v726
      %v729 = vrot.slane %v725, 4
      %v731 = vshrl.u32 %v648, 16
      %v733 = vrot.slane %v731, 7
      %v734 = vshll.u32 %v648, 16
      %v736 = vor.u32 %v733, %v734
      %v737 = vsel %vm653, %v729, %v736
      %v738 = vrot.slane %v733, 4
      %v740 = vshrl.u32 %v649, 16
      %v742 = vrot.slane %v740, 7
      %v743 = vshll.u32 %v649, 16
      %v745 = vor.u32 %v742, %v743
      %v746 = vrot.slane %v742, 4
      %v748 = vshrl.u32 %v650, 16
      %v750 = vrot.slane %v748, 7
      %v751 = vshll.u32 %v650, 16
      %v753 = vor.u32 %v750, %v751
      %v754 = vsel %vm653, %v746, %v753
      %v755 = vrot.slane %v750, 4
      %vm774 = vcmask 1043456
      %vm775 = vsmask.f32 7938
      %vm776 = vmand %vm774, %vm775
      %v777 = vld [vmem:[#allocation3] sm:$0xf]
      %v778 = vsel %vm776, %v660, %v777
      %779 = vst [vmem:[#allocation3] sm:$0xf] %v778
      %780 = vst [vmem:[#allocation3 + $0x4] sm:$0xf] %v669
      %vm781 = vcmask 1040384
      %vm782 = vmand %vm781, %vm651
      %v783 = vld [vmem:[#allocation3 + $0x8] sm:$0x1]
      %v784 = vsel %vm782, %v670, %v783
      %785 = vst [vmem:[#allocation3 + $0x8] sm:$0x1] %v784
      %v786 = vld [vmem:[#allocation3 + $0xc] sm:$0xf]
      %v787 = vsel %vm776, %v677, %v786
      %788 = vst [vmem:[#allocation3 + $0xc] sm:$0xf] %v787
      %789 = vst [vmem:[#allocation3 + $0x10] sm:$0xf] %v686
      %v790 = vld [vmem:[#allocation3 + $0x14] sm:$0x1]
      %v791 = vsel %vm782, %v687, %v790
      %792 = vst [vmem:[#allocation3 + $0x14] sm:$0x1] %v791
      %v793 = vld [vmem:[#allocation3 + $0x18] sm:$0xf]
      %v794 = vsel %vm776, %v694, %v793
      %795 = vst [vmem:[#allocation3 + $0x18] sm:$0xf] %v794
      %796 = vst [vmem:[#allocation3 + $0x1c] sm:$0xf] %v703
      %v797 = vld [vmem:[#allocation3 + $0x20] sm:$0x1]
      %v798 = vsel %vm782, %v704, %v797
      %799 = vst [vmem:[#allocation3 + $0x20] sm:$0x1] %v798
      %v800 = vld [vmem:[#allocation3 + $0x24] sm:$0xf]
      %v801 = vsel %vm776, %v711, %v800
      %802 = vst [vmem:[#allocation3 + $0x24] sm:$0xf] %v801
      %803 = vst [vmem:[#allocation3 + $0x28] sm:$0xf] %v720
      %v804 = vld [vmem:[#allocation3 + $0x2c] sm:$0x1]
      %v805 = vsel %vm782, %v721, %v804
      %806 = vst [vmem:[#allocation3 + $0x2c] sm:$0x1] %v805
      %v807 = vld [vmem:[#allocation3 + $0x30] sm:$0xf]
      %v808 = vsel %vm776, %v728, %v807
      %809 = vst [vmem:[#allocation3 + $0x30] sm:$0xf] %v808
      %810 = vst [vmem:[#allocation3 + $0x34] sm:$0xf] %v737
      %v811 = vld [vmem:[#allocation3 + $0x38] sm:$0x1]
      %v812 = vsel %vm782, %v738, %v811
      %813 = vst [vmem:[#allocation3 + $0x38] sm:$0x1] %v812
      %v814 = vld [vmem:[#allocation3 + $0x3c] sm:$0xf]
      %v815 = vsel %vm776, %v745, %v814
      %816 = vst [vmem:[#allocation3 + $0x3c] sm:$0xf] %v815
      %817 = vst [vmem:[#allocation3 + $0x40] sm:$0xf] %v754
      %v818 = vld [vmem:[#allocation3 + $0x44] sm:$0x1]
      %v819 = vsel %vm782, %v755, %v818
      %820 = vst [vmem:[#allocation3 + $0x44] sm:$0x1] %v819
      %p821 = scmp.eq.s32.totalorder %s23, 0
      // Predicated region
      $region147: #{_lambda_.1} parent=43 // pred_check
        %p822 = pneg %p821
      $region148: #{_lambda_.1} parent=43 // pred_check_branch
        %824 = sbr.rel (%p822) target = $region150
      $region149: #{_lambda_.1} parent=43 // pred_region
        %825 = vst [vmem:[#allocation3] sm:$0xf] 0
        %826 = vst [vmem:[#allocation3 + $0x4] sm:$0xf] 0
        %827 = vst [vmem:[#allocation3 + $0x8] sm:$0x1] 0
      $region150: #{_lambda_.1} parent=43 // pred_fallthru
        _
      %p828 = scmp.eq.s32.totalorder %s23, 3
      // Predicated region
      $region151: #{_lambda_.1} parent=43 // pred_check
        %p829 = pneg %p828
      $region152: #{_lambda_.1} parent=43 // pred_check_branch
        %831 = sbr.rel (%p829) target = $region154
      $region153: #{_lambda_.1} parent=43 // pred_region
        %s832 = scalar_lea.vmem [#allocation3], 60
        %833 = vst [vmem:[%s832] sm:$0xf] 0
        %834 = vst [vmem:[%s832 + $0x4] sm:$0xf] 0
        %835 = vst [vmem:[%s832 + $0x8] sm:$0x1] 0
      $region154: #{_lambda_.1} parent=43 // pred_fallthru
        _
      %v836 = vld [vmem:[#allocation3] sm:$0xf]
      %v837 = vld [vmem:[#allocation3 + $0x4] sm:$0xf]
      %v838 = vld [vmem:[#allocation3 + $0xc] sm:$0xf]
      %v839 = vld [vmem:[#allocation3 + $0x10] sm:$0xf]
      %v840 = vld [vmem:[#allocation3 + $0x18] sm:$0xf]
      %v841 = vld [vmem:[#allocation3 + $0x1c] sm:$0xf]
      %v842 = vld [vmem:[#allocation3 + $0x24] sm:$0xf]
      %v843 = vld [vmem:[#allocation3 + $0x28] sm:$0xf]
      %v844 = vld [vmem:[%s3] sm:$0xf]
      %v845 = vld [vmem:[%s3 + $0x4] sm:$0xf]
      %v846 = vld [vmem:[%s3 + $0x8] sm:$0xf]
      %v847 = vld [vmem:[%s3 + $0xc] sm:$0xf]
      %v848 = vld [vmem:[%s3 + $0x10] sm:$0xf]
      %v849 = vld [vmem:[%s3 + $0x14] sm:$0xf]
      %v850 = vld [vmem:[%s3 + $0x18] sm:$0xf]
      %v851 = vld [vmem:[%s3 + $0x1c] sm:$0xf]
      %v852 = vld [vmem:[%s3 + $0x20] sm:$0xf]
      %v853 = vld [vmem:[%s3 + $0x24] sm:$0xf]
      %v854 = vld [vmem:[%s3 + $0x28] sm:$0xf]
      %v855 = vld [vmem:[%s3 + $0x2c] sm:$0xf]
      %v856 = vld [vmem:[%s3 + $0x30] sm:$0xf]
      %v857 = vld [vmem:[%s3 + $0x34] sm:$0xf]
      %v858 = vld [vmem:[%s3 + $0x38] sm:$0xf]
      %v859 = vld [vmem:[%s3 + $0x3c] sm:$0xf]
      %v860 = vld [vmem:[#allocation3 + $0x8] sm:$0x1]
      %v861 = vld [vmem:[#allocation3 + $0x14] sm:$0x1]
      %v862 = vld [vmem:[#allocation3 + $0x20] sm:$0x1]
      %v863 = vld [vmem:[#allocation3 + $0x2c] sm:$0x1]
      %vm864 = vsmask.f32 3328
      %vm865 = vsmask.f32 7440
      %vm866 = vmor %vm864, %vm865
      %v868 = vshrl.u32 %v836, 16
      %v870 = vrot.slane %v868, 4
      %v871 = vshll.u32 %v836, 16
      %v873 = vrot.slane %v871, 5
      %v874 = vor.u32 %v870, %v873
      %v875 = vrot.slane %v874, 4
      %v877 = vshll.u32 %v837, 16
      %v879 = vrot.slane %v877, 5
      %v880 = vsel %vm866, %v875, %v879
      %v881 = vshrl.u32 %v837, 16
      %v883 = vrot.slane %v881, 4
      %v884 = vor.u32 %v883, %v879
      %v885 = vrot.slane %v884, 4
      %v887 = vshll.u32 %v860, 16
      %v889 = vrot.slane %v887, 5
      %v890 = vsel %vm866, %v885, %v889
      %v892 = vshrl.u32 %v838, 16
      %v894 = vrot.slane %v892, 4
      %v895 = vshll.u32 %v838, 16
      %v897 = vrot.slane %v895, 5
      %v898 = vor.u32 %v894, %v897
      %v899 = vrot.slane %v898, 4
      %v901 = vshll.u32 %v839, 16
      %v903 = vrot.slane %v901, 5
      %v904 = vsel %vm866, %v899, %v903
      %v905 = vshrl.u32 %v839, 16
      %v907 = vrot.slane %v905, 4
      %v908 = vor.u32 %v907, %v903
      %v909 = vrot.slane %v908, 4
      %v911 = vshll.u32 %v861, 16
      %v913 = vrot.slane %v911, 5
      %v914 = vsel %vm866, %v909, %v913
      %v916 = vshrl.u32 %v840, 16
      %v918 = vrot.slane %v916, 4
      %v919 = vshll.u32 %v840, 16
      %v921 = vrot.slane %v919, 5
      %v922 = vor.u32 %v918, %v921
      %v923 = vrot.slane %v922, 4
      %v925 = vshll.u32 %v841, 16
      %v927 = vrot.slane %v925, 5
      %v928 = vsel %vm866, %v923, %v927
      %v929 = vshrl.u32 %v841, 16
      %v931 = vrot.slane %v929, 4
      %v932 = vor.u32 %v931, %v927
      %v933 = vrot.slane %v932, 4
      %v935 = vshll.u32 %v862, 16
      %v937 = vrot.slane %v935, 5
      %v938 = vsel %vm866, %v933, %v937
      %v940 = vshrl.u32 %v842, 16
      %v942 = vrot.slane %v940, 4
      %v943 = vshll.u32 %v842, 16
      %v945 = vrot.slane %v943, 5
      %v946 = vor.u32 %v942, %v945
      %v947 = vrot.slane %v946, 4
      %v949 = vshll.u32 %v843, 16
      %v951 = vrot.slane %v949, 5
      %v952 = vsel %vm866, %v947, %v951
      %v953 = vshrl.u32 %v843, 16
      %v955 = vrot.slane %v953, 4
      %v956 = vor.u32 %v955, %v951
      %v957 = vrot.slane %v956, 4
      %v959 = vshll.u32 %v863, 16
      %v961 = vrot.slane %v959, 5
      %v962 = vsel %vm866, %v957, %v961
      %s963 = scalar_lea.vmem %s3, 64
      %v964 = vld [vmem:[%s963] sm:$0xf]
      %v965 = vld [vmem:[%s963 + $0x4] sm:$0xf]
      %v966 = vld [vmem:[%s963 + $0x8] sm:$0xf]
      %v967 = vld [vmem:[%s963 + $0xc] sm:$0xf]
      %v968 = vld [vmem:[%s963 + $0x10] sm:$0xf]
      %v969 = vld [vmem:[%s963 + $0x14] sm:$0xf]
      %v970 = vld [vmem:[%s963 + $0x18] sm:$0xf]
      %v971 = vld [vmem:[%s963 + $0x1c] sm:$0xf]
      %v972 = vld [vmem:[%s963 + $0x20] sm:$0xf]
      %v973 = vld [vmem:[%s963 + $0x24] sm:$0xf]
      %v974 = vld [vmem:[%s963 + $0x28] sm:$0xf]
      %v975 = vld [vmem:[%s963 + $0x2c] sm:$0xf]
      %v976 = vld [vmem:[%s963 + $0x30] sm:$0xf]
      %v977 = vld [vmem:[%s963 + $0x34] sm:$0xf]
      %v978 = vld [vmem:[%s963 + $0x38] sm:$0xf]
      %v979 = vld [vmem:[%s963 + $0x3c] sm:$0xf]
      %v980 = vunpack.c.l.b16 %v880
      %v981 = vunpack.c.l.b16 %v890
      %v982 = vunpack.c.l.b16 %v904
      %v983 = vunpack.c.l.b16 %v914
      %v984 = vunpack.c.l.b16 %v928
      %v985 = vunpack.c.l.b16 %v938
      %v986 = vunpack.c.l.b16 %v952
      %v987 = vunpack.c.l.b16 %v962
      %v988 = vpack.c.b16 %v981, %v980
      %v989 = vpack.c.b16 %v983, %v982
      %v990 = vpack.c.b16 %v985, %v984
      %v991 = vpack.c.b16 %v987, %v986
      %v1012 = vunpack.c.l.b16 %v964
      %v1013 = vunpack.c.l.b16 %v965
      %v1014 = vunpack.c.l.b16 %v966
      %v1015 = vunpack.c.l.b16 %v967
      %v1016 = vunpack.c.l.b16 %v968
      %v1017 = vunpack.c.l.b16 %v969
      %v1018 = vunpack.c.l.b16 %v970
      %v1019 = vunpack.c.l.b16 %v971
      %v1020 = vunpack.c.l.b16 %v972
      %v1021 = vunpack.c.l.b16 %v973
      %v1022 = vunpack.c.l.b16 %v974
      %v1023 = vunpack.c.l.b16 %v975
      %v1024 = vunpack.c.l.b16 %v976
      %v1025 = vunpack.c.l.b16 %v977
      %v1026 = vunpack.c.l.b16 %v978
      %v1027 = vunpack.c.l.b16 %v979
      %v1028 = vpack.c.b16 %v1013, %v1012
      %v1029 = vpack.c.b16 %v1015, %v1014
      %v1030 = vpack.c.b16 %v1017, %v1016
      %v1031 = vpack.c.b16 %v1019, %v1018
      %v1032 = vpack.c.b16 %v1021, %v1020
      %v1033 = vpack.c.b16 %v1023, %v1022
      %v1034 = vpack.c.b16 %v1025, %v1024
      %v1035 = vpack.c.b16 %v1027, %v1026
      %1044 = vmatprep.subr.bf16.mxu0 0
      %1045 = vmatpush1.bf16.msra.mxu0 %v1028
      %1046 = vmatprep.subr.bf16.mxu0 0
      %1047 = vmatpush1.bf16.msra.mxu0 %v1029
      %1048 = vmatprep.subr.bf16.mxu0 0
      %1049 = vmatpush1.bf16.msra.mxu0 %v1030
      %1050 = vmatprep.subr.bf16.mxu0 0
      %1051 = vmatpush1.bf16.msra.mxu0 %v1031
      %1052 = vmatprep.subr.bf16.mxu0 0
      %1053 = vmatpush1.bf16.msra.mxu0 %v1032
      %1054 = vmatprep.subr.bf16.mxu0 0
      %1055 = vmatpush1.bf16.msra.mxu0 %v1033
      %1056 = vmatprep.subr.bf16.mxu0 0
      %1057 = vmatpush1.bf16.msra.mxu0 %v1034
      %1058 = vmatprep.subr.bf16.mxu0 0
      %1059 = vmatpush1.bf16.msra.mxu0 %v1035
      %1060 = vmatprep.subr.bf16.mxu0 0
      %1061 = vmatpush1.bf16.msra.mxu0 0
      %1062 = vmatprep.subr.bf16.mxu0 0
      %1063 = vmatpush1.bf16.msra.mxu0 0
      %1064 = vmatprep.subr.bf16.mxu0 0
      %1065 = vmatpush1.bf16.msra.mxu0 0
      %1066 = vmatprep.subr.bf16.mxu0 0
      %1067 = vmatpush1.bf16.msra.mxu0 0
      %1068 = vmatprep.subr.bf16.mxu0 0
      %1069 = vmatpush1.bf16.msra.mxu0 0
      %1070 = vmatprep.subr.bf16.mxu0 0
      %1071 = vmatpush1.bf16.msra.mxu0 0
      %1072 = vmatprep.subr.bf16.mxu0 0
      %1073 = vmatpush1.bf16.msra.mxu0 0
      %1074 = vmatprep.subr.bf16.mxu0 0
      %1075 = vmatpush1.bf16.msra.mxu0 0
      %1076 = vmatprep.mubr.bf16.mxu0 0
      %1077 = vmatmul.mubr.bf16.gmra.mrb[0].mxu0 %v988
      %v1078 = vpop.f32.mrb[0].mxu0
      %v1079 = vadd.f32 0.0, %v1078
      %v1080 = vpop.f32.mrb[0].mxu0
      %v1081 = vpop.f32.mrb[0].mxu0
      %v1082 = vadd.f32 0.0, %v1081
      %v1083 = vpop.f32.mrb[0].mxu0
      %1084 = vmatprep.mubr.bf16.mxu0 0
      %1085 = vmatmul.mubr.bf16.gmra.mrb[0].mxu0 %v989
      %v1086 = vpop.f32.mrb[0].mxu0
      %v1087 = vadd.f32 0.0, %v1086
      %v1088 = vpop.f32.mrb[0].mxu0
      %v1089 = vpop.f32.mrb[0].mxu0
      %v1090 = vadd.f32 0.0, %v1089
      %v1091 = vpop.f32.mrb[0].mxu0
      %1092 = vmatprep.mubr.bf16.mxu0 0
      %1093 = vmatmul.mubr.bf16.gmra.mrb[0].mxu0 %v990
      %v1094 = vpop.f32.mrb[0].mxu0
      %v1095 = vadd.f32 0.0, %v1094
      %v1096 = vpop.f32.mrb[0].mxu0
      %v1097 = vpop.f32.mrb[0].mxu0
      %v1098 = vadd.f32 0.0, %v1097
      %v1099 = vpop.f32.mrb[0].mxu0
      %1100 = vmatprep.mubr.bf16.mxu0 0
      %1101 = vmatmul.mubr.bf16.gmra.mrb[0].mxu0 %v991
      %v1102 = vpop.f32.mrb[0].mxu0
      %v1103 = vadd.f32 0.0, %v1102
      %v1104 = vpop.f32.mrb[0].mxu0
      %v1105 = vpop.f32.mrb[0].mxu0
      %v1106 = vadd.f32 0.0, %v1105
      %v1107 = vpop.f32.mrb[0].mxu0
      %1108 = vdwg.mxu0
      %v1117 = vunpack.c.l.b16 %v836
      %v1118 = vunpack.c.l.b16 %v837
      %v1119 = vunpack.c.l.b16 %v838
      %v1120 = vunpack.c.l.b16 %v839
      %v1121 = vunpack.c.l.b16 %v840
      %v1122 = vunpack.c.l.b16 %v841
      %v1123 = vunpack.c.l.b16 %v842
      %v1124 = vunpack.c.l.b16 %v843
      %v1125 = vpack.c.b16 %v1118, %v1117
      %v1126 = vpack.c.b16 %v1120, %v1119
      %v1127 = vpack.c.b16 %v1122, %v1121
      %v1128 = vpack.c.b16 %v1124, %v1123
      %v1149 = vunpack.c.l.b16 %v844
      %v1150 = vunpack.c.l.b16 %v845
      %v1151 = vunpack.c.l.b16 %v846
      %v1152 = vunpack.c.l.b16 %v847
      %v1153 = vunpack.c.l.b16 %v848
      %v1154 = vunpack.c.l.b16 %v849
      %v1155 = vunpack.c.l.b16 %v850
      %v1156 = vunpack.c.l.b16 %v851
      %v1157 = vunpack.c.l.b16 %v852
      %v1158 = vunpack.c.l.b16 %v853
      %v1159 = vunpack.c.l.b16 %v854
      %v1160 = vunpack.c.l.b16 %v855
      %v1161 = vunpack.c.l.b16 %v856
      %v1162 = vunpack.c.l.b16 %v857
      %v1163 = vunpack.c.l.b16 %v858
      %v1164 = vunpack.c.l.b16 %v859
      %v1165 = vpack.c.b16 %v1150, %v1149
      %v1166 = vpack.c.b16 %v1152, %v1151
      %v1167 = vpack.c.b16 %v1154, %v1153
      %v1168 = vpack.c.b16 %v1156, %v1155
      %v1169 = vpack.c.b16 %v1158, %v1157
      %v1170 = vpack.c.b16 %v1160, %v1159
      %v1171 = vpack.c.b16 %v1162, %v1161
      %v1172 = vpack.c.b16 %v1164, %v1163
      %1181 = vmatprep.subr.bf16.mxu0 0
      %1182 = vmatpush1.bf16.msra.mxu0 %v1165
      %1183 = vmatprep.subr.bf16.mxu0 0
      %1184 = vmatpush1.bf16.msra.mxu0 %v1166
      %1185 = vmatprep.subr.bf16.mxu0 0
      %1186 = vmatpush1.bf16.msra.mxu0 %v1167
      %1187 = vmatprep.subr.bf16.mxu0 0
      %1188 = vmatpush1.bf16.msra.mxu0 %v1168
      %1189 = vmatprep.subr.bf16.mxu0 0
      %1190 = vmatpush1.bf16.msra.mxu0 %v1169
      %1191 = vmatprep.subr.bf16.mxu0 0
      %1192 = vmatpush1.bf16.msra.mxu0 %v1170
      %1193 = vmatprep.subr.bf16.mxu0 0
      %1194 = vmatpush1.bf16.msra.mxu0 %v1171
      %1195 = vmatprep.subr.bf16.mxu0 0
      %1196 = vmatpush1.bf16.msra.mxu0 %v1172
      %1197 = vmatprep.subr.bf16.mxu0 0
      %1198 = vmatpush1.bf16.msra.mxu0 0
      %1199 = vmatprep.subr.bf16.mxu0 0
      %1200 = vmatpush1.bf16.msra.mxu0 0
      %1201 = vmatprep.subr.bf16.mxu0 0
      %1202 = vmatpush1.bf16.msra.mxu0 0
      %1203 = vmatprep.subr.bf16.mxu0 0
      %1204 = vmatpush1.bf16.msra.mxu0 0
      %1205 = vmatprep.subr.bf16.mxu0 0
      %1206 = vmatpush1.bf16.msra.mxu0 0
      %1207 = vmatprep.subr.bf16.mxu0 0
      %1208 = vmatpush1.bf16.msra.mxu0 0
      %1209 = vmatprep.subr.bf16.mxu0 0
      %1210 = vmatpush1.bf16.msra.mxu0 0
      %1211 = vmatprep.subr.bf16.mxu0 0
      %1212 = vmatpush1.bf16.msra.mxu0 0
      %1213 = vmatprep.mubr.bf16.mxu0 0
      %1214 = vmatmul.mubr.bf16.gmra.mrb[0].mxu0 %v1125
      %v1215 = vpop.f32.mrb[0].mxu0
      %v1216 = vadd.f32 %v1079, %v1215
      %v1217 = vpop.f32.mrb[0].mxu0
      %v1218 = vpop.f32.mrb[0].mxu0
      %v1219 = vadd.f32 %v1082, %v1218
      %v1220 = vpop.f32.mrb[0].mxu0
      %1221 = vmatprep.mubr.bf16.mxu0 0
      %1222 = vmatmul.mubr.bf16.gmra.mrb[0].mxu0 %v1126
      %v1223 = vpop.f32.mrb[0].mxu0
      %v1224 = vadd.f32 %v1087, %v1223
      %v1225 = vpop.f32.mrb[0].mxu0
      %v1226 = vpop.f32.mrb[0].mxu0
      %v1227 = vadd.f32 %v1090, %v1226
      %v1228 = vpop.f32.mrb[0].mxu0
      %1229 = vmatprep.mubr.bf16.mxu0 0
      %1230 = vmatmul.mubr.bf16.gmra.mrb[0].mxu0 %v1127
      %v1231 = vpop.f32.mrb[0].mxu0
      %v1232 = vadd.f32 %v1095, %v1231
      %v1233 = vpop.f32.mrb[0].mxu0
      %v1234 = vpop.f32.mrb[0].mxu0
      %v1235 = vadd.f32 %v1098, %v1234
      %v1236 = vpop.f32.mrb[0].mxu0
      %1237 = vmatprep.mubr.bf16.mxu0 0
      %1238 = vmatmul.mubr.bf16.gmra.mrb[0].mxu0 %v1128
      %v1239 = vpop.f32.mrb[0].mxu0
      %v1240 = vadd.f32 %v1103, %v1239
      %v1241 = vpop.f32.mrb[0].mxu0
      %v1242 = vpop.f32.mrb[0].mxu0
      %v1243 = vadd.f32 %v1106, %v1242
      %v1244 = vpop.f32.mrb[0].mxu0
      %1245 = vdwg.mxu0
      %v1246 = vld [vmem:[#allocation3] sm:$0xe]
      %v1247 = vld [vmem:[#allocation3 + $0xc] sm:$0xe]
      %v1248 = vld [vmem:[#allocation3 + $0x18] sm:$0xe]
      %v1249 = vld [vmem:[#allocation3 + $0x24] sm:$0xe]
      %vm1258 = vcmask 1042432
      %vm1259 = vcmask 1046532
      %vm1260 = vmor %vm1258, %vm1259
      %v1261 = vrot.slane %v1246, 5
      %v1262 = vrot.slane %v1261, 4
      %v1263 = vrot.slane %v837, 5
      %v1264 = vsel %vm1260, %v1262, %v1263
      %v1265 = vrot.slane %v1263, 4
      %v1266 = vrot.slane %v860, 5
      %v1267 = vsel %vm1260, %v1265, %v1266
      %v1268 = vrot.slane %v1247, 5
      %v1269 = vrot.slane %v1268, 4
      %v1270 = vrot.slane %v839, 5
      %v1271 = vsel %vm1260, %v1269, %v1270
      %v1272 = vrot.slane %v1270, 4
      %v1273 = vrot.slane %v861, 5
      %v1274 = vsel %vm1260, %v1272, %v1273
      %v1275 = vrot.slane %v1248, 5
      %v1276 = vrot.slane %v1275, 4
      %v1277 = vrot.slane %v841, 5
      %v1278 = vsel %vm1260, %v1276, %v1277
      %v1279 = vrot.slane %v1277, 4
      %v1280 = vrot.slane %v862, 5
      %v1281 = vsel %vm1260, %v1279, %v1280
      %v1282 = vrot.slane %v1249, 5
      %v1283 = vrot.slane %v1282, 4
      %v1284 = vrot.slane %v843, 5
      %v1285 = vsel %vm1260, %v1283, %v1284
      %v1286 = vrot.slane %v1284, 4
      %v1287 = vrot.slane %v863, 5
      %v1288 = vsel %vm1260, %v1286, %v1287
      %s1289 = scalar_lea.vmem %s3, 128
      %v1290 = vld [vmem:[%s1289] sm:$0xf]
      %v1291 = vld [vmem:[%s1289 + $0x4] sm:$0xf]
      %v1292 = vld [vmem:[%s1289 + $0x8] sm:$0xf]
      %v1293 = vld [vmem:[%s1289 + $0xc] sm:$0xf]
      %v1294 = vld [vmem:[%s1289 + $0x10] sm:$0xf]
      %v1295 = vld [vmem:[%s1289 + $0x14] sm:$0xf]
      %v1296 = vld [vmem:[%s1289 + $0x18] sm:$0xf]
      %v1297 = vld [vmem:[%s1289 + $0x1c] sm:$0xf]
      %v1298 = vld [vmem:[%s1289 + $0x20] sm:$0xf]
      %v1299 = vld [vmem:[%s1289 + $0x24] sm:$0xf]
      %v1300 = vld [vmem:[%s1289 + $0x28] sm:$0xf]
      %v1301 = vld [vmem:[%s1289 + $0x2c] sm:$0xf]
      %v1302 = vld [vmem:[%s1289 + $0x30] sm:$0xf]
      %v1303 = vld [vmem:[%s1289 + $0x34] sm:$0xf]
      %v1304 = vld [vmem:[%s1289 + $0x38] sm:$0xf]
      %v1305 = vld [vmem:[%s1289 + $0x3c] sm:$0xf]
      %v1306 = vunpack.c.l.b16 %v1264
      %v1307 = vunpack.c.l.b16 %v1267
      %v1308 = vunpack.c.l.b16 %v1271
      %v1309 = vunpack.c.l.b16 %v1274
      %v1310 = vunpack.c.l.b16 %v1278
      %v1311 = vunpack.c.l.b16 %v1281
      %v1312 = vunpack.c.l.b16 %v1285
      %v1313 = vunpack.c.l.b16 %v1288
      %v1314 = vpack.c.b16 %v1307, %v1306
      %v1315 = vpack.c.b16 %v1309, %v1308
      %v1316 = vpack.c.b16 %v1311, %v1310
      %v1317 = vpack.c.b16 %v1313, %v1312
      %v1338 = vunpack.c.l.b16 %v1290
      %v1339 = vunpack.c.l.b16 %v1291
      %v1340 = vunpack.c.l.b16 %v1292
      %v1341 = vunpack.c.l.b16 %v1293
      %v1342 = vunpack.c.l.b16 %v1294
      %v1343 = vunpack.c.l.b16 %v1295
      %v1344 = vunpack.c.l.b16 %v1296
      %v1345 = vunpack.c.l.b16 %v1297
      %v1346 = vunpack.c.l.b16 %v1298
      %v1347 = vunpack.c.l.b16 %v1299
      %v1348 = vunpack.c.l.b16 %v1300
      %v1349 = vunpack.c.l.b16 %v1301
      %v1350 = vunpack.c.l.b16 %v1302
      %v1351 = vunpack.c.l.b16 %v1303
      %v1352 = vunpack.c.l.b16 %v1304
      %v1353 = vunpack.c.l.b16 %v1305
      %v1354 = vpack.c.b16 %v1339, %v1338
      %v1355 = vpack.c.b16 %v1341, %v1340
      %v1356 = vpack.c.b16 %v1343, %v1342
      %v1357 = vpack.c.b16 %v1345, %v1344
      %v1358 = vpack.c.b16 %v1347, %v1346
      %v1359 = vpack.c.b16 %v1349, %v1348
      %v1360 = vpack.c.b16 %v1351, %v1350
      %v1361 = vpack.c.b16 %v1353, %v1352
      %1370 = vmatprep.subr.bf16.mxu0 0
      %1371 = vmatpush1.bf16.msra.mxu0 %v1354
      %1372 = vmatprep.subr.bf16.mxu0 0
      %1373 = vmatpush1.bf16.msra.mxu0 %v1355
      %1374 = vmatprep.subr.bf16.mxu0 0
      %1375 = vmatpush1.bf16.msra.mxu0 %v1356
      %1376 = vmatprep.subr.bf16.mxu0 0
      %1377 = vmatpush1.bf16.msra.mxu0 %v1357
      %1378 = vmatprep.subr.bf16.mxu0 0
      %1379 = vmatpush1.bf16.msra.mxu0 %v1358
      %1380 = vmatprep.subr.bf16.mxu0 0
      %1381 = vmatpush1.bf16.msra.mxu0 %v1359
      %1382 = vmatprep.subr.bf16.mxu0 0
      %1383 = vmatpush1.bf16.msra.mxu0 %v1360
      %1384 = vmatprep.subr.bf16.mxu0 0
      %1385 = vmatpush1.bf16.msra.mxu0 %v1361
      %1386 = vmatprep.subr.bf16.mxu0 0
      %1387 = vmatpush1.bf16.msra.mxu0 0
      %1388 = vmatprep.subr.bf16.mxu0 0
      %1389 = vmatpush1.bf16.msra.mxu0 0
      %1390 = vmatprep.subr.bf16.mxu0 0
      %1391 = vmatpush1.bf16.msra.mxu0 0
      %1392 = vmatprep.subr.bf16.mxu0 0
      %1393 = vmatpush1.bf16.msra.mxu0 0
      %1394 = vmatprep.subr.bf16.mxu0 0
      %1395 = vmatpush1.bf16.msra.mxu0 0
      %1396 = vmatprep.subr.bf16.mxu0 0
      %1397 = vmatpush1.bf16.msra.mxu0 0
      %1398 = vmatprep.subr.bf16.mxu0 0
      %1399 = vmatpush1.bf16.msra.mxu0 0
      %1400 = vmatprep.subr.bf16.mxu0 0
      %1401 = vmatpush1.bf16.msra.mxu0 0
      %1402 = vmatprep.mubr.bf16.mxu0 0
      %1403 = vmatmul.mubr.bf16.gmra.mrb[0].mxu0 %v1314
      %v1404 = vpop.f32.mrb[0].mxu0
      %v1405 = vadd.f32 0.0, %v1404
      %v1406 = vpop.f32.mrb[0].mxu0
      %v1407 = vpop.f32.mrb[0].mxu0
      %v1408 = vadd.f32 0.0, %v1407
      %v1409 = vpop.f32.mrb[0].mxu0
      %1410 = vmatprep.mubr.bf16.mxu0 0
      %1411 = vmatmul.mubr.bf16.gmra.mrb[0].mxu0 %v1315
      %v1412 = vpop.f32.mrb[0].mxu0
      %v1413 = vadd.f32 0.0, %v1412
      %v1414 = vpop.f32.mrb[0].mxu0
      %v1415 = vpop.f32.mrb[0].mxu0
      %v1416 = vadd.f32 0.0, %v1415
      %v1417 = vpop.f32.mrb[0].mxu0
      %1418 = vmatprep.mubr.bf16.mxu0 0
      %1419 = vmatmul.mubr.bf16.gmra.mrb[0].mxu0 %v1316
      %v1420 = vpop.f32.mrb[0].mxu0
      %v1421 = vadd.f32 0.0, %v1420
      %v1422 = vpop.f32.mrb[0].mxu0
      %v1423 = vpop.f32.mrb[0].mxu0
      %v1424 = vadd.f32 0.0, %v1423
      %v1425 = vpop.f32.mrb[0].mxu0
      %1426 = vmatprep.mubr.bf16.mxu0 0
      %1427 = vmatmul.mubr.bf16.gmra.mrb[0].mxu0 %v1317
      %v1428 = vpop.f32.mrb[0].mxu0
      %v1429 = vadd.f32 0.0, %v1428
      %v1430 = vpop.f32.mrb[0].mxu0
      %v1431 = vpop.f32.mrb[0].mxu0
      %v1432 = vadd.f32 0.0, %v1431
      %v1433 = vpop.f32.mrb[0].mxu0
      %1434 = vdwg.mxu0
      %v1435 = vadd.f32 %v1216, %v1405
      %v1436 = vadd.f32 %v1219, %v1408
      %v1437 = vadd.f32 %v1224, %v1413
      %v1438 = vadd.f32 %v1227, %v1416
      %v1439 = vadd.f32 %v1232, %v1421
      %v1440 = vadd.f32 %v1235, %v1424
      %v1441 = vadd.f32 %v1240, %v1429
      %v1442 = vadd.f32 %v1243, %v1432
      %s1443 = scalar_lea.vmem [#allocation3], 12
      %v1444 = vld [vmem:[%s1443] sm:$0xf]
      %v1445 = vld [vmem:[%s1443 + $0x4] sm:$0xf]
      %v1446 = vld [vmem:[%s1443 + $0xc] sm:$0xf]
      %v1447 = vld [vmem:[%s1443 + $0x10] sm:$0xf]
      %v1448 = vld [vmem:[%s1443 + $0x18] sm:$0xf]
      %v1449 = vld [vmem:[%s1443 + $0x1c] sm:$0xf]
      %v1450 = vld [vmem:[%s1443 + $0x24] sm:$0xf]
      %v1451 = vld [vmem:[%s1443 + $0x28] sm:$0xf]
      %s1452 = scalar_lea.vmem %s3, 192
      %v1453 = vld [vmem:[%s1452] sm:$0xf]
      %v1454 = vld [vmem:[%s1452 + $0x4] sm:$0xf]
      %v1455 = vld [vmem:[%s1452 + $0x8] sm:$0xf]
      %v1456 = vld [vmem:[%s1452 + $0xc] sm:$0xf]
      %v1457 = vld [vmem:[%s1452 + $0x10] sm:$0xf]
      %v1458 = vld [vmem:[%s1452 + $0x14] sm:$0xf]
      %v1459 = vld [vmem:[%s1452 + $0x18] sm:$0xf]
      %v1460 = vld [vmem:[%s1452 + $0x1c] sm:$0xf]
      %v1461 = vld [vmem:[%s1452 + $0x20] sm:$0xf]
      %v1462 = vld [vmem:[%s1452 + $0x24] sm:$0xf]
      %v1463 = vld [vmem:[%s1452 + $0x28] sm:$0xf]
      %v1464 = vld [vmem:[%s1452 + $0x2c] sm:$0xf]
      %v1465 = vld [vmem:[%s1452 + $0x30] sm:$0xf]
      %v1466 = vld [vmem:[%s1452 + $0x34] sm:$0xf]
      %v1467 = vld [vmem:[%s1452 + $0x38] sm:$0xf]
      %v1468 = vld [vmem:[%s1452 + $0x3c] sm:$0xf]
      %v1477 = vunpack.c.l.b16 %v1444
      %v1478 = vunpack.c.l.b16 %v1445
      %v1479 = vunpack.c.l.b16 %v1446
      %v1480 = vunpack.c.l.b16 %v1447
      %v1481 = vunpack.c.l.b16 %v1448
      %v1482 = vunpack.c.l.b16 %v1449
      %v1483 = vunpack.c.l.b16 %v1450
      %v1484 = vunpack.c.l.b16 %v1451
      %v1485 = vpack.c.b16 %v1478, %v1477
      %v1486 = vpack.c.b16 %v1480, %v1479
      %v1487 = vpack.c.b16 %v1482, %v1481
      %v1488 = vpack.c.b16 %v1484, %v1483
      %v1509 = vunpack.c.l.b16 %v1453
      %v1510 = vunpack.c.l.b16 %v1454
      %v1511 = vunpack.c.l.b16 %v1455
      %v1512 = vunpack.c.l.b16 %v1456
      %v1513 = vunpack.c.l.b16 %v1457
      %v1514 = vunpack.c.l.b16 %v1458
      %v1515 = vunpack.c.l.b16 %v1459
      %v1516 = vunpack.c.l.b16 %v1460
      %v1517 = vunpack.c.l.b16 %v1461
      %v1518 = vunpack.c.l.b16 %v1462
      %v1519 = vunpack.c.l.b16 %v1463
      %v1520 = vunpack.c.l.b16 %v1464
      %v1521 = vunpack.c.l.b16 %v1465
      %v1522 = vunpack.c.l.b16 %v1466
      %v1523 = vunpack.c.l.b16 %v1467
      %v1524 = vunpack.c.l.b16 %v1468
      %v1525 = vpack.c.b16 %v1510, %v1509
      %v1526 = vpack.c.b16 %v1512, %v1511
      %v1527 = vpack.c.b16 %v1514, %v1513
      %v1528 = vpack.c.b16 %v1516, %v1515
      %v1529 = vpack.c.b16 %v1518, %v1517
      %v1530 = vpack.c.b16 %v1520, %v1519
      %v1531 = vpack.c.b16 %v1522, %v1521
      %v1532 = vpack.c.b16 %v1524, %v1523
      %1541 = vmatprep.subr.bf16.mxu0 0
      %1542 = vmatpush1.bf16.msra.mxu0 %v1525
      %1543 = vmatprep.subr.bf16.mxu0 0
      %1544 = vmatpush1.bf16.msra.mxu0 %v1526
      %1545 = vmatprep.subr.bf16.mxu0 0
      %1546 = vmatpush1.bf16.msra.mxu0 %v1527
      %1547 = vmatprep.subr.bf16.mxu0 0
      %1548 = vmatpush1.bf16.msra.mxu0 %v1528
      %1549 = vmatprep.subr.bf16.mxu0 0
      %1550 = vmatpush1.bf16.msra.mxu0 %v1529
      %1551 = vmatprep.subr.bf16.mxu0 0
      %1552 = vmatpush1.bf16.msra.mxu0 %v1530
      %1553 = vmatprep.subr.bf16.mxu0 0
      %1554 = vmatpush1.bf16.msra.mxu0 %v1531
      %1555 = vmatprep.subr.bf16.mxu0 0
      %1556 = vmatpush1.bf16.msra.mxu0 %v1532
      %1557 = vmatprep.subr.bf16.mxu0 0
      %1558 = vmatpush1.bf16.msra.mxu0 0
      %1559 = vmatprep.subr.bf16.mxu0 0
      %1560 = vmatpush1.bf16.msra.mxu0 0
      %1561 = vmatprep.subr.bf16.mxu0 0
      %1562 = vmatpush1.bf16.msra.mxu0 0
      %1563 = vmatprep.subr.bf16.mxu0 0
      %1564 = vmatpush1.bf16.msra.mxu0 0
      %1565 = vmatprep.subr.bf16.mxu0 0
      %1566 = vmatpush1.bf16.msra.mxu0 0
      %1567 = vmatprep.subr.bf16.mxu0 0
      %1568 = vmatpush1.bf16.msra.mxu0 0
      %1569 = vmatprep.subr.bf16.mxu0 0
      %1570 = vmatpush1.bf16.msra.mxu0 0
      %1571 = vmatprep.subr.bf16.mxu0 0
      %1572 = vmatpush1.bf16.msra.mxu0 0
      %1573 = vmatprep.mubr.bf16.mxu0 0
      %1574 = vmatmul.mubr.bf16.gmra.mrb[0].mxu0 %v1485
      %v1575 = vpop.f32.mrb[0].mxu0
      %v1576 = vadd.f32 0.0, %v1575
      %v1577 = vpop.f32.mrb[0].mxu0
      %v1578 = vpop.f32.mrb[0].mxu0
      %v1579 = vadd.f32 0.0, %v1578
      %v1580 = vpop.f32.mrb[0].mxu0
      %1581 = vmatprep.mubr.bf16.mxu0 0
      %1582 = vmatmul.mubr.bf16.gmra.mrb[0].mxu0 %v1486
      %v1583 = vpop.f32.mrb[0].mxu0
      %v1584 = vadd.f32 0.0, %v1583
      %v1585 = vpop.f32.mrb[0].mxu0
      %v1586 = vpop.f32.mrb[0].mxu0
      %v1587 = vadd.f32 0.0, %v1586
      %v1588 = vpop.f32.mrb[0].mxu0
      %1589 = vmatprep.mubr.bf16.mxu0 0
      %1590 = vmatmul.mubr.bf16.gmra.mrb[0].mxu0 %v1487
      %v1591 = vpop.f32.mrb[0].mxu0
      %v1592 = vadd.f32 0.0, %v1591
      %v1593 = vpop.f32.mrb[0].mxu0
      %v1594 = vpop.f32.mrb[0].mxu0
      %v1595 = vadd.f32 0.0, %v1594
      %v1596 = vpop.f32.mrb[0].mxu0
      %1597 = vmatprep.mubr.bf16.mxu0 0
      %1598 = vmatmul.mubr.bf16.gmra.mrb[0].mxu0 %v1488
      %v1599 = vpop.f32.mrb[0].mxu0
      %v1600 = vadd.f32 0.0, %v1599
      %v1601 = vpop.f32.mrb[0].mxu0
      %v1602 = vpop.f32.mrb[0].mxu0
      %v1603 = vadd.f32 0.0, %v1602
      %v1604 = vpop.f32.mrb[0].mxu0
      %1605 = vdwg.mxu0
      %v1606 = vadd.f32 %v1435, %v1576
      %v1607 = vadd.f32 %v1436, %v1579
      %v1608 = vadd.f32 %v1437, %v1584
      %v1609 = vadd.f32 %v1438, %v1587
      %v1610 = vadd.f32 %v1439, %v1592
      %v1611 = vadd.f32 %v1440, %v1595
      %v1612 = vadd.f32 %v1441, %v1600
      %v1613 = vadd.f32 %v1442, %v1603
      %v1614 = vld [vmem:[%s1443] sm:$0xf]
      %v1615 = vld [vmem:[%s1443 + $0x4] sm:$0xf]
      %v1616 = vld [vmem:[%s1443 + $0x8] sm:$0x1]
      %v1617 = vld [vmem:[%s1443 + $0xc] sm:$0xf]
      %v1618 = vld [vmem:[%s1443 + $0x10] sm:$0xf]
      %v1619 = vld [vmem:[%s1443 + $0x14] sm:$0x1]
      %v1620 = vld [vmem:[%s1443 + $0x18] sm:$0xf]
      %v1621 = vld [vmem:[%s1443 + $0x1c] sm:$0xf]
      %v1622 = vld [vmem:[%s1443 + $0x20] sm:$0x1]
      %v1623 = vld [vmem:[%s1443 + $0x24] sm:$0xf]
      %v1624 = vld [vmem:[%s1443 + $0x28] sm:$0xf]
      %v1625 = vld [vmem:[%s1443 + $0x2c] sm:$0x1]
      %v1627 = vshrl.u32 %v1614, 16
      %v1629 = vrot.slane %v1627, 4
      %v1630 = vshll.u32 %v1614, 16
      %v1632 = vrot.slane %v1630, 5
      %v1633 = vor.u32 %v1629, %v1632
      %v1634 = vrot.slane %v1633, 4
      %v1636 = vshll.u32 %v1615, 16
      %v1638 = vrot.slane %v1636, 5
      %v1639 = vsel %vm866, %v1634, %v1638
      %v1640 = vshrl.u32 %v1615, 16
      %v1642 = vrot.slane %v1640, 4
      %v1643 = vor.u32 %v1642, %v1638
      %v1644 = vrot.slane %v1643, 4
      %v1646 = vshll.u32 %v1616, 16
      %v1648 = vrot.slane %v1646, 5
      %v1649 = vsel %vm866, %v1644, %v1648
      %v1651 = vshrl.u32 %v1617, 16
      %v1653 = vrot.slane %v1651, 4
      %v1654 = vshll.u32 %v1617, 16
      %v1656 = vrot.slane %v1654, 5
      %v1657 = vor.u32 %v1653, %v1656
      %v1658 = vrot.slane %v1657, 4
      %v1660 = vshll.u32 %v1618, 16
      %v1662 = vrot.slane %v1660, 5
      %v1663 = vsel %vm866, %v1658, %v1662
      %v1664 = vshrl.u32 %v1618, 16
      %v1666 = vrot.slane %v1664, 4
      %v1667 = vor.u32 %v1666, %v1662
      %v1668 = vrot.slane %v1667, 4
      %v1670 = vshll.u32 %v1619, 16
      %v1672 = vrot.slane %v1670, 5
      %v1673 = vsel %vm866, %v1668, %v1672
      %v1675 = vshrl.u32 %v1620, 16
      %v1677 = vrot.slane %v1675, 4
      %v1678 = vshll.u32 %v1620, 16
      %v1680 = vrot.slane %v1678, 5
      %v1681 = vor.u32 %v1677, %v1680
      %v1682 = vrot.slane %v1681, 4
      %v1684 = vshll.u32 %v1621, 16
      %v1686 = vrot.slane %v1684, 5
      %v1687 = vsel %vm866, %v1682, %v1686
      %v1688 = vshrl.u32 %v1621, 16
      %v1690 = vrot.slane %v1688, 4
      %v1691 = vor.u32 %v1690, %v1686
      %v1692 = vrot.slane %v1691, 4
      %v1694 = vshll.u32 %v1622, 16
      %v1696 = vrot.slane %v1694, 5
      %v1697 = vsel %vm866, %v1692, %v1696
      %v1699 = vshrl.u32 %v1623, 16
      %v1701 = vrot.slane %v1699, 4
      %v1702 = vshll.u32 %v1623, 16
      %v1704 = vrot.slane %v1702, 5
      %v1705 = vor.u32 %v1701, %v1704
      %v1706 = vrot.slane %v1705, 4
      %v1708 = vshll.u32 %v1624, 16
      %v1710 = vrot.slane %v1708, 5
      %v1711 = vsel %vm866, %v1706, %v1710
      %v1712 = vshrl.u32 %v1624, 16
      %v1714 = vrot.slane %v1712, 4
      %v1715 = vor.u32 %v1714, %v1710
      %v1716 = vrot.slane %v1715, 4
      %v1718 = vshll.u32 %v1625, 16
      %v1720 = vrot.slane %v1718, 5
      %v1721 = vsel %vm866, %v1716, %v1720
      %s1722 = scalar_lea.vmem %s3, 256
      %v1723 = vld [vmem:[%s1722] sm:$0xf]
      %v1724 = vld [vmem:[%s1722 + $0x4] sm:$0xf]
      %v1725 = vld [vmem:[%s1722 + $0x8] sm:$0xf]
      %v1726 = vld [vmem:[%s1722 + $0xc] sm:$0xf]
      %v1727 = vld [vmem:[%s1722 + $0x10] sm:$0xf]
      %v1728 = vld [vmem:[%s1722 + $0x14] sm:$0xf]
      %v1729 = vld [vmem:[%s1722 + $0x18] sm:$0xf]
      %v1730 = vld [vmem:[%s1722 + $0x1c] sm:$0xf]
      %v1731 = vld [vmem:[%s1722 + $0x20] sm:$0xf]
      %v1732 = vld [vmem:[%s1722 + $0x24] sm:$0xf]
      %v1733 = vld [vmem:[%s1722 + $0x28] sm:$0xf]
      %v1734 = vld [vmem:[%s1722 + $0x2c] sm:$0xf]
      %v1735 = vld [vmem:[%s1722 + $0x30] sm:$0xf]
      %v1736 = vld [vmem:[%s1722 + $0x34] sm:$0xf]
      %v1737 = vld [vmem:[%s1722 + $0x38] sm:$0xf]
      %v1738 = vld [vmem:[%s1722 + $0x3c] sm:$0xf]
      %v1739 = vunpack.c.l.b16 %v1639
      %v1740 = vunpack.c.l.b16 %v1649
      %v1741 = vunpack.c.l.b16 %v1663
      %v1742 = vunpack.c.l.b16 %v1673
      %v1743 = vunpack.c.l.b16 %v1687
      %v1744 = vunpack.c.l.b16 %v1697
      %v1745 = vunpack.c.l.b16 %v1711
      %v1746 = vunpack.c.l.b16 %v1721
      %v1747 = vpack.c.b16 %v1740, %v1739
      %v1748 = vpack.c.b16 %v1742, %v1741
      %v1749 = vpack.c.b16 %v1744, %v1743
      %v1750 = vpack.c.b16 %v1746, %v1745
      %v1771 = vunpack.c.l.b16 %v1723
      %v1772 = vunpack.c.l.b16 %v1724
      %v1773 = vunpack.c.l.b16 %v1725
      %v1774 = vunpack.c.l.b16 %v1726
      %v1775 = vunpack.c.l.b16 %v1727
      %v1776 = vunpack.c.l.b16 %v1728
      %v1777 = vunpack.c.l.b16 %v1729
      %v1778 = vunpack.c.l.b16 %v1730
      %v1779 = vunpack.c.l.b16 %v1731
      %v1780 = vunpack.c.l.b16 %v1732
      %v1781 = vunpack.c.l.b16 %v1733
      %v1782 = vunpack.c.l.b16 %v1734
      %v1783 = vunpack.c.l.b16 %v1735
      %v1784 = vunpack.c.l.b16 %v1736
      %v1785 = vunpack.c.l.b16 %v1737
      %v1786 = vunpack.c.l.b16 %v1738
      %v1787 = vpack.c.b16 %v1772, %v1771
      %v1788 = vpack.c.b16 %v1774, %v1773
      %v1789 = vpack.c.b16 %v1776, %v1775
      %v1790 = vpack.c.b16 %v1778, %v1777
      %v1791 = vpack.c.b16 %v1780, %v1779
      %v1792 = vpack.c.b16 %v1782, %v1781
      %v1793 = vpack.c.b16 %v1784, %v1783
      %v1794 = vpack.c.b16 %v1786, %v1785
      %1803 = vmatprep.subr.bf16.mxu0 0
      %1804 = vmatpush1.bf16.msra.mxu0 %v1787
      %1805 = vmatprep.subr.bf16.mxu0 0
      %1806 = vmatpush1.bf16.msra.mxu0 %v1788
      %1807 = vmatprep.subr.bf16.mxu0 0
      %1808 = vmatpush1.bf16.msra.mxu0 %v1789
      %1809 = vmatprep.subr.bf16.mxu0 0
      %1810 = vmatpush1.bf16.msra.mxu0 %v1790
      %1811 = vmatprep.subr.bf16.mxu0 0
      %1812 = vmatpush1.bf16.msra.mxu0 %v1791
      %1813 = vmatprep.subr.bf16.mxu0 0
      %1814 = vmatpush1.bf16.msra.mxu0 %v1792
      %1815 = vmatprep.subr.bf16.mxu0 0
      %1816 = vmatpush1.bf16.msra.mxu0 %v1793
      %1817 = vmatprep.subr.bf16.mxu0 0
      %1818 = vmatpush1.bf16.msra.mxu0 %v1794
      %1819 = vmatprep.subr.bf16.mxu0 0
      %1820 = vmatpush1.bf16.msra.mxu0 0
      %1821 = vmatprep.subr.bf16.mxu0 0
      %1822 = vmatpush1.bf16.msra.mxu0 0
      %1823 = vmatprep.subr.bf16.mxu0 0
      %1824 = vmatpush1.bf16.msra.mxu0 0
      %1825 = vmatprep.subr.bf16.mxu0 0
      %1826 = vmatpush1.bf16.msra.mxu0 0
      %1827 = vmatprep.subr.bf16.mxu0 0
      %1828 = vmatpush1.bf16.msra.mxu0 0
      %1829 = vmatprep.subr.bf16.mxu0 0
      %1830 = vmatpush1.bf16.msra.mxu0 0
      %1831 = vmatprep.subr.bf16.mxu0 0
      %1832 = vmatpush1.bf16.msra.mxu0 0
      %1833 = vmatprep.subr.bf16.mxu0 0
      %1834 = vmatpush1.bf16.msra.mxu0 0
      %1835 = vmatprep.mubr.bf16.mxu0 0
      %1836 = vmatmul.mubr.bf16.gmra.mrb[0].mxu0 %v1747
      %v1837 = vpop.f32.mrb[0].mxu0
      %v1838 = vadd.f32 0.0, %v1837
      %v1839 = vpop.f32.mrb[0].mxu0
      %v1840 = vpop.f32.mrb[0].mxu0
      %v1841 = vadd.f32 0.0, %v1840
      %v1842 = vpop.f32.mrb[0].mxu0
      %1843 = vmatprep.mubr.bf16.mxu0 0
      %1844 = vmatmul.mubr.bf16.gmra.mrb[0].mxu0 %v1748
      %v1845 = vpop.f32.mrb[0].mxu0
      %v1846 = vadd.f32 0.0, %v1845
      %v1847 = vpop.f32.mrb[0].mxu0
      %v1848 = vpop.f32.mrb[0].mxu0
      %v1849 = vadd.f32 0.0, %v1848
      %v1850 = vpop.f32.mrb[0].mxu0
      %1851 = vmatprep.mubr.bf16.mxu0 0
      %1852 = vmatmul.mubr.bf16.gmra.mrb[0].mxu0 %v1749
      %v1853 = vpop.f32.mrb[0].mxu0
      %v1854 = vadd.f32 0.0, %v1853
      %v1855 = vpop.f32.mrb[0].mxu0
      %v1856 = vpop.f32.mrb[0].mxu0
      %v1857 = vadd.f32 0.0, %v1856
      %v1858 = vpop.f32.mrb[0].mxu0
      %1859 = vmatprep.mubr.bf16.mxu0 0
      %1860 = vmatmul.mubr.bf16.gmra.mrb[0].mxu0 %v1750
      %v1861 = vpop.f32.mrb[0].mxu0
      %v1862 = vadd.f32 0.0, %v1861
      %v1863 = vpop.f32.mrb[0].mxu0
      %v1864 = vpop.f32.mrb[0].mxu0
      %v1865 = vadd.f32 0.0, %v1864
      %v1866 = vpop.f32.mrb[0].mxu0
      %1867 = vdwg.mxu0
      %v1868 = vadd.f32 %v1606, %v1838
      %v1869 = vadd.f32 %v1607, %v1841
      %v1870 = vadd.f32 %v1608, %v1846
      %v1871 = vadd.f32 %v1609, %v1849
      %v1872 = vadd.f32 %v1610, %v1854
      %v1873 = vadd.f32 %v1611, %v1857
      %v1874 = vadd.f32 %v1612, %v1862
      %v1875 = vadd.f32 %v1613, %v1865
      %v1876 = vld [vmem:[%s1443] sm:$0xe]
      %v1877 = vld [vmem:[%s1443 + $0xc] sm:$0xe]
      %v1878 = vld [vmem:[%s1443 + $0x18] sm:$0xe]
      %v1879 = vld [vmem:[%s1443 + $0x24] sm:$0xe]
      %v1892 = vrot.slane %v1876, 5
      %v1893 = vrot.slane %v1892, 4
      %v1894 = vrot.slane %v1615, 5
      %v1895 = vsel %vm1260, %v1893, %v1894
      %v1896 = vrot.slane %v1894, 4
      %v1897 = vrot.slane %v1616, 5
      %v1898 = vsel %vm1260, %v1896, %v1897
      %v1899 = vrot.slane %v1877, 5
      %v1900 = vrot.slane %v1899, 4
      %v1901 = vrot.slane %v1618, 5
      %v1902 = vsel %vm1260, %v1900, %v1901
      %v1903 = vrot.slane %v1901, 4
      %v1904 = vrot.slane %v1619, 5
      %v1905 = vsel %vm1260, %v1903, %v1904
      %v1906 = vrot.slane %v1878, 5
      %v1907 = vrot.slane %v1906, 4
      %v1908 = vrot.slane %v1621, 5
      %v1909 = vsel %vm1260, %v1907, %v1908
      %v1910 = vrot.slane %v1908, 4
      %v1911 = vrot.slane %v1622, 5
      %v1912 = vsel %vm1260, %v1910, %v1911
      %v1913 = vrot.slane %v1879, 5
      %v1914 = vrot.slane %v1913, 4
      %v1915 = vrot.slane %v1624, 5
      %v1916 = vsel %vm1260, %v1914, %v1915
      %v1917 = vrot.slane %v1915, 4
      %v1918 = vrot.slane %v1625, 5
      %v1919 = vsel %vm1260, %v1917, %v1918
      %s1920 = scalar_lea.vmem %s3, 320
      %v1921 = vld [vmem:[%s1920] sm:$0xf]
      %v1922 = vld [vmem:[%s1920 + $0x4] sm:$0xf]
      %v1923 = vld [vmem:[%s1920 + $0x8] sm:$0xf]
      %v1924 = vld [vmem:[%s1920 + $0xc] sm:$0xf]
      %v1925 = vld [vmem:[%s1920 + $0x10] sm:$0xf]
      %v1926 = vld [vmem:[%s1920 + $0x14] sm:$0xf]
      %v1927 = vld [vmem:[%s1920 + $0x18] sm:$0xf]
      %v1928 = vld [vmem:[%s1920 + $0x1c] sm:$0xf]
      %v1929 = vld [vmem:[%s1920 + $0x20] sm:$0xf]
      %v1930 = vld [vmem:[%s1920 + $0x24] sm:$0xf]
      %v1931 = vld [vmem:[%s1920 + $0x28] sm:$0xf]
      %v1932 = vld [vmem:[%s1920 + $0x2c] sm:$0xf]
      %v1933 = vld [vmem:[%s1920 + $0x30] sm:$0xf]
      %v1934 = vld [vmem:[%s1920 + $0x34] sm:$0xf]
      %v1935 = vld [vmem:[%s1920 + $0x38] sm:$0xf]
      %v1936 = vld [vmem:[%s1920 + $0x3c] sm:$0xf]
      %v1937 = vunpack.c.l.b16 %v1895
      %v1938 = vunpack.c.l.b16 %v1898
      %v1939 = vunpack.c.l.b16 %v1902
      %v1940 = vunpack.c.l.b16 %v1905
      %v1941 = vunpack.c.l.b16 %v1909
      %v1942 = vunpack.c.l.b16 %v1912
      %v1943 = vunpack.c.l.b16 %v1916
      %v1944 = vunpack.c.l.b16 %v1919
      %v1945 = vpack.c.b16 %v1938, %v1937
      %v1946 = vpack.c.b16 %v1940, %v1939
      %v1947 = vpack.c.b16 %v1942, %v1941
      %v1948 = vpack.c.b16 %v1944, %v1943
      %v1969 = vunpack.c.l.b16 %v1921
      %v1970 = vunpack.c.l.b16 %v1922
      %v1971 = vunpack.c.l.b16 %v1923
      %v1972 = vunpack.c.l.b16 %v1924
      %v1973 = vunpack.c.l.b16 %v1925
      %v1974 = vunpack.c.l.b16 %v1926
      %v1975 = vunpack.c.l.b16 %v1927
      %v1976 = vunpack.c.l.b16 %v1928
      %v1977 = vunpack.c.l.b16 %v1929
      %v1978 = vunpack.c.l.b16 %v1930
      %v1979 = vunpack.c.l.b16 %v1931
      %v1980 = vunpack.c.l.b16 %v1932
      %v1981 = vunpack.c.l.b16 %v1933
      %v1982 = vunpack.c.l.b16 %v1934
      %v1983 = vunpack.c.l.b16 %v1935
      %v1984 = vunpack.c.l.b16 %v1936
      %v1985 = vpack.c.b16 %v1970, %v1969
      %v1986 = vpack.c.b16 %v1972, %v1971
      %v1987 = vpack.c.b16 %v1974, %v1973
      %v1988 = vpack.c.b16 %v1976, %v1975
      %v1989 = vpack.c.b16 %v1978, %v1977
      %v1990 = vpack.c.b16 %v1980, %v1979
      %v1991 = vpack.c.b16 %v1982, %v1981
      %v1992 = vpack.c.b16 %v1984, %v1983
      %2001 = vmatprep.subr.bf16.mxu0 0
      %2002 = vmatpush1.bf16.msra.mxu0 %v1985
      %2003 = vmatprep.subr.bf16.mxu0 0
      %2004 = vmatpush1.bf16.msra.mxu0 %v1986
      %2005 = vmatprep.subr.bf16.mxu0 0
      %2006 = vmatpush1.bf16.msra.mxu0 %v1987
      %2007 = vmatprep.subr.bf16.mxu0 0
      %2008 = vmatpush1.bf16.msra.mxu0 %v1988
      %2009 = vmatprep.subr.bf16.mxu0 0
      %2010 = vmatpush1.bf16.msra.mxu0 %v1989
      %2011 = vmatprep.subr.bf16.mxu0 0
      %2012 = vmatpush1.bf16.msra.mxu0 %v1990
      %2013 = vmatprep.subr.bf16.mxu0 0
      %2014 = vmatpush1.bf16.msra.mxu0 %v1991
      %2015 = vmatprep.subr.bf16.mxu0 0
      %2016 = vmatpush1.bf16.msra.mxu0 %v1992
      %2017 = vmatprep.subr.bf16.mxu0 0
      %2018 = vmatpush1.bf16.msra.mxu0 0
      %2019 = vmatprep.subr.bf16.mxu0 0
      %2020 = vmatpush1.bf16.msra.mxu0 0
      %2021 = vmatprep.subr.bf16.mxu0 0
      %2022 = vmatpush1.bf16.msra.mxu0 0
      %2023 = vmatprep.subr.bf16.mxu0 0
      %2024 = vmatpush1.bf16.msra.mxu0 0
      %2025 = vmatprep.subr.bf16.mxu0 0
      %2026 = vmatpush1.bf16.msra.mxu0 0
      %2027 = vmatprep.subr.bf16.mxu0 0
      %2028 = vmatpush1.bf16.msra.mxu0 0
      %2029 = vmatprep.subr.bf16.mxu0 0
      %2030 = vmatpush1.bf16.msra.mxu0 0
      %2031 = vmatprep.subr.bf16.mxu0 0
      %2032 = vmatpush1.bf16.msra.mxu0 0
      %2033 = vmatprep.mubr.bf16.mxu0 0
      %2034 = vmatmul.mubr.bf16.gmra.mrb[0].mxu0 %v1945
      %v2035 = vpop.f32.mrb[0].mxu0
      %v2036 = vadd.f32 0.0, %v2035
      %v2037 = vpop.f32.mrb[0].mxu0
      %v2038 = vpop.f32.mrb[0].mxu0
      %v2039 = vadd.f32 0.0, %v2038
      %v2040 = vpop.f32.mrb[0].mxu0
      %2041 = vmatprep.mubr.bf16.mxu0 0
      %2042 = vmatmul.mubr.bf16.gmra.mrb[0].mxu0 %v1946
      %v2043 = vpop.f32.mrb[0].mxu0
      %v2044 = vadd.f32 0.0, %v2043
      %v2045 = vpop.f32.mrb[0].mxu0
      %v2046 = vpop.f32.mrb[0].mxu0
      %v2047 = vadd.f32 0.0, %v2046
      %v2048 = vpop.f32.mrb[0].mxu0
      %2049 = vmatprep.mubr.bf16.mxu0 0
      %2050 = vmatmul.mubr.bf16.gmra.mrb[0].mxu0 %v1947
      %v2051 = vpop.f32.mrb[0].mxu0
      %v2052 = vadd.f32 0.0, %v2051
      %v2053 = vpop.f32.mrb[0].mxu0
      %v2054 = vpop.f32.mrb[0].mxu0
      %v2055 = vadd.f32 0.0, %v2054
      %v2056 = vpop.f32.mrb[0].mxu0
      %2057 = vmatprep.mubr.bf16.mxu0 0
      %2058 = vmatmul.mubr.bf16.gmra.mrb[0].mxu0 %v1948
      %v2059 = vpop.f32.mrb[0].mxu0
      %v2060 = vadd.f32 0.0, %v2059
      %v2061 = vpop.f32.mrb[0].mxu0
      %v2062 = vpop.f32.mrb[0].mxu0
      %v2063 = vadd.f32 0.0, %v2062
      %v2064 = vpop.f32.mrb[0].mxu0
      %2065 = vdwg.mxu0
      %v2066 = vadd.f32 %v1868, %v2036
      %v2067 = vadd.f32 %v1869, %v2039
      %v2068 = vadd.f32 %v1870, %v2044
      %v2069 = vadd.f32 %v1871, %v2047
      %v2070 = vadd.f32 %v1872, %v2052
      %v2071 = vadd.f32 %v1873, %v2055
      %v2072 = vadd.f32 %v1874, %v2060
      %v2073 = vadd.f32 %v1875, %v2063
      %s2074 = scalar_lea.vmem [#allocation3], 24
      %v2075 = vld [vmem:[%s2074] sm:$0xf]
      %v2076 = vld [vmem:[%s2074 + $0x4] sm:$0xf]
      %v2077 = vld [vmem:[%s2074 + $0xc] sm:$0xf]
      %v2078 = vld [vmem:[%s2074 + $0x10] sm:$0xf]
      %v2079 = vld [vmem:[%s2074 + $0x18] sm:$0xf]
      %v2080 = vld [vmem:[%s2074 + $0x1c] sm:$0xf]
      %v2081 = vld [vmem:[%s2074 + $0x24] sm:$0xf]
      %v2082 = vld [vmem:[%s2074 + $0x28] sm:$0xf]
      %s2083 = scalar_lea.vmem %s3, 384
      %v2084 = vld [vmem:[%s2083] sm:$0xf]
      %v2085 = vld [vmem:[%s2083 + $0x4] sm:$0xf]
      %v2086 = vld [vmem:[%s2083 + $0x8] sm:$0xf]
      %v2087 = vld [vmem:[%s2083 + $0xc] sm:$0xf]
      %v2088 = vld [vmem:[%s2083 + $0x10] sm:$0xf]
      %v2089 = vld [vmem:[%s2083 + $0x14] sm:$0xf]
      %v2090 = vld [vmem:[%s2083 + $0x18] sm:$0xf]
      %v2091 = vld [vmem:[%s2083 + $0x1c] sm:$0xf]
      %v2092 = vld [vmem:[%s2083 + $0x20] sm:$0xf]
      %v2093 = vld [vmem:[%s2083 + $0x24] sm:$0xf]
      %v2094 = vld [vmem:[%s2083 + $0x28] sm:$0xf]
      %v2095 = vld [vmem:[%s2083 + $0x2c] sm:$0xf]
      %v2096 = vld [vmem:[%s2083 + $0x30] sm:$0xf]
      %v2097 = vld [vmem:[%s2083 + $0x34] sm:$0xf]
      %v2098 = vld [vmem:[%s2083 + $0x38] sm:$0xf]
      %v2099 = vld [vmem:[%s2083 + $0x3c] sm:$0xf]
      %v2108 = vunpack.c.l.b16 %v2075
      %v2109 = vunpack.c.l.b16 %v2076
      %v2110 = vunpack.c.l.b16 %v2077
      %v2111 = vunpack.c.l.b16 %v2078
      %v2112 = vunpack.c.l.b16 %v2079
      %v2113 = vunpack.c.l.b16 %v2080
      %v2114 = vunpack.c.l.b16 %v2081
      %v2115 = vunpack.c.l.b16 %v2082
      %v2116 = vpack.c.b16 %v2109, %v2108
      %v2117 = vpack.c.b16 %v2111, %v2110
      %v2118 = vpack.c.b16 %v2113, %v2112
      %v2119 = vpack.c.b16 %v2115, %v2114
      %v2140 = vunpack.c.l.b16 %v2084
      %v2141 = vunpack.c.l.b16 %v2085
      %v2142 = vunpack.c.l.b16 %v2086
      %v2143 = vunpack.c.l.b16 %v2087
      %v2144 = vunpack.c.l.b16 %v2088
      %v2145 = vunpack.c.l.b16 %v2089
      %v2146 = vunpack.c.l.b16 %v2090
      %v2147 = vunpack.c.l.b16 %v2091
      %v2148 = vunpack.c.l.b16 %v2092
      %v2149 = vunpack.c.l.b16 %v2093
      %v2150 = vunpack.c.l.b16 %v2094
      %v2151 = vunpack.c.l.b16 %v2095
      %v2152 = vunpack.c.l.b16 %v2096
      %v2153 = vunpack.c.l.b16 %v2097
      %v2154 = vunpack.c.l.b16 %v2098
      %v2155 = vunpack.c.l.b16 %v2099
      %v2156 = vpack.c.b16 %v2141, %v2140
      %v2157 = vpack.c.b16 %v2143, %v2142
      %v2158 = vpack.c.b16 %v2145, %v2144
      %v2159 = vpack.c.b16 %v2147, %v2146
      %v2160 = vpack.c.b16 %v2149, %v2148
      %v2161 = vpack.c.b16 %v2151, %v2150
      %v2162 = vpack.c.b16 %v2153, %v2152
      %v2163 = vpack.c.b16 %v2155, %v2154
      %2172 = vmatprep.subr.bf16.mxu0 0
      %2173 = vmatpush1.bf16.msra.mxu0 %v2156
      %2174 = vmatprep.subr.bf16.mxu0 0
      %2175 = vmatpush1.bf16.msra.mxu0 %v2157
      %2176 = vmatprep.subr.bf16.mxu0 0
      %2177 = vmatpush1.bf16.msra.mxu0 %v2158
      %2178 = vmatprep.subr.bf16.mxu0 0
      %2179 = vmatpush1.bf16.msra.mxu0 %v2159
      %2180 = vmatprep.subr.bf16.mxu0 0
      %2181 = vmatpush1.bf16.msra.mxu0 %v2160
      %2182 = vmatprep.subr.bf16.mxu0 0
      %2183 = vmatpush1.bf16.msra.mxu0 %v2161
      %2184 = vmatprep.subr.bf16.mxu0 0
      %2185 = vmatpush1.bf16.msra.mxu0 %v2162
      %2186 = vmatprep.subr.bf16.mxu0 0
      %2187 = vmatpush1.bf16.msra.mxu0 %v2163
      %2188 = vmatprep.subr.bf16.mxu0 0
      %2189 = vmatpush1.bf16.msra.mxu0 0
      %2190 = vmatprep.subr.bf16.mxu0 0
      %2191 = vmatpush1.bf16.msra.mxu0 0
      %2192 = vmatprep.subr.bf16.mxu0 0
      %2193 = vmatpush1.bf16.msra.mxu0 0
      %2194 = vmatprep.subr.bf16.mxu0 0
      %2195 = vmatpush1.bf16.msra.mxu0 0
      %2196 = vmatprep.subr.bf16.mxu0 0
      %2197 = vmatpush1.bf16.msra.mxu0 0
      %2198 = vmatprep.subr.bf16.mxu0 0
      %2199 = vmatpush1.bf16.msra.mxu0 0
      %2200 = vmatprep.subr.bf16.mxu0 0
      %2201 = vmatpush1.bf16.msra.mxu0 0
      %2202 = vmatprep.subr.bf16.mxu0 0
      %2203 = vmatpush1.bf16.msra.mxu0 0
      %2204 = vmatprep.mubr.bf16.mxu0 0
      %2205 = vmatmul.mubr.bf16.gmra.mrb[0].mxu0 %v2116
      %v2206 = vpop.f32.mrb[0].mxu0
      %v2207 = vadd.f32 0.0, %v2206
      %v2208 = vpop.f32.mrb[0].mxu0
      %v2209 = vpop.f32.mrb[0].mxu0
      %v2210 = vadd.f32 0.0, %v2209
      %v2211 = vpop.f32.mrb[0].mxu0
      %2212 = vmatprep.mubr.bf16.mxu0 0
      %2213 = vmatmul.mubr.bf16.gmra.mrb[0].mxu0 %v2117
      %v2214 = vpop.f32.mrb[0].mxu0
      %v2215 = vadd.f32 0.0, %v2214
      %v2216 = vpop.f32.mrb[0].mxu0
      %v2217 = vpop.f32.mrb[0].mxu0
      %v2218 = vadd.f32 0.0, %v2217
      %v2219 = vpop.f32.mrb[0].mxu0
      %2220 = vmatprep.mubr.bf16.mxu0 0
      %2221 = vmatmul.mubr.bf16.gmra.mrb[0].mxu0 %v2118
      %v2222 = vpop.f32.mrb[0].mxu0
      %v2223 = vadd.f32 0.0, %v2222
      %v2224 = vpop.f32.mrb[0].mxu0
      %v2225 = vpop.f32.mrb[0].mxu0
      %v2226 = vadd.f32 0.0, %v2225
      %v2227 = vpop.f32.mrb[0].mxu0
      %2228 = vmatprep.mubr.bf16.mxu0 0
      %2229 = vmatmul.mubr.bf16.gmra.mrb[0].mxu0 %v2119
      %v2230 = vpop.f32.mrb[0].mxu0
      %v2231 = vadd.f32 0.0, %v2230
      %v2232 = vpop.f32.mrb[0].mxu0
      %v2233 = vpop.f32.mrb[0].mxu0
      %v2234 = vadd.f32 0.0, %v2233
      %v2235 = vpop.f32.mrb[0].mxu0
      %2236 = vdwg.mxu0
      %v2237 = vadd.f32 %v2066, %v2207
      %v2238 = vadd.f32 %v2067, %v2210
      %v2239 = vadd.f32 %v2068, %v2215
      %v2240 = vadd.f32 %v2069, %v2218
      %v2241 = vadd.f32 %v2070, %v2223
      %v2242 = vadd.f32 %v2071, %v2226
      %v2243 = vadd.f32 %v2072, %v2231
      %v2244 = vadd.f32 %v2073, %v2234
      %v2245 = vld [vmem:[%s2074] sm:$0xf]
      %v2246 = vld [vmem:[%s2074 + $0x4] sm:$0xf]
      %v2247 = vld [vmem:[%s2074 + $0x8] sm:$0x1]
      %v2248 = vld [vmem:[%s2074 + $0xc] sm:$0xf]
      %v2249 = vld [vmem:[%s2074 + $0x10] sm:$0xf]
      %v2250 = vld [vmem:[%s2074 + $0x14] sm:$0x1]
      %v2251 = vld [vmem:[%s2074 + $0x18] sm:$0xf]
      %v2252 = vld [vmem:[%s2074 + $0x1c] sm:$0xf]
      %v2253 = vld [vmem:[%s2074 + $0x20] sm:$0x1]
      %v2254 = vld [vmem:[%s2074 + $0x24] sm:$0xf]
      %v2255 = vld [vmem:[%s2074 + $0x28] sm:$0xf]
      %v2256 = vld [vmem:[%s2074 + $0x2c] sm:$0x1]
      %v2258 = vshrl.u32 %v2245, 16
      %v2260 = vrot.slane %v2258, 4
      %v2261 = vshll.u32 %v2245, 16
      %v2263 = vrot.slane %v2261, 5
      %v2264 = vor.u32 %v2260, %v2263
      %v2265 = vrot.slane %v2264, 4
      %v2267 = vshll.u32 %v2246, 16
      %v2269 = vrot.slane %v2267, 5
      %v2270 = vsel %vm866, %v2265, %v2269
      %v2271 = vshrl.u32 %v2246, 16
      %v2273 = vrot.slane %v2271, 4
      %v2274 = vor.u32 %v2273, %v2269
      %v2275 = vrot.slane %v2274, 4
      %v2277 = vshll.u32 %v2247, 16
      %v2279 = vrot.slane %v2277, 5
      %v2280 = vsel %vm866, %v2275, %v2279
      %v2282 = vshrl.u32 %v2248, 16
      %v2284 = vrot.slane %v2282, 4
      %v2285 = vshll.u32 %v2248, 16
      %v2287 = vrot.slane %v2285, 5
      %v2288 = vor.u32 %v2284, %v2287
      %v2289 = vrot.slane %v2288, 4
      %v2291 = vshll.u32 %v2249, 16
      %v2293 = vrot.slane %v2291, 5
      %v2294 = vsel %vm866, %v2289, %v2293
      %v2295 = vshrl.u32 %v2249, 16
      %v2297 = vrot.slane %v2295, 4
      %v2298 = vor.u32 %v2297, %v2293
      %v2299 = vrot.slane %v2298, 4
      %v2301 = vshll.u32 %v2250, 16
      %v2303 = vrot.slane %v2301, 5
      %v2304 = vsel %vm866, %v2299, %v2303
      %v2306 = vshrl.u32 %v2251, 16
      %v2308 = vrot.slane %v2306, 4
      %v2309 = vshll.u32 %v2251, 16
      %v2311 = vrot.slane %v2309, 5
      %v2312 = vor.u32 %v2308, %v2311
      %v2313 = vrot.slane %v2312, 4
      %v2315 = vshll.u32 %v2252, 16
      %v2317 = vrot.slane %v2315, 5
      %v2318 = vsel %vm866, %v2313, %v2317
      %v2319 = vshrl.u32 %v2252, 16
      %v2321 = vrot.slane %v2319, 4
      %v2322 = vor.u32 %v2321, %v2317
      %v2323 = vrot.slane %v2322, 4
      %v2325 = vshll.u32 %v2253, 16
      %v2327 = vrot.slane %v2325, 5
      %v2328 = vsel %vm866, %v2323, %v2327
      %v2330 = vshrl.u32 %v2254, 16
      %v2332 = vrot.slane %v2330, 4
      %v2333 = vshll.u32 %v2254, 16
      %v2335 = vrot.slane %v2333, 5
      %v2336 = vor.u32 %v2332, %v2335
      %v2337 = vrot.slane %v2336, 4
      %v2339 = vshll.u32 %v2255, 16
      %v2341 = vrot.slane %v2339, 5
      %v2342 = vsel %vm866, %v2337, %v2341
      %v2343 = vshrl.u32 %v2255, 16
      %v2345 = vrot.slane %v2343, 4
      %v2346 = vor.u32 %v2345, %v2341
      %v2347 = vrot.slane %v2346, 4
      %v2349 = vshll.u32 %v2256, 16
      %v2351 = vrot.slane %v2349, 5
      %v2352 = vsel %vm866, %v2347, %v2351
      %s2353 = scalar_lea.vmem %s3, 448
      %v2354 = vld [vmem:[%s2353] sm:$0xf]
      %v2355 = vld [vmem:[%s2353 + $0x4] sm:$0xf]
      %v2356 = vld [vmem:[%s2353 + $0x8] sm:$0xf]
      %v2357 = vld [vmem:[%s2353 + $0xc] sm:$0xf]
      %v2358 = vld [vmem:[%s2353 + $0x10] sm:$0xf]
      %v2359 = vld [vmem:[%s2353 + $0x14] sm:$0xf]
      %v2360 = vld [vmem:[%s2353 + $0x18] sm:$0xf]
      %v2361 = vld [vmem:[%s2353 + $0x1c] sm:$0xf]
      %v2362 = vld [vmem:[%s2353 + $0x20] sm:$0xf]
      %v2363 = vld [vmem:[%s2353 + $0x24] sm:$0xf]
      %v2364 = vld [vmem:[%s2353 + $0x28] sm:$0xf]
      %v2365 = vld [vmem:[%s2353 + $0x2c] sm:$0xf]
      %v2366 = vld [vmem:[%s2353 + $0x30] sm:$0xf]
      %v2367 = vld [vmem:[%s2353 + $0x34] sm:$0xf]
      %v2368 = vld [vmem:[%s2353 + $0x38] sm:$0xf]
      %v2369 = vld [vmem:[%s2353 + $0x3c] sm:$0xf]
      %v2370 = vunpack.c.l.b16 %v2270
      %v2371 = vunpack.c.l.b16 %v2280
      %v2372 = vunpack.c.l.b16 %v2294
      %v2373 = vunpack.c.l.b16 %v2304
      %v2374 = vunpack.c.l.b16 %v2318
      %v2375 = vunpack.c.l.b16 %v2328
      %v2376 = vunpack.c.l.b16 %v2342
      %v2377 = vunpack.c.l.b16 %v2352
      %v2378 = vpack.c.b16 %v2371, %v2370
      %v2379 = vpack.c.b16 %v2373, %v2372
      %v2380 = vpack.c.b16 %v2375, %v2374
      %v2381 = vpack.c.b16 %v2377, %v2376
      %v2402 = vunpack.c.l.b16 %v2354
      %v2403 = vunpack.c.l.b16 %v2355
      %v2404 = vunpack.c.l.b16 %v2356
      %v2405 = vunpack.c.l.b16 %v2357
      %v2406 = vunpack.c.l.b16 %v2358
      %v2407 = vunpack.c.l.b16 %v2359
      %v2408 = vunpack.c.l.b16 %v2360
      %v2409 = vunpack.c.l.b16 %v2361
      %v2410 = vunpack.c.l.b16 %v2362
      %v2411 = vunpack.c.l.b16 %v2363
      %v2412 = vunpack.c.l.b16 %v2364
      %v2413 = vunpack.c.l.b16 %v2365
      %v2414 = vunpack.c.l.b16 %v2366
      %v2415 = vunpack.c.l.b16 %v2367
      %v2416 = vunpack.c.l.b16 %v2368
      %v2417 = vunpack.c.l.b16 %v2369
      %v2418 = vpack.c.b16 %v2403, %v2402
      %v2419 = vpack.c.b16 %v2405, %v2404
      %v2420 = vpack.c.b16 %v2407, %v2406
      %v2421 = vpack.c.b16 %v2409, %v2408
      %v2422 = vpack.c.b16 %v2411, %v2410
      %v2423 = vpack.c.b16 %v2413, %v2412
      %v2424 = vpack.c.b16 %v2415, %v2414
      %v2425 = vpack.c.b16 %v2417, %v2416
      %2434 = vmatprep.subr.bf16.mxu0 0
      %2435 = vmatpush1.bf16.msra.mxu0 %v2418
      %2436 = vmatprep.subr.bf16.mxu0 0
      %2437 = vmatpush1.bf16.msra.mxu0 %v2419
      %2438 = vmatprep.subr.bf16.mxu0 0
      %2439 = vmatpush1.bf16.msra.mxu0 %v2420
      %2440 = vmatprep.subr.bf16.mxu0 0
      %2441 = vmatpush1.bf16.msra.mxu0 %v2421
      %2442 = vmatprep.subr.bf16.mxu0 0
      %2443 = vmatpush1.bf16.msra.mxu0 %v2422
      %2444 = vmatprep.subr.bf16.mxu0 0
      %2445 = vmatpush1.bf16.msra.mxu0 %v2423
      %2446 = vmatprep.subr.bf16.mxu0 0
      %2447 = vmatpush1.bf16.msra.mxu0 %v2424
      %2448 = vmatprep.subr.bf16.mxu0 0
      %2449 = vmatpush1.bf16.msra.mxu0 %v2425
      %2450 = vmatprep.subr.bf16.mxu0 0
      %2451 = vmatpush1.bf16.msra.mxu0 0
      %2452 = vmatprep.subr.bf16.mxu0 0
      %2453 = vmatpush1.bf16.msra.mxu0 0
      %2454 = vmatprep.subr.bf16.mxu0 0
      %2455 = vmatpush1.bf16.msra.mxu0 0
      %2456 = vmatprep.subr.bf16.mxu0 0
      %2457 = vmatpush1.bf16.msra.mxu0 0
      %2458 = vmatprep.subr.bf16.mxu0 0
      %2459 = vmatpush1.bf16.msra.mxu0 0
      %2460 = vmatprep.subr.bf16.mxu0 0
      %2461 = vmatpush1.bf16.msra.mxu0 0
      %2462 = vmatprep.subr.bf16.mxu0 0
      %2463 = vmatpush1.bf16.msra.mxu0 0
      %2464 = vmatprep.subr.bf16.mxu0 0
      %2465 = vmatpush1.bf16.msra.mxu0 0
      %2466 = vmatprep.mubr.bf16.mxu0 0
      %2467 = vmatmul.mubr.bf16.gmra.mrb[0].mxu0 %v2378
      %v2468 = vpop.f32.mrb[0].mxu0
      %v2469 = vadd.f32 0.0, %v2468
      %v2470 = vpop.f32.mrb[0].mxu0
      %v2471 = vpop.f32.mrb[0].mxu0
      %v2472 = vadd.f32 0.0, %v2471
      %v2473 = vpop.f32.mrb[0].mxu0
      %2474 = vmatprep.mubr.bf16.mxu0 0
      %2475 = vmatmul.mubr.bf16.gmra.mrb[0].mxu0 %v2379
      %v2476 = vpop.f32.mrb[0].mxu0
      %v2477 = vadd.f32 0.0, %v2476
      %v2478 = vpop.f32.mrb[0].mxu0
      %v2479 = vpop.f32.mrb[0].mxu0
      %v2480 = vadd.f32 0.0, %v2479
      %v2481 = vpop.f32.mrb[0].mxu0
      %2482 = vmatprep.mubr.bf16.mxu0 0
      %2483 = vmatmul.mubr.bf16.gmra.mrb[0].mxu0 %v2380
      %v2484 = vpop.f32.mrb[0].mxu0
      %v2485 = vadd.f32 0.0, %v2484
      %v2486 = vpop.f32.mrb[0].mxu0
      %v2487 = vpop.f32.mrb[0].mxu0
      %v2488 = vadd.f32 0.0, %v2487
      %v2489 = vpop.f32.mrb[0].mxu0
      %2490 = vmatprep.mubr.bf16.mxu0 0
      %2491 = vmatmul.mubr.bf16.gmra.mrb[0].mxu0 %v2381
      %v2492 = vpop.f32.mrb[0].mxu0
      %v2493 = vadd.f32 0.0, %v2492
      %v2494 = vpop.f32.mrb[0].mxu0
      %v2495 = vpop.f32.mrb[0].mxu0
      %v2496 = vadd.f32 0.0, %v2495
      %v2497 = vpop.f32.mrb[0].mxu0
      %2498 = vdwg.mxu0
      %v2499 = vadd.f32 %v2237, %v2469
      %v2500 = vadd.f32 %v2238, %v2472
      %v2501 = vadd.f32 %v2239, %v2477
      %v2502 = vadd.f32 %v2240, %v2480
      %v2503 = vadd.f32 %v2241, %v2485
      %v2504 = vadd.f32 %v2242, %v2488
      %v2505 = vadd.f32 %v2243, %v2493
      %v2506 = vadd.f32 %v2244, %v2496
      %v2507 = vld [vmem:[%s2074] sm:$0xe]
      %v2508 = vld [vmem:[%s2074 + $0xc] sm:$0xe]
      %v2509 = vld [vmem:[%s2074 + $0x18] sm:$0xe]
      %v2510 = vld [vmem:[%s2074 + $0x24] sm:$0xe]
      %v2523 = vrot.slane %v2507, 5
      %v2524 = vrot.slane %v2523, 4
      %v2525 = vrot.slane %v2246, 5
      %v2526 = vsel %vm1260, %v2524, %v2525
      %v2527 = vrot.slane %v2525, 4
      %v2528 = vrot.slane %v2247, 5
      %v2529 = vsel %vm1260, %v2527, %v2528
      %v2530 = vrot.slane %v2508, 5
      %v2531 = vrot.slane %v2530, 4
      %v2532 = vrot.slane %v2249, 5
      %v2533 = vsel %vm1260, %v2531, %v2532
      %v2534 = vrot.slane %v2532, 4
      %v2535 = vrot.slane %v2250, 5
      %v2536 = vsel %vm1260, %v2534, %v2535
      %v2537 = vrot.slane %v2509, 5
      %v2538 = vrot.slane %v2537, 4
      %v2539 = vrot.slane %v2252, 5
      %v2540 = vsel %vm1260, %v2538, %v2539
      %v2541 = vrot.slane %v2539, 4
      %v2542 = vrot.slane %v2253, 5
      %v2543 = vsel %vm1260, %v2541, %v2542
      %v2544 = vrot.slane %v2510, 5
      %v2545 = vrot.slane %v2544, 4
      %v2546 = vrot.slane %v2255, 5
      %v2547 = vsel %vm1260, %v2545, %v2546
      %v2548 = vrot.slane %v2546, 4
      %v2549 = vrot.slane %v2256, 5
      %v2550 = vsel %vm1260, %v2548, %v2549
      %s2551 = scalar_lea.vmem %s3, 512
      %v2552 = vld [vmem:[%s2551] sm:$0xf]
      %v2553 = vld [vmem:[%s2551 + $0x4] sm:$0xf]
      %v2554 = vld [vmem:[%s2551 + $0x8] sm:$0xf]
      %v2555 = vld [vmem:[%s2551 + $0xc] sm:$0xf]
      %v2556 = vld [vmem:[%s2551 + $0x10] sm:$0xf]
      %v2557 = vld [vmem:[%s2551 + $0x14] sm:$0xf]
      %v2558 = vld [vmem:[%s2551 + $0x18] sm:$0xf]
      %v2559 = vld [vmem:[%s2551 + $0x1c] sm:$0xf]
      %v2560 = vld [vmem:[%s2551 + $0x20] sm:$0xf]
      %v2561 = vld [vmem:[%s2551 + $0x24] sm:$0xf]
      %v2562 = vld [vmem:[%s2551 + $0x28] sm:$0xf]
      %v2563 = vld [vmem:[%s2551 + $0x2c] sm:$0xf]
      %v2564 = vld [vmem:[%s2551 + $0x30] sm:$0xf]
      %v2565 = vld [vmem:[%s2551 + $0x34] sm:$0xf]
      %v2566 = vld [vmem:[%s2551 + $0x38] sm:$0xf]
      %v2567 = vld [vmem:[%s2551 + $0x3c] sm:$0xf]
      %v2568 = vunpack.c.l.b16 %v2526
      %v2569 = vunpack.c.l.b16 %v2529
      %v2570 = vunpack.c.l.b16 %v2533
      %v2571 = vunpack.c.l.b16 %v2536
      %v2572 = vunpack.c.l.b16 %v2540
      %v2573 = vunpack.c.l.b16 %v2543
      %v2574 = vunpack.c.l.b16 %v2547
      %v2575 = vunpack.c.l.b16 %v2550
      %v2576 = vpack.c.b16 %v2569, %v2568
      %v2577 = vpack.c.b16 %v2571, %v2570
      %v2578 = vpack.c.b16 %v2573, %v2572
      %v2579 = vpack.c.b16 %v2575, %v2574
      %v2600 = vunpack.c.l.b16 %v2552
      %v2601 = vunpack.c.l.b16 %v2553
      %v2602 = vunpack.c.l.b16 %v2554
      %v2603 = vunpack.c.l.b16 %v2555
      %v2604 = vunpack.c.l.b16 %v2556
      %v2605 = vunpack.c.l.b16 %v2557
      %v2606 = vunpack.c.l.b16 %v2558
      %v2607 = vunpack.c.l.b16 %v2559
      %v2608 = vunpack.c.l.b16 %v2560
      %v2609 = vunpack.c.l.b16 %v2561
      %v2610 = vunpack.c.l.b16 %v2562
      %v2611 = vunpack.c.l.b16 %v2563
      %v2612 = vunpack.c.l.b16 %v2564
      %v2613 = vunpack.c.l.b16 %v2565
      %v2614 = vunpack.c.l.b16 %v2566
      %v2615 = vunpack.c.l.b16 %v2567
      %v2616 = vpack.c.b16 %v2601, %v2600
      %v2617 = vpack.c.b16 %v2603, %v2602
      %v2618 = vpack.c.b16 %v2605, %v2604
      %v2619 = vpack.c.b16 %v2607, %v2606
      %v2620 = vpack.c.b16 %v2609, %v2608
      %v2621 = vpack.c.b16 %v2611, %v2610
      %v2622 = vpack.c.b16 %v2613, %v2612
      %v2623 = vpack.c.b16 %v2615, %v2614
      %2632 = vmatprep.subr.bf16.mxu0 0
      %2633 = vmatpush1.bf16.msra.mxu0 %v2616
      %2634 = vmatprep.subr.bf16.mxu0 0
      %2635 = vmatpush1.bf16.msra.mxu0 %v2617
      %2636 = vmatprep.subr.bf16.mxu0 0
      %2637 = vmatpush1.bf16.msra.mxu0 %v2618
      %2638 = vmatprep.subr.bf16.mxu0 0
      %2639 = vmatpush1.bf16.msra.mxu0 %v2619
      %2640 = vmatprep.subr.bf16.mxu0 0
      %2641 = vmatpush1.bf16.msra.mxu0 %v2620
      %2642 = vmatprep.subr.bf16.mxu0 0
      %2643 = vmatpush1.bf16.msra.mxu0 %v2621
      %2644 = vmatprep.subr.bf16.mxu0 0
      %2645 = vmatpush1.bf16.msra.mxu0 %v2622
      %2646 = vmatprep.subr.bf16.mxu0 0
      %2647 = vmatpush1.bf16.msra.mxu0 %v2623
      %2648 = vmatprep.subr.bf16.mxu0 0
      %2649 = vmatpush1.bf16.msra.mxu0 0
      %2650 = vmatprep.subr.bf16.mxu0 0
      %2651 = vmatpush1.bf16.msra.mxu0 0
      %2652 = vmatprep.subr.bf16.mxu0 0
      %2653 = vmatpush1.bf16.msra.mxu0 0
      %2654 = vmatprep.subr.bf16.mxu0 0
      %2655 = vmatpush1.bf16.msra.mxu0 0
      %2656 = vmatprep.subr.bf16.mxu0 0
      %2657 = vmatpush1.bf16.msra.mxu0 0
      %2658 = vmatprep.subr.bf16.mxu0 0
      %2659 = vmatpush1.bf16.msra.mxu0 0
      %2660 = vmatprep.subr.bf16.mxu0 0
      %2661 = vmatpush1.bf16.msra.mxu0 0
      %2662 = vmatprep.subr.bf16.mxu0 0
      %2663 = vmatpush1.bf16.msra.mxu0 0
      %2664 = vmatprep.mubr.bf16.mxu0 0
      %2665 = vmatmul.mubr.bf16.gmra.mrb[0].mxu0 %v2576
      %v2666 = vpop.f32.mrb[0].mxu0
      %v2667 = vadd.f32 0.0, %v2666
      %v2668 = vpop.f32.mrb[0].mxu0
      %v2669 = vpop.f32.mrb[0].mxu0
      %v2670 = vadd.f32 0.0, %v2669
      %v2671 = vpop.f32.mrb[0].mxu0
      %2672 = vmatprep.mubr.bf16.mxu0 0
      %2673 = vmatmul.mubr.bf16.gmra.mrb[0].mxu0 %v2577
      %v2674 = vpop.f32.mrb[0].mxu0
      %v2675 = vadd.f32 0.0, %v2674
      %v2676 = vpop.f32.mrb[0].mxu0
      %v2677 = vpop.f32.mrb[0].mxu0
      %v2678 = vadd.f32 0.0, %v2677
      %v2679 = vpop.f32.mrb[0].mxu0
      %2680 = vmatprep.mubr.bf16.mxu0 0
      %2681 = vmatmul.mubr.bf16.gmra.mrb[0].mxu0 %v2578
      %v2682 = vpop.f32.mrb[0].mxu0
      %v2683 = vadd.f32 0.0, %v2682
      %v2684 = vpop.f32.mrb[0].mxu0
      %v2685 = vpop.f32.mrb[0].mxu0
      %v2686 = vadd.f32 0.0, %v2685
      %v2687 = vpop.f32.mrb[0].mxu0
      %2688 = vmatprep.mubr.bf16.mxu0 0
      %2689 = vmatmul.mubr.bf16.gmra.mrb[0].mxu0 %v2579
      %v2690 = vpop.f32.mrb[0].mxu0
      %v2691 = vadd.f32 0.0, %v2690
      %v2692 = vpop.f32.mrb[0].mxu0
      %v2693 = vpop.f32.mrb[0].mxu0
      %v2694 = vadd.f32 0.0, %v2693
      %v2695 = vpop.f32.mrb[0].mxu0
      %2696 = vdwg.mxu0
      %v2697 = vadd.f32 %v2499, %v2667
      %v2698 = vadd.f32 %v2500, %v2670
      %v2699 = vadd.f32 %v2501, %v2675
      %v2700 = vadd.f32 %v2502, %v2678
      %v2701 = vadd.f32 %v2503, %v2683
      %v2702 = vadd.f32 %v2504, %v2686
      %v2703 = vadd.f32 %v2505, %v2691
      %v2704 = vadd.f32 %v2506, %v2694
      %v2705 = vld [vmem:[%s4] sm:$0x1]
      %v2707 = vlaneseq
      %v2708 = vshrl.u32 %v2707, 7
      %v2709 = vsub.s32 0, %v2708
      %v2710 = vrot.slane %v2705, %v2709
      %v2712 = vadd.f32 %v2697, %v2710
      %v2713 = vadd.f32 %v2698, %v2710
      %v2714 = vadd.f32 %v2699, %v2710
      %v2715 = vadd.f32 %v2700, %v2710
      %v2716 = vadd.f32 %v2701, %v2710
      %v2717 = vadd.f32 %v2702, %v2710
      %v2718 = vadd.f32 %v2703, %v2710
      %v2719 = vadd.f32 %v2704, %v2710
      %v2720 = vmax.f32 %v2712, 0.0
      %v2721 = vmax.f32 %v2713, 0.0
      %v2722 = vmax.f32 %v2714, 0.0
      %v2723 = vmax.f32 %v2715, 0.0
      %v2724 = vmax.f32 %v2716, 0.0
      %v2725 = vmax.f32 %v2717, 0.0
      %v2726 = vmax.f32 %v2718, 0.0
      %v2727 = vmax.f32 %v2719, 0.0
      %v2728 = vpack.c.bf16 %v2721, %v2720
      %v2729 = vpack.c.bf16 %v2723, %v2722
      %v2730 = vpack.c.bf16 %v2725, %v2724
      %v2731 = vpack.c.bf16 %v2727, %v2726
      %v2732 = vld [vmem:[%s5] sm:$0xf]
      %v2733 = vld [vmem:[%s5 + $0x4] sm:$0xf]
      %v2734 = vld [vmem:[%s5 + $0x8] sm:$0xf]
      %v2735 = vld [vmem:[%s5 + $0xc] sm:$0xf]
      %v2736 = vld [vmem:[%s5 + $0x10] sm:$0xf]
      %v2737 = vld [vmem:[%s5 + $0x14] sm:$0xf]
      %v2738 = vld [vmem:[%s5 + $0x18] sm:$0xf]
      %v2739 = vld [vmem:[%s5 + $0x1c] sm:$0xf]
      %v2740 = vld [vmem:[%s5 + $0x20] sm:$0xf]
      %v2741 = vld [vmem:[%s5 + $0x24] sm:$0xf]
      %v2742 = vld [vmem:[%s5 + $0x28] sm:$0xf]
      %v2743 = vld [vmem:[%s5 + $0x2c] sm:$0xf]
      %v2744 = vld [vmem:[%s5 + $0x30] sm:$0xf]
      %v2745 = vld [vmem:[%s5 + $0x34] sm:$0xf]
      %v2746 = vld [vmem:[%s5 + $0x38] sm:$0xf]
      %v2747 = vld [vmem:[%s5 + $0x3c] sm:$0xf]
      %v2748 = vld [vmem:[%s6] sm:$0x1]
      %v2750 = vlaneseq
      %v2751 = vshrl.u32 %v2750, 7
      %v2752 = vsub.s32 0, %v2751
      %v2753 = vrot.slane %v2748, %v2752
      %v2771 = vunpack.c.l.b16 %v2732
      %v2772 = vunpack.c.l.b16 %v2733
      %v2773 = vunpack.c.l.b16 %v2734
      %v2774 = vunpack.c.l.b16 %v2735
      %v2775 = vunpack.c.l.b16 %v2736
      %v2776 = vunpack.c.l.b16 %v2737
      %v2777 = vunpack.c.l.b16 %v2738
      %v2778 = vunpack.c.l.b16 %v2739
      %v2779 = vunpack.c.l.b16 %v2740
      %v2780 = vunpack.c.l.b16 %v2741
      %v2781 = vunpack.c.l.b16 %v2742
      %v2782 = vunpack.c.l.b16 %v2743
      %v2783 = vunpack.c.l.b16 %v2744
      %v2784 = vunpack.c.l.b16 %v2745
      %v2785 = vunpack.c.l.b16 %v2746
      %v2786 = vunpack.c.l.b16 %v2747
      %v2787 = vpack.c.b16 %v2772, %v2771
      %v2788 = vpack.c.b16 %v2774, %v2773
      %v2789 = vpack.c.b16 %v2776, %v2775
      %v2790 = vpack.c.b16 %v2778, %v2777
      %v2791 = vpack.c.b16 %v2780, %v2779
      %v2792 = vpack.c.b16 %v2782, %v2781
      %v2793 = vpack.c.b16 %v2784, %v2783
      %v2794 = vpack.c.b16 %v2786, %v2785
      %2803 = vmatprep.subr.bf16.mxu0 0
      %2804 = vmatpush1.bf16.msra.mxu0 %v2787
      %2805 = vmatprep.subr.bf16.mxu0 0
      %2806 = vmatpush1.bf16.msra.mxu0 %v2788
      %2807 = vmatprep.subr.bf16.mxu0 0
      %2808 = vmatpush1.bf16.msra.mxu0 %v2789
      %2809 = vmatprep.subr.bf16.mxu0 0
      %2810 = vmatpush1.bf16.msra.mxu0 %v2790
      %2811 = vmatprep.subr.bf16.mxu0 0
      %2812 = vmatpush1.bf16.msra.mxu0 %v2791
      %2813 = vmatprep.subr.bf16.mxu0 0
      %2814 = vmatpush1.bf16.msra.mxu0 %v2792
      %2815 = vmatprep.subr.bf16.mxu0 0
      %2816 = vmatpush1.bf16.msra.mxu0 %v2793
      %2817 = vmatprep.subr.bf16.mxu0 0
      %2818 = vmatpush1.bf16.msra.mxu0 %v2794
      %2819 = vmatprep.subr.bf16.mxu0 0
      %2820 = vmatpush1.bf16.msra.mxu0 0
      %2821 = vmatprep.subr.bf16.mxu0 0
      %2822 = vmatpush1.bf16.msra.mxu0 0
      %2823 = vmatprep.subr.bf16.mxu0 0
      %2824 = vmatpush1.bf16.msra.mxu0 0
      %2825 = vmatprep.subr.bf16.mxu0 0
      %2826 = vmatpush1.bf16.msra.mxu0 0
      %2827 = vmatprep.subr.bf16.mxu0 0
      %2828 = vmatpush1.bf16.msra.mxu0 0
      %2829 = vmatprep.subr.bf16.mxu0 0
      %2830 = vmatpush1.bf16.msra.mxu0 0
      %2831 = vmatprep.subr.bf16.mxu0 0
      %2832 = vmatpush1.bf16.msra.mxu0 0
      %2833 = vmatprep.subr.bf16.mxu0 0
      %2834 = vmatpush1.bf16.msra.mxu0 0
      %2835 = vmatprep.mubr.bf16.mxu0 0
      %2836 = vmatmul.mubr.bf16.gmra.mrb[0].mxu0 %v2728
      %v2837 = vpop.f32.mrb[0].mxu0
      %v2838 = vadd.f32 %v2753, %v2837
      %v2839 = vpop.f32.mrb[0].mxu0
      %v2840 = vpop.f32.mrb[0].mxu0
      %v2841 = vadd.f32 %v2753, %v2840
      %v2842 = vpop.f32.mrb[0].mxu0
      %2843 = vmatprep.mubr.bf16.mxu0 0
      %2844 = vmatmul.mubr.bf16.gmra.mrb[0].mxu0 %v2729
      %v2845 = vpop.f32.mrb[0].mxu0
      %v2846 = vadd.f32 %v2753, %v2845
      %v2847 = vpop.f32.mrb[0].mxu0
      %v2848 = vpop.f32.mrb[0].mxu0
      %v2849 = vadd.f32 %v2753, %v2848
      %v2850 = vpop.f32.mrb[0].mxu0
      %2851 = vmatprep.mubr.bf16.mxu0 0
      %2852 = vmatmul.mubr.bf16.gmra.mrb[0].mxu0 %v2730
      %v2853 = vpop.f32.mrb[0].mxu0
      %v2854 = vadd.f32 %v2753, %v2853
      %v2855 = vpop.f32.mrb[0].mxu0
      %v2856 = vpop.f32.mrb[0].mxu0
      %v2857 = vadd.f32 %v2753, %v2856
      %v2858 = vpop.f32.mrb[0].mxu0
      %2859 = vmatprep.mubr.bf16.mxu0 0
      %2860 = vmatmul.mubr.bf16.gmra.mrb[0].mxu0 %v2731
      %v2861 = vpop.f32.mrb[0].mxu0
      %v2862 = vadd.f32 %v2753, %v2861
      %v2863 = vpop.f32.mrb[0].mxu0
      %v2864 = vpop.f32.mrb[0].mxu0
      %v2865 = vadd.f32 %v2753, %v2864
      %v2866 = vpop.f32.mrb[0].mxu0
      %2867 = vdwg.mxu0
      %v2868 = vld [vmem:[%s317] sm:$0xff]
      %v2869 = vld [vmem:[%s317 + $0x8] sm:$0xff]
      %v2870 = vld [vmem:[%s317 + $0x10] sm:$0xff]
      %v2871 = vld [vmem:[%s317 + $0x18] sm:$0xff]
      %v2872 = vunpack.c.l.bf16 %v2868
      %v2873 = vunpack.c.h.bf16 %v2868
      %v2874 = vunpack.c.l.bf16 %v2869
      %v2875 = vunpack.c.h.bf16 %v2869
      %v2876 = vunpack.c.l.bf16 %v2870
      %v2877 = vunpack.c.h.bf16 %v2870
      %v2878 = vunpack.c.l.bf16 %v2871
      %v2879 = vunpack.c.h.bf16 %v2871
      %v2880 = vadd.f32 %v2838, %v2872
      %v2881 = vadd.f32 %v2841, %v2873
      %v2882 = vadd.f32 %v2846, %v2874
      %v2883 = vadd.f32 %v2849, %v2875
      %v2884 = vadd.f32 %v2854, %v2876
      %v2885 = vadd.f32 %v2857, %v2877
      %v2886 = vadd.f32 %v2862, %v2878
      %v2887 = vadd.f32 %v2865, %v2879
      %v2888 = vmax.f32 %v2880, 0.0
      %v2889 = vmax.f32 %v2881, 0.0
      %v2890 = vmax.f32 %v2882, 0.0
      %v2891 = vmax.f32 %v2883, 0.0
      %v2892 = vmax.f32 %v2884, 0.0
      %v2893 = vmax.f32 %v2885, 0.0
      %v2894 = vmax.f32 %v2886, 0.0
      %v2895 = vmax.f32 %v2887, 0.0
      %v2896 = vpack.c.bf16 %v2889, %v2888
      %v2897 = vpack.c.bf16 %v2891, %v2890
      %v2898 = vpack.c.bf16 %v2893, %v2892
      %v2899 = vpack.c.bf16 %v2895, %v2894
      %v2904 = vunpack.c.l.b16 %v2896
      %v2905 = vunpack.c.h.b16 %v2896
      %v2906 = vunpack.c.l.b16 %v2897
      %v2907 = vunpack.c.h.b16 %v2897
      %v2908 = vunpack.c.l.b16 %v2898
      %v2909 = vunpack.c.h.b16 %v2898
      %v2910 = vunpack.c.l.b16 %v2899
      %v2911 = vunpack.c.h.b16 %v2899
      %v2912 = vpack.c.b16 %v2904, %v2904
      %v2913 = vpack.c.b16 %v2905, %v2905
      %v2914 = vpack.c.b16 %v2906, %v2906
      %v2915 = vpack.c.b16 %v2907, %v2907
      %v2916 = vpack.c.b16 %v2908, %v2908
      %v2917 = vpack.c.b16 %v2909, %v2909
      %v2918 = vpack.c.b16 %v2910, %v2910
      %v2919 = vpack.c.b16 %v2911, %v2911
      %2928 = vst [vmem:[%s256] sm:$0xf] %v2912
      %2929 = vst [vmem:[%s256 + $0x4] sm:$0xf] %v2913
      %2930 = vst [vmem:[%s256 + $0x8] sm:$0xf] %v2914
      %2931 = vst [vmem:[%s256 + $0xc] sm:$0xf] %v2915
      %2932 = vst [vmem:[%s256 + $0x10] sm:$0xf] %v2916
      %2933 = vst [vmem:[%s256 + $0x14] sm:$0xf] %v2917
      %2934 = vst [vmem:[%s256 + $0x18] sm:$0xf] %v2918
      %2935 = vst [vmem:[%s256 + $0x1c] sm:$0xf] %v2919
      %s2936 = smul.u32 4, %s23
      %p2937 = scmp.lt.s32.totalorder %s22, 1
      %s2938 = scalar_select %p2937, %s22, 1
      %p2939 = scmp.lt.s32.totalorder %s2936, 15
      %s2940 = scalar_select %p2939, %s2936, 15
      %s2941 = smul.addr %s2940, 2
      %s2942 = smul.addr %s2938, 32
      %s2943 = sadd.s32 %s2941, %s2942
      %s2944 = smul.addr %s2943, 4
      %s2945 = scalar_lea.vmem %s7, %s2944
      // Predicated region
      $region155: #{_lambda_.1} parent=43 // pred_check
        %p2946 = pneg %p176
      $region156: #{_lambda_.1} parent=43 // pred_check_branch
        %2948 = sbr.rel (%p2946) target = $region158
      $region157: #{_lambda_.1} parent=43 // pred_region
        %s2949 = smul.u32 4, %s23
      $region158: #{_lambda_.1} parent=43 // pred_fallthru
        _
    $region44: #{_lambda_.1} parent=5 // pred_fallthru
      _
    %p2950 = scmp.le.s32.totalorder 2, %s13
    // Predicated region
    $region159: #{_lambda_.1} parent=5 // pred_check
      %p2951 = pneg %p2950
    $region160: #{_lambda_.1} parent=5 // pred_check_branch
      %2953 = sbr.rel (%p2951) target = $region162
    $region161: #{_lambda_.1} parent=5 // pred_region
      %s2954 = ssub.s32 %s13, 2
      // Predicated region
      $region163: #{_lambda_.1} parent=161 // pred_check
        %p2955 = pneg %p182
      $region164: #{_lambda_.1} parent=161 // pred_check_branch
        %2957 = sbr.rel (%p2955) target = $region166
      $region165: #{_lambda_.1} parent=161 // pred_region
        %s2958 = smul.u32 4, %s25
        %p2959 = scmp.lt.s32.totalorder %s24, 1
        %s2960 = scalar_select %p2959, %s24, 1
        %p2961 = scmp.lt.s32.totalorder %s2958, 15
        %s2962 = scalar_select %p2961, %s2958, 15
        %s2963 = smul.addr %s2962, 2
        %s2964 = smul.addr %s2960, 32
        %s2965 = sadd.s32 %s2963, %s2964
        %s2966 = smul.addr %s2965, 4
        %s2967 = scalar_lea.vmem %s7, %s2966
      $region166: #{_lambda_.1} parent=161 // pred_fallthru
        _
    $region162: #{_lambda_.1} parent=5 // pred_fallthru
      _
  $region6: #{_lambda_.1} parent=0 // loop_footer
    %s17 = sadd.s32 1, %s13
  $region7: #{_lambda_.1} parent=0 // loop_footer_branch
    %12 = sbr.rel target = $region3
  $region8: #{_lambda_.1} parent=0 // loop_exit
    _
  %2968 = vsyncmov [#allocation4]
  %s2969 = vpop.sfrf %2968
  %p2970 = scmp.eq.s32.totalorder %s2969, 0
  %p2971 = pneg %p2970
  %2973 = shalt.err (%p2971)
  %s2974 = scalar_lea.sflag [#allocation4], 1
  %2975 = vsyncmov %s2974
  %s2976 = vpop.sfrf %2975
  %p2977 = scmp.eq.s32.totalorder %s2976, 0
  %p2978 = pneg %p2977
  %2980 = shalt.err (%p2978)
  %s2981 = scalar_lea.sflag [#allocation4], 2
  %2982 = vsyncmov %s2981
  %s2983 = vpop.sfrf %2982
  %p2984 = scmp.eq.s32.totalorder %s2983, 0
  %p2985 = pneg %p2984
  %2987 = shalt.err (%p2985)

</llo_original>
